<compile_context>
chip_gen: v5e
topology: v5e:2x2
jax: 0.10.0
libtpu: 0.0.40
codegen_flags: <defaults>
</compile_context>

<pallas_src>
import functools

import jax
import jax.numpy as jnp
from jax.experimental import pallas as pl
from jax.experimental.pallas import tpu as pltpu

PREDNET_IN = 123          # self.prednet_input_len = 123 * 1
PAD_IN = 128              # lane-aligned feature dim (zero-padded 123 -> 128)
PREDNET_LEN1 = 256
PREDNET_LEN2 = 128
STUDENT_N = 64
EXER_N = 32
TILE_B = 512              # batch columns per grid step (sweep 512..2048)


def neuralcdm_kernel(scale_ref, stu_id_ref, exer_id_ref, kn_ref,
                     stu_tab_ref, exer_tab_ref,
                     w1_ref, b1_ref, w2_ref, b2_ref, w3_ref, b3_ref,
                     out_ref):
    tile_b = kn_ref.shape[1]
    student_n = stu_tab_ref.shape[1]
    exer_n = exer_tab_ref.shape[1]

    # --- fused embedding gathers: one-hot(ids) matmuls on the MXU -----------
    # ids are lane-dense (1, tile_b) int32 rows; tables are VMEM-resident,
    # feature-major (PAD_IN, n) bf16.  one_hot entries are exact in bf16 and
    # table values were drawn bf16-exact, so stu_t == student_emb[stu_id].T.
    stu_ids = stu_id_ref[...]                                   # (1, tile_b)
    exer_ids = exer_id_ref[...]
    oh_s = (jax.lax.broadcasted_iota(jnp.int32, (student_n, tile_b), 0)
            == stu_ids).astype(jnp.bfloat16)                    # (S, tile_b)
    oh_e = (jax.lax.broadcasted_iota(jnp.int32, (exer_n, tile_b), 0)
            == exer_ids).astype(jnp.bfloat16)                   # (E, tile_b)
    stu_t = jnp.dot(stu_tab_ref[...], oh_s,
                    preferred_element_type=jnp.float32)          # (PAD_IN, tb)
    exer_t = jnp.dot(exer_tab_ref[...], oh_e,
                     preferred_element_type=jnp.float32)         # (PAD_IN, tb)

    # input_x = (stu_emb - exer_emb) * kn_emb * (1 - cuxin) * yunqi * 100
    # ((1 - cuxin) * yunqi * 100 pre-folded into one SMEM scalar; f32 math.)
    x = (stu_t - exer_t) * kn_ref[...].astype(jnp.float32) * scale_ref[0]

    # prednet_full1 -> sigmoid -> dropout (eval: identity). bf16 MXU, f32 acc.
    h1 = jax.nn.sigmoid(
        jnp.dot(w1_ref[...], x.astype(jnp.bfloat16),
                preferred_element_type=jnp.float32) + b1_ref[...])
    # prednet_full2 -> sigmoid -> dropout (eval: identity).
    h2 = jax.nn.sigmoid(
        jnp.dot(w2_ref[...], h1.astype(jnp.bfloat16),
                preferred_element_type=jnp.float32) + b2_ref[...])

    # prednet_full3 (out dim 1): VPU multiply + sublane reduce -> lane-dense
    # (1, tile_b) row (unmasked stores), keeps the MXU free.
    logit = jnp.sum(w3_ref[...] * h2, axis=0, keepdims=True) + b3_ref[...]
    out_ref[...] = jax.nn.sigmoid(logit)


@functools.partial(jax.jit, static_argnames=("tile_b",))
def neuralcdm_forward(stu_id, exer_id, kn_emb_t, cuxin, yunqi, params,
                      tile_b=TILE_B):
    """stu_id/exer_id: (B,) int32; kn_emb_t: (PAD_IN, B) feature-major 0/1
    knowledge-relevancy (rows >= 123 zero); cuxin/yunqi: (1,) f32 scalars."""
    B = stu_id.shape[0]
    grid_b = pl.cdiv(B, tile_b)
    bp = grid_b * tile_b
    if bp != B:   # pad batch to a tile multiple; padded cols sliced off below
        stu_id = jnp.pad(stu_id, (0, bp - B))
        exer_id = jnp.pad(exer_id, (0, bp - B))
        kn_emb_t = jnp.pad(kn_emb_t, ((0, 0), (0, bp - B)))

    stu_row = stu_id.reshape(1, bp).astype(jnp.int32)
    exer_row = exer_id.reshape(1, bp).astype(jnp.int32)
    kn_t = kn_emb_t.astype(jnp.bfloat16)          # 0/1 mask -> lossless bf16

    # Fold (1 - cuxin) * yunqi * 100 into one scalar for SMEM.
    scale = ((1.0 - cuxin) * yunqi * 100.0).astype(jnp.float32)   # (1,)

    row = lambda i: (0, i)     # tiled along the lane-dense batch axis
    const = lambda i: (0, 0)   # grid-invariant (VMEM-resident) operands
    grid_spec = pltpu.PrefetchScalarGridSpec(
        num_scalar_prefetch=0,
        grid=(grid_b,),
        in_specs=[
            pl.BlockSpec(memory_space=pltpu.MemorySpace.SMEM),     # scale
            pl.BlockSpec((1, tile_b), row),                        # stu_id row
            pl.BlockSpec((1, tile_b), row),                        # exer_id row
            pl.BlockSpec((PAD_IN, tile_b), row),                   # kn_t (bf16)
            pl.BlockSpec((PAD_IN, STUDENT_N), const),              # stu table
            pl.BlockSpec((PAD_IN, EXER_N), const),                 # exer table
            pl.BlockSpec((PREDNET_LEN1, PAD_IN), const),           # w1 (bf16)
            pl.BlockSpec((PREDNET_LEN1, 1), const),                # b1
            pl.BlockSpec((PREDNET_LEN2, PREDNET_LEN1), const),     # w2 (bf16)
            pl.BlockSpec((PREDNET_LEN2, 1), const),                # b2
            pl.BlockSpec((PREDNET_LEN2, 1), const),                # w3 col
            pl.BlockSpec((1, 1), const),                           # b3
        ],
        out_specs=pl.BlockSpec((1, tile_b), row),                  # lane-dense
    )
    out_row = pl.pallas_call(
        neuralcdm_kernel,
        out_shape=jax.ShapeDtypeStruct((1, bp), jnp.float32),
        grid_spec=grid_spec,
        compiler_params=pltpu.CompilerParams(
            dimension_semantics=("parallel",),
            vmem_limit_bytes=32 * 1024 * 1024),    # safe on v7x's 64 MiB
    )(scale, stu_row, exer_row, kn_t,
      params["stu_tab"], params["exer_tab"],
      params["w1"], params["b1"], params["w2"], params["b2"],
      params["w3"], params["b3"])
    # (1, bp) -> (bp, 1) is a free reshape; slice off padded rows.
    return out_row.reshape(bp, 1)[:B]


def xavier_normal(key, shape, fan_in, fan_out):
    std = (2.0 / (fan_in + fan_out)) ** 0.5
    return std * jax.random.normal(key, shape, dtype=jnp.float32)


def init_params(key):
    ks = jax.random.split(key, 8)
    # Embedding tables, feature-major (PAD_IN, n), rows 123..127 zero.  Values
    # drawn bf16-exact so the in-kernel one-hot-matmul gather is exact.
    stu_tab = jnp.zeros((PAD_IN, STUDENT_N), jnp.float32)
    stu_tab = stu_tab.at[:PREDNET_IN].set(
        (0.1 * jax.random.normal(ks[0], (PREDNET_IN, STUDENT_N),
                                 dtype=jnp.float32)
         ).astype(jnp.bfloat16).astype(jnp.float32))
    exer_tab = jnp.zeros((PAD_IN, EXER_N), jnp.float32)
    exer_tab = exer_tab.at[:PREDNET_IN].set(
        (0.1 * jax.random.normal(ks[1], (PREDNET_IN, EXER_N),
                                 dtype=jnp.float32)
         ).astype(jnp.bfloat16).astype(jnp.float32))

    # MLP weights in PyTorch (out, in) layout == feature-major kernel layout.
    # w1 padded in the in-dim (cols 123..127 zero) so padded lanes contribute 0.
    w1 = jnp.zeros((PREDNET_LEN1, PAD_IN), jnp.float32)
    w1 = w1.at[:, :PREDNET_IN].set(
        xavier_normal(ks[2], (PREDNET_LEN1, PREDNET_IN),
                      PREDNET_IN, PREDNET_LEN1))
    w2 = xavier_normal(ks[4], (PREDNET_LEN2, PREDNET_LEN1),
                       PREDNET_LEN1, PREDNET_LEN2)
    w3 = xavier_normal(ks[6], (1, PREDNET_LEN2), PREDNET_LEN2, 1).T  # (128, 1)
    return {
        "stu_tab": stu_tab.astype(jnp.bfloat16),
        "exer_tab": exer_tab.astype(jnp.bfloat16),
        "w1": w1.astype(jnp.bfloat16),
        "b1": 0.01 * jax.random.normal(ks[3], (PREDNET_LEN1, 1),
                                       dtype=jnp.float32),
        "w2": w2.astype(jnp.bfloat16),
        "b2": 0.01 * jax.random.normal(ks[5], (PREDNET_LEN2, 1),
                                       dtype=jnp.float32),
        "w3": w3.astype(jnp.float32),
        "b3": 0.01 * jax.random.normal(ks[7], (1, 1), dtype=jnp.float32),
    }


if __name__ == "__main__":
    key = jax.random.PRNGKey(0)
    k_params, k_kn, k_stu_id, k_exer_id, k_cuxin, k_yunqi = jax.random.split(key, 6)

    batch = 1000          # not a tile multiple on purpose (exercises padding)
    params = init_params(k_params)

    stu_id = jax.random.randint(k_stu_id, (batch,), 0, STUDENT_N, dtype=jnp.int32)
    exer_id = jax.random.randint(k_exer_id, (batch,), 0, EXER_N, dtype=jnp.int32)

    # Knowledge relevancy vectors, feature-major (PAD_IN, B), rows >=123 zero.
    kn_t = jnp.zeros((PAD_IN, batch), jnp.float32)
    kn_t = kn_t.at[:PREDNET_IN].set(
        jax.random.bernoulli(k_kn, 0.3, (PREDNET_IN, batch)).astype(jnp.float32))

    # Undefined globals in the source forward(): deterministic scalars here.
    cuxin = jax.random.uniform(k_cuxin, (1,), dtype=jnp.float32)
    yunqi = jax.random.uniform(k_yunqi, (1,), dtype=jnp.float32)

    out = neuralcdm_forward(stu_id, exer_id, kn_t.astype(jnp.bfloat16),
                            cuxin, yunqi, params)
    out = jax.block_until_ready(out)

    # Pure-JAX reference (true gathers, matched precision: bf16 MXU operands,
    # f32 accumulation and f32 elementwise).
    stu_tab_f32 = params["stu_tab"].astype(jnp.float32)
    exer_tab_f32 = params["exer_tab"].astype(jnp.float32)
    stu_emb_t = stu_tab_f32[:, stu_id]                 # (PAD_IN, B)
    exer_emb_t = exer_tab_f32[:, exer_id]              # (PAD_IN, B)
    scale = (1.0 - cuxin[0]) * yunqi[0] * 100.0
    x_t = (stu_emb_t - exer_emb_t) * kn_t * scale
    h1 = jax.nn.sigmoid(
        jnp.dot(params["w1"], x_t.astype(jnp.bfloat16),
                preferred_element_type=jnp.float32) + params["b1"])
    h2 = jax.nn.sigmoid(
        jnp.dot(params["w2"], h1.astype(jnp.bfloat16),
                preferred_element_type=jnp.float32) + params["b2"])
    ref = jax.nn.sigmoid(
        jnp.sum(params["w3"] * h2, axis=0, keepdims=True) + params["b3"])
    ref = ref.reshape(batch, 1)

    assert out.shape == (batch, 1)
    assert jnp.allclose(out, ref, atol=2e-3, rtol=2e-3), (
        float(jnp.max(jnp.abs(out - ref))))

    print("KERNEL_OK")
</pallas_src>

<mosaic_0001>
module attributes {stable_mosaic.version = 11 : i64} {
  func.func @neuralcdm_kernel(%arg0: i32, %arg1: memref<1xf32, #tpu.memory_space<smem>>, %arg2: memref<1x512xi32, #tpu.memory_space<vmem>>, %arg3: memref<1x512xi32, #tpu.memory_space<vmem>>, %arg4: memref<128x512xbf16, #tpu.memory_space<vmem>>, %arg5: memref<128x64xbf16, #tpu.memory_space<vmem>>, %arg6: memref<128x32xbf16, #tpu.memory_space<vmem>>, %arg7: memref<256x128xbf16, #tpu.memory_space<vmem>>, %arg8: memref<256x1xf32, #tpu.memory_space<vmem>>, %arg9: memref<128x256xbf16, #tpu.memory_space<vmem>>, %arg10: memref<128x1xf32, #tpu.memory_space<vmem>>, %arg11: memref<128x1xf32, #tpu.memory_space<vmem>>, %arg12: memref<1x1xf32, #tpu.memory_space<vmem>>, %arg13: memref<1x512xf32, #tpu.memory_space<vmem>>) attributes {dimension_semantics = [#tpu.dimension_semantics<parallel>], iteration_bounds = array<i64: 2>, scalar_prefetch = 0 : i64, scratch_operands = 0 : i64, tpu.core_type = #tpu.core_type<tc>, window_params = [{transform_indices = @transform_0, window_bounds = array<i64: 1>}, {transform_indices = @transform_1, window_bounds = array<i64: 1, 512>}, {transform_indices = @transform_2, window_bounds = array<i64: 1, 512>}, {transform_indices = @transform_3, window_bounds = array<i64: 128, 512>}, {pipeline_mode = #tpu.pipeline_mode<synchronous>, transform_indices = @transform_4, window_bounds = array<i64: 128, 64>}, {pipeline_mode = #tpu.pipeline_mode<synchronous>, transform_indices = @transform_5, window_bounds = array<i64: 128, 32>}, {pipeline_mode = #tpu.pipeline_mode<synchronous>, transform_indices = @transform_6, window_bounds = array<i64: 256, 128>}, {pipeline_mode = #tpu.pipeline_mode<synchronous>, transform_indices = @transform_7, window_bounds = array<i64: 256, 1>}, {pipeline_mode = #tpu.pipeline_mode<synchronous>, transform_indices = @transform_8, window_bounds = array<i64: 128, 256>}, {pipeline_mode = #tpu.pipeline_mode<synchronous>, transform_indices = @transform_9, window_bounds = array<i64: 128, 1>}, {pipeline_mode = #tpu.pipeline_mode<synchronous>, transform_indices = @transform_10, window_bounds = array<i64: 128, 1>}, {pipeline_mode = #tpu.pipeline_mode<synchronous>, transform_indices = @transform_11, window_bounds = array<i64: 1, 1>}, {transform_indices = @transform_12, window_bounds = array<i64: 1, 512>}]} {
    %c0 = arith.constant 0 : index
    %c0_0 = arith.constant 0 : index
    %0 = vector.load %arg2[%c0, %c0_0] : memref<1x512xi32, #tpu.memory_space<vmem>>, vector<1x512xi32>
    %c0_1 = arith.constant 0 : index
    %c0_2 = arith.constant 0 : index
    %1 = vector.load %arg3[%c0_1, %c0_2] : memref<1x512xi32, #tpu.memory_space<vmem>>, vector<1x512xi32>
    %2 = tpu.iota {dimensions = array<i32: 0>} : vector<64x512xi32>
    %3 = vector.broadcast %0 : vector<1x512xi32> to vector<64x512xi32>
    %4 = arith.cmpi eq, %2, %3 : vector<64x512xi32>
    %5 = arith.extui %4 : vector<64x512xi1> to vector<64x512xi32>
    %6 = arith.sitofp %5 : vector<64x512xi32> to vector<64x512xf32>
    %7 = arith.truncf %6 : vector<64x512xf32> to vector<64x512xbf16>
    %8 = tpu.iota {dimensions = array<i32: 0>} : vector<32x512xi32>
    %9 = vector.broadcast %1 : vector<1x512xi32> to vector<32x512xi32>
    %10 = arith.cmpi eq, %8, %9 : vector<32x512xi32>
    %11 = arith.extui %10 : vector<32x512xi1> to vector<32x512xi32>
    %12 = arith.sitofp %11 : vector<32x512xi32> to vector<32x512xf32>
    %13 = arith.truncf %12 : vector<32x512xf32> to vector<32x512xbf16>
    %c0_3 = arith.constant 0 : index
    %c0_4 = arith.constant 0 : index
    %14 = vector.load %arg5[%c0_3, %c0_4] : memref<128x64xbf16, #tpu.memory_space<vmem>>, vector<128x64xbf16>
    %cst = arith.constant dense<0.000000e+00> : vector<128x512xf32>
    %15 = tpu.matmul %14, %7, %cst {dimension_numbers = #tpu.dot_dimension_numbers<[1], [0], [0], [1], [0, 0, 1, 1], [], []>} : vector<128x64xbf16>, vector<64x512xbf16>, vector<128x512xf32> -> vector<128x512xf32>
    %c0_5 = arith.constant 0 : index
    %c0_6 = arith.constant 0 : index
    %16 = vector.load %arg6[%c0_5, %c0_6] : memref<128x32xbf16, #tpu.memory_space<vmem>>, vector<128x32xbf16>
    %cst_7 = arith.constant dense<0.000000e+00> : vector<128x512xf32>
    %17 = tpu.matmul %16, %13, %cst_7 {dimension_numbers = #tpu.dot_dimension_numbers<[1], [0], [0], [1], [0, 0, 1, 1], [], []>} : vector<128x32xbf16>, vector<32x512xbf16>, vector<128x512xf32> -> vector<128x512xf32>
    %18 = arith.subf %15, %17 : vector<128x512xf32>
    %c0_8 = arith.constant 0 : index
    %c0_9 = arith.constant 0 : index
    %19 = vector.load %arg4[%c0_8, %c0_9] : memref<128x512xbf16, #tpu.memory_space<vmem>>, vector<128x512xbf16>
    %20 = arith.extf %19 : vector<128x512xbf16> to vector<128x512xf32>
    %21 = arith.mulf %18, %20 : vector<128x512xf32>
    %c0_10 = arith.constant 0 : index
    %22 = memref.load %arg1[%c0_10] : memref<1xf32, #tpu.memory_space<smem>>
    %23 = vector.broadcast %22 : f32 to vector<128x512xf32>
    %24 = arith.mulf %21, %23 : vector<128x512xf32>
    %c0_11 = arith.constant 0 : index
    %c0_12 = arith.constant 0 : index
    %25 = vector.load %arg7[%c0_11, %c0_12] : memref<256x128xbf16, #tpu.memory_space<vmem>>, vector<256x128xbf16>
    %26 = arith.truncf %24 : vector<128x512xf32> to vector<128x512xbf16>
    %cst_13 = arith.constant dense<0.000000e+00> : vector<256x512xf32>
    %27 = tpu.matmul %25, %26, %cst_13 {dimension_numbers = #tpu.dot_dimension_numbers<[1], [0], [0], [1], [0, 0, 1, 1], [], []>} : vector<256x128xbf16>, vector<128x512xbf16>, vector<256x512xf32> -> vector<256x512xf32>
    %c0_14 = arith.constant 0 : index
    %c0_15 = arith.constant 0 : index
    %28 = vector.load %arg8[%c0_14, %c0_15] : memref<256x1xf32, #tpu.memory_space<vmem>>, vector<256x1xf32>
    %29 = vector.broadcast %28 : vector<256x1xf32> to vector<256x512xf32>
    %30 = arith.addf %27, %29 : vector<256x512xf32>
    %31 = arith.negf %30 : vector<256x512xf32>
    %32 = math.exp %31 : vector<256x512xf32>
    %cst_16 = arith.constant 1.000000e+00 : f32
    %33 = vector.broadcast %cst_16 : f32 to vector<256x512xf32>
    %34 = arith.addf %33, %32 : vector<256x512xf32>
    %35 = arith.divf %33, %34 : vector<256x512xf32>
    %c0_17 = arith.constant 0 : index
    %c0_18 = arith.constant 0 : index
    %36 = vector.load %arg9[%c0_17, %c0_18] : memref<128x256xbf16, #tpu.memory_space<vmem>>, vector<128x256xbf16>
    %37 = arith.truncf %35 : vector<256x512xf32> to vector<256x512xbf16>
    %cst_19 = arith.constant dense<0.000000e+00> : vector<128x512xf32>
    %38 = tpu.matmul %36, %37, %cst_19 {dimension_numbers = #tpu.dot_dimension_numbers<[1], [0], [0], [1], [0, 0, 1, 1], [], []>} : vector<128x256xbf16>, vector<256x512xbf16>, vector<128x512xf32> -> vector<128x512xf32>
    %c0_20 = arith.constant 0 : index
    %c0_21 = arith.constant 0 : index
    %39 = vector.load %arg10[%c0_20, %c0_21] : memref<128x1xf32, #tpu.memory_space<vmem>>, vector<128x1xf32>
    %40 = vector.broadcast %39 : vector<128x1xf32> to vector<128x512xf32>
    %41 = arith.addf %38, %40 : vector<128x512xf32>
    %42 = arith.negf %41 : vector<128x512xf32>
    %43 = math.exp %42 : vector<128x512xf32>
    %cst_22 = arith.constant 1.000000e+00 : f32
    %44 = vector.broadcast %cst_22 : f32 to vector<128x512xf32>
    %45 = arith.addf %44, %43 : vector<128x512xf32>
    %46 = arith.divf %44, %45 : vector<128x512xf32>
    %c0_23 = arith.constant 0 : index
    %c0_24 = arith.constant 0 : index
    %47 = vector.load %arg11[%c0_23, %c0_24] : memref<128x1xf32, #tpu.memory_space<vmem>>, vector<128x1xf32>
    %48 = vector.broadcast %47 : vector<128x1xf32> to vector<128x512xf32>
    %49 = arith.mulf %48, %46 : vector<128x512xf32>
    %cst_25 = arith.constant dense<0.000000e+00> : vector<512xf32>
    %50 = vector.multi_reduction <add>, %49, %cst_25 [0] : vector<128x512xf32> to vector<512xf32>
    %51 = vector.shape_cast %50 : vector<512xf32> to vector<1x512xf32>
    %c0_26 = arith.constant 0 : index
    %c0_27 = arith.constant 0 : index
    %52 = vector.load %arg12[%c0_26, %c0_27] : memref<1x1xf32, #tpu.memory_space<vmem>>, vector<1x1xf32>
    %53 = vector.broadcast %52 : vector<1x1xf32> to vector<1x512xf32>
    %54 = arith.addf %51, %53 : vector<1x512xf32>
    %55 = arith.negf %54 : vector<1x512xf32>
    %56 = math.exp %55 : vector<1x512xf32>
    %cst_28 = arith.constant 1.000000e+00 : f32
    %57 = vector.broadcast %cst_28 : f32 to vector<1x512xf32>
    %58 = arith.addf %57, %56 : vector<1x512xf32>
    %59 = arith.divf %57, %58 : vector<1x512xf32>
    %c0_29 = arith.constant 0 : index
    %c0_30 = arith.constant 0 : index
    %60 = vector.load %arg13[%c0_29, %c0_30] : memref<1x512xf32, #tpu.memory_space<vmem>>, vector<1x512xf32>
    tpu.vector_store %arg13[%c0_29, %c0_30], %59 {strides = array<i32>} : memref<1x512xf32, #tpu.memory_space<vmem>>, vector<1x512xf32>,
    return
  }
  func.func @transform_0(%arg0: i32) -> i32 {
    %c0_i32 = arith.constant 0 : i32
    %c0_i32_0 = arith.constant 0 : i32
    return %c0_i32 : i32
  }
  func.func @transform_1(%arg0: i32) -> (i32, i32) {
    %c0_i32 = arith.constant 0 : i32
    %c0_i32_0 = arith.constant 0 : i32
    return %c0_i32, %arg0 : i32, i32
  }
  func.func @transform_2(%arg0: i32) -> (i32, i32) {
    %c0_i32 = arith.constant 0 : i32
    %c0_i32_0 = arith.constant 0 : i32
    return %c0_i32, %arg0 : i32, i32
  }
  func.func @transform_3(%arg0: i32) -> (i32, i32) {
    %c0_i32 = arith.constant 0 : i32
    %c0_i32_0 = arith.constant 0 : i32
    return %c0_i32, %arg0 : i32, i32
  }
  func.func @transform_4(%arg0: i32) -> (i32, i32) {
    %c0_i32 = arith.constant 0 : i32
    %c0_i32_0 = arith.constant 0 : i32
    %c0_i32_1 = arith.constant 0 : i32
    return %c0_i32, %c0_i32_0 : i32, i32
  }
  func.func @transform_5(%arg0: i32) -> (i32, i32) {
    %c0_i32 = arith.constant 0 : i32
    %c0_i32_0 = arith.constant 0 : i32
    %c0_i32_1 = arith.constant 0 : i32
    return %c0_i32, %c0_i32_0 : i32, i32
  }
  func.func @transform_6(%arg0: i32) -> (i32, i32) {
    %c0_i32 = arith.constant 0 : i32
    %c0_i32_0 = arith.constant 0 : i32
    %c0_i32_1 = arith.constant 0 : i32
    return %c0_i32, %c0_i32_0 : i32, i32
  }
  func.func @transform_7(%arg0: i32) -> (i32, i32) {
    %c0_i32 = arith.constant 0 : i32
    %c0_i32_0 = arith.constant 0 : i32
    %c0_i32_1 = arith.constant 0 : i32
    return %c0_i32, %c0_i32_0 : i32, i32
  }
  func.func @transform_8(%arg0: i32) -> (i32, i32) {
    %c0_i32 = arith.constant 0 : i32
    %c0_i32_0 = arith.constant 0 : i32
    %c0_i32_1 = arith.constant 0 : i32
    return %c0_i32, %c0_i32_0 : i32, i32
  }
  func.func @transform_9(%arg0: i32) -> (i32, i32) {
    %c0_i32 = arith.constant 0 : i32
    %c0_i32_0 = arith.constant 0 : i32
    %c0_i32_1 = arith.constant 0 : i32
    return %c0_i32, %c0_i32_0 : i32, i32
  }
  func.func @transform_10(%arg0: i32) -> (i32, i32) {
    %c0_i32 = arith.constant 0 : i32
    %c0_i32_0 = arith.constant 0 : i32
    %c0_i32_1 = arith.constant 0 : i32
    return %c0_i32, %c0_i32_0 : i32, i32
  }
  func.func @transform_11(%arg0: i32) -> (i32, i32) {
    %c0_i32 = arith.constant 0 : i32
    %c0_i32_0 = arith.constant 0 : i32
    %c0_i32_1 = arith.constant 0 : i32
    return %c0_i32, %c0_i32_0 : i32, i32
  }
  func.func @transform_12(%arg0: i32) -> (i32, i32) {
    %c0_i32 = arith.constant 0 : i32
    %c0_i32_0 = arith.constant 0 : i32
    return %c0_i32, %arg0 : i32, i32
  }
}

</mosaic_0001>

<llo_original>
// kernel: neuralcdm_forward.1
$region0: #{neuralcdm_forward.1}
  #allocation0 [shape = 'u32[]', space=smem, size = 0x4, offset = 0x4, fixed_abs, tag = 'smem constant byte address 0x4 - core index']
  #allocation1 [shape = 'u32[72,128]{1,0:T(1,128)}', space=vmem, size = 0x9000, scoped, tag = 'internal scratch']
  #allocation2 [shape = 'f32[1]{0:T(128)S(6)}', space=smem, size = 0x200, scoped, tag = 'scoped memory for neuralcdm_forward.1']
  #allocation3 [shape = 'f32[1,1]{1,0:T(1,128)S(1)}', space=vmem, size = 0x200, scoped, tag = 'scoped memory for neuralcdm_forward.1']
  %s0 = inlined_call_operand.<no memory space> [shape: f32[1], index: 0, kind: input, shape index: {}]
  %s1 = inlined_call_operand.vmem [shape: s32[1,1024], index: 1, kind: input, shape index: {}]
  %s2 = inlined_call_operand.vmem [shape: s32[1,1024], index: 2, kind: input, shape index: {}]
  %s3 = inlined_call_operand.vmem [shape: bf16[128,1024], index: 3, kind: input, shape index: {}]
  %s4 = inlined_call_operand.vmem [shape: bf16[128,64], index: 4, kind: input, shape index: {}]
  %s5 = inlined_call_operand.vmem [shape: bf16[128,32], index: 5, kind: input, shape index: {}]
  %s6 = inlined_call_operand.vmem [shape: bf16[256,128], index: 6, kind: input, shape index: {}]
  %s7 = inlined_call_operand.vmem [shape: f32[256,1], index: 7, kind: input, shape index: {}]
  %s8 = inlined_call_operand.vmem [shape: bf16[128,256], index: 8, kind: input, shape index: {}]
  %s9 = inlined_call_operand.vmem [shape: f32[128,1], index: 9, kind: input, shape index: {}]
  %s10 = inlined_call_operand.vmem [shape: f32[128,1], index: 10, kind: input, shape index: {}]
  %s11 = inlined_call_operand.<no memory space> [shape: f32[1,1], index: 11, kind: input, shape index: {}]
  %s12 = inlined_call_operand.vmem [shape: f32[1,1024], index: 12, kind: output, shape index: {}]
  %s13 = sld [smem:[#allocation0]]
  $region104: #{neuralcdm_forward.1} parent=0
    _
  %s15 = ssub.s32 1, %s13
  %s16 = scalar_select 0, %s15, %s13
  %17 = sst [smem:[#allocation2]] %s0
  %v18 = vstv %s11
  %19 = vst [vmem:[#allocation3] sm:$0x1] %v18
  $region1: #{neuralcdm_forward.1} parent=0
    #allocation4 [shape = 'u8[262144]{0}', space=vmem, size = 0x40000, scoped, tag = 'input window, operand 3']
    loop: start=0, step=1, limit=4
    $region2: #{neuralcdm_forward.1} parent=1 // loop_pre_header
      _
    $region3: #{neuralcdm_forward.1} parent=1 // loop_header
      %s21 = sphi 0, %s25
      %p22 = scmp.ge.s32.totalorder %s21, 4
      %s29 = sphi 0, %s29
      %s31 = sphi 0, %s29
      %s32 = sphi 0, %s31
      %s46 = sphi 0, %s32
      %s52 = sphi 0, %s54
      %s55 = sphi 0, %s52
      %s56 = sphi 0, %s55
      %s72 = sphi 0, %s56
      %s78 = sphi 0, %s80
      %s81 = sphi 0, %s78
      %s82 = sphi 0, %s81
      %s98 = sphi 0, %s82
      %s104 = sphi 0, %s106
      %s107 = sphi 0, %s104
      %s108 = sphi 0, %s107
      %s124 = sphi 0, %s108
      %s128 = sphi 0, %s128
      %s130 = sphi 0, %s128
      %s131 = sphi 0, %s130
      %s145 = sphi 0, %s131
      %s149 = sphi 0, %s149
      %s151 = sphi 0, %s149
      %s152 = sphi 0, %s151
      %s166 = sphi 0, %s152
      %s170 = sphi 0, %s170
      %s172 = sphi 0, %s170
      %s173 = sphi 0, %s172
      %s187 = sphi 0, %s173
      %s191 = sphi 0, %s191
      %s193 = sphi 0, %s191
      %s194 = sphi 0, %s193
      %s208 = sphi 0, %s194
      %s212 = sphi 0, %s212
      %s214 = sphi 0, %s212
      %s215 = sphi 0, %s214
      %s229 = sphi 0, %s215
      %s233 = sphi 0, %s233
      %s235 = sphi 0, %s233
      %s236 = sphi 0, %s235
      %s250 = sphi 0, %s236
      %s254 = sphi 0, %s254
      %s256 = sphi 0, %s254
      %s257 = sphi 0, %s256
      %s271 = sphi 0, %s257
      %s275 = sphi 0, %s275
      %s277 = sphi 0, %s275
      %s278 = sphi 0, %s277
      %s292 = sphi 0, %s278
      %s298 = sphi 0, %s300
      %s301 = sphi 0, %s298
      %s302 = sphi 0, %s301
      %s318 = sphi 0, %s302
    $region4: #{neuralcdm_forward.1} parent=1 // loop_header_branch
      %24 = sbr.rel (%p22) target = $region8
    $region5: #{neuralcdm_forward.1} parent=1 // loop_body
      %s26 = ssub.s32 %s21, 1
      %s27 = ssub.s32 %s21, 2
      %s28 = sadd.s32 %s21, 1
      %s30 = sadd.s32 %s29, 1
      %p33 = scmp.eq.s32.totalorder %s21, 1
      %p34 = scmp.ne.s32.totalorder %s29, %s31
      %p35 = scmp.eq.s32.totalorder %s21, 0
      %p36 = por %p34, %p35
      %p37 = scmp.ne.s32.totalorder %s29, %s31
      %p38 = scmp.eq.s32.totalorder %s26, 1
      %p39 = por %p37, %p38
      %p40 = scmp.ne.s32.totalorder %s31, %s32
      %p41 = scmp.eq.s32.totalorder %s26, 0
      %p42 = por %p40, %p41
      %p43 = scmp.ne.s32.totalorder %s31, %s32
      %p44 = scmp.eq.s32.totalorder %s27, 1
      %p45 = por %p43, %p44
      %p47 = scmp.ne.s32.totalorder %s32, %s46
      %p48 = scmp.eq.s32.totalorder %s27, 0
      %p49 = por %p47, %p48
      %s50 = ssub.s32 %s21, %s28
      %p51 = scmp.eq.s32.totalorder %s50, 0
      %s53 = sadd.s32 %s52, 1
      %s54 = scalar_select %p51, %s52, %s53
      %p57 = pneg %p51
      %p58 = scmp.eq.s32.totalorder %s21, 1
      %p59 = por %p57, %p58
      %p60 = scmp.ne.s32.totalorder %s52, %s55
      %p61 = scmp.eq.s32.totalorder %s21, 0
      %p62 = por %p60, %p61
      %p63 = scmp.ne.s32.totalorder %s52, %s55
      %p64 = scmp.eq.s32.totalorder %s26, 1
      %p65 = por %p63, %p64
      %p66 = scmp.ne.s32.totalorder %s55, %s56
      %p67 = scmp.eq.s32.totalorder %s26, 0
      %p68 = por %p66, %p67
      %p69 = scmp.ne.s32.totalorder %s55, %s56
      %p70 = scmp.eq.s32.totalorder %s27, 1
      %p71 = por %p69, %p70
      %p73 = scmp.ne.s32.totalorder %s56, %s72
      %p74 = scmp.eq.s32.totalorder %s27, 0
      %p75 = por %p73, %p74
      %s76 = ssub.s32 %s21, %s28
      %p77 = scmp.eq.s32.totalorder %s76, 0
      %s79 = sadd.s32 %s78, 1
      %s80 = scalar_select %p77, %s78, %s79
      %p83 = pneg %p77
      %p84 = scmp.eq.s32.totalorder %s21, 1
      %p85 = por %p83, %p84
      %p86 = scmp.ne.s32.totalorder %s78, %s81
      %p87 = scmp.eq.s32.totalorder %s21, 0
      %p88 = por %p86, %p87
      %p89 = scmp.ne.s32.totalorder %s78, %s81
      %p90 = scmp.eq.s32.totalorder %s26, 1
      %p91 = por %p89, %p90
      %p92 = scmp.ne.s32.totalorder %s81, %s82
      %p93 = scmp.eq.s32.totalorder %s26, 0
      %p94 = por %p92, %p93
      %p95 = scmp.ne.s32.totalorder %s81, %s82
      %p96 = scmp.eq.s32.totalorder %s27, 1
      %p97 = por %p95, %p96
      %p99 = scmp.ne.s32.totalorder %s82, %s98
      %p100 = scmp.eq.s32.totalorder %s27, 0
      %p101 = por %p99, %p100
      %s102 = ssub.s32 %s21, %s28
      %p103 = scmp.eq.s32.totalorder %s102, 0
      %s105 = sadd.s32 %s104, 1
      %s106 = scalar_select %p103, %s104, %s105
      %p109 = pneg %p103
      %p110 = scmp.eq.s32.totalorder %s21, 1
      %p111 = por %p109, %p110
      %p112 = scmp.ne.s32.totalorder %s104, %s107
      %p113 = scmp.eq.s32.totalorder %s21, 0
      %p114 = por %p112, %p113
      %p115 = scmp.ne.s32.totalorder %s104, %s107
      %p116 = scmp.eq.s32.totalorder %s26, 1
      %p117 = por %p115, %p116
      %p118 = scmp.ne.s32.totalorder %s107, %s108
      %p119 = scmp.eq.s32.totalorder %s26, 0
      %p120 = por %p118, %p119
      %p121 = scmp.ne.s32.totalorder %s107, %s108
      %p122 = scmp.eq.s32.totalorder %s27, 1
      %p123 = por %p121, %p122
      %p125 = scmp.ne.s32.totalorder %s108, %s124
      %p126 = scmp.eq.s32.totalorder %s27, 0
      %p127 = por %p125, %p126
      %s129 = sadd.s32 %s128, 1
      %p132 = scmp.eq.s32.totalorder %s21, 1
      %p133 = scmp.ne.s32.totalorder %s128, %s130
      %p134 = scmp.eq.s32.totalorder %s21, 0
      %p135 = por %p133, %p134
      %p136 = scmp.ne.s32.totalorder %s128, %s130
      %p137 = scmp.eq.s32.totalorder %s26, 1
      %p138 = por %p136, %p137
      %p139 = scmp.ne.s32.totalorder %s130, %s131
      %p140 = scmp.eq.s32.totalorder %s26, 0
      %p141 = por %p139, %p140
      %p142 = scmp.ne.s32.totalorder %s130, %s131
      %p143 = scmp.eq.s32.totalorder %s27, 1
      %p144 = por %p142, %p143
      %p146 = scmp.ne.s32.totalorder %s131, %s145
      %p147 = scmp.eq.s32.totalorder %s27, 0
      %p148 = por %p146, %p147
      %s150 = sadd.s32 %s149, 1
      %p153 = scmp.eq.s32.totalorder %s21, 1
      %p154 = scmp.ne.s32.totalorder %s149, %s151
      %p155 = scmp.eq.s32.totalorder %s21, 0
      %p156 = por %p154, %p155
      %p157 = scmp.ne.s32.totalorder %s149, %s151
      %p158 = scmp.eq.s32.totalorder %s26, 1
      %p159 = por %p157, %p158
      %p160 = scmp.ne.s32.totalorder %s151, %s152
      %p161 = scmp.eq.s32.totalorder %s26, 0
      %p162 = por %p160, %p161
      %p163 = scmp.ne.s32.totalorder %s151, %s152
      %p164 = scmp.eq.s32.totalorder %s27, 1
      %p165 = por %p163, %p164
      %p167 = scmp.ne.s32.totalorder %s152, %s166
      %p168 = scmp.eq.s32.totalorder %s27, 0
      %p169 = por %p167, %p168
      %s171 = sadd.s32 %s170, 1
      %p174 = scmp.eq.s32.totalorder %s21, 1
      %p175 = scmp.ne.s32.totalorder %s170, %s172
      %p176 = scmp.eq.s32.totalorder %s21, 0
      %p177 = por %p175, %p176
      %p178 = scmp.ne.s32.totalorder %s170, %s172
      %p179 = scmp.eq.s32.totalorder %s26, 1
      %p180 = por %p178, %p179
      %p181 = scmp.ne.s32.totalorder %s172, %s173
      %p182 = scmp.eq.s32.totalorder %s26, 0
      %p183 = por %p181, %p182
      %p184 = scmp.ne.s32.totalorder %s172, %s173
      %p185 = scmp.eq.s32.totalorder %s27, 1
      %p186 = por %p184, %p185
      %p188 = scmp.ne.s32.totalorder %s173, %s187
      %p189 = scmp.eq.s32.totalorder %s27, 0
      %p190 = por %p188, %p189
      %s192 = sadd.s32 %s191, 1
      %p195 = scmp.eq.s32.totalorder %s21, 1
      %p196 = scmp.ne.s32.totalorder %s191, %s193
      %p197 = scmp.eq.s32.totalorder %s21, 0
      %p198 = por %p196, %p197
      %p199 = scmp.ne.s32.totalorder %s191, %s193
      %p200 = scmp.eq.s32.totalorder %s26, 1
      %p201 = por %p199, %p200
      %p202 = scmp.ne.s32.totalorder %s193, %s194
      %p203 = scmp.eq.s32.totalorder %s26, 0
      %p204 = por %p202, %p203
      %p205 = scmp.ne.s32.totalorder %s193, %s194
      %p206 = scmp.eq.s32.totalorder %s27, 1
      %p207 = por %p205, %p206
      %p209 = scmp.ne.s32.totalorder %s194, %s208
      %p210 = scmp.eq.s32.totalorder %s27, 0
      %p211 = por %p209, %p210
      %s213 = sadd.s32 %s212, 1
      %p216 = scmp.eq.s32.totalorder %s21, 1
      %p217 = scmp.ne.s32.totalorder %s212, %s214
      %p218 = scmp.eq.s32.totalorder %s21, 0
      %p219 = por %p217, %p218
      %p220 = scmp.ne.s32.totalorder %s212, %s214
      %p221 = scmp.eq.s32.totalorder %s26, 1
      %p222 = por %p220, %p221
      %p223 = scmp.ne.s32.totalorder %s214, %s215
      %p224 = scmp.eq.s32.totalorder %s26, 0
      %p225 = por %p223, %p224
      %p226 = scmp.ne.s32.totalorder %s214, %s215
      %p227 = scmp.eq.s32.totalorder %s27, 1
      %p228 = por %p226, %p227
      %p230 = scmp.ne.s32.totalorder %s215, %s229
      %p231 = scmp.eq.s32.totalorder %s27, 0
      %p232 = por %p230, %p231
      %s234 = sadd.s32 %s233, 1
      %p237 = scmp.eq.s32.totalorder %s21, 1
      %p238 = scmp.ne.s32.totalorder %s233, %s235
      %p239 = scmp.eq.s32.totalorder %s21, 0
      %p240 = por %p238, %p239
      %p241 = scmp.ne.s32.totalorder %s233, %s235
      %p242 = scmp.eq.s32.totalorder %s26, 1
      %p243 = por %p241, %p242
      %p244 = scmp.ne.s32.totalorder %s235, %s236
      %p245 = scmp.eq.s32.totalorder %s26, 0
      %p246 = por %p244, %p245
      %p247 = scmp.ne.s32.totalorder %s235, %s236
      %p248 = scmp.eq.s32.totalorder %s27, 1
      %p249 = por %p247, %p248
      %p251 = scmp.ne.s32.totalorder %s236, %s250
      %p252 = scmp.eq.s32.totalorder %s27, 0
      %p253 = por %p251, %p252
      %s255 = sadd.s32 %s254, 1
      %p258 = scmp.eq.s32.totalorder %s21, 1
      %p259 = scmp.ne.s32.totalorder %s254, %s256
      %p260 = scmp.eq.s32.totalorder %s21, 0
      %p261 = por %p259, %p260
      %p262 = scmp.ne.s32.totalorder %s254, %s256
      %p263 = scmp.eq.s32.totalorder %s26, 1
      %p264 = por %p262, %p263
      %p265 = scmp.ne.s32.totalorder %s256, %s257
      %p266 = scmp.eq.s32.totalorder %s26, 0
      %p267 = por %p265, %p266
      %p268 = scmp.ne.s32.totalorder %s256, %s257
      %p269 = scmp.eq.s32.totalorder %s27, 1
      %p270 = por %p268, %p269
      %p272 = scmp.ne.s32.totalorder %s257, %s271
      %p273 = scmp.eq.s32.totalorder %s27, 0
      %p274 = por %p272, %p273
      %s276 = sadd.s32 %s275, 1
      %p279 = scmp.eq.s32.totalorder %s21, 1
      %p280 = scmp.ne.s32.totalorder %s275, %s277
      %p281 = scmp.eq.s32.totalorder %s21, 0
      %p282 = por %p280, %p281
      %p283 = scmp.ne.s32.totalorder %s275, %s277
      %p284 = scmp.eq.s32.totalorder %s26, 1
      %p285 = por %p283, %p284
      %p286 = scmp.ne.s32.totalorder %s277, %s278
      %p287 = scmp.eq.s32.totalorder %s26, 0
      %p288 = por %p286, %p287
      %p289 = scmp.ne.s32.totalorder %s277, %s278
      %p290 = scmp.eq.s32.totalorder %s27, 1
      %p291 = por %p289, %p290
      %p293 = scmp.ne.s32.totalorder %s278, %s292
      %p294 = scmp.eq.s32.totalorder %s27, 0
      %p295 = por %p293, %p294
      %s296 = ssub.s32 %s21, %s28
      %p297 = scmp.eq.s32.totalorder %s296, 0
      %s299 = sadd.s32 %s298, 1
      %s300 = scalar_select %p297, %s298, %s299
      %p303 = pneg %p297
      %p304 = scmp.eq.s32.totalorder %s21, 1
      %p305 = por %p303, %p304
      %p306 = scmp.ne.s32.totalorder %s298, %s301
      %p307 = scmp.eq.s32.totalorder %s21, 0
      %p308 = por %p306, %p307
      %p309 = scmp.ne.s32.totalorder %s298, %s301
      %p310 = scmp.eq.s32.totalorder %s26, 1
      %p311 = por %p309, %p310
      %p312 = scmp.ne.s32.totalorder %s301, %s302
      %p313 = scmp.eq.s32.totalorder %s26, 0
      %p314 = por %p312, %p313
      %p315 = scmp.ne.s32.totalorder %s301, %s302
      %p316 = scmp.eq.s32.totalorder %s27, 1
      %p317 = por %p315, %p316
      %p319 = scmp.ne.s32.totalorder %s302, %s318
      %p320 = scmp.eq.s32.totalorder %s27, 0
      %p321 = por %p319, %p320
      %p322 = scmp.le.s32.totalorder 1, %s21
      %p323 = scmp.lt.s32.totalorder %s21, 3
      %p324 = pnand %p322, %p323
      %p325 = pneg %p324
      // Predicated region
      $region9: #{neuralcdm_forward.1} parent=5 // pred_check
        _
      $region10: #{neuralcdm_forward.1} parent=5 // pred_check_branch
        %327 = sbr.rel (%p324) target = $region12
      $region11: #{neuralcdm_forward.1} parent=5 // pred_region
        %s328 = ssub.s32 %s21, 1
        // Predicated region
        $region13: #{neuralcdm_forward.1} parent=11 // pred_check
          %p329 = pneg %p42
        $region14: #{neuralcdm_forward.1} parent=11 // pred_check_branch
          %331 = sbr.rel (%p329) target = $region16
        $region15: #{neuralcdm_forward.1} parent=11 // pred_region
          _
        $region16: #{neuralcdm_forward.1} parent=11 // pred_fallthru
          _
        // Predicated region
        $region17: #{neuralcdm_forward.1} parent=11 // pred_check
          %p332 = pneg %p141
        $region18: #{neuralcdm_forward.1} parent=11 // pred_check_branch
          %334 = sbr.rel (%p332) target = $region20
        $region19: #{neuralcdm_forward.1} parent=11 // pred_region
          _
        $region20: #{neuralcdm_forward.1} parent=11 // pred_fallthru
          _
        // Predicated region
        $region21: #{neuralcdm_forward.1} parent=11 // pred_check
          %p335 = pneg %p162
        $region22: #{neuralcdm_forward.1} parent=11 // pred_check_branch
          %337 = sbr.rel (%p335) target = $region24
        $region23: #{neuralcdm_forward.1} parent=11 // pred_region
          _
        $region24: #{neuralcdm_forward.1} parent=11 // pred_fallthru
          _
        // Predicated region
        $region25: #{neuralcdm_forward.1} parent=11 // pred_check
          %p338 = pneg %p183
        $region26: #{neuralcdm_forward.1} parent=11 // pred_check_branch
          %340 = sbr.rel (%p338) target = $region28
        $region27: #{neuralcdm_forward.1} parent=11 // pred_region
          _
        $region28: #{neuralcdm_forward.1} parent=11 // pred_fallthru
          _
        // Predicated region
        $region29: #{neuralcdm_forward.1} parent=11 // pred_check
          %p341 = pneg %p204
        $region30: #{neuralcdm_forward.1} parent=11 // pred_check_branch
          %343 = sbr.rel (%p341) target = $region32
        $region31: #{neuralcdm_forward.1} parent=11 // pred_region
          _
        $region32: #{neuralcdm_forward.1} parent=11 // pred_fallthru
          _
        // Predicated region
        $region33: #{neuralcdm_forward.1} parent=11 // pred_check
          %p344 = pneg %p225
        $region34: #{neuralcdm_forward.1} parent=11 // pred_check_branch
          %346 = sbr.rel (%p344) target = $region36
        $region35: #{neuralcdm_forward.1} parent=11 // pred_region
          _
        $region36: #{neuralcdm_forward.1} parent=11 // pred_fallthru
          _
        // Predicated region
        $region37: #{neuralcdm_forward.1} parent=11 // pred_check
          %p347 = pneg %p246
        $region38: #{neuralcdm_forward.1} parent=11 // pred_check_branch
          %349 = sbr.rel (%p347) target = $region40
        $region39: #{neuralcdm_forward.1} parent=11 // pred_region
          _
        $region40: #{neuralcdm_forward.1} parent=11 // pred_fallthru
          _
        // Predicated region
        $region41: #{neuralcdm_forward.1} parent=11 // pred_check
          %p350 = pneg %p267
        $region42: #{neuralcdm_forward.1} parent=11 // pred_check_branch
          %352 = sbr.rel (%p350) target = $region44
        $region43: #{neuralcdm_forward.1} parent=11 // pred_region
          _
        $region44: #{neuralcdm_forward.1} parent=11 // pred_fallthru
          _
        // Predicated region
        $region45: #{neuralcdm_forward.1} parent=11 // pred_check
          %p353 = pneg %p288
        $region46: #{neuralcdm_forward.1} parent=11 // pred_check_branch
          %355 = sbr.rel (%p353) target = $region48
        $region47: #{neuralcdm_forward.1} parent=11 // pred_region
          _
        $region48: #{neuralcdm_forward.1} parent=11 // pred_fallthru
          _
      $region12: #{neuralcdm_forward.1} parent=5 // pred_fallthru
        _
      %p356 = scmp.lt.s32.totalorder %s21, 2
      // Predicated region
      $region49: #{neuralcdm_forward.1} parent=5 // pred_check
        %p357 = pneg %p356
      $region50: #{neuralcdm_forward.1} parent=5 // pred_check_branch
        %359 = sbr.rel (%p357) target = $region52
      $region51: #{neuralcdm_forward.1} parent=5 // pred_region
        // Predicated region
        $region53: #{neuralcdm_forward.1} parent=51 // pred_check
          %p360 = pneg %p62
        $region54: #{neuralcdm_forward.1} parent=51 // pred_check_branch
          %362 = sbr.rel (%p360) target = $region56
        $region55: #{neuralcdm_forward.1} parent=51 // pred_region
          %s363 = smul.u32 4, %s21
          %p364 = scmp.lt.s32.totalorder %s363, 7
          %s365 = scalar_select %p364, %s363, 7
          %s366 = scalar_lea.vmem %s1, %s365
          %s367 = smul.u32 4, %s21
        $region56: #{neuralcdm_forward.1} parent=51 // pred_fallthru
          _
        // Predicated region
        $region57: #{neuralcdm_forward.1} parent=51 // pred_check
          %p368 = pneg %p88
        $region58: #{neuralcdm_forward.1} parent=51 // pred_check_branch
          %370 = sbr.rel (%p368) target = $region60
        $region59: #{neuralcdm_forward.1} parent=51 // pred_region
          %s371 = smul.u32 4, %s21
          %p372 = scmp.lt.s32.totalorder %s371, 7
          %s373 = scalar_select %p372, %s371, 7
          %s374 = scalar_lea.vmem %s2, %s373
          %s375 = smul.u32 4, %s21
        $region60: #{neuralcdm_forward.1} parent=51 // pred_fallthru
          _
        // Predicated region
        $region61: #{neuralcdm_forward.1} parent=51 // pred_check
          %p376 = pneg %p114
        $region62: #{neuralcdm_forward.1} parent=51 // pred_check_branch
          %378 = sbr.rel (%p376) target = $region64
        $region63: #{neuralcdm_forward.1} parent=51 // pred_region
          %s379 = sand.u32 %s104, 1
          %s380 = sand.u32 %s104, 1
          %s381 = smul.addr %s380, 256
          %s382 = scalar_lea.vmem [#allocation4], %s381
          %s383 = smul.u32 4, %s21
          %s384 = smul.addr %s383, 4
          %s385 = scalar_lea.vmem %s3, %s384
          // Predicated region
          $region65: #{neuralcdm_forward.1} parent=63 // pred_check
            _
          $region66: #{neuralcdm_forward.1} parent=63 // pred_check_branch
            %387 = sbr.rel (0) target = $region68
          $region67: #{neuralcdm_forward.1} parent=63 // pred_region
            // Predicated region
            $region69: #{neuralcdm_forward.1} parent=67 // pred_check
              _
            $region70: #{neuralcdm_forward.1} parent=67 // pred_check_branch
              %389 = sbr.rel (0) target = $region72
            $region71: #{neuralcdm_forward.1} parent=67 // pred_region
              loop: start=0, step=1, limit=1
              $region73: #{neuralcdm_forward.1} parent=71 // loop_pre_header
                _
              $region74: #{neuralcdm_forward.1} parent=71 // loop_header
                %s391 = sphi 0, %s395
                %p392 = scmp.ge.s32.totalorder %s391, 1
                %s396 = sphi %s385, %s385
                %s397 = sphi %s382, %s382
              $region75: #{neuralcdm_forward.1} parent=71 // loop_header_branch
                %394 = sbr.rel (%p392) target = $region79
              $region76: #{neuralcdm_forward.1} parent=71 // loop_body
                %v398 = vld [vmem:[%s396] sm:$0xff]
                %399 = vst [vmem:[%s397] sm:$0xff] %v398
                %v400 = vld [vmem:[%s396 + $0x8] sm:$0xff]
                %401 = vst [vmem:[%s397 + $0x8] sm:$0xff] %v400
                %v402 = vld [vmem:[%s396 + $0x20] sm:$0xff]
                %403 = vst [vmem:[%s397 + $0x10] sm:$0xff] %v402
                %v404 = vld [vmem:[%s396 + $0x28] sm:$0xff]
                %405 = vst [vmem:[%s397 + $0x18] sm:$0xff] %v404
                %v406 = vld [vmem:[%s396 + $0x40] sm:$0xff]
                %407 = vst [vmem:[%s397 + $0x20] sm:$0xff] %v406
                %v408 = vld [vmem:[%s396 + $0x48] sm:$0xff]
                %409 = vst [vmem:[%s397 + $0x28] sm:$0xff] %v408
                %v410 = vld [vmem:[%s396 + $0x60] sm:$0xff]
                %411 = vst [vmem:[%s397 + $0x30] sm:$0xff] %v410
                %v412 = vld [vmem:[%s396 + $0x68] sm:$0xff]
                %413 = vst [vmem:[%s397 + $0x38] sm:$0xff] %v412
                %v414 = vld [vmem:[%s396 + $0x80] sm:$0xff]
                %415 = vst [vmem:[%s397 + $0x40] sm:$0xff] %v414
                %v416 = vld [vmem:[%s396 + $0x88] sm:$0xff]
                %417 = vst [vmem:[%s397 + $0x48] sm:$0xff] %v416
                %v418 = vld [vmem:[%s396 + $0xa0] sm:$0xff]
                %419 = vst [vmem:[%s397 + $0x50] sm:$0xff] %v418
                %v420 = vld [vmem:[%s396 + $0xa8] sm:$0xff]
                %421 = vst [vmem:[%s397 + $0x58] sm:$0xff] %v420
                %v422 = vld [vmem:[%s396 + $0xc0] sm:$0xff]
                %423 = vst [vmem:[%s397 + $0x60] sm:$0xff] %v422
                %v424 = vld [vmem:[%s396 + $0xc8] sm:$0xff]
                %425 = vst [vmem:[%s397 + $0x68] sm:$0xff] %v424
                %v426 = vld [vmem:[%s396 + $0xe0] sm:$0xff]
                %427 = vst [vmem:[%s397 + $0x70] sm:$0xff] %v426
                %v428 = vld [vmem:[%s396 + $0xe8] sm:$0xff]
                %429 = vst [vmem:[%s397 + $0x78] sm:$0xff] %v428
                %v430 = vld [vmem:[%s396 + $0x100] sm:$0xff]
                %431 = vst [vmem:[%s397 + $0x80] sm:$0xff] %v430
                %v432 = vld [vmem:[%s396 + $0x108] sm:$0xff]
                %433 = vst [vmem:[%s397 + $0x88] sm:$0xff] %v432
                %v434 = vld [vmem:[%s396 + $0x120] sm:$0xff]
                %435 = vst [vmem:[%s397 + $0x90] sm:$0xff] %v434
                %v436 = vld [vmem:[%s396 + $0x128] sm:$0xff]
                %437 = vst [vmem:[%s397 + $0x98] sm:$0xff] %v436
                %v438 = vld [vmem:[%s396 + $0x140] sm:$0xff]
                %439 = vst [vmem:[%s397 + $0xa0] sm:$0xff] %v438
                %v440 = vld [vmem:[%s396 + $0x148] sm:$0xff]
                %441 = vst [vmem:[%s397 + $0xa8] sm:$0xff] %v440
                %v442 = vld [vmem:[%s396 + $0x160] sm:$0xff]
                %443 = vst [vmem:[%s397 + $0xb0] sm:$0xff] %v442
                %v444 = vld [vmem:[%s396 + $0x168] sm:$0xff]
                %445 = vst [vmem:[%s397 + $0xb8] sm:$0xff] %v444
                %v446 = vld [vmem:[%s396 + $0x180] sm:$0xff]
                %447 = vst [vmem:[%s397 + $0xc0] sm:$0xff] %v446
                %v448 = vld [vmem:[%s396 + $0x188] sm:$0xff]
                %449 = vst [vmem:[%s397 + $0xc8] sm:$0xff] %v448
                %v450 = vld [vmem:[%s396 + $0x1a0] sm:$0xff]
                %451 = vst [vmem:[%s397 + $0xd0] sm:$0xff] %v450
                %v452 = vld [vmem:[%s396 + $0x1a8] sm:$0xff]
                %453 = vst [vmem:[%s397 + $0xd8] sm:$0xff] %v452
                %v454 = vld [vmem:[%s396 + $0x1c0] sm:$0xff]
                %455 = vst [vmem:[%s397 + $0xe0] sm:$0xff] %v454
                %v456 = vld [vmem:[%s396 + $0x1c8] sm:$0xff]
                %457 = vst [vmem:[%s397 + $0xe8] sm:$0xff] %v456
                %v458 = vld [vmem:[%s396 + $0x1e0] sm:$0xff]
                %459 = vst [vmem:[%s397 + $0xf0] sm:$0xff] %v458
                %v460 = vld [vmem:[%s396 + $0x1e8] sm:$0xff]
                %461 = vst [vmem:[%s397 + $0xf8] sm:$0xff] %v460
              $region77: #{neuralcdm_forward.1} parent=71 // loop_footer
                %s395 = sadd.s32 1, %s391
              $region78: #{neuralcdm_forward.1} parent=71 // loop_footer_branch
                %390 = sbr.rel target = $region74
              $region79: #{neuralcdm_forward.1} parent=71 // loop_exit
                _
            $region72: #{neuralcdm_forward.1} parent=67 // pred_fallthru
              _
            // Predicated region
            $region80: #{neuralcdm_forward.1} parent=67 // pred_check
              _
            $region81: #{neuralcdm_forward.1} parent=67 // pred_check_branch
              %463 = sbr.rel target = $region83
            $region82: #{neuralcdm_forward.1} parent=67 // pred_region
              _
            $region83: #{neuralcdm_forward.1} parent=67 // pred_fallthru
              _
          $region68: #{neuralcdm_forward.1} parent=63 // pred_fallthru
            _
          %464 = vnop
        $region64: #{neuralcdm_forward.1} parent=51 // pred_fallthru
          _
      $region52: #{neuralcdm_forward.1} parent=5 // pred_fallthru
        _
      %p465 = scmp.le.s32.totalorder 1, %s21
      %p466 = scmp.lt.s32.totalorder %s21, 3
      %p467 = pnand %p465, %p466
      %p468 = pneg %p467
      // Predicated region
      $region84: #{neuralcdm_forward.1} parent=5 // pred_check
        _
      $region85: #{neuralcdm_forward.1} parent=5 // pred_check_branch
        %470 = sbr.rel (%p467) target = $region87
      $region86: #{neuralcdm_forward.1} parent=5 // pred_region
        %s471 = ssub.s32 %s21, 1
        %s472 = sand.u32 %s107, 1
        %s473 = sand.u32 %s107, 1
        %s474 = smul.addr %s473, 256
        %s475 = scalar_lea.vmem [#allocation4], %s474
        // Predicated region
        $region88: #{neuralcdm_forward.1} parent=86 // pred_check
          %p476 = pneg %p120
        $region89: #{neuralcdm_forward.1} parent=86 // pred_check_branch
          %478 = sbr.rel (%p476) target = $region91
        $region90: #{neuralcdm_forward.1} parent=86 // pred_region
          _
        $region91: #{neuralcdm_forward.1} parent=86 // pred_fallthru
          _
        %p479 = pneg %p42
        %p480 = pneg %p39
        %s481 = smul.u32 4, %s26
        %p482 = scmp.lt.s32.totalorder %s481, 7
        %s483 = scalar_select %p482, %s481, 7
        %s484 = scalar_lea.vmem %s1, %s483
        %p485 = pneg %p68
        %p486 = pneg %p65
        %s487 = smul.u32 4, %s26
        %p488 = scmp.lt.s32.totalorder %s487, 7
        %s489 = scalar_select %p488, %s487, 7
        %s490 = scalar_lea.vmem %s2, %s489
        %p491 = pneg %p94
        %p492 = pneg %p91
        %s493 = sand.u32 %s107, 1
        %s494 = sand.u32 %s107, 1
        %s495 = smul.addr %s494, 256
        %s496 = scalar_lea.vmem [#allocation4], %s495
        %p497 = pneg %p120
        %p498 = pneg %p117
        %p499 = pneg %p141
        %p500 = pneg %p138
        %p501 = pneg %p162
        %p502 = pneg %p159
        %p503 = pneg %p183
        %p504 = pneg %p180
        %p505 = pneg %p204
        %p506 = pneg %p201
        %p507 = pneg %p225
        %p508 = pneg %p222
        %p509 = pneg %p246
        %p510 = pneg %p243
        %p511 = pneg %p267
        %p512 = pneg %p264
        %p513 = pneg %p288
        %p514 = pneg %p285
        %p515 = pneg %p314
        %p516 = pneg %p311
        %s517 = smul.u32 4, %s26
        %p518 = scmp.lt.s32.totalorder %s517, 7
        %s519 = scalar_select %p518, %s517, 7
        %s520 = scalar_lea.vmem %s12, %s519
        %s521 = smul.u32 4, %s26
        %p522 = scmp.lt.s32.totalorder %s521, 7
        %s523 = scalar_select %p522, %s521, 7
        %s524 = scalar_lea.vmem %s1, %s523
        %s525 = smul.u32 4, %s26
        %s526 = smul.u32 4, %s26
        %p527 = scmp.lt.s32.totalorder %s526, 7
        %s528 = scalar_select %p527, %s526, 7
        %s529 = scalar_lea.vmem %s2, %s528
        %s530 = smul.u32 4, %s26
        %s531 = smul.u32 4, %s26
        %s532 = smul.u32 4, %s26
        %p533 = scmp.lt.s32.totalorder %s532, 7
        %s534 = scalar_select %p533, %s532, 7
        %s535 = scalar_lea.vmem %s12, %s534
        %s536 = smul.u32 4, %s26
        %v538 = vld [vmem:[%s524] sm:$0xf]
        %v539 = vld [vmem:[%s529] sm:$0xf]
        %v540 = vlaneseq
        %v541 = vshrl.u32 %v540, 7
        %v542 = vadd.s32 %v541, 8
        %v543 = vadd.s32 %v541, 16
        %v544 = vadd.s32 %v541, 24
        %v545 = vadd.s32 %v541, 32
        %v546 = vadd.s32 %v541, 40
        %v547 = vadd.s32 %v541, 48
        %v548 = vadd.s32 %v541, 56
        %v549 = vperm.slane %v538, 0
        %v550 = vperm.slane %v538, 1
        %v551 = vperm.slane %v538, 2
        %v552 = vperm.slane %v538, 3
        %vm553 = vcmp.eq.s32.totalorder %v541, %v549
        %vm554 = vcmp.eq.s32.totalorder %v541, %v550
        %vm555 = vcmp.eq.s32.totalorder %v541, %v551
        %vm556 = vcmp.eq.s32.totalorder %v541, %v552
        %vm557 = vcmp.eq.s32.totalorder %v542, %v549
        %vm558 = vcmp.eq.s32.totalorder %v542, %v550
        %vm559 = vcmp.eq.s32.totalorder %v542, %v551
        %vm560 = vcmp.eq.s32.totalorder %v542, %v552
        %vm561 = vcmp.eq.s32.totalorder %v543, %v549
        %vm562 = vcmp.eq.s32.totalorder %v543, %v550
        %vm563 = vcmp.eq.s32.totalorder %v543, %v551
        %vm564 = vcmp.eq.s32.totalorder %v543, %v552
        %vm565 = vcmp.eq.s32.totalorder %v544, %v549
        %vm566 = vcmp.eq.s32.totalorder %v544, %v550
        %vm567 = vcmp.eq.s32.totalorder %v544, %v551
        %vm568 = vcmp.eq.s32.totalorder %v544, %v552
        %vm569 = vcmp.eq.s32.totalorder %v545, %v549
        %vm570 = vcmp.eq.s32.totalorder %v545, %v550
        %vm571 = vcmp.eq.s32.totalorder %v545, %v551
        %vm572 = vcmp.eq.s32.totalorder %v545, %v552
        %vm573 = vcmp.eq.s32.totalorder %v546, %v549
        %vm574 = vcmp.eq.s32.totalorder %v546, %v550
        %vm575 = vcmp.eq.s32.totalorder %v546, %v551
        %vm576 = vcmp.eq.s32.totalorder %v546, %v552
        %vm577 = vcmp.eq.s32.totalorder %v547, %v549
        %vm578 = vcmp.eq.s32.totalorder %v547, %v550
        %vm579 = vcmp.eq.s32.totalorder %v547, %v551
        %vm580 = vcmp.eq.s32.totalorder %v547, %v552
        %vm581 = vcmp.eq.s32.totalorder %v548, %v549
        %vm582 = vcmp.eq.s32.totalorder %v548, %v550
        %vm583 = vcmp.eq.s32.totalorder %v548, %v551
        %vm584 = vcmp.eq.s32.totalorder %v548, %v552
        %v585 = vsel %vm553, 1, 0
        %v586 = vsel %vm554, 1, 0
        %v587 = vsel %vm555, 1, 0
        %v588 = vsel %vm556, 1, 0
        %v589 = vsel %vm557, 1, 0
        %v590 = vsel %vm558, 1, 0
        %v591 = vsel %vm559, 1, 0
        %v592 = vsel %vm560, 1, 0
        %v593 = vsel %vm561, 1, 0
        %v594 = vsel %vm562, 1, 0
        %v595 = vsel %vm563, 1, 0
        %v596 = vsel %vm564, 1, 0
        %v597 = vsel %vm565, 1, 0
        %v598 = vsel %vm566, 1, 0
        %v599 = vsel %vm567, 1, 0
        %v600 = vsel %vm568, 1, 0
        %v601 = vsel %vm569, 1, 0
        %v602 = vsel %vm570, 1, 0
        %v603 = vsel %vm571, 1, 0
        %v604 = vsel %vm572, 1, 0
        %v605 = vsel %vm573, 1, 0
        %v606 = vsel %vm574, 1, 0
        %v607 = vsel %vm575, 1, 0
        %v608 = vsel %vm576, 1, 0
        %v609 = vsel %vm577, 1, 0
        %v610 = vsel %vm578, 1, 0
        %v611 = vsel %vm579, 1, 0
        %v612 = vsel %vm580, 1, 0
        %v613 = vsel %vm581, 1, 0
        %v614 = vsel %vm582, 1, 0
        %v615 = vsel %vm583, 1, 0
        %v616 = vsel %vm584, 1, 0
        %v617 = vcvt.s32.f32 %v585
        %v618 = vcvt.s32.f32 %v586
        %v619 = vcvt.s32.f32 %v587
        %v620 = vcvt.s32.f32 %v588
        %v621 = vcvt.s32.f32 %v589
        %v622 = vcvt.s32.f32 %v590
        %v623 = vcvt.s32.f32 %v591
        %v624 = vcvt.s32.f32 %v592
        %v625 = vcvt.s32.f32 %v593
        %v626 = vcvt.s32.f32 %v594
        %v627 = vcvt.s32.f32 %v595
        %v628 = vcvt.s32.f32 %v596
        %v629 = vcvt.s32.f32 %v597
        %v630 = vcvt.s32.f32 %v598
        %v631 = vcvt.s32.f32 %v599
        %v632 = vcvt.s32.f32 %v600
        %v633 = vcvt.s32.f32 %v601
        %v634 = vcvt.s32.f32 %v602
        %v635 = vcvt.s32.f32 %v603
        %v636 = vcvt.s32.f32 %v604
        %v637 = vcvt.s32.f32 %v605
        %v638 = vcvt.s32.f32 %v606
        %v639 = vcvt.s32.f32 %v607
        %v640 = vcvt.s32.f32 %v608
        %v641 = vcvt.s32.f32 %v609
        %v642 = vcvt.s32.f32 %v610
        %v643 = vcvt.s32.f32 %v611
        %v644 = vcvt.s32.f32 %v612
        %v645 = vcvt.s32.f32 %v613
        %v646 = vcvt.s32.f32 %v614
        %v647 = vcvt.s32.f32 %v615
        %v648 = vcvt.s32.f32 %v616
        %v649 = vpack.c.bf16 %v621, %v617
        %v650 = vpack.c.bf16 %v622, %v618
        %v651 = vpack.c.bf16 %v623, %v619
        %v652 = vpack.c.bf16 %v624, %v620
        %v653 = vpack.c.bf16 %v629, %v625
        %v654 = vpack.c.bf16 %v630, %v626
        %v655 = vpack.c.bf16 %v631, %v627
        %v656 = vpack.c.bf16 %v632, %v628
        %v657 = vpack.c.bf16 %v637, %v633
        %v658 = vpack.c.bf16 %v638, %v634
        %v659 = vpack.c.bf16 %v639, %v635
        %v660 = vpack.c.bf16 %v640, %v636
        %v661 = vpack.c.bf16 %v645, %v641
        %v662 = vpack.c.bf16 %v646, %v642
        %v663 = vpack.c.bf16 %v647, %v643
        %v664 = vpack.c.bf16 %v648, %v644
        %v665 = vperm.slane %v539, 0
        %v666 = vperm.slane %v539, 1
        %v667 = vperm.slane %v539, 2
        %v668 = vperm.slane %v539, 3
        %vm669 = vcmp.eq.s32.totalorder %v541, %v665
        %vm670 = vcmp.eq.s32.totalorder %v541, %v666
        %vm671 = vcmp.eq.s32.totalorder %v541, %v667
        %vm672 = vcmp.eq.s32.totalorder %v541, %v668
        %vm673 = vcmp.eq.s32.totalorder %v542, %v665
        %vm674 = vcmp.eq.s32.totalorder %v542, %v666
        %vm675 = vcmp.eq.s32.totalorder %v542, %v667
        %vm676 = vcmp.eq.s32.totalorder %v542, %v668
        %vm677 = vcmp.eq.s32.totalorder %v543, %v665
        %vm678 = vcmp.eq.s32.totalorder %v543, %v666
        %vm679 = vcmp.eq.s32.totalorder %v543, %v667
        %vm680 = vcmp.eq.s32.totalorder %v543, %v668
        %vm681 = vcmp.eq.s32.totalorder %v544, %v665
        %vm682 = vcmp.eq.s32.totalorder %v544, %v666
        %vm683 = vcmp.eq.s32.totalorder %v544, %v667
        %vm684 = vcmp.eq.s32.totalorder %v544, %v668
        %v685 = vsel %vm669, 1, 0
        %v686 = vsel %vm670, 1, 0
        %v687 = vsel %vm671, 1, 0
        %v688 = vsel %vm672, 1, 0
        %v689 = vsel %vm673, 1, 0
        %v690 = vsel %vm674, 1, 0
        %v691 = vsel %vm675, 1, 0
        %v692 = vsel %vm676, 1, 0
        %v693 = vsel %vm677, 1, 0
        %v694 = vsel %vm678, 1, 0
        %v695 = vsel %vm679, 1, 0
        %v696 = vsel %vm680, 1, 0
        %v697 = vsel %vm681, 1, 0
        %v698 = vsel %vm682, 1, 0
        %v699 = vsel %vm683, 1, 0
        %v700 = vsel %vm684, 1, 0
        %v701 = vcvt.s32.f32 %v685
        %v702 = vcvt.s32.f32 %v686
        %v703 = vcvt.s32.f32 %v687
        %v704 = vcvt.s32.f32 %v688
        %v705 = vcvt.s32.f32 %v689
        %v706 = vcvt.s32.f32 %v690
        %v707 = vcvt.s32.f32 %v691
        %v708 = vcvt.s32.f32 %v692
        %v709 = vcvt.s32.f32 %v693
        %v710 = vcvt.s32.f32 %v694
        %v711 = vcvt.s32.f32 %v695
        %v712 = vcvt.s32.f32 %v696
        %v713 = vcvt.s32.f32 %v697
        %v714 = vcvt.s32.f32 %v698
        %v715 = vcvt.s32.f32 %v699
        %v716 = vcvt.s32.f32 %v700
        %v717 = vpack.c.bf16 %v705, %v701
        %v718 = vpack.c.bf16 %v706, %v702
        %v719 = vpack.c.bf16 %v707, %v703
        %v720 = vpack.c.bf16 %v708, %v704
        %v721 = vpack.c.bf16 %v713, %v709
        %v722 = vpack.c.bf16 %v714, %v710
        %v723 = vpack.c.bf16 %v715, %v711
        %v724 = vpack.c.bf16 %v716, %v712
        %v725 = vld [vmem:[%s4] sm:$0xf]
        %v726 = vld [vmem:[%s4 + $0x4] sm:$0xf]
        %v727 = vld [vmem:[%s4 + $0x8] sm:$0xf]
        %v728 = vld [vmem:[%s4 + $0xc] sm:$0xf]
        %v729 = vld [vmem:[%s4 + $0x10] sm:$0xf]
        %v730 = vld [vmem:[%s4 + $0x14] sm:$0xf]
        %v731 = vld [vmem:[%s4 + $0x18] sm:$0xf]
        %v732 = vld [vmem:[%s4 + $0x1c] sm:$0xf]
        %v733 = vld [vmem:[%s4 + $0x20] sm:$0xf]
        %v734 = vld [vmem:[%s4 + $0x24] sm:$0xf]
        %v735 = vld [vmem:[%s4 + $0x28] sm:$0xf]
        %v736 = vld [vmem:[%s4 + $0x2c] sm:$0xf]
        %v737 = vld [vmem:[%s4 + $0x30] sm:$0xf]
        %v738 = vld [vmem:[%s4 + $0x34] sm:$0xf]
        %v739 = vld [vmem:[%s4 + $0x38] sm:$0xf]
        %v740 = vld [vmem:[%s4 + $0x3c] sm:$0xf]
        %v757 = vunpack.c.l.b16 %v725
        %v758 = vunpack.c.l.b16 %v726
        %v759 = vunpack.c.l.b16 %v727
        %v760 = vunpack.c.l.b16 %v728
        %v761 = vunpack.c.l.b16 %v729
        %v762 = vunpack.c.l.b16 %v730
        %v763 = vunpack.c.l.b16 %v731
        %v764 = vunpack.c.l.b16 %v732
        %v765 = vunpack.c.l.b16 %v733
        %v766 = vunpack.c.l.b16 %v734
        %v767 = vunpack.c.l.b16 %v735
        %v768 = vunpack.c.l.b16 %v736
        %v769 = vunpack.c.l.b16 %v737
        %v770 = vunpack.c.l.b16 %v738
        %v771 = vunpack.c.l.b16 %v739
        %v772 = vunpack.c.l.b16 %v740
        %v773 = vpack.c.b16 %v758, %v757
        %v774 = vpack.c.b16 %v760, %v759
        %v775 = vpack.c.b16 %v762, %v761
        %v776 = vpack.c.b16 %v764, %v763
        %v777 = vpack.c.b16 %v766, %v765
        %v778 = vpack.c.b16 %v768, %v767
        %v779 = vpack.c.b16 %v770, %v769
        %v780 = vpack.c.b16 %v772, %v771
        %vm781 = vcmask 523264
        %v783 = vsel %vm781, %v773, 0
        %v786 = vsel %vm781, %v774, 0
        %v789 = vsel %vm781, %v775, 0
        %v792 = vsel %vm781, %v776, 0
        %v795 = vsel %vm781, %v777, 0
        %v798 = vsel %vm781, %v778, 0
        %v801 = vsel %vm781, %v779, 0
        %v804 = vsel %vm781, %v780, 0
        %806 = vmatpush.bf16.msra.mxu0 0
        %807 = vmatpush.bf16.msra.mxu0 0
        %808 = vmatpush.bf16.msra.mxu0 0
        %809 = vmatpush.bf16.msra.mxu0 0
        %810 = vmatpush.bf16.msra.mxu0 %v661
        %811 = vmatpush.bf16.msra.mxu0 %v657
        %812 = vmatpush.bf16.msra.mxu0 %v653
        %813 = vmatpush.bf16.msra.mxu0 %v649
        %814 = vmatmul.bf16.gmra.mxu0 %v783
        %v815 = vpop.f32.mrf.mxu0
        %v816 = vadd.f32 0.0, %v815
        %v817 = vpop.f32.mrf.mxu0
        %v818 = vadd.f32 0.0, %v817
        %819 = vmatmul.bf16.gmra.mxu0 %v786
        %v820 = vpop.f32.mrf.mxu0
        %v821 = vadd.f32 0.0, %v820
        %v822 = vpop.f32.mrf.mxu0
        %v823 = vadd.f32 0.0, %v822
        %824 = vmatmul.bf16.gmra.mxu0 %v789
        %v825 = vpop.f32.mrf.mxu0
        %v826 = vadd.f32 0.0, %v825
        %v827 = vpop.f32.mrf.mxu0
        %v828 = vadd.f32 0.0, %v827
        %829 = vmatmul.bf16.gmra.mxu0 %v792
        %v830 = vpop.f32.mrf.mxu0
        %v831 = vadd.f32 0.0, %v830
        %v832 = vpop.f32.mrf.mxu0
        %v833 = vadd.f32 0.0, %v832
        %834 = vmatmul.bf16.gmra.mxu0 %v795
        %v835 = vpop.f32.mrf.mxu0
        %v836 = vadd.f32 0.0, %v835
        %v837 = vpop.f32.mrf.mxu0
        %v838 = vadd.f32 0.0, %v837
        %839 = vmatmul.bf16.gmra.mxu0 %v798
        %v840 = vpop.f32.mrf.mxu0
        %v841 = vadd.f32 0.0, %v840
        %v842 = vpop.f32.mrf.mxu0
        %v843 = vadd.f32 0.0, %v842
        %844 = vmatmul.bf16.gmra.mxu0 %v801
        %v845 = vpop.f32.mrf.mxu0
        %v846 = vadd.f32 0.0, %v845
        %v847 = vpop.f32.mrf.mxu0
        %v848 = vadd.f32 0.0, %v847
        %849 = vmatmul.bf16.gmra.mxu0 %v804
        %v850 = vpop.f32.mrf.mxu0
        %v851 = vadd.f32 0.0, %v850
        %v852 = vpop.f32.mrf.mxu0
        %v853 = vadd.f32 0.0, %v852
        %854 = vdwg.mxu0
        %855 = vmatpush.bf16.msra.mxu0 0
        %856 = vmatpush.bf16.msra.mxu0 0
        %857 = vmatpush.bf16.msra.mxu0 0
        %858 = vmatpush.bf16.msra.mxu0 0
        %859 = vmatpush.bf16.msra.mxu0 %v662
        %860 = vmatpush.bf16.msra.mxu0 %v658
        %861 = vmatpush.bf16.msra.mxu0 %v654
        %862 = vmatpush.bf16.msra.mxu0 %v650
        %863 = vmatmul.bf16.gmra.mxu0 %v783
        %v864 = vpop.f32.mrf.mxu0
        %v865 = vadd.f32 0.0, %v864
        %v866 = vpop.f32.mrf.mxu0
        %v867 = vadd.f32 0.0, %v866
        %868 = vmatmul.bf16.gmra.mxu0 %v786
        %v869 = vpop.f32.mrf.mxu0
        %v870 = vadd.f32 0.0, %v869
        %v871 = vpop.f32.mrf.mxu0
        %v872 = vadd.f32 0.0, %v871
        %873 = vmatmul.bf16.gmra.mxu0 %v789
        %v874 = vpop.f32.mrf.mxu0
        %v875 = vadd.f32 0.0, %v874
        %v876 = vpop.f32.mrf.mxu0
        %v877 = vadd.f32 0.0, %v876
        %878 = vmatmul.bf16.gmra.mxu0 %v792
        %v879 = vpop.f32.mrf.mxu0
        %v880 = vadd.f32 0.0, %v879
        %v881 = vpop.f32.mrf.mxu0
        %v882 = vadd.f32 0.0, %v881
        %883 = vmatmul.bf16.gmra.mxu0 %v795
        %v884 = vpop.f32.mrf.mxu0
        %v885 = vadd.f32 0.0, %v884
        %v886 = vpop.f32.mrf.mxu0
        %v887 = vadd.f32 0.0, %v886
        %888 = vmatmul.bf16.gmra.mxu0 %v798
        %v889 = vpop.f32.mrf.mxu0
        %v890 = vadd.f32 0.0, %v889
        %v891 = vpop.f32.mrf.mxu0
        %v892 = vadd.f32 0.0, %v891
        %893 = vmatmul.bf16.gmra.mxu0 %v801
        %v894 = vpop.f32.mrf.mxu0
        %v895 = vadd.f32 0.0, %v894
        %v896 = vpop.f32.mrf.mxu0
        %v897 = vadd.f32 0.0, %v896
        %898 = vmatmul.bf16.gmra.mxu0 %v804
        %v899 = vpop.f32.mrf.mxu0
        %v900 = vadd.f32 0.0, %v899
        %v901 = vpop.f32.mrf.mxu0
        %v902 = vadd.f32 0.0, %v901
        %903 = vdwg.mxu0
        %904 = vmatpush.bf16.msra.mxu0 0
        %905 = vmatpush.bf16.msra.mxu0 0
        %906 = vmatpush.bf16.msra.mxu0 0
        %907 = vmatpush.bf16.msra.mxu0 0
        %908 = vmatpush.bf16.msra.mxu0 %v663
        %909 = vmatpush.bf16.msra.mxu0 %v659
        %910 = vmatpush.bf16.msra.mxu0 %v655
        %911 = vmatpush.bf16.msra.mxu0 %v651
        %912 = vmatmul.bf16.gmra.mxu0 %v783
        %v913 = vpop.f32.mrf.mxu0
        %v914 = vadd.f32 0.0, %v913
        %v915 = vpop.f32.mrf.mxu0
        %v916 = vadd.f32 0.0, %v915
        %917 = vmatmul.bf16.gmra.mxu0 %v786
        %v918 = vpop.f32.mrf.mxu0
        %v919 = vadd.f32 0.0, %v918
        %v920 = vpop.f32.mrf.mxu0
        %v921 = vadd.f32 0.0, %v920
        %922 = vmatmul.bf16.gmra.mxu0 %v789
        %v923 = vpop.f32.mrf.mxu0
        %v924 = vadd.f32 0.0, %v923
        %v925 = vpop.f32.mrf.mxu0
        %v926 = vadd.f32 0.0, %v925
        %927 = vmatmul.bf16.gmra.mxu0 %v792
        %v928 = vpop.f32.mrf.mxu0
        %v929 = vadd.f32 0.0, %v928
        %v930 = vpop.f32.mrf.mxu0
        %v931 = vadd.f32 0.0, %v930
        %932 = vmatmul.bf16.gmra.mxu0 %v795
        %v933 = vpop.f32.mrf.mxu0
        %v934 = vadd.f32 0.0, %v933
        %v935 = vpop.f32.mrf.mxu0
        %v936 = vadd.f32 0.0, %v935
        %937 = vmatmul.bf16.gmra.mxu0 %v798
        %v938 = vpop.f32.mrf.mxu0
        %v939 = vadd.f32 0.0, %v938
        %v940 = vpop.f32.mrf.mxu0
        %v941 = vadd.f32 0.0, %v940
        %942 = vmatmul.bf16.gmra.mxu0 %v801
        %v943 = vpop.f32.mrf.mxu0
        %v944 = vadd.f32 0.0, %v943
        %v945 = vpop.f32.mrf.mxu0
        %v946 = vadd.f32 0.0, %v945
        %947 = vmatmul.bf16.gmra.mxu0 %v804
        %v948 = vpop.f32.mrf.mxu0
        %v949 = vadd.f32 0.0, %v948
        %v950 = vpop.f32.mrf.mxu0
        %v951 = vadd.f32 0.0, %v950
        %952 = vdwg.mxu0
        %953 = vmatpush.bf16.msra.mxu0 0
        %954 = vmatpush.bf16.msra.mxu0 0
        %955 = vmatpush.bf16.msra.mxu0 0
        %956 = vmatpush.bf16.msra.mxu0 0
        %957 = vmatpush.bf16.msra.mxu0 %v664
        %958 = vmatpush.bf16.msra.mxu0 %v660
        %959 = vmatpush.bf16.msra.mxu0 %v656
        %960 = vmatpush.bf16.msra.mxu0 %v652
        %961 = vmatmul.bf16.gmra.mxu0 %v783
        %v962 = vpop.f32.mrf.mxu0
        %v963 = vadd.f32 0.0, %v962
        %v964 = vpop.f32.mrf.mxu0
        %v965 = vadd.f32 0.0, %v964
        %966 = vmatmul.bf16.gmra.mxu0 %v786
        %v967 = vpop.f32.mrf.mxu0
        %v968 = vadd.f32 0.0, %v967
        %v969 = vpop.f32.mrf.mxu0
        %v970 = vadd.f32 0.0, %v969
        %971 = vmatmul.bf16.gmra.mxu0 %v789
        %v972 = vpop.f32.mrf.mxu0
        %v973 = vadd.f32 0.0, %v972
        %v974 = vpop.f32.mrf.mxu0
        %v975 = vadd.f32 0.0, %v974
        %976 = vmatmul.bf16.gmra.mxu0 %v792
        %v977 = vpop.f32.mrf.mxu0
        %v978 = vadd.f32 0.0, %v977
        %v979 = vpop.f32.mrf.mxu0
        %v980 = vadd.f32 0.0, %v979
        %981 = vmatmul.bf16.gmra.mxu0 %v795
        %v982 = vpop.f32.mrf.mxu0
        %v983 = vadd.f32 0.0, %v982
        %v984 = vpop.f32.mrf.mxu0
        %v985 = vadd.f32 0.0, %v984
        %986 = vmatmul.bf16.gmra.mxu0 %v798
        %v987 = vpop.f32.mrf.mxu0
        %v988 = vadd.f32 0.0, %v987
        %v989 = vpop.f32.mrf.mxu0
        %v990 = vadd.f32 0.0, %v989
        %991 = vmatmul.bf16.gmra.mxu0 %v801
        %v992 = vpop.f32.mrf.mxu0
        %v993 = vadd.f32 0.0, %v992
        %v994 = vpop.f32.mrf.mxu0
        %v995 = vadd.f32 0.0, %v994
        %996 = vmatmul.bf16.gmra.mxu0 %v804
        %v997 = vpop.f32.mrf.mxu0
        %v998 = vadd.f32 0.0, %v997
        %v999 = vpop.f32.mrf.mxu0
        %v1000 = vadd.f32 0.0, %v999
        %1001 = vdwg.mxu0
        %v1002 = vld [vmem:[%s5] sm:$0xf]
        %v1003 = vld [vmem:[%s5 + $0x4] sm:$0xf]
        %v1004 = vld [vmem:[%s5 + $0x8] sm:$0xf]
        %v1005 = vld [vmem:[%s5 + $0xc] sm:$0xf]
        %v1006 = vld [vmem:[%s5 + $0x10] sm:$0xf]
        %v1007 = vld [vmem:[%s5 + $0x14] sm:$0xf]
        %v1008 = vld [vmem:[%s5 + $0x18] sm:$0xf]
        %v1009 = vld [vmem:[%s5 + $0x1c] sm:$0xf]
        %v1010 = vld [vmem:[%s5 + $0x20] sm:$0xf]
        %v1011 = vld [vmem:[%s5 + $0x24] sm:$0xf]
        %v1012 = vld [vmem:[%s5 + $0x28] sm:$0xf]
        %v1013 = vld [vmem:[%s5 + $0x2c] sm:$0xf]
        %v1014 = vld [vmem:[%s5 + $0x30] sm:$0xf]
        %v1015 = vld [vmem:[%s5 + $0x34] sm:$0xf]
        %v1016 = vld [vmem:[%s5 + $0x38] sm:$0xf]
        %v1017 = vld [vmem:[%s5 + $0x3c] sm:$0xf]
        %v1034 = vunpack.c.l.b16 %v1002
        %v1035 = vunpack.c.l.b16 %v1003
        %v1036 = vunpack.c.l.b16 %v1004
        %v1037 = vunpack.c.l.b16 %v1005
        %v1038 = vunpack.c.l.b16 %v1006
        %v1039 = vunpack.c.l.b16 %v1007
        %v1040 = vunpack.c.l.b16 %v1008
        %v1041 = vunpack.c.l.b16 %v1009
        %v1042 = vunpack.c.l.b16 %v1010
        %v1043 = vunpack.c.l.b16 %v1011
        %v1044 = vunpack.c.l.b16 %v1012
        %v1045 = vunpack.c.l.b16 %v1013
        %v1046 = vunpack.c.l.b16 %v1014
        %v1047 = vunpack.c.l.b16 %v1015
        %v1048 = vunpack.c.l.b16 %v1016
        %v1049 = vunpack.c.l.b16 %v1017
        %v1050 = vpack.c.b16 %v1035, %v1034
        %v1051 = vpack.c.b16 %v1037, %v1036
        %v1052 = vpack.c.b16 %v1039, %v1038
        %v1053 = vpack.c.b16 %v1041, %v1040
        %v1054 = vpack.c.b16 %v1043, %v1042
        %v1055 = vpack.c.b16 %v1045, %v1044
        %v1056 = vpack.c.b16 %v1047, %v1046
        %v1057 = vpack.c.b16 %v1049, %v1048
        %vm1058 = vcmask 261120
        %v1060 = vsel %vm1058, %v1050, 0
        %v1063 = vsel %vm1058, %v1051, 0
        %v1066 = vsel %vm1058, %v1052, 0
        %v1069 = vsel %vm1058, %v1053, 0
        %v1072 = vsel %vm1058, %v1054, 0
        %v1075 = vsel %vm1058, %v1055, 0
        %v1078 = vsel %vm1058, %v1056, 0
        %v1081 = vsel %vm1058, %v1057, 0
        %1083 = vmatpush.bf16.msra.mxu0 0
        %1084 = vmatpush.bf16.msra.mxu0 0
        %1085 = vmatpush.bf16.msra.mxu0 0
        %1086 = vmatpush.bf16.msra.mxu0 0
        %1087 = vmatpush.bf16.msra.mxu0 0
        %1088 = vmatpush.bf16.msra.mxu0 0
        %1089 = vmatpush.bf16.msra.mxu0 %v721
        %1090 = vmatpush.bf16.msra.mxu0 %v717
        %1091 = vmatmul.bf16.gmra.mxu0 %v1060
        %v1092 = vpop.f32.mrf.mxu0
        %v1093 = vadd.f32 0.0, %v1092
        %v1094 = vpop.f32.mrf.mxu0
        %v1095 = vadd.f32 0.0, %v1094
        %1096 = vmatmul.bf16.gmra.mxu0 %v1063
        %v1097 = vpop.f32.mrf.mxu0
        %v1098 = vadd.f32 0.0, %v1097
        %v1099 = vpop.f32.mrf.mxu0
        %v1100 = vadd.f32 0.0, %v1099
        %1101 = vmatmul.bf16.gmra.mxu0 %v1066
        %v1102 = vpop.f32.mrf.mxu0
        %v1103 = vadd.f32 0.0, %v1102
        %v1104 = vpop.f32.mrf.mxu0
        %v1105 = vadd.f32 0.0, %v1104
        %1106 = vmatmul.bf16.gmra.mxu0 %v1069
        %v1107 = vpop.f32.mrf.mxu0
        %v1108 = vadd.f32 0.0, %v1107
        %v1109 = vpop.f32.mrf.mxu0
        %v1110 = vadd.f32 0.0, %v1109
        %1111 = vmatmul.bf16.gmra.mxu0 %v1072
        %v1112 = vpop.f32.mrf.mxu0
        %v1113 = vadd.f32 0.0, %v1112
        %v1114 = vpop.f32.mrf.mxu0
        %v1115 = vadd.f32 0.0, %v1114
        %1116 = vmatmul.bf16.gmra.mxu0 %v1075
        %v1117 = vpop.f32.mrf.mxu0
        %v1118 = vadd.f32 0.0, %v1117
        %v1119 = vpop.f32.mrf.mxu0
        %v1120 = vadd.f32 0.0, %v1119
        %1121 = vmatmul.bf16.gmra.mxu0 %v1078
        %v1122 = vpop.f32.mrf.mxu0
        %v1123 = vadd.f32 0.0, %v1122
        %v1124 = vpop.f32.mrf.mxu0
        %v1125 = vadd.f32 0.0, %v1124
        %1126 = vmatmul.bf16.gmra.mxu0 %v1081
        %v1127 = vpop.f32.mrf.mxu0
        %v1128 = vadd.f32 0.0, %v1127
        %v1129 = vpop.f32.mrf.mxu0
        %v1130 = vadd.f32 0.0, %v1129
        %1131 = vdwg.mxu0
        %1132 = vmatpush.bf16.msra.mxu0 0
        %1133 = vmatpush.bf16.msra.mxu0 0
        %1134 = vmatpush.bf16.msra.mxu0 0
        %1135 = vmatpush.bf16.msra.mxu0 0
        %1136 = vmatpush.bf16.msra.mxu0 0
        %1137 = vmatpush.bf16.msra.mxu0 0
        %1138 = vmatpush.bf16.msra.mxu0 %v722
        %1139 = vmatpush.bf16.msra.mxu0 %v718
        %1140 = vmatmul.bf16.gmra.mxu0 %v1060
        %v1141 = vpop.f32.mrf.mxu0
        %v1142 = vadd.f32 0.0, %v1141
        %v1143 = vpop.f32.mrf.mxu0
        %v1144 = vadd.f32 0.0, %v1143
        %1145 = vmatmul.bf16.gmra.mxu0 %v1063
        %v1146 = vpop.f32.mrf.mxu0
        %v1147 = vadd.f32 0.0, %v1146
        %v1148 = vpop.f32.mrf.mxu0
        %v1149 = vadd.f32 0.0, %v1148
        %1150 = vmatmul.bf16.gmra.mxu0 %v1066
        %v1151 = vpop.f32.mrf.mxu0
        %v1152 = vadd.f32 0.0, %v1151
        %v1153 = vpop.f32.mrf.mxu0
        %v1154 = vadd.f32 0.0, %v1153
        %1155 = vmatmul.bf16.gmra.mxu0 %v1069
        %v1156 = vpop.f32.mrf.mxu0
        %v1157 = vadd.f32 0.0, %v1156
        %v1158 = vpop.f32.mrf.mxu0
        %v1159 = vadd.f32 0.0, %v1158
        %1160 = vmatmul.bf16.gmra.mxu0 %v1072
        %v1161 = vpop.f32.mrf.mxu0
        %v1162 = vadd.f32 0.0, %v1161
        %v1163 = vpop.f32.mrf.mxu0
        %v1164 = vadd.f32 0.0, %v1163
        %1165 = vmatmul.bf16.gmra.mxu0 %v1075
        %v1166 = vpop.f32.mrf.mxu0
        %v1167 = vadd.f32 0.0, %v1166
        %v1168 = vpop.f32.mrf.mxu0
        %v1169 = vadd.f32 0.0, %v1168
        %1170 = vmatmul.bf16.gmra.mxu0 %v1078
        %v1171 = vpop.f32.mrf.mxu0
        %v1172 = vadd.f32 0.0, %v1171
        %v1173 = vpop.f32.mrf.mxu0
        %v1174 = vadd.f32 0.0, %v1173
        %1175 = vmatmul.bf16.gmra.mxu0 %v1081
        %v1176 = vpop.f32.mrf.mxu0
        %v1177 = vadd.f32 0.0, %v1176
        %v1178 = vpop.f32.mrf.mxu0
        %v1179 = vadd.f32 0.0, %v1178
        %1180 = vdwg.mxu0
        %1181 = vmatpush.bf16.msra.mxu0 0
        %1182 = vmatpush.bf16.msra.mxu0 0
        %1183 = vmatpush.bf16.msra.mxu0 0
        %1184 = vmatpush.bf16.msra.mxu0 0
        %1185 = vmatpush.bf16.msra.mxu0 0
        %1186 = vmatpush.bf16.msra.mxu0 0
        %1187 = vmatpush.bf16.msra.mxu0 %v723
        %1188 = vmatpush.bf16.msra.mxu0 %v719
        %1189 = vmatmul.bf16.gmra.mxu0 %v1060
        %v1190 = vpop.f32.mrf.mxu0
        %v1191 = vadd.f32 0.0, %v1190
        %v1192 = vpop.f32.mrf.mxu0
        %v1193 = vadd.f32 0.0, %v1192
        %1194 = vmatmul.bf16.gmra.mxu0 %v1063
        %v1195 = vpop.f32.mrf.mxu0
        %v1196 = vadd.f32 0.0, %v1195
        %v1197 = vpop.f32.mrf.mxu0
        %v1198 = vadd.f32 0.0, %v1197
        %1199 = vmatmul.bf16.gmra.mxu0 %v1066
        %v1200 = vpop.f32.mrf.mxu0
        %v1201 = vadd.f32 0.0, %v1200
        %v1202 = vpop.f32.mrf.mxu0
        %v1203 = vadd.f32 0.0, %v1202
        %1204 = vmatmul.bf16.gmra.mxu0 %v1069
        %v1205 = vpop.f32.mrf.mxu0
        %v1206 = vadd.f32 0.0, %v1205
        %v1207 = vpop.f32.mrf.mxu0
        %v1208 = vadd.f32 0.0, %v1207
        %1209 = vmatmul.bf16.gmra.mxu0 %v1072
        %v1210 = vpop.f32.mrf.mxu0
        %v1211 = vadd.f32 0.0, %v1210
        %v1212 = vpop.f32.mrf.mxu0
        %v1213 = vadd.f32 0.0, %v1212
        %1214 = vmatmul.bf16.gmra.mxu0 %v1075
        %v1215 = vpop.f32.mrf.mxu0
        %v1216 = vadd.f32 0.0, %v1215
        %v1217 = vpop.f32.mrf.mxu0
        %v1218 = vadd.f32 0.0, %v1217
        %1219 = vmatmul.bf16.gmra.mxu0 %v1078
        %v1220 = vpop.f32.mrf.mxu0
        %v1221 = vadd.f32 0.0, %v1220
        %v1222 = vpop.f32.mrf.mxu0
        %v1223 = vadd.f32 0.0, %v1222
        %1224 = vmatmul.bf16.gmra.mxu0 %v1081
        %v1225 = vpop.f32.mrf.mxu0
        %v1226 = vadd.f32 0.0, %v1225
        %v1227 = vpop.f32.mrf.mxu0
        %v1228 = vadd.f32 0.0, %v1227
        %1229 = vdwg.mxu0
        %1230 = vmatpush.bf16.msra.mxu0 0
        %1231 = vmatpush.bf16.msra.mxu0 0
        %1232 = vmatpush.bf16.msra.mxu0 0
        %1233 = vmatpush.bf16.msra.mxu0 0
        %1234 = vmatpush.bf16.msra.mxu0 0
        %1235 = vmatpush.bf16.msra.mxu0 0
        %1236 = vmatpush.bf16.msra.mxu0 %v724
        %1237 = vmatpush.bf16.msra.mxu0 %v720
        %1238 = vmatmul.bf16.gmra.mxu0 %v1060
        %v1239 = vpop.f32.mrf.mxu0
        %v1240 = vadd.f32 0.0, %v1239
        %v1241 = vpop.f32.mrf.mxu0
        %v1242 = vadd.f32 0.0, %v1241
        %1243 = vmatmul.bf16.gmra.mxu0 %v1063
        %v1244 = vpop.f32.mrf.mxu0
        %v1245 = vadd.f32 0.0, %v1244
        %v1246 = vpop.f32.mrf.mxu0
        %v1247 = vadd.f32 0.0, %v1246
        %1248 = vmatmul.bf16.gmra.mxu0 %v1066
        %v1249 = vpop.f32.mrf.mxu0
        %v1250 = vadd.f32 0.0, %v1249
        %v1251 = vpop.f32.mrf.mxu0
        %v1252 = vadd.f32 0.0, %v1251
        %1253 = vmatmul.bf16.gmra.mxu0 %v1069
        %v1254 = vpop.f32.mrf.mxu0
        %v1255 = vadd.f32 0.0, %v1254
        %v1256 = vpop.f32.mrf.mxu0
        %v1257 = vadd.f32 0.0, %v1256
        %1258 = vmatmul.bf16.gmra.mxu0 %v1072
        %v1259 = vpop.f32.mrf.mxu0
        %v1260 = vadd.f32 0.0, %v1259
        %v1261 = vpop.f32.mrf.mxu0
        %v1262 = vadd.f32 0.0, %v1261
        %1263 = vmatmul.bf16.gmra.mxu0 %v1075
        %v1264 = vpop.f32.mrf.mxu0
        %v1265 = vadd.f32 0.0, %v1264
        %v1266 = vpop.f32.mrf.mxu0
        %v1267 = vadd.f32 0.0, %v1266
        %1268 = vmatmul.bf16.gmra.mxu0 %v1078
        %v1269 = vpop.f32.mrf.mxu0
        %v1270 = vadd.f32 0.0, %v1269
        %v1271 = vpop.f32.mrf.mxu0
        %v1272 = vadd.f32 0.0, %v1271
        %1273 = vmatmul.bf16.gmra.mxu0 %v1081
        %v1274 = vpop.f32.mrf.mxu0
        %v1275 = vadd.f32 0.0, %v1274
        %v1276 = vpop.f32.mrf.mxu0
        %v1277 = vadd.f32 0.0, %v1276
        %1278 = vdwg.mxu0
        %v1279 = vsub.f32 %v816, %v1093
        %v1280 = vsub.f32 %v865, %v1142
        %v1281 = vsub.f32 %v914, %v1191
        %v1282 = vsub.f32 %v963, %v1240
        %v1283 = vsub.f32 %v818, %v1095
        %v1284 = vsub.f32 %v867, %v1144
        %v1285 = vsub.f32 %v916, %v1193
        %v1286 = vsub.f32 %v965, %v1242
        %v1287 = vsub.f32 %v821, %v1098
        %v1288 = vsub.f32 %v870, %v1147
        %v1289 = vsub.f32 %v919, %v1196
        %v1290 = vsub.f32 %v968, %v1245
        %v1291 = vsub.f32 %v823, %v1100
        %v1292 = vsub.f32 %v872, %v1149
        %v1293 = vsub.f32 %v921, %v1198
        %v1294 = vsub.f32 %v970, %v1247
        %v1295 = vsub.f32 %v826, %v1103
        %v1296 = vsub.f32 %v875, %v1152
        %v1297 = vsub.f32 %v924, %v1201
        %v1298 = vsub.f32 %v973, %v1250
        %v1299 = vsub.f32 %v828, %v1105
        %v1300 = vsub.f32 %v877, %v1154
        %v1301 = vsub.f32 %v926, %v1203
        %v1302 = vsub.f32 %v975, %v1252
        %v1303 = vsub.f32 %v831, %v1108
        %v1304 = vsub.f32 %v880, %v1157
        %v1305 = vsub.f32 %v929, %v1206
        %v1306 = vsub.f32 %v978, %v1255
        %v1307 = vsub.f32 %v833, %v1110
        %v1308 = vsub.f32 %v882, %v1159
        %v1309 = vsub.f32 %v931, %v1208
        %v1310 = vsub.f32 %v980, %v1257
        %v1311 = vsub.f32 %v836, %v1113
        %v1312 = vsub.f32 %v885, %v1162
        %v1313 = vsub.f32 %v934, %v1211
        %v1314 = vsub.f32 %v983, %v1260
        %v1315 = vsub.f32 %v838, %v1115
        %v1316 = vsub.f32 %v887, %v1164
        %v1317 = vsub.f32 %v936, %v1213
        %v1318 = vsub.f32 %v985, %v1262
        %v1319 = vsub.f32 %v841, %v1118
        %v1320 = vsub.f32 %v890, %v1167
        %v1321 = vsub.f32 %v939, %v1216
        %v1322 = vsub.f32 %v988, %v1265
        %v1323 = vsub.f32 %v843, %v1120
        %v1324 = vsub.f32 %v892, %v1169
        %v1325 = vsub.f32 %v941, %v1218
        %v1326 = vsub.f32 %v990, %v1267
        %v1327 = vsub.f32 %v846, %v1123
        %v1328 = vsub.f32 %v895, %v1172
        %v1329 = vsub.f32 %v944, %v1221
        %v1330 = vsub.f32 %v993, %v1270
        %v1331 = vsub.f32 %v848, %v1125
        %v1332 = vsub.f32 %v897, %v1174
        %v1333 = vsub.f32 %v946, %v1223
        %v1334 = vsub.f32 %v995, %v1272
        %v1335 = vsub.f32 %v851, %v1128
        %v1336 = vsub.f32 %v900, %v1177
        %v1337 = vsub.f32 %v949, %v1226
        %v1338 = vsub.f32 %v998, %v1275
        %v1339 = vsub.f32 %v853, %v1130
        %v1340 = vsub.f32 %v902, %v1179
        %v1341 = vsub.f32 %v951, %v1228
        %v1342 = vsub.f32 %v1000, %v1277
        %v1343 = vld [vmem:[%s475] sm:$0xff]
        %v1344 = vld [vmem:[%s475 + $0x8] sm:$0xff]
        %v1345 = vld [vmem:[%s475 + $0x10] sm:$0xff]
        %v1346 = vld [vmem:[%s475 + $0x18] sm:$0xff]
        %v1347 = vld [vmem:[%s475 + $0x20] sm:$0xff]
        %v1348 = vld [vmem:[%s475 + $0x28] sm:$0xff]
        %v1349 = vld [vmem:[%s475 + $0x30] sm:$0xff]
        %v1350 = vld [vmem:[%s475 + $0x38] sm:$0xff]
        %v1351 = vld [vmem:[%s475 + $0x40] sm:$0xff]
        %v1352 = vld [vmem:[%s475 + $0x48] sm:$0xff]
        %v1353 = vld [vmem:[%s475 + $0x50] sm:$0xff]
        %v1354 = vld [vmem:[%s475 + $0x58] sm:$0xff]
        %v1355 = vld [vmem:[%s475 + $0x60] sm:$0xff]
        %v1356 = vld [vmem:[%s475 + $0x68] sm:$0xff]
        %v1357 = vld [vmem:[%s475 + $0x70] sm:$0xff]
        %v1358 = vld [vmem:[%s475 + $0x78] sm:$0xff]
        %v1359 = vld [vmem:[%s475 + $0x80] sm:$0xff]
        %v1360 = vld [vmem:[%s475 + $0x88] sm:$0xff]
        %v1361 = vld [vmem:[%s475 + $0x90] sm:$0xff]
        %v1362 = vld [vmem:[%s475 + $0x98] sm:$0xff]
        %v1363 = vld [vmem:[%s475 + $0xa0] sm:$0xff]
        %v1364 = vld [vmem:[%s475 + $0xa8] sm:$0xff]
        %v1365 = vld [vmem:[%s475 + $0xb0] sm:$0xff]
        %v1366 = vld [vmem:[%s475 + $0xb8] sm:$0xff]
        %v1367 = vld [vmem:[%s475 + $0xc0] sm:$0xff]
        %v1368 = vld [vmem:[%s475 + $0xc8] sm:$0xff]
        %v1369 = vld [vmem:[%s475 + $0xd0] sm:$0xff]
        %v1370 = vld [vmem:[%s475 + $0xd8] sm:$0xff]
        %v1371 = vld [vmem:[%s475 + $0xe0] sm:$0xff]
        %v1372 = vld [vmem:[%s475 + $0xe8] sm:$0xff]
        %v1373 = vld [vmem:[%s475 + $0xf0] sm:$0xff]
        %v1374 = vld [vmem:[%s475 + $0xf8] sm:$0xff]
        %v1375 = vunpack.c.l.bf16 %v1343
        %v1376 = vunpack.c.h.bf16 %v1343
        %v1377 = vunpack.c.l.bf16 %v1344
        %v1378 = vunpack.c.h.bf16 %v1344
        %v1379 = vunpack.c.l.bf16 %v1345
        %v1380 = vunpack.c.h.bf16 %v1345
        %v1381 = vunpack.c.l.bf16 %v1346
        %v1382 = vunpack.c.h.bf16 %v1346
        %v1383 = vunpack.c.l.bf16 %v1347
        %v1384 = vunpack.c.h.bf16 %v1347
        %v1385 = vunpack.c.l.bf16 %v1348
        %v1386 = vunpack.c.h.bf16 %v1348
        %v1387 = vunpack.c.l.bf16 %v1349
        %v1388 = vunpack.c.h.bf16 %v1349
        %v1389 = vunpack.c.l.bf16 %v1350
        %v1390 = vunpack.c.h.bf16 %v1350
        %v1391 = vunpack.c.l.bf16 %v1351
        %v1392 = vunpack.c.h.bf16 %v1351
        %v1393 = vunpack.c.l.bf16 %v1352
        %v1394 = vunpack.c.h.bf16 %v1352
        %v1395 = vunpack.c.l.bf16 %v1353
        %v1396 = vunpack.c.h.bf16 %v1353
        %v1397 = vunpack.c.l.bf16 %v1354
        %v1398 = vunpack.c.h.bf16 %v1354
        %v1399 = vunpack.c.l.bf16 %v1355
        %v1400 = vunpack.c.h.bf16 %v1355
        %v1401 = vunpack.c.l.bf16 %v1356
        %v1402 = vunpack.c.h.bf16 %v1356
        %v1403 = vunpack.c.l.bf16 %v1357
        %v1404 = vunpack.c.h.bf16 %v1357
        %v1405 = vunpack.c.l.bf16 %v1358
        %v1406 = vunpack.c.h.bf16 %v1358
        %v1407 = vunpack.c.l.bf16 %v1359
        %v1408 = vunpack.c.h.bf16 %v1359
        %v1409 = vunpack.c.l.bf16 %v1360
        %v1410 = vunpack.c.h.bf16 %v1360
        %v1411 = vunpack.c.l.bf16 %v1361
        %v1412 = vunpack.c.h.bf16 %v1361
        %v1413 = vunpack.c.l.bf16 %v1362
        %v1414 = vunpack.c.h.bf16 %v1362
        %v1415 = vunpack.c.l.bf16 %v1363
        %v1416 = vunpack.c.h.bf16 %v1363
        %v1417 = vunpack.c.l.bf16 %v1364
        %v1418 = vunpack.c.h.bf16 %v1364
        %v1419 = vunpack.c.l.bf16 %v1365
        %v1420 = vunpack.c.h.bf16 %v1365
        %v1421 = vunpack.c.l.bf16 %v1366
        %v1422 = vunpack.c.h.bf16 %v1366
        %v1423 = vunpack.c.l.bf16 %v1367
        %v1424 = vunpack.c.h.bf16 %v1367
        %v1425 = vunpack.c.l.bf16 %v1368
        %v1426 = vunpack.c.h.bf16 %v1368
        %v1427 = vunpack.c.l.bf16 %v1369
        %v1428 = vunpack.c.h.bf16 %v1369
        %v1429 = vunpack.c.l.bf16 %v1370
        %v1430 = vunpack.c.h.bf16 %v1370
        %v1431 = vunpack.c.l.bf16 %v1371
        %v1432 = vunpack.c.h.bf16 %v1371
        %v1433 = vunpack.c.l.bf16 %v1372
        %v1434 = vunpack.c.h.bf16 %v1372
        %v1435 = vunpack.c.l.bf16 %v1373
        %v1436 = vunpack.c.h.bf16 %v1373
        %v1437 = vunpack.c.l.bf16 %v1374
        %v1438 = vunpack.c.h.bf16 %v1374
        %v1439 = vmul.f32 %v1279, %v1375
        %v1440 = vmul.f32 %v1280, %v1376
        %v1441 = vmul.f32 %v1281, %v1377
        %v1442 = vmul.f32 %v1282, %v1378
        %v1443 = vmul.f32 %v1283, %v1379
        %v1444 = vmul.f32 %v1284, %v1380
        %v1445 = vmul.f32 %v1285, %v1381
        %v1446 = vmul.f32 %v1286, %v1382
        %v1447 = vmul.f32 %v1287, %v1383
        %v1448 = vmul.f32 %v1288, %v1384
        %v1449 = vmul.f32 %v1289, %v1385
        %v1450 = vmul.f32 %v1290, %v1386
        %v1451 = vmul.f32 %v1291, %v1387
        %v1452 = vmul.f32 %v1292, %v1388
        %v1453 = vmul.f32 %v1293, %v1389
        %v1454 = vmul.f32 %v1294, %v1390
        %v1455 = vmul.f32 %v1295, %v1391
        %v1456 = vmul.f32 %v1296, %v1392
        %v1457 = vmul.f32 %v1297, %v1393
        %v1458 = vmul.f32 %v1298, %v1394
        %v1459 = vmul.f32 %v1299, %v1395
        %v1460 = vmul.f32 %v1300, %v1396
        %v1461 = vmul.f32 %v1301, %v1397
        %v1462 = vmul.f32 %v1302, %v1398
        %v1463 = vmul.f32 %v1303, %v1399
        %v1464 = vmul.f32 %v1304, %v1400
        %v1465 = vmul.f32 %v1305, %v1401
        %v1466 = vmul.f32 %v1306, %v1402
        %v1467 = vmul.f32 %v1307, %v1403
        %v1468 = vmul.f32 %v1308, %v1404
        %v1469 = vmul.f32 %v1309, %v1405
        %v1470 = vmul.f32 %v1310, %v1406
        %v1471 = vmul.f32 %v1311, %v1407
        %v1472 = vmul.f32 %v1312, %v1408
        %v1473 = vmul.f32 %v1313, %v1409
        %v1474 = vmul.f32 %v1314, %v1410
        %v1475 = vmul.f32 %v1315, %v1411
        %v1476 = vmul.f32 %v1316, %v1412
        %v1477 = vmul.f32 %v1317, %v1413
        %v1478 = vmul.f32 %v1318, %v1414
        %v1479 = vmul.f32 %v1319, %v1415
        %v1480 = vmul.f32 %v1320, %v1416
        %v1481 = vmul.f32 %v1321, %v1417
        %v1482 = vmul.f32 %v1322, %v1418
        %v1483 = vmul.f32 %v1323, %v1419
        %v1484 = vmul.f32 %v1324, %v1420
        %v1485 = vmul.f32 %v1325, %v1421
        %v1486 = vmul.f32 %v1326, %v1422
        %v1487 = vmul.f32 %v1327, %v1423
        %v1488 = vmul.f32 %v1328, %v1424
        %v1489 = vmul.f32 %v1329, %v1425
        %v1490 = vmul.f32 %v1330, %v1426
        %v1491 = vmul.f32 %v1331, %v1427
        %v1492 = vmul.f32 %v1332, %v1428
        %v1493 = vmul.f32 %v1333, %v1429
        %v1494 = vmul.f32 %v1334, %v1430
        %v1495 = vmul.f32 %v1335, %v1431
        %v1496 = vmul.f32 %v1336, %v1432
        %v1497 = vmul.f32 %v1337, %v1433
        %v1498 = vmul.f32 %v1338, %v1434
        %v1499 = vmul.f32 %v1339, %v1435
        %v1500 = vmul.f32 %v1340, %v1436
        %v1501 = vmul.f32 %v1341, %v1437
        %v1502 = vmul.f32 %v1342, %v1438
        %s1503 = sld [smem:[#allocation2]]
        %v1504 = vstv %s1503
        %v1505 = vmul.f32 %v1439, %v1504
        %v1506 = vmul.f32 %v1440, %v1504
        %v1507 = vmul.f32 %v1441, %v1504
        %v1508 = vmul.f32 %v1442, %v1504
        %v1509 = vmul.f32 %v1443, %v1504
        %v1510 = vmul.f32 %v1444, %v1504
        %v1511 = vmul.f32 %v1445, %v1504
        %v1512 = vmul.f32 %v1446, %v1504
        %v1513 = vmul.f32 %v1447, %v1504
        %v1514 = vmul.f32 %v1448, %v1504
        %v1515 = vmul.f32 %v1449, %v1504
        %v1516 = vmul.f32 %v1450, %v1504
        %v1517 = vmul.f32 %v1451, %v1504
        %v1518 = vmul.f32 %v1452, %v1504
        %v1519 = vmul.f32 %v1453, %v1504
        %v1520 = vmul.f32 %v1454, %v1504
        %v1521 = vmul.f32 %v1455, %v1504
        %v1522 = vmul.f32 %v1456, %v1504
        %v1523 = vmul.f32 %v1457, %v1504
        %v1524 = vmul.f32 %v1458, %v1504
        %v1525 = vmul.f32 %v1459, %v1504
        %v1526 = vmul.f32 %v1460, %v1504
        %v1527 = vmul.f32 %v1461, %v1504
        %v1528 = vmul.f32 %v1462, %v1504
        %v1529 = vmul.f32 %v1463, %v1504
        %v1530 = vmul.f32 %v1464, %v1504
        %v1531 = vmul.f32 %v1465, %v1504
        %v1532 = vmul.f32 %v1466, %v1504
        %v1533 = vmul.f32 %v1467, %v1504
        %v1534 = vmul.f32 %v1468, %v1504
        %v1535 = vmul.f32 %v1469, %v1504
        %v1536 = vmul.f32 %v1470, %v1504
        %v1537 = vmul.f32 %v1471, %v1504
        %v1538 = vmul.f32 %v1472, %v1504
        %v1539 = vmul.f32 %v1473, %v1504
        %v1540 = vmul.f32 %v1474, %v1504
        %v1541 = vmul.f32 %v1475, %v1504
        %v1542 = vmul.f32 %v1476, %v1504
        %v1543 = vmul.f32 %v1477, %v1504
        %v1544 = vmul.f32 %v1478, %v1504
        %v1545 = vmul.f32 %v1479, %v1504
        %v1546 = vmul.f32 %v1480, %v1504
        %v1547 = vmul.f32 %v1481, %v1504
        %v1548 = vmul.f32 %v1482, %v1504
        %v1549 = vmul.f32 %v1483, %v1504
        %v1550 = vmul.f32 %v1484, %v1504
        %v1551 = vmul.f32 %v1485, %v1504
        %v1552 = vmul.f32 %v1486, %v1504
        %v1553 = vmul.f32 %v1487, %v1504
        %v1554 = vmul.f32 %v1488, %v1504
        %v1555 = vmul.f32 %v1489, %v1504
        %v1556 = vmul.f32 %v1490, %v1504
        %v1557 = vmul.f32 %v1491, %v1504
        %v1558 = vmul.f32 %v1492, %v1504
        %v1559 = vmul.f32 %v1493, %v1504
        %v1560 = vmul.f32 %v1494, %v1504
        %v1561 = vmul.f32 %v1495, %v1504
        %v1562 = vmul.f32 %v1496, %v1504
        %v1563 = vmul.f32 %v1497, %v1504
        %v1564 = vmul.f32 %v1498, %v1504
        %v1565 = vmul.f32 %v1499, %v1504
        %v1566 = vmul.f32 %v1500, %v1504
        %v1567 = vmul.f32 %v1501, %v1504
        %v1568 = vmul.f32 %v1502, %v1504
        %v1569 = vld [vmem:[%s6] sm:$0xf]
        %v1570 = vld [vmem:[%s6 + $0x4] sm:$0xf]
        %v1571 = vld [vmem:[%s6 + $0x8] sm:$0xf]
        %v1572 = vld [vmem:[%s6 + $0xc] sm:$0xf]
        %v1573 = vld [vmem:[%s6 + $0x10] sm:$0xf]
        %v1574 = vld [vmem:[%s6 + $0x14] sm:$0xf]
        %v1575 = vld [vmem:[%s6 + $0x18] sm:$0xf]
        %v1576 = vld [vmem:[%s6 + $0x1c] sm:$0xf]
        %v1577 = vld [vmem:[%s6 + $0x20] sm:$0xf]
        %v1578 = vld [vmem:[%s6 + $0x24] sm:$0xf]
        %v1579 = vld [vmem:[%s6 + $0x28] sm:$0xf]
        %v1580 = vld [vmem:[%s6 + $0x2c] sm:$0xf]
        %v1581 = vld [vmem:[%s6 + $0x30] sm:$0xf]
        %v1582 = vld [vmem:[%s6 + $0x34] sm:$0xf]
        %v1583 = vld [vmem:[%s6 + $0x38] sm:$0xf]
        %v1584 = vld [vmem:[%s6 + $0x3c] sm:$0xf]
        %v1585 = vld [vmem:[%s6 + $0x40] sm:$0xf]
        %v1586 = vld [vmem:[%s6 + $0x44] sm:$0xf]
        %v1587 = vld [vmem:[%s6 + $0x48] sm:$0xf]
        %v1588 = vld [vmem:[%s6 + $0x4c] sm:$0xf]
        %v1589 = vld [vmem:[%s6 + $0x50] sm:$0xf]
        %v1590 = vld [vmem:[%s6 + $0x54] sm:$0xf]
        %v1591 = vld [vmem:[%s6 + $0x58] sm:$0xf]
        %v1592 = vld [vmem:[%s6 + $0x5c] sm:$0xf]
        %v1593 = vld [vmem:[%s6 + $0x60] sm:$0xf]
        %v1594 = vld [vmem:[%s6 + $0x64] sm:$0xf]
        %v1595 = vld [vmem:[%s6 + $0x68] sm:$0xf]
        %v1596 = vld [vmem:[%s6 + $0x6c] sm:$0xf]
        %v1597 = vld [vmem:[%s6 + $0x70] sm:$0xf]
        %v1598 = vld [vmem:[%s6 + $0x74] sm:$0xf]
        %v1599 = vld [vmem:[%s6 + $0x78] sm:$0xf]
        %v1600 = vld [vmem:[%s6 + $0x7c] sm:$0xf]
        %v1601 = vpack.c.bf16 %v1509, %v1505
        %v1602 = vpack.c.bf16 %v1510, %v1506
        %v1603 = vpack.c.bf16 %v1511, %v1507
        %v1604 = vpack.c.bf16 %v1512, %v1508
        %v1605 = vpack.c.bf16 %v1517, %v1513
        %v1606 = vpack.c.bf16 %v1518, %v1514
        %v1607 = vpack.c.bf16 %v1519, %v1515
        %v1608 = vpack.c.bf16 %v1520, %v1516
        %v1609 = vpack.c.bf16 %v1525, %v1521
        %v1610 = vpack.c.bf16 %v1526, %v1522
        %v1611 = vpack.c.bf16 %v1527, %v1523
        %v1612 = vpack.c.bf16 %v1528, %v1524
        %v1613 = vpack.c.bf16 %v1533, %v1529
        %v1614 = vpack.c.bf16 %v1534, %v1530
        %v1615 = vpack.c.bf16 %v1535, %v1531
        %v1616 = vpack.c.bf16 %v1536, %v1532
        %v1617 = vpack.c.bf16 %v1541, %v1537
        %v1618 = vpack.c.bf16 %v1542, %v1538
        %v1619 = vpack.c.bf16 %v1543, %v1539
        %v1620 = vpack.c.bf16 %v1544, %v1540
        %v1621 = vpack.c.bf16 %v1549, %v1545
        %v1622 = vpack.c.bf16 %v1550, %v1546
        %v1623 = vpack.c.bf16 %v1551, %v1547
        %v1624 = vpack.c.bf16 %v1552, %v1548
        %v1625 = vpack.c.bf16 %v1557, %v1553
        %v1626 = vpack.c.bf16 %v1558, %v1554
        %v1627 = vpack.c.bf16 %v1559, %v1555
        %v1628 = vpack.c.bf16 %v1560, %v1556
        %v1629 = vpack.c.bf16 %v1565, %v1561
        %v1630 = vpack.c.bf16 %v1566, %v1562
        %v1631 = vpack.c.bf16 %v1567, %v1563
        %v1632 = vpack.c.bf16 %v1568, %v1564
        %v1633 = vld [vmem:[%s7] sm:$0xff]
        %v1634 = vld [vmem:[%s7 + $0x8] sm:$0xff]
        %v1635 = vld [vmem:[%s7 + $0x10] sm:$0xff]
        %v1636 = vld [vmem:[%s7 + $0x18] sm:$0xff]
        %v1637 = vld [vmem:[%s7 + $0x20] sm:$0xff]
        %v1638 = vld [vmem:[%s7 + $0x28] sm:$0xff]
        %v1639 = vld [vmem:[%s7 + $0x30] sm:$0xff]
        %v1640 = vld [vmem:[%s7 + $0x38] sm:$0xff]
        %v1641 = vld [vmem:[%s7 + $0x40] sm:$0xff]
        %v1642 = vld [vmem:[%s7 + $0x48] sm:$0xff]
        %v1643 = vld [vmem:[%s7 + $0x50] sm:$0xff]
        %v1644 = vld [vmem:[%s7 + $0x58] sm:$0xff]
        %v1645 = vld [vmem:[%s7 + $0x60] sm:$0xff]
        %v1646 = vld [vmem:[%s7 + $0x68] sm:$0xff]
        %v1647 = vld [vmem:[%s7 + $0x70] sm:$0xff]
        %v1648 = vld [vmem:[%s7 + $0x78] sm:$0xff]
        %v1649 = vld [vmem:[%s7 + $0x80] sm:$0xff]
        %v1650 = vld [vmem:[%s7 + $0x88] sm:$0xff]
        %v1651 = vld [vmem:[%s7 + $0x90] sm:$0xff]
        %v1652 = vld [vmem:[%s7 + $0x98] sm:$0xff]
        %v1653 = vld [vmem:[%s7 + $0xa0] sm:$0xff]
        %v1654 = vld [vmem:[%s7 + $0xa8] sm:$0xff]
        %v1655 = vld [vmem:[%s7 + $0xb0] sm:$0xff]
        %v1656 = vld [vmem:[%s7 + $0xb8] sm:$0xff]
        %v1657 = vld [vmem:[%s7 + $0xc0] sm:$0xff]
        %v1658 = vld [vmem:[%s7 + $0xc8] sm:$0xff]
        %v1659 = vld [vmem:[%s7 + $0xd0] sm:$0xff]
        %v1660 = vld [vmem:[%s7 + $0xd8] sm:$0xff]
        %v1661 = vld [vmem:[%s7 + $0xe0] sm:$0xff]
        %v1662 = vld [vmem:[%s7 + $0xe8] sm:$0xff]
        %v1663 = vld [vmem:[%s7 + $0xf0] sm:$0xff]
        %v1664 = vld [vmem:[%s7 + $0xf8] sm:$0xff]
        %1666 = vset.pattern.permute.xlu0 0
        %1667 = vperm.xlu0 %1666, %v1633
        %v1668 = vpop.permute.xlu0 %1667
        %1671 = vset.pattern.permute.xlu0 0
        %1672 = vperm.xlu0 %1671, %v1634
        %v1673 = vpop.permute.xlu0 %1672
        %1676 = vset.pattern.permute.xlu0 0
        %1677 = vperm.xlu0 %1676, %v1635
        %v1678 = vpop.permute.xlu0 %1677
        %1681 = vset.pattern.permute.xlu0 0
        %1682 = vperm.xlu0 %1681, %v1636
        %v1683 = vpop.permute.xlu0 %1682
        %1686 = vset.pattern.permute.xlu0 0
        %1687 = vperm.xlu0 %1686, %v1637
        %v1688 = vpop.permute.xlu0 %1687
        %1691 = vset.pattern.permute.xlu0 0
        %1692 = vperm.xlu0 %1691, %v1638
        %v1693 = vpop.permute.xlu0 %1692
        %1696 = vset.pattern.permute.xlu0 0
        %1697 = vperm.xlu0 %1696, %v1639
        %v1698 = vpop.permute.xlu0 %1697
        %1701 = vset.pattern.permute.xlu0 0
        %1702 = vperm.xlu0 %1701, %v1640
        %v1703 = vpop.permute.xlu0 %1702
        %1706 = vset.pattern.permute.xlu0 0
        %1707 = vperm.xlu0 %1706, %v1641
        %v1708 = vpop.permute.xlu0 %1707
        %1711 = vset.pattern.permute.xlu0 0
        %1712 = vperm.xlu0 %1711, %v1642
        %v1713 = vpop.permute.xlu0 %1712
        %1716 = vset.pattern.permute.xlu0 0
        %1717 = vperm.xlu0 %1716, %v1643
        %v1718 = vpop.permute.xlu0 %1717
        %1721 = vset.pattern.permute.xlu0 0
        %1722 = vperm.xlu0 %1721, %v1644
        %v1723 = vpop.permute.xlu0 %1722
        %1726 = vset.pattern.permute.xlu0 0
        %1727 = vperm.xlu0 %1726, %v1645
        %v1728 = vpop.permute.xlu0 %1727
        %1731 = vset.pattern.permute.xlu0 0
        %1732 = vperm.xlu0 %1731, %v1646
        %v1733 = vpop.permute.xlu0 %1732
        %1736 = vset.pattern.permute.xlu0 0
        %1737 = vperm.xlu0 %1736, %v1647
        %v1738 = vpop.permute.xlu0 %1737
        %1741 = vset.pattern.permute.xlu0 0
        %1742 = vperm.xlu0 %1741, %v1648
        %v1743 = vpop.permute.xlu0 %1742
        %1746 = vset.pattern.permute.xlu0 0
        %1747 = vperm.xlu0 %1746, %v1649
        %v1748 = vpop.permute.xlu0 %1747
        %1751 = vset.pattern.permute.xlu0 0
        %1752 = vperm.xlu0 %1751, %v1650
        %v1753 = vpop.permute.xlu0 %1752
        %1756 = vset.pattern.permute.xlu0 0
        %1757 = vperm.xlu0 %1756, %v1651
        %v1758 = vpop.permute.xlu0 %1757
        %1761 = vset.pattern.permute.xlu0 0
        %1762 = vperm.xlu0 %1761, %v1652
        %v1763 = vpop.permute.xlu0 %1762
        %1766 = vset.pattern.permute.xlu0 0
        %1767 = vperm.xlu0 %1766, %v1653
        %v1768 = vpop.permute.xlu0 %1767
        %1771 = vset.pattern.permute.xlu0 0
        %1772 = vperm.xlu0 %1771, %v1654
        %v1773 = vpop.permute.xlu0 %1772
        %1776 = vset.pattern.permute.xlu0 0
        %1777 = vperm.xlu0 %1776, %v1655
        %v1778 = vpop.permute.xlu0 %1777
        %1781 = vset.pattern.permute.xlu0 0
        %1782 = vperm.xlu0 %1781, %v1656
        %v1783 = vpop.permute.xlu0 %1782
        %1786 = vset.pattern.permute.xlu0 0
        %1787 = vperm.xlu0 %1786, %v1657
        %v1788 = vpop.permute.xlu0 %1787
        %1791 = vset.pattern.permute.xlu0 0
        %1792 = vperm.xlu0 %1791, %v1658
        %v1793 = vpop.permute.xlu0 %1792
        %1796 = vset.pattern.permute.xlu0 0
        %1797 = vperm.xlu0 %1796, %v1659
        %v1798 = vpop.permute.xlu0 %1797
        %1801 = vset.pattern.permute.xlu0 0
        %1802 = vperm.xlu0 %1801, %v1660
        %v1803 = vpop.permute.xlu0 %1802
        %1806 = vset.pattern.permute.xlu0 0
        %1807 = vperm.xlu0 %1806, %v1661
        %v1808 = vpop.permute.xlu0 %1807
        %1811 = vset.pattern.permute.xlu0 0
        %1812 = vperm.xlu0 %1811, %v1662
        %v1813 = vpop.permute.xlu0 %1812
        %1816 = vset.pattern.permute.xlu0 0
        %1817 = vperm.xlu0 %1816, %v1663
        %v1818 = vpop.permute.xlu0 %1817
        %1821 = vset.pattern.permute.xlu0 0
        %1822 = vperm.xlu0 %1821, %v1664
        %v1823 = vpop.permute.xlu0 %1822
        %v1857 = vunpack.c.l.b16 %v1569
        %v1858 = vunpack.c.l.b16 %v1570
        %v1859 = vunpack.c.l.b16 %v1571
        %v1860 = vunpack.c.l.b16 %v1572
        %v1861 = vunpack.c.l.b16 %v1573
        %v1862 = vunpack.c.l.b16 %v1574
        %v1863 = vunpack.c.l.b16 %v1575
        %v1864 = vunpack.c.l.b16 %v1576
        %v1865 = vunpack.c.l.b16 %v1577
        %v1866 = vunpack.c.l.b16 %v1578
        %v1867 = vunpack.c.l.b16 %v1579
        %v1868 = vunpack.c.l.b16 %v1580
        %v1869 = vunpack.c.l.b16 %v1581
        %v1870 = vunpack.c.l.b16 %v1582
        %v1871 = vunpack.c.l.b16 %v1583
        %v1872 = vunpack.c.l.b16 %v1584
        %v1873 = vunpack.c.l.b16 %v1585
        %v1874 = vunpack.c.l.b16 %v1586
        %v1875 = vunpack.c.l.b16 %v1587
        %v1876 = vunpack.c.l.b16 %v1588
        %v1877 = vunpack.c.l.b16 %v1589
        %v1878 = vunpack.c.l.b16 %v1590
        %v1879 = vunpack.c.l.b16 %v1591
        %v1880 = vunpack.c.l.b16 %v1592
        %v1881 = vunpack.c.l.b16 %v1593
        %v1882 = vunpack.c.l.b16 %v1594
        %v1883 = vunpack.c.l.b16 %v1595
        %v1884 = vunpack.c.l.b16 %v1596
        %v1885 = vunpack.c.l.b16 %v1597
        %v1886 = vunpack.c.l.b16 %v1598
        %v1887 = vunpack.c.l.b16 %v1599
        %v1888 = vunpack.c.l.b16 %v1600
        %v1889 = vpack.c.b16 %v1858, %v1857
        %v1890 = vpack.c.b16 %v1860, %v1859
        %v1891 = vpack.c.b16 %v1862, %v1861
        %v1892 = vpack.c.b16 %v1864, %v1863
        %v1893 = vpack.c.b16 %v1866, %v1865
        %v1894 = vpack.c.b16 %v1868, %v1867
        %v1895 = vpack.c.b16 %v1870, %v1869
        %v1896 = vpack.c.b16 %v1872, %v1871
        %v1897 = vpack.c.b16 %v1874, %v1873
        %v1898 = vpack.c.b16 %v1876, %v1875
        %v1899 = vpack.c.b16 %v1878, %v1877
        %v1900 = vpack.c.b16 %v1880, %v1879
        %v1901 = vpack.c.b16 %v1882, %v1881
        %v1902 = vpack.c.b16 %v1884, %v1883
        %v1903 = vpack.c.b16 %v1886, %v1885
        %v1904 = vpack.c.b16 %v1888, %v1887
        %1921 = vmatpush.bf16.msra.mxu0 %v1629
        %1922 = vmatpush.bf16.msra.mxu0 %v1625
        %1923 = vmatpush.bf16.msra.mxu0 %v1621
        %1924 = vmatpush.bf16.msra.mxu0 %v1617
        %1925 = vmatpush.bf16.msra.mxu0 %v1613
        %1926 = vmatpush.bf16.msra.mxu0 %v1609
        %1927 = vmatpush.bf16.msra.mxu0 %v1605
        %1928 = vmatpush.bf16.msra.mxu0 %v1601
        %1929 = vmatmul.bf16.gmra.mxu0 %v1889
        %v1930 = vpop.f32.mrf.mxu0
        %v1931 = vadd.f32 %v1668, %v1930
        %v1932 = vpop.f32.mrf.mxu0
        %v1933 = vadd.f32 %v1673, %v1932
        %1934 = vmatmul.bf16.gmra.mxu0 %v1890
        %v1935 = vpop.f32.mrf.mxu0
        %v1936 = vadd.f32 %v1678, %v1935
        %v1937 = vpop.f32.mrf.mxu0
        %v1938 = vadd.f32 %v1683, %v1937
        %1939 = vmatmul.bf16.gmra.mxu0 %v1891
        %v1940 = vpop.f32.mrf.mxu0
        %v1941 = vadd.f32 %v1688, %v1940
        %v1942 = vpop.f32.mrf.mxu0
        %v1943 = vadd.f32 %v1693, %v1942
        %1944 = vmatmul.bf16.gmra.mxu0 %v1892
        %v1945 = vpop.f32.mrf.mxu0
        %v1946 = vadd.f32 %v1698, %v1945
        %v1947 = vpop.f32.mrf.mxu0
        %v1948 = vadd.f32 %v1703, %v1947
        %1949 = vmatmul.bf16.gmra.mxu0 %v1893
        %v1950 = vpop.f32.mrf.mxu0
        %v1951 = vadd.f32 %v1708, %v1950
        %v1952 = vpop.f32.mrf.mxu0
        %v1953 = vadd.f32 %v1713, %v1952
        %1954 = vmatmul.bf16.gmra.mxu0 %v1894
        %v1955 = vpop.f32.mrf.mxu0
        %v1956 = vadd.f32 %v1718, %v1955
        %v1957 = vpop.f32.mrf.mxu0
        %v1958 = vadd.f32 %v1723, %v1957
        %1959 = vmatmul.bf16.gmra.mxu0 %v1895
        %v1960 = vpop.f32.mrf.mxu0
        %v1961 = vadd.f32 %v1728, %v1960
        %v1962 = vpop.f32.mrf.mxu0
        %v1963 = vadd.f32 %v1733, %v1962
        %1964 = vmatmul.bf16.gmra.mxu0 %v1896
        %v1965 = vpop.f32.mrf.mxu0
        %v1966 = vadd.f32 %v1738, %v1965
        %v1967 = vpop.f32.mrf.mxu0
        %v1968 = vadd.f32 %v1743, %v1967
        %1969 = vmatmul.bf16.gmra.mxu0 %v1897
        %v1970 = vpop.f32.mrf.mxu0
        %v1971 = vadd.f32 %v1748, %v1970
        %v1972 = vpop.f32.mrf.mxu0
        %v1973 = vadd.f32 %v1753, %v1972
        %1974 = vmatmul.bf16.gmra.mxu0 %v1898
        %v1975 = vpop.f32.mrf.mxu0
        %v1976 = vadd.f32 %v1758, %v1975
        %v1977 = vpop.f32.mrf.mxu0
        %v1978 = vadd.f32 %v1763, %v1977
        %1979 = vmatmul.bf16.gmra.mxu0 %v1899
        %v1980 = vpop.f32.mrf.mxu0
        %v1981 = vadd.f32 %v1768, %v1980
        %v1982 = vpop.f32.mrf.mxu0
        %v1983 = vadd.f32 %v1773, %v1982
        %1984 = vmatmul.bf16.gmra.mxu0 %v1900
        %v1985 = vpop.f32.mrf.mxu0
        %v1986 = vadd.f32 %v1778, %v1985
        %v1987 = vpop.f32.mrf.mxu0
        %v1988 = vadd.f32 %v1783, %v1987
        %1989 = vmatmul.bf16.gmra.mxu0 %v1901
        %v1990 = vpop.f32.mrf.mxu0
        %v1991 = vadd.f32 %v1788, %v1990
        %v1992 = vpop.f32.mrf.mxu0
        %v1993 = vadd.f32 %v1793, %v1992
        %1994 = vmatmul.bf16.gmra.mxu0 %v1902
        %v1995 = vpop.f32.mrf.mxu0
        %v1996 = vadd.f32 %v1798, %v1995
        %v1997 = vpop.f32.mrf.mxu0
        %v1998 = vadd.f32 %v1803, %v1997
        %1999 = vmatmul.bf16.gmra.mxu0 %v1903
        %v2000 = vpop.f32.mrf.mxu0
        %v2001 = vadd.f32 %v1808, %v2000
        %v2002 = vpop.f32.mrf.mxu0
        %v2003 = vadd.f32 %v1813, %v2002
        %2004 = vmatmul.bf16.gmra.mxu0 %v1904
        %v2005 = vpop.f32.mrf.mxu0
        %v2006 = vadd.f32 %v1818, %v2005
        %v2007 = vpop.f32.mrf.mxu0
        %v2008 = vadd.f32 %v1823, %v2007
        %2009 = vdwg.mxu0
        %2010 = vmatpush.bf16.msra.mxu0 %v1630
        %2011 = vmatpush.bf16.msra.mxu0 %v1626
        %2012 = vmatpush.bf16.msra.mxu0 %v1622
        %2013 = vmatpush.bf16.msra.mxu0 %v1618
        %2014 = vmatpush.bf16.msra.mxu0 %v1614
        %2015 = vmatpush.bf16.msra.mxu0 %v1610
        %2016 = vmatpush.bf16.msra.mxu0 %v1606
        %2017 = vmatpush.bf16.msra.mxu0 %v1602
        %2018 = vmatmul.bf16.gmra.mxu0 %v1889
        %v2019 = vpop.f32.mrf.mxu0
        %v2020 = vadd.f32 %v1668, %v2019
        %v2021 = vpop.f32.mrf.mxu0
        %v2022 = vadd.f32 %v1673, %v2021
        %2023 = vmatmul.bf16.gmra.mxu0 %v1890
        %v2024 = vpop.f32.mrf.mxu0
        %v2025 = vadd.f32 %v1678, %v2024
        %v2026 = vpop.f32.mrf.mxu0
        %v2027 = vadd.f32 %v1683, %v2026
        %2028 = vmatmul.bf16.gmra.mxu0 %v1891
        %v2029 = vpop.f32.mrf.mxu0
        %v2030 = vadd.f32 %v1688, %v2029
        %v2031 = vpop.f32.mrf.mxu0
        %v2032 = vadd.f32 %v1693, %v2031
        %2033 = vmatmul.bf16.gmra.mxu0 %v1892
        %v2034 = vpop.f32.mrf.mxu0
        %v2035 = vadd.f32 %v1698, %v2034
        %v2036 = vpop.f32.mrf.mxu0
        %v2037 = vadd.f32 %v1703, %v2036
        %2038 = vmatmul.bf16.gmra.mxu0 %v1893
        %v2039 = vpop.f32.mrf.mxu0
        %v2040 = vadd.f32 %v1708, %v2039
        %v2041 = vpop.f32.mrf.mxu0
        %v2042 = vadd.f32 %v1713, %v2041
        %2043 = vmatmul.bf16.gmra.mxu0 %v1894
        %v2044 = vpop.f32.mrf.mxu0
        %v2045 = vadd.f32 %v1718, %v2044
        %v2046 = vpop.f32.mrf.mxu0
        %v2047 = vadd.f32 %v1723, %v2046
        %2048 = vmatmul.bf16.gmra.mxu0 %v1895
        %v2049 = vpop.f32.mrf.mxu0
        %v2050 = vadd.f32 %v1728, %v2049
        %v2051 = vpop.f32.mrf.mxu0
        %v2052 = vadd.f32 %v1733, %v2051
        %2053 = vmatmul.bf16.gmra.mxu0 %v1896
        %v2054 = vpop.f32.mrf.mxu0
        %v2055 = vadd.f32 %v1738, %v2054
        %v2056 = vpop.f32.mrf.mxu0
        %v2057 = vadd.f32 %v1743, %v2056
        %2058 = vmatmul.bf16.gmra.mxu0 %v1897
        %v2059 = vpop.f32.mrf.mxu0
        %v2060 = vadd.f32 %v1748, %v2059
        %v2061 = vpop.f32.mrf.mxu0
        %v2062 = vadd.f32 %v1753, %v2061
        %2063 = vmatmul.bf16.gmra.mxu0 %v1898
        %v2064 = vpop.f32.mrf.mxu0
        %v2065 = vadd.f32 %v1758, %v2064
        %v2066 = vpop.f32.mrf.mxu0
        %v2067 = vadd.f32 %v1763, %v2066
        %2068 = vmatmul.bf16.gmra.mxu0 %v1899
        %v2069 = vpop.f32.mrf.mxu0
        %v2070 = vadd.f32 %v1768, %v2069
        %v2071 = vpop.f32.mrf.mxu0
        %v2072 = vadd.f32 %v1773, %v2071
        %2073 = vmatmul.bf16.gmra.mxu0 %v1900
        %v2074 = vpop.f32.mrf.mxu0
        %v2075 = vadd.f32 %v1778, %v2074
        %v2076 = vpop.f32.mrf.mxu0
        %v2077 = vadd.f32 %v1783, %v2076
        %2078 = vmatmul.bf16.gmra.mxu0 %v1901
        %v2079 = vpop.f32.mrf.mxu0
        %v2080 = vadd.f32 %v1788, %v2079
        %v2081 = vpop.f32.mrf.mxu0
        %v2082 = vadd.f32 %v1793, %v2081
        %2083 = vmatmul.bf16.gmra.mxu0 %v1902
        %v2084 = vpop.f32.mrf.mxu0
        %v2085 = vadd.f32 %v1798, %v2084
        %v2086 = vpop.f32.mrf.mxu0
        %v2087 = vadd.f32 %v1803, %v2086
        %2088 = vmatmul.bf16.gmra.mxu0 %v1903
        %v2089 = vpop.f32.mrf.mxu0
        %v2090 = vadd.f32 %v1808, %v2089
        %v2091 = vpop.f32.mrf.mxu0
        %v2092 = vadd.f32 %v1813, %v2091
        %2093 = vmatmul.bf16.gmra.mxu0 %v1904
        %v2094 = vpop.f32.mrf.mxu0
        %v2095 = vadd.f32 %v1818, %v2094
        %v2096 = vpop.f32.mrf.mxu0
        %v2097 = vadd.f32 %v1823, %v2096
        %2098 = vdwg.mxu0
        %2099 = vmatpush.bf16.msra.mxu0 %v1631
        %2100 = vmatpush.bf16.msra.mxu0 %v1627
        %2101 = vmatpush.bf16.msra.mxu0 %v1623
        %2102 = vmatpush.bf16.msra.mxu0 %v1619
        %2103 = vmatpush.bf16.msra.mxu0 %v1615
        %2104 = vmatpush.bf16.msra.mxu0 %v1611
        %2105 = vmatpush.bf16.msra.mxu0 %v1607
        %2106 = vmatpush.bf16.msra.mxu0 %v1603
        %2107 = vmatmul.bf16.gmra.mxu0 %v1889
        %v2108 = vpop.f32.mrf.mxu0
        %v2109 = vadd.f32 %v1668, %v2108
        %v2110 = vpop.f32.mrf.mxu0
        %v2111 = vadd.f32 %v1673, %v2110
        %2112 = vmatmul.bf16.gmra.mxu0 %v1890
        %v2113 = vpop.f32.mrf.mxu0
        %v2114 = vadd.f32 %v1678, %v2113
        %v2115 = vpop.f32.mrf.mxu0
        %v2116 = vadd.f32 %v1683, %v2115
        %2117 = vmatmul.bf16.gmra.mxu0 %v1891
        %v2118 = vpop.f32.mrf.mxu0
        %v2119 = vadd.f32 %v1688, %v2118
        %v2120 = vpop.f32.mrf.mxu0
        %v2121 = vadd.f32 %v1693, %v2120
        %2122 = vmatmul.bf16.gmra.mxu0 %v1892
        %v2123 = vpop.f32.mrf.mxu0
        %v2124 = vadd.f32 %v1698, %v2123
        %v2125 = vpop.f32.mrf.mxu0
        %v2126 = vadd.f32 %v1703, %v2125
        %2127 = vmatmul.bf16.gmra.mxu0 %v1893
        %v2128 = vpop.f32.mrf.mxu0
        %v2129 = vadd.f32 %v1708, %v2128
        %v2130 = vpop.f32.mrf.mxu0
        %v2131 = vadd.f32 %v1713, %v2130
        %2132 = vmatmul.bf16.gmra.mxu0 %v1894
        %v2133 = vpop.f32.mrf.mxu0
        %v2134 = vadd.f32 %v1718, %v2133
        %v2135 = vpop.f32.mrf.mxu0
        %v2136 = vadd.f32 %v1723, %v2135
        %2137 = vmatmul.bf16.gmra.mxu0 %v1895
        %v2138 = vpop.f32.mrf.mxu0
        %v2139 = vadd.f32 %v1728, %v2138
        %v2140 = vpop.f32.mrf.mxu0
        %v2141 = vadd.f32 %v1733, %v2140
        %2142 = vmatmul.bf16.gmra.mxu0 %v1896
        %v2143 = vpop.f32.mrf.mxu0
        %v2144 = vadd.f32 %v1738, %v2143
        %v2145 = vpop.f32.mrf.mxu0
        %v2146 = vadd.f32 %v1743, %v2145
        %2147 = vmatmul.bf16.gmra.mxu0 %v1897
        %v2148 = vpop.f32.mrf.mxu0
        %v2149 = vadd.f32 %v1748, %v2148
        %v2150 = vpop.f32.mrf.mxu0
        %v2151 = vadd.f32 %v1753, %v2150
        %2152 = vmatmul.bf16.gmra.mxu0 %v1898
        %v2153 = vpop.f32.mrf.mxu0
        %v2154 = vadd.f32 %v1758, %v2153
        %v2155 = vpop.f32.mrf.mxu0
        %v2156 = vadd.f32 %v1763, %v2155
        %2157 = vmatmul.bf16.gmra.mxu0 %v1899
        %v2158 = vpop.f32.mrf.mxu0
        %v2159 = vadd.f32 %v1768, %v2158
        %v2160 = vpop.f32.mrf.mxu0
        %v2161 = vadd.f32 %v1773, %v2160
        %2162 = vmatmul.bf16.gmra.mxu0 %v1900
        %v2163 = vpop.f32.mrf.mxu0
        %v2164 = vadd.f32 %v1778, %v2163
        %v2165 = vpop.f32.mrf.mxu0
        %v2166 = vadd.f32 %v1783, %v2165
        %2167 = vmatmul.bf16.gmra.mxu0 %v1901
        %v2168 = vpop.f32.mrf.mxu0
        %v2169 = vadd.f32 %v1788, %v2168
        %v2170 = vpop.f32.mrf.mxu0
        %v2171 = vadd.f32 %v1793, %v2170
        %2172 = vmatmul.bf16.gmra.mxu0 %v1902
        %v2173 = vpop.f32.mrf.mxu0
        %v2174 = vadd.f32 %v1798, %v2173
        %v2175 = vpop.f32.mrf.mxu0
        %v2176 = vadd.f32 %v1803, %v2175
        %2177 = vmatmul.bf16.gmra.mxu0 %v1903
        %v2178 = vpop.f32.mrf.mxu0
        %v2179 = vadd.f32 %v1808, %v2178
        %v2180 = vpop.f32.mrf.mxu0
        %v2181 = vadd.f32 %v1813, %v2180
        %2182 = vmatmul.bf16.gmra.mxu0 %v1904
        %v2183 = vpop.f32.mrf.mxu0
        %v2184 = vadd.f32 %v1818, %v2183
        %v2185 = vpop.f32.mrf.mxu0
        %v2186 = vadd.f32 %v1823, %v2185
        %2187 = vdwg.mxu0
        %2188 = vmatpush.bf16.msra.mxu0 %v1632
        %2189 = vmatpush.bf16.msra.mxu0 %v1628
        %2190 = vmatpush.bf16.msra.mxu0 %v1624
        %2191 = vmatpush.bf16.msra.mxu0 %v1620
        %2192 = vmatpush.bf16.msra.mxu0 %v1616
        %2193 = vmatpush.bf16.msra.mxu0 %v1612
        %2194 = vmatpush.bf16.msra.mxu0 %v1608
        %2195 = vmatpush.bf16.msra.mxu0 %v1604
        %2196 = vmatmul.bf16.gmra.mxu0 %v1889
        %v2197 = vpop.f32.mrf.mxu0
        %v2198 = vadd.f32 %v1668, %v2197
        %v2199 = vpop.f32.mrf.mxu0
        %v2200 = vadd.f32 %v1673, %v2199
        %2201 = vmatmul.bf16.gmra.mxu0 %v1890
        %v2202 = vpop.f32.mrf.mxu0
        %v2203 = vadd.f32 %v1678, %v2202
        %v2204 = vpop.f32.mrf.mxu0
        %v2205 = vadd.f32 %v1683, %v2204
        %2206 = vmatmul.bf16.gmra.mxu0 %v1891
        %v2207 = vpop.f32.mrf.mxu0
        %v2208 = vadd.f32 %v1688, %v2207
        %v2209 = vpop.f32.mrf.mxu0
        %v2210 = vadd.f32 %v1693, %v2209
        %2211 = vmatmul.bf16.gmra.mxu0 %v1892
        %v2212 = vpop.f32.mrf.mxu0
        %v2213 = vadd.f32 %v1698, %v2212
        %v2214 = vpop.f32.mrf.mxu0
        %v2215 = vadd.f32 %v1703, %v2214
        %2216 = vmatmul.bf16.gmra.mxu0 %v1893
        %v2217 = vpop.f32.mrf.mxu0
        %v2218 = vadd.f32 %v1708, %v2217
        %v2219 = vpop.f32.mrf.mxu0
        %v2220 = vadd.f32 %v1713, %v2219
        %2221 = vmatmul.bf16.gmra.mxu0 %v1894
        %v2222 = vpop.f32.mrf.mxu0
        %v2223 = vadd.f32 %v1718, %v2222
        %v2224 = vpop.f32.mrf.mxu0
        %v2225 = vadd.f32 %v1723, %v2224
        %2226 = vmatmul.bf16.gmra.mxu0 %v1895
        %v2227 = vpop.f32.mrf.mxu0
        %v2228 = vadd.f32 %v1728, %v2227
        %v2229 = vpop.f32.mrf.mxu0
        %v2230 = vadd.f32 %v1733, %v2229
        %2231 = vmatmul.bf16.gmra.mxu0 %v1896
        %v2232 = vpop.f32.mrf.mxu0
        %v2233 = vadd.f32 %v1738, %v2232
        %v2234 = vpop.f32.mrf.mxu0
        %v2235 = vadd.f32 %v1743, %v2234
        %2236 = vmatmul.bf16.gmra.mxu0 %v1897
        %v2237 = vpop.f32.mrf.mxu0
        %v2238 = vadd.f32 %v1748, %v2237
        %v2239 = vpop.f32.mrf.mxu0
        %v2240 = vadd.f32 %v1753, %v2239
        %2241 = vmatmul.bf16.gmra.mxu0 %v1898
        %v2242 = vpop.f32.mrf.mxu0
        %v2243 = vadd.f32 %v1758, %v2242
        %v2244 = vpop.f32.mrf.mxu0
        %v2245 = vadd.f32 %v1763, %v2244
        %2246 = vmatmul.bf16.gmra.mxu0 %v1899
        %v2247 = vpop.f32.mrf.mxu0
        %v2248 = vadd.f32 %v1768, %v2247
        %v2249 = vpop.f32.mrf.mxu0
        %v2250 = vadd.f32 %v1773, %v2249
        %2251 = vmatmul.bf16.gmra.mxu0 %v1900
        %v2252 = vpop.f32.mrf.mxu0
        %v2253 = vadd.f32 %v1778, %v2252
        %v2254 = vpop.f32.mrf.mxu0
        %v2255 = vadd.f32 %v1783, %v2254
        %2256 = vmatmul.bf16.gmra.mxu0 %v1901
        %v2257 = vpop.f32.mrf.mxu0
        %v2258 = vadd.f32 %v1788, %v2257
        %v2259 = vpop.f32.mrf.mxu0
        %v2260 = vadd.f32 %v1793, %v2259
        %2261 = vmatmul.bf16.gmra.mxu0 %v1902
        %v2262 = vpop.f32.mrf.mxu0
        %v2263 = vadd.f32 %v1798, %v2262
        %v2264 = vpop.f32.mrf.mxu0
        %v2265 = vadd.f32 %v1803, %v2264
        %2266 = vmatmul.bf16.gmra.mxu0 %v1903
        %v2267 = vpop.f32.mrf.mxu0
        %v2268 = vadd.f32 %v1808, %v2267
        %v2269 = vpop.f32.mrf.mxu0
        %v2270 = vadd.f32 %v1813, %v2269
        %2271 = vmatmul.bf16.gmra.mxu0 %v1904
        %v2272 = vpop.f32.mrf.mxu0
        %v2273 = vadd.f32 %v1818, %v2272
        %v2274 = vpop.f32.mrf.mxu0
        %v2275 = vadd.f32 %v1823, %v2274
        %2276 = vdwg.mxu0
        %v2277 = vxor.u32 %v1931, 2147483648
        %v2278 = vxor.u32 %v2020, 2147483648
        %v2279 = vxor.u32 %v2109, 2147483648
        %v2280 = vxor.u32 %v2198, 2147483648
        %v2281 = vxor.u32 %v1933, 2147483648
        %v2282 = vxor.u32 %v2022, 2147483648
        %v2283 = vxor.u32 %v2111, 2147483648
        %v2284 = vxor.u32 %v2200, 2147483648
        %v2285 = vxor.u32 %v1936, 2147483648
        %v2286 = vxor.u32 %v2025, 2147483648
        %v2287 = vxor.u32 %v2114, 2147483648
        %v2288 = vxor.u32 %v2203, 2147483648
        %v2289 = vxor.u32 %v1938, 2147483648
        %v2290 = vxor.u32 %v2027, 2147483648
        %v2291 = vxor.u32 %v2116, 2147483648
        %v2292 = vxor.u32 %v2205, 2147483648
        %v2293 = vxor.u32 %v1941, 2147483648
        %v2294 = vxor.u32 %v2030, 2147483648
        %v2295 = vxor.u32 %v2119, 2147483648
        %v2296 = vxor.u32 %v2208, 2147483648
        %v2297 = vxor.u32 %v1943, 2147483648
        %v2298 = vxor.u32 %v2032, 2147483648
        %v2299 = vxor.u32 %v2121, 2147483648
        %v2300 = vxor.u32 %v2210, 2147483648
        %v2301 = vxor.u32 %v1946, 2147483648
        %v2302 = vxor.u32 %v2035, 2147483648
        %v2303 = vxor.u32 %v2124, 2147483648
        %v2304 = vxor.u32 %v2213, 2147483648
        %v2305 = vxor.u32 %v1948, 2147483648
        %v2306 = vxor.u32 %v2037, 2147483648
        %v2307 = vxor.u32 %v2126, 2147483648
        %v2308 = vxor.u32 %v2215, 2147483648
        %v2309 = vxor.u32 %v1951, 2147483648
        %v2310 = vxor.u32 %v2040, 2147483648
        %v2311 = vxor.u32 %v2129, 2147483648
        %v2312 = vxor.u32 %v2218, 2147483648
        %v2313 = vxor.u32 %v1953, 2147483648
        %v2314 = vxor.u32 %v2042, 2147483648
        %v2315 = vxor.u32 %v2131, 2147483648
        %v2316 = vxor.u32 %v2220, 2147483648
        %v2317 = vxor.u32 %v1956, 2147483648
        %v2318 = vxor.u32 %v2045, 2147483648
        %v2319 = vxor.u32 %v2134, 2147483648
        %v2320 = vxor.u32 %v2223, 2147483648
        %v2321 = vxor.u32 %v1958, 2147483648
        %v2322 = vxor.u32 %v2047, 2147483648
        %v2323 = vxor.u32 %v2136, 2147483648
        %v2324 = vxor.u32 %v2225, 2147483648
        %v2325 = vxor.u32 %v1961, 2147483648
        %v2326 = vxor.u32 %v2050, 2147483648
        %v2327 = vxor.u32 %v2139, 2147483648
        %v2328 = vxor.u32 %v2228, 2147483648
        %v2329 = vxor.u32 %v1963, 2147483648
        %v2330 = vxor.u32 %v2052, 2147483648
        %v2331 = vxor.u32 %v2141, 2147483648
        %v2332 = vxor.u32 %v2230, 2147483648
        %v2333 = vxor.u32 %v1966, 2147483648
        %v2334 = vxor.u32 %v2055, 2147483648
        %v2335 = vxor.u32 %v2144, 2147483648
        %v2336 = vxor.u32 %v2233, 2147483648
        %v2337 = vxor.u32 %v1968, 2147483648
        %v2338 = vxor.u32 %v2057, 2147483648
        %v2339 = vxor.u32 %v2146, 2147483648
        %v2340 = vxor.u32 %v2235, 2147483648
        %v2341 = vxor.u32 %v1971, 2147483648
        %v2342 = vxor.u32 %v2060, 2147483648
        %v2343 = vxor.u32 %v2149, 2147483648
        %v2344 = vxor.u32 %v2238, 2147483648
        %v2345 = vxor.u32 %v1973, 2147483648
        %v2346 = vxor.u32 %v2062, 2147483648
        %v2347 = vxor.u32 %v2151, 2147483648
        %v2348 = vxor.u32 %v2240, 2147483648
        %v2349 = vxor.u32 %v1976, 2147483648
        %v2350 = vxor.u32 %v2065, 2147483648
        %v2351 = vxor.u32 %v2154, 2147483648
        %v2352 = vxor.u32 %v2243, 2147483648
        %v2353 = vxor.u32 %v1978, 2147483648
        %v2354 = vxor.u32 %v2067, 2147483648
        %v2355 = vxor.u32 %v2156, 2147483648
        %v2356 = vxor.u32 %v2245, 2147483648
        %v2357 = vxor.u32 %v1981, 2147483648
        %v2358 = vxor.u32 %v2070, 2147483648
        %v2359 = vxor.u32 %v2159, 2147483648
        %v2360 = vxor.u32 %v2248, 2147483648
        %v2361 = vxor.u32 %v1983, 2147483648
        %v2362 = vxor.u32 %v2072, 2147483648
        %v2363 = vxor.u32 %v2161, 2147483648
        %v2364 = vxor.u32 %v2250, 2147483648
        %v2365 = vxor.u32 %v1986, 2147483648
        %v2366 = vxor.u32 %v2075, 2147483648
        %v2367 = vxor.u32 %v2164, 2147483648
        %v2368 = vxor.u32 %v2253, 2147483648
        %v2369 = vxor.u32 %v1988, 2147483648
        %v2370 = vxor.u32 %v2077, 2147483648
        %v2371 = vxor.u32 %v2166, 2147483648
        %v2372 = vxor.u32 %v2255, 2147483648
        %v2373 = vxor.u32 %v1991, 2147483648
        %v2374 = vxor.u32 %v2080, 2147483648
        %v2375 = vxor.u32 %v2169, 2147483648
        %v2376 = vxor.u32 %v2258, 2147483648
        %v2377 = vxor.u32 %v1993, 2147483648
        %v2378 = vxor.u32 %v2082, 2147483648
        %v2379 = vxor.u32 %v2171, 2147483648
        %v2380 = vxor.u32 %v2260, 2147483648
        %v2381 = vxor.u32 %v1996, 2147483648
        %v2382 = vxor.u32 %v2085, 2147483648
        %v2383 = vxor.u32 %v2174, 2147483648
        %v2384 = vxor.u32 %v2263, 2147483648
        %v2385 = vxor.u32 %v1998, 2147483648
        %v2386 = vxor.u32 %v2087, 2147483648
        %v2387 = vxor.u32 %v2176, 2147483648
        %v2388 = vxor.u32 %v2265, 2147483648
        %v2389 = vxor.u32 %v2001, 2147483648
        %v2390 = vxor.u32 %v2090, 2147483648
        %v2391 = vxor.u32 %v2179, 2147483648
        %v2392 = vxor.u32 %v2268, 2147483648
        %v2393 = vxor.u32 %v2003, 2147483648
        %v2394 = vxor.u32 %v2092, 2147483648
        %v2395 = vxor.u32 %v2181, 2147483648
        %v2396 = vxor.u32 %v2270, 2147483648
        %v2397 = vxor.u32 %v2006, 2147483648
        %v2398 = vxor.u32 %v2095, 2147483648
        %v2399 = vxor.u32 %v2184, 2147483648
        %v2400 = vxor.u32 %v2273, 2147483648
        %v2401 = vxor.u32 %v2008, 2147483648
        %v2402 = vxor.u32 %v2097, 2147483648
        %v2403 = vxor.u32 %v2186, 2147483648
        %v2404 = vxor.u32 %v2275, 2147483648
        %v2405 = vmul.f32 %v2277, 1.442695
        %v2406 = vpow.pop %v2405
        %v2407 = vmul.f32 %v2278, 1.442695
        %v2408 = vpow.pop %v2407
        %v2409 = vmul.f32 %v2279, 1.442695
        %v2410 = vpow.pop %v2409
        %v2411 = vmul.f32 %v2280, 1.442695
        %v2412 = vpow.pop %v2411
        %v2413 = vmul.f32 %v2281, 1.442695
        %v2414 = vpow.pop %v2413
        %v2415 = vmul.f32 %v2282, 1.442695
        %v2416 = vpow.pop %v2415
        %v2417 = vmul.f32 %v2283, 1.442695
        %v2418 = vpow.pop %v2417
        %v2419 = vmul.f32 %v2284, 1.442695
        %v2420 = vpow.pop %v2419
        %v2421 = vmul.f32 %v2285, 1.442695
        %v2422 = vpow.pop %v2421
        %v2423 = vmul.f32 %v2286, 1.442695
        %v2424 = vpow.pop %v2423
        %v2425 = vmul.f32 %v2287, 1.442695
        %v2426 = vpow.pop %v2425
        %v2427 = vmul.f32 %v2288, 1.442695
        %v2428 = vpow.pop %v2427
        %v2429 = vmul.f32 %v2289, 1.442695
        %v2430 = vpow.pop %v2429
        %v2431 = vmul.f32 %v2290, 1.442695
        %v2432 = vpow.pop %v2431
        %v2433 = vmul.f32 %v2291, 1.442695
        %v2434 = vpow.pop %v2433
        %v2435 = vmul.f32 %v2292, 1.442695
        %v2436 = vpow.pop %v2435
        %v2437 = vmul.f32 %v2293, 1.442695
        %v2438 = vpow.pop %v2437
        %v2439 = vmul.f32 %v2294, 1.442695
        %v2440 = vpow.pop %v2439
        %v2441 = vmul.f32 %v2295, 1.442695
        %v2442 = vpow.pop %v2441
        %v2443 = vmul.f32 %v2296, 1.442695
        %v2444 = vpow.pop %v2443
        %v2445 = vmul.f32 %v2297, 1.442695
        %v2446 = vpow.pop %v2445
        %v2447 = vmul.f32 %v2298, 1.442695
        %v2448 = vpow.pop %v2447
        %v2449 = vmul.f32 %v2299, 1.442695
        %v2450 = vpow.pop %v2449
        %v2451 = vmul.f32 %v2300, 1.442695
        %v2452 = vpow.pop %v2451
        %v2453 = vmul.f32 %v2301, 1.442695
        %v2454 = vpow.pop %v2453
        %v2455 = vmul.f32 %v2302, 1.442695
        %v2456 = vpow.pop %v2455
        %v2457 = vmul.f32 %v2303, 1.442695
        %v2458 = vpow.pop %v2457
        %v2459 = vmul.f32 %v2304, 1.442695
        %v2460 = vpow.pop %v2459
        %v2461 = vmul.f32 %v2305, 1.442695
        %v2462 = vpow.pop %v2461
        %v2463 = vmul.f32 %v2306, 1.442695
        %v2464 = vpow.pop %v2463
        %v2465 = vmul.f32 %v2307, 1.442695
        %v2466 = vpow.pop %v2465
        %v2467 = vmul.f32 %v2308, 1.442695
        %v2468 = vpow.pop %v2467
        %v2469 = vmul.f32 %v2309, 1.442695
        %v2470 = vpow.pop %v2469
        %v2471 = vmul.f32 %v2310, 1.442695
        %v2472 = vpow.pop %v2471
        %v2473 = vmul.f32 %v2311, 1.442695
        %v2474 = vpow.pop %v2473
        %v2475 = vmul.f32 %v2312, 1.442695
        %v2476 = vpow.pop %v2475
        %v2477 = vmul.f32 %v2313, 1.442695
        %v2478 = vpow.pop %v2477
        %v2479 = vmul.f32 %v2314, 1.442695
        %v2480 = vpow.pop %v2479
        %v2481 = vmul.f32 %v2315, 1.442695
        %v2482 = vpow.pop %v2481
        %v2483 = vmul.f32 %v2316, 1.442695
        %v2484 = vpow.pop %v2483
        %v2485 = vmul.f32 %v2317, 1.442695
        %v2486 = vpow.pop %v2485
        %v2487 = vmul.f32 %v2318, 1.442695
        %v2488 = vpow.pop %v2487
        %v2489 = vmul.f32 %v2319, 1.442695
        %v2490 = vpow.pop %v2489
        %v2491 = vmul.f32 %v2320, 1.442695
        %v2492 = vpow.pop %v2491
        %v2493 = vmul.f32 %v2321, 1.442695
        %v2494 = vpow.pop %v2493
        %v2495 = vmul.f32 %v2322, 1.442695
        %v2496 = vpow.pop %v2495
        %v2497 = vmul.f32 %v2323, 1.442695
        %v2498 = vpow.pop %v2497
        %v2499 = vmul.f32 %v2324, 1.442695
        %v2500 = vpow.pop %v2499
        %v2501 = vmul.f32 %v2325, 1.442695
        %v2502 = vpow.pop %v2501
        %v2503 = vmul.f32 %v2326, 1.442695
        %v2504 = vpow.pop %v2503
        %v2505 = vmul.f32 %v2327, 1.442695
        %v2506 = vpow.pop %v2505
        %v2507 = vmul.f32 %v2328, 1.442695
        %v2508 = vpow.pop %v2507
        %v2509 = vmul.f32 %v2329, 1.442695
        %v2510 = vpow.pop %v2509
        %v2511 = vmul.f32 %v2330, 1.442695
        %v2512 = vpow.pop %v2511
        %v2513 = vmul.f32 %v2331, 1.442695
        %v2514 = vpow.pop %v2513
        %v2515 = vmul.f32 %v2332, 1.442695
        %v2516 = vpow.pop %v2515
        %v2517 = vmul.f32 %v2333, 1.442695
        %v2518 = vpow.pop %v2517
        %v2519 = vmul.f32 %v2334, 1.442695
        %v2520 = vpow.pop %v2519
        %v2521 = vmul.f32 %v2335, 1.442695
        %v2522 = vpow.pop %v2521
        %v2523 = vmul.f32 %v2336, 1.442695
        %v2524 = vpow.pop %v2523
        %v2525 = vmul.f32 %v2337, 1.442695
        %v2526 = vpow.pop %v2525
        %v2527 = vmul.f32 %v2338, 1.442695
        %v2528 = vpow.pop %v2527
        %v2529 = vmul.f32 %v2339, 1.442695
        %v2530 = vpow.pop %v2529
        %v2531 = vmul.f32 %v2340, 1.442695
        %v2532 = vpow.pop %v2531
        %v2533 = vmul.f32 %v2341, 1.442695
        %v2534 = vpow.pop %v2533
        %v2535 = vmul.f32 %v2342, 1.442695
        %v2536 = vpow.pop %v2535
        %v2537 = vmul.f32 %v2343, 1.442695
        %v2538 = vpow.pop %v2537
        %v2539 = vmul.f32 %v2344, 1.442695
        %v2540 = vpow.pop %v2539
        %v2541 = vmul.f32 %v2345, 1.442695
        %v2542 = vpow.pop %v2541
        %v2543 = vmul.f32 %v2346, 1.442695
        %v2544 = vpow.pop %v2543
        %v2545 = vmul.f32 %v2347, 1.442695
        %v2546 = vpow.pop %v2545
        %v2547 = vmul.f32 %v2348, 1.442695
        %v2548 = vpow.pop %v2547
        %v2549 = vmul.f32 %v2349, 1.442695
        %v2550 = vpow.pop %v2549
        %v2551 = vmul.f32 %v2350, 1.442695
        %v2552 = vpow.pop %v2551
        %v2553 = vmul.f32 %v2351, 1.442695
        %v2554 = vpow.pop %v2553
        %v2555 = vmul.f32 %v2352, 1.442695
        %v2556 = vpow.pop %v2555
        %v2557 = vmul.f32 %v2353, 1.442695
        %v2558 = vpow.pop %v2557
        %v2559 = vmul.f32 %v2354, 1.442695
        %v2560 = vpow.pop %v2559
        %v2561 = vmul.f32 %v2355, 1.442695
        %v2562 = vpow.pop %v2561
        %v2563 = vmul.f32 %v2356, 1.442695
        %v2564 = vpow.pop %v2563
        %v2565 = vmul.f32 %v2357, 1.442695
        %v2566 = vpow.pop %v2565
        %v2567 = vmul.f32 %v2358, 1.442695
        %v2568 = vpow.pop %v2567
        %v2569 = vmul.f32 %v2359, 1.442695
        %v2570 = vpow.pop %v2569
        %v2571 = vmul.f32 %v2360, 1.442695
        %v2572 = vpow.pop %v2571
        %v2573 = vmul.f32 %v2361, 1.442695
        %v2574 = vpow.pop %v2573
        %v2575 = vmul.f32 %v2362, 1.442695
        %v2576 = vpow.pop %v2575
        %v2577 = vmul.f32 %v2363, 1.442695
        %v2578 = vpow.pop %v2577
        %v2579 = vmul.f32 %v2364, 1.442695
        %v2580 = vpow.pop %v2579
        %v2581 = vmul.f32 %v2365, 1.442695
        %v2582 = vpow.pop %v2581
        %v2583 = vmul.f32 %v2366, 1.442695
        %v2584 = vpow.pop %v2583
        %v2585 = vmul.f32 %v2367, 1.442695
        %v2586 = vpow.pop %v2585
        %v2587 = vmul.f32 %v2368, 1.442695
        %v2588 = vpow.pop %v2587
        %v2589 = vmul.f32 %v2369, 1.442695
        %v2590 = vpow.pop %v2589
        %v2591 = vmul.f32 %v2370, 1.442695
        %v2592 = vpow.pop %v2591
        %v2593 = vmul.f32 %v2371, 1.442695
        %v2594 = vpow.pop %v2593
        %v2595 = vmul.f32 %v2372, 1.442695
        %v2596 = vpow.pop %v2595
        %v2597 = vmul.f32 %v2373, 1.442695
        %v2598 = vpow.pop %v2597
        %v2599 = vmul.f32 %v2374, 1.442695
        %v2600 = vpow.pop %v2599
        %v2601 = vmul.f32 %v2375, 1.442695
        %v2602 = vpow.pop %v2601
        %v2603 = vmul.f32 %v2376, 1.442695
        %v2604 = vpow.pop %v2603
        %v2605 = vmul.f32 %v2377, 1.442695
        %v2606 = vpow.pop %v2605
        %v2607 = vmul.f32 %v2378, 1.442695
        %v2608 = vpow.pop %v2607
        %v2609 = vmul.f32 %v2379, 1.442695
        %v2610 = vpow.pop %v2609
        %v2611 = vmul.f32 %v2380, 1.442695
        %v2612 = vpow.pop %v2611
        %v2613 = vmul.f32 %v2381, 1.442695
        %v2614 = vpow.pop %v2613
        %v2615 = vmul.f32 %v2382, 1.442695
        %v2616 = vpow.pop %v2615
        %v2617 = vmul.f32 %v2383, 1.442695
        %v2618 = vpow.pop %v2617
        %v2619 = vmul.f32 %v2384, 1.442695
        %v2620 = vpow.pop %v2619
        %v2621 = vmul.f32 %v2385, 1.442695
        %v2622 = vpow.pop %v2621
        %v2623 = vmul.f32 %v2386, 1.442695
        %v2624 = vpow.pop %v2623
        %v2625 = vmul.f32 %v2387, 1.442695
        %v2626 = vpow.pop %v2625
        %v2627 = vmul.f32 %v2388, 1.442695
        %v2628 = vpow.pop %v2627
        %v2629 = vmul.f32 %v2389, 1.442695
        %v2630 = vpow.pop %v2629
        %v2631 = vmul.f32 %v2390, 1.442695
        %v2632 = vpow.pop %v2631
        %v2633 = vmul.f32 %v2391, 1.442695
        %v2634 = vpow.pop %v2633
        %v2635 = vmul.f32 %v2392, 1.442695
        %v2636 = vpow.pop %v2635
        %v2637 = vmul.f32 %v2393, 1.442695
        %v2638 = vpow.pop %v2637
        %v2639 = vmul.f32 %v2394, 1.442695
        %v2640 = vpow.pop %v2639
        %v2641 = vmul.f32 %v2395, 1.442695
        %v2642 = vpow.pop %v2641
        %v2643 = vmul.f32 %v2396, 1.442695
        %v2644 = vpow.pop %v2643
        %v2645 = vmul.f32 %v2397, 1.442695
        %v2646 = vpow.pop %v2645
        %v2647 = vmul.f32 %v2398, 1.442695
        %v2648 = vpow.pop %v2647
        %v2649 = vmul.f32 %v2399, 1.442695
        %v2650 = vpow.pop %v2649
        %v2651 = vmul.f32 %v2400, 1.442695
        %v2652 = vpow.pop %v2651
        %v2653 = vmul.f32 %v2401, 1.442695
        %v2654 = vpow.pop %v2653
        %v2655 = vmul.f32 %v2402, 1.442695
        %v2656 = vpow.pop %v2655
        %v2657 = vmul.f32 %v2403, 1.442695
        %v2658 = vpow.pop %v2657
        %v2659 = vmul.f32 %v2404, 1.442695
        %v2660 = vpow.pop %v2659
        %v2661 = vadd.f32 %v2406, 1.0
        %v2662 = vadd.f32 %v2408, 1.0
        %v2663 = vadd.f32 %v2410, 1.0
        %v2664 = vadd.f32 %v2412, 1.0
        %v2665 = vadd.f32 %v2414, 1.0
        %v2666 = vadd.f32 %v2416, 1.0
        %v2667 = vadd.f32 %v2418, 1.0
        %v2668 = vadd.f32 %v2420, 1.0
        %v2669 = vadd.f32 %v2422, 1.0
        %v2670 = vadd.f32 %v2424, 1.0
        %v2671 = vadd.f32 %v2426, 1.0
        %v2672 = vadd.f32 %v2428, 1.0
        %v2673 = vadd.f32 %v2430, 1.0
        %v2674 = vadd.f32 %v2432, 1.0
        %v2675 = vadd.f32 %v2434, 1.0
        %v2676 = vadd.f32 %v2436, 1.0
        %v2677 = vadd.f32 %v2438, 1.0
        %v2678 = vadd.f32 %v2440, 1.0
        %v2679 = vadd.f32 %v2442, 1.0
        %v2680 = vadd.f32 %v2444, 1.0
        %v2681 = vadd.f32 %v2446, 1.0
        %v2682 = vadd.f32 %v2448, 1.0
        %v2683 = vadd.f32 %v2450, 1.0
        %v2684 = vadd.f32 %v2452, 1.0
        %v2685 = vadd.f32 %v2454, 1.0
        %v2686 = vadd.f32 %v2456, 1.0
        %v2687 = vadd.f32 %v2458, 1.0
        %v2688 = vadd.f32 %v2460, 1.0
        %v2689 = vadd.f32 %v2462, 1.0
        %v2690 = vadd.f32 %v2464, 1.0
        %v2691 = vadd.f32 %v2466, 1.0
        %v2692 = vadd.f32 %v2468, 1.0
        %v2693 = vadd.f32 %v2470, 1.0
        %v2694 = vadd.f32 %v2472, 1.0
        %v2695 = vadd.f32 %v2474, 1.0
        %v2696 = vadd.f32 %v2476, 1.0
        %v2697 = vadd.f32 %v2478, 1.0
        %v2698 = vadd.f32 %v2480, 1.0
        %v2699 = vadd.f32 %v2482, 1.0
        %v2700 = vadd.f32 %v2484, 1.0
        %v2701 = vadd.f32 %v2486, 1.0
        %v2702 = vadd.f32 %v2488, 1.0
        %v2703 = vadd.f32 %v2490, 1.0
        %v2704 = vadd.f32 %v2492, 1.0
        %v2705 = vadd.f32 %v2494, 1.0
        %v2706 = vadd.f32 %v2496, 1.0
        %v2707 = vadd.f32 %v2498, 1.0
        %v2708 = vadd.f32 %v2500, 1.0
        %v2709 = vadd.f32 %v2502, 1.0
        %v2710 = vadd.f32 %v2504, 1.0
        %v2711 = vadd.f32 %v2506, 1.0
        %v2712 = vadd.f32 %v2508, 1.0
        %v2713 = vadd.f32 %v2510, 1.0
        %v2714 = vadd.f32 %v2512, 1.0
        %v2715 = vadd.f32 %v2514, 1.0
        %v2716 = vadd.f32 %v2516, 1.0
        %v2717 = vadd.f32 %v2518, 1.0
        %v2718 = vadd.f32 %v2520, 1.0
        %v2719 = vadd.f32 %v2522, 1.0
        %v2720 = vadd.f32 %v2524, 1.0
        %v2721 = vadd.f32 %v2526, 1.0
        %v2722 = vadd.f32 %v2528, 1.0
        %v2723 = vadd.f32 %v2530, 1.0
        %v2724 = vadd.f32 %v2532, 1.0
        %v2725 = vadd.f32 %v2534, 1.0
        %v2726 = vadd.f32 %v2536, 1.0
        %v2727 = vadd.f32 %v2538, 1.0
        %v2728 = vadd.f32 %v2540, 1.0
        %v2729 = vadd.f32 %v2542, 1.0
        %v2730 = vadd.f32 %v2544, 1.0
        %v2731 = vadd.f32 %v2546, 1.0
        %v2732 = vadd.f32 %v2548, 1.0
        %v2733 = vadd.f32 %v2550, 1.0
        %v2734 = vadd.f32 %v2552, 1.0
        %v2735 = vadd.f32 %v2554, 1.0
        %v2736 = vadd.f32 %v2556, 1.0
        %v2737 = vadd.f32 %v2558, 1.0
        %v2738 = vadd.f32 %v2560, 1.0
        %v2739 = vadd.f32 %v2562, 1.0
        %v2740 = vadd.f32 %v2564, 1.0
        %v2741 = vadd.f32 %v2566, 1.0
        %v2742 = vadd.f32 %v2568, 1.0
        %v2743 = vadd.f32 %v2570, 1.0
        %v2744 = vadd.f32 %v2572, 1.0
        %v2745 = vadd.f32 %v2574, 1.0
        %v2746 = vadd.f32 %v2576, 1.0
        %v2747 = vadd.f32 %v2578, 1.0
        %v2748 = vadd.f32 %v2580, 1.0
        %v2749 = vadd.f32 %v2582, 1.0
        %v2750 = vadd.f32 %v2584, 1.0
        %v2751 = vadd.f32 %v2586, 1.0
        %v2752 = vadd.f32 %v2588, 1.0
        %v2753 = vadd.f32 %v2590, 1.0
        %v2754 = vadd.f32 %v2592, 1.0
        %v2755 = vadd.f32 %v2594, 1.0
        %v2756 = vadd.f32 %v2596, 1.0
        %v2757 = vadd.f32 %v2598, 1.0
        %v2758 = vadd.f32 %v2600, 1.0
        %v2759 = vadd.f32 %v2602, 1.0
        %v2760 = vadd.f32 %v2604, 1.0
        %v2761 = vadd.f32 %v2606, 1.0
        %v2762 = vadd.f32 %v2608, 1.0
        %v2763 = vadd.f32 %v2610, 1.0
        %v2764 = vadd.f32 %v2612, 1.0
        %v2765 = vadd.f32 %v2614, 1.0
        %v2766 = vadd.f32 %v2616, 1.0
        %v2767 = vadd.f32 %v2618, 1.0
        %v2768 = vadd.f32 %v2620, 1.0
        %v2769 = vadd.f32 %v2622, 1.0
        %v2770 = vadd.f32 %v2624, 1.0
        %v2771 = vadd.f32 %v2626, 1.0
        %v2772 = vadd.f32 %v2628, 1.0
        %v2773 = vadd.f32 %v2630, 1.0
        %v2774 = vadd.f32 %v2632, 1.0
        %v2775 = vadd.f32 %v2634, 1.0
        %v2776 = vadd.f32 %v2636, 1.0
        %v2777 = vadd.f32 %v2638, 1.0
        %v2778 = vadd.f32 %v2640, 1.0
        %v2779 = vadd.f32 %v2642, 1.0
        %v2780 = vadd.f32 %v2644, 1.0
        %v2781 = vadd.f32 %v2646, 1.0
        %v2782 = vadd.f32 %v2648, 1.0
        %v2783 = vadd.f32 %v2650, 1.0
        %v2784 = vadd.f32 %v2652, 1.0
        %v2785 = vadd.f32 %v2654, 1.0
        %v2786 = vadd.f32 %v2656, 1.0
        %v2787 = vadd.f32 %v2658, 1.0
        %v2788 = vadd.f32 %v2660, 1.0
        %v2789 = vrcp.pop %v2661
        %v2790 = vmul.f32 %v2661, %v2789
        %v2791 = vsub.f32 1.0, %v2790
        %v2792 = vmul.f32 %v2789, %v2791
        %v2793 = vadd.f32 %v2789, %v2792
        %vm2794 = vweird.f32 %v2661
        %vm2795 = vweird.f32 %v2789
        %vm2796 = vmor %vm2794, %vm2795
        %v2797 = vsel %vm2796, %v2789, %v2793
        %v2798 = vand.u32 2147483647, %v2661
        %vm2799 = vcmp.eq.f32.partialorder %v2798, 8.507059e+37
        %v2800 = vand.u32 %v2661, 2147483648
        %v2801 = vor.u32 1.1754944e-38, %v2800
        %v2802 = vsel %vm2799, %v2801, %v2797
        %v2803 = vmul.f32 1.0, %v2802
        %v2804 = vrcp.pop %v2662
        %v2805 = vmul.f32 %v2662, %v2804
        %v2806 = vsub.f32 1.0, %v2805
        %v2807 = vmul.f32 %v2804, %v2806
        %v2808 = vadd.f32 %v2804, %v2807
        %vm2809 = vweird.f32 %v2662
        %vm2810 = vweird.f32 %v2804
        %vm2811 = vmor %vm2809, %vm2810
        %v2812 = vsel %vm2811, %v2804, %v2808
        %v2813 = vand.u32 2147483647, %v2662
        %vm2814 = vcmp.eq.f32.partialorder %v2813, 8.507059e+37
        %v2815 = vand.u32 %v2662, 2147483648
        %v2816 = vor.u32 1.1754944e-38, %v2815
        %v2817 = vsel %vm2814, %v2816, %v2812
        %v2818 = vmul.f32 1.0, %v2817
        %v2819 = vrcp.pop %v2663
        %v2820 = vmul.f32 %v2663, %v2819
        %v2821 = vsub.f32 1.0, %v2820
        %v2822 = vmul.f32 %v2819, %v2821
        %v2823 = vadd.f32 %v2819, %v2822
        %vm2824 = vweird.f32 %v2663
        %vm2825 = vweird.f32 %v2819
        %vm2826 = vmor %vm2824, %vm2825
        %v2827 = vsel %vm2826, %v2819, %v2823
        %v2828 = vand.u32 2147483647, %v2663
        %vm2829 = vcmp.eq.f32.partialorder %v2828, 8.507059e+37
        %v2830 = vand.u32 %v2663, 2147483648
        %v2831 = vor.u32 1.1754944e-38, %v2830
        %v2832 = vsel %vm2829, %v2831, %v2827
        %v2833 = vmul.f32 1.0, %v2832
        %v2834 = vrcp.pop %v2664
        %v2835 = vmul.f32 %v2664, %v2834
        %v2836 = vsub.f32 1.0, %v2835
        %v2837 = vmul.f32 %v2834, %v2836
        %v2838 = vadd.f32 %v2834, %v2837
        %vm2839 = vweird.f32 %v2664
        %vm2840 = vweird.f32 %v2834
        %vm2841 = vmor %vm2839, %vm2840
        %v2842 = vsel %vm2841, %v2834, %v2838
        %v2843 = vand.u32 2147483647, %v2664
        %vm2844 = vcmp.eq.f32.partialorder %v2843, 8.507059e+37
        %v2845 = vand.u32 %v2664, 2147483648
        %v2846 = vor.u32 1.1754944e-38, %v2845
        %v2847 = vsel %vm2844, %v2846, %v2842
        %v2848 = vmul.f32 1.0, %v2847
        %v2849 = vrcp.pop %v2665
        %v2850 = vmul.f32 %v2665, %v2849
        %v2851 = vsub.f32 1.0, %v2850
        %v2852 = vmul.f32 %v2849, %v2851
        %v2853 = vadd.f32 %v2849, %v2852
        %vm2854 = vweird.f32 %v2665
        %vm2855 = vweird.f32 %v2849
        %vm2856 = vmor %vm2854, %vm2855
        %v2857 = vsel %vm2856, %v2849, %v2853
        %v2858 = vand.u32 2147483647, %v2665
        %vm2859 = vcmp.eq.f32.partialorder %v2858, 8.507059e+37
        %v2860 = vand.u32 %v2665, 2147483648
        %v2861 = vor.u32 1.1754944e-38, %v2860
        %v2862 = vsel %vm2859, %v2861, %v2857
        %v2863 = vmul.f32 1.0, %v2862
        %v2864 = vrcp.pop %v2666
        %v2865 = vmul.f32 %v2666, %v2864
        %v2866 = vsub.f32 1.0, %v2865
        %v2867 = vmul.f32 %v2864, %v2866
        %v2868 = vadd.f32 %v2864, %v2867
        %vm2869 = vweird.f32 %v2666
        %vm2870 = vweird.f32 %v2864
        %vm2871 = vmor %vm2869, %vm2870
        %v2872 = vsel %vm2871, %v2864, %v2868
        %v2873 = vand.u32 2147483647, %v2666
        %vm2874 = vcmp.eq.f32.partialorder %v2873, 8.507059e+37
        %v2875 = vand.u32 %v2666, 2147483648
        %v2876 = vor.u32 1.1754944e-38, %v2875
        %v2877 = vsel %vm2874, %v2876, %v2872
        %v2878 = vmul.f32 1.0, %v2877
        %v2879 = vrcp.pop %v2667
        %v2880 = vmul.f32 %v2667, %v2879
        %v2881 = vsub.f32 1.0, %v2880
        %v2882 = vmul.f32 %v2879, %v2881
        %v2883 = vadd.f32 %v2879, %v2882
        %vm2884 = vweird.f32 %v2667
        %vm2885 = vweird.f32 %v2879
        %vm2886 = vmor %vm2884, %vm2885
        %v2887 = vsel %vm2886, %v2879, %v2883
        %v2888 = vand.u32 2147483647, %v2667
        %vm2889 = vcmp.eq.f32.partialorder %v2888, 8.507059e+37
        %v2890 = vand.u32 %v2667, 2147483648
        %v2891 = vor.u32 1.1754944e-38, %v2890
        %v2892 = vsel %vm2889, %v2891, %v2887
        %v2893 = vmul.f32 1.0, %v2892
        %v2894 = vrcp.pop %v2668
        %v2895 = vmul.f32 %v2668, %v2894
        %v2896 = vsub.f32 1.0, %v2895
        %v2897 = vmul.f32 %v2894, %v2896
        %v2898 = vadd.f32 %v2894, %v2897
        %vm2899 = vweird.f32 %v2668
        %vm2900 = vweird.f32 %v2894
        %vm2901 = vmor %vm2899, %vm2900
        %v2902 = vsel %vm2901, %v2894, %v2898
        %v2903 = vand.u32 2147483647, %v2668
        %vm2904 = vcmp.eq.f32.partialorder %v2903, 8.507059e+37
        %v2905 = vand.u32 %v2668, 2147483648
        %v2906 = vor.u32 1.1754944e-38, %v2905
        %v2907 = vsel %vm2904, %v2906, %v2902
        %v2908 = vmul.f32 1.0, %v2907
        %v2909 = vrcp.pop %v2669
        %v2910 = vmul.f32 %v2669, %v2909
        %v2911 = vsub.f32 1.0, %v2910
        %v2912 = vmul.f32 %v2909, %v2911
        %v2913 = vadd.f32 %v2909, %v2912
        %vm2914 = vweird.f32 %v2669
        %vm2915 = vweird.f32 %v2909
        %vm2916 = vmor %vm2914, %vm2915
        %v2917 = vsel %vm2916, %v2909, %v2913
        %v2918 = vand.u32 2147483647, %v2669
        %vm2919 = vcmp.eq.f32.partialorder %v2918, 8.507059e+37
        %v2920 = vand.u32 %v2669, 2147483648
        %v2921 = vor.u32 1.1754944e-38, %v2920
        %v2922 = vsel %vm2919, %v2921, %v2917
        %v2923 = vmul.f32 1.0, %v2922
        %v2924 = vrcp.pop %v2670
        %v2925 = vmul.f32 %v2670, %v2924
        %v2926 = vsub.f32 1.0, %v2925
        %v2927 = vmul.f32 %v2924, %v2926
        %v2928 = vadd.f32 %v2924, %v2927
        %vm2929 = vweird.f32 %v2670
        %vm2930 = vweird.f32 %v2924
        %vm2931 = vmor %vm2929, %vm2930
        %v2932 = vsel %vm2931, %v2924, %v2928
        %v2933 = vand.u32 2147483647, %v2670
        %vm2934 = vcmp.eq.f32.partialorder %v2933, 8.507059e+37
        %v2935 = vand.u32 %v2670, 2147483648
        %v2936 = vor.u32 1.1754944e-38, %v2935
        %v2937 = vsel %vm2934, %v2936, %v2932
        %v2938 = vmul.f32 1.0, %v2937
        %v2939 = vrcp.pop %v2671
        %v2940 = vmul.f32 %v2671, %v2939
        %v2941 = vsub.f32 1.0, %v2940
        %v2942 = vmul.f32 %v2939, %v2941
        %v2943 = vadd.f32 %v2939, %v2942
        %vm2944 = vweird.f32 %v2671
        %vm2945 = vweird.f32 %v2939
        %vm2946 = vmor %vm2944, %vm2945
        %v2947 = vsel %vm2946, %v2939, %v2943
        %v2948 = vand.u32 2147483647, %v2671
        %vm2949 = vcmp.eq.f32.partialorder %v2948, 8.507059e+37
        %v2950 = vand.u32 %v2671, 2147483648
        %v2951 = vor.u32 1.1754944e-38, %v2950
        %v2952 = vsel %vm2949, %v2951, %v2947
        %v2953 = vmul.f32 1.0, %v2952
        %v2954 = vrcp.pop %v2672
        %v2955 = vmul.f32 %v2672, %v2954
        %v2956 = vsub.f32 1.0, %v2955
        %v2957 = vmul.f32 %v2954, %v2956
        %v2958 = vadd.f32 %v2954, %v2957
        %vm2959 = vweird.f32 %v2672
        %vm2960 = vweird.f32 %v2954
        %vm2961 = vmor %vm2959, %vm2960
        %v2962 = vsel %vm2961, %v2954, %v2958
        %v2963 = vand.u32 2147483647, %v2672
        %vm2964 = vcmp.eq.f32.partialorder %v2963, 8.507059e+37
        %v2965 = vand.u32 %v2672, 2147483648
        %v2966 = vor.u32 1.1754944e-38, %v2965
        %v2967 = vsel %vm2964, %v2966, %v2962
        %v2968 = vmul.f32 1.0, %v2967
        %v2969 = vrcp.pop %v2673
        %v2970 = vmul.f32 %v2673, %v2969
        %v2971 = vsub.f32 1.0, %v2970
        %v2972 = vmul.f32 %v2969, %v2971
        %v2973 = vadd.f32 %v2969, %v2972
        %vm2974 = vweird.f32 %v2673
        %vm2975 = vweird.f32 %v2969
        %vm2976 = vmor %vm2974, %vm2975
        %v2977 = vsel %vm2976, %v2969, %v2973
        %v2978 = vand.u32 2147483647, %v2673
        %vm2979 = vcmp.eq.f32.partialorder %v2978, 8.507059e+37
        %v2980 = vand.u32 %v2673, 2147483648
        %v2981 = vor.u32 1.1754944e-38, %v2980
        %v2982 = vsel %vm2979, %v2981, %v2977
        %v2983 = vmul.f32 1.0, %v2982
        %v2984 = vrcp.pop %v2674
        %v2985 = vmul.f32 %v2674, %v2984
        %v2986 = vsub.f32 1.0, %v2985
        %v2987 = vmul.f32 %v2984, %v2986
        %v2988 = vadd.f32 %v2984, %v2987
        %vm2989 = vweird.f32 %v2674
        %vm2990 = vweird.f32 %v2984
        %vm2991 = vmor %vm2989, %vm2990
        %v2992 = vsel %vm2991, %v2984, %v2988
        %v2993 = vand.u32 2147483647, %v2674
        %vm2994 = vcmp.eq.f32.partialorder %v2993, 8.507059e+37
        %v2995 = vand.u32 %v2674, 2147483648
        %v2996 = vor.u32 1.1754944e-38, %v2995
        %v2997 = vsel %vm2994, %v2996, %v2992
        %v2998 = vmul.f32 1.0, %v2997
        %v2999 = vrcp.pop %v2675
        %v3000 = vmul.f32 %v2675, %v2999
        %v3001 = vsub.f32 1.0, %v3000
        %v3002 = vmul.f32 %v2999, %v3001
        %v3003 = vadd.f32 %v2999, %v3002
        %vm3004 = vweird.f32 %v2675
        %vm3005 = vweird.f32 %v2999
        %vm3006 = vmor %vm3004, %vm3005
        %v3007 = vsel %vm3006, %v2999, %v3003
        %v3008 = vand.u32 2147483647, %v2675
        %vm3009 = vcmp.eq.f32.partialorder %v3008, 8.507059e+37
        %v3010 = vand.u32 %v2675, 2147483648
        %v3011 = vor.u32 1.1754944e-38, %v3010
        %v3012 = vsel %vm3009, %v3011, %v3007
        %v3013 = vmul.f32 1.0, %v3012
        %v3014 = vrcp.pop %v2676
        %v3015 = vmul.f32 %v2676, %v3014
        %v3016 = vsub.f32 1.0, %v3015
        %v3017 = vmul.f32 %v3014, %v3016
        %v3018 = vadd.f32 %v3014, %v3017
        %vm3019 = vweird.f32 %v2676
        %vm3020 = vweird.f32 %v3014
        %vm3021 = vmor %vm3019, %vm3020
        %v3022 = vsel %vm3021, %v3014, %v3018
        %v3023 = vand.u32 2147483647, %v2676
        %vm3024 = vcmp.eq.f32.partialorder %v3023, 8.507059e+37
        %v3025 = vand.u32 %v2676, 2147483648
        %v3026 = vor.u32 1.1754944e-38, %v3025
        %v3027 = vsel %vm3024, %v3026, %v3022
        %v3028 = vmul.f32 1.0, %v3027
        %v3029 = vrcp.pop %v2677
        %v3030 = vmul.f32 %v2677, %v3029
        %v3031 = vsub.f32 1.0, %v3030
        %v3032 = vmul.f32 %v3029, %v3031
        %v3033 = vadd.f32 %v3029, %v3032
        %vm3034 = vweird.f32 %v2677
        %vm3035 = vweird.f32 %v3029
        %vm3036 = vmor %vm3034, %vm3035
        %v3037 = vsel %vm3036, %v3029, %v3033
        %v3038 = vand.u32 2147483647, %v2677
        %vm3039 = vcmp.eq.f32.partialorder %v3038, 8.507059e+37
        %v3040 = vand.u32 %v2677, 2147483648
        %v3041 = vor.u32 1.1754944e-38, %v3040
        %v3042 = vsel %vm3039, %v3041, %v3037
        %v3043 = vmul.f32 1.0, %v3042
        %v3044 = vrcp.pop %v2678
        %v3045 = vmul.f32 %v2678, %v3044
        %v3046 = vsub.f32 1.0, %v3045
        %v3047 = vmul.f32 %v3044, %v3046
        %v3048 = vadd.f32 %v3044, %v3047
        %vm3049 = vweird.f32 %v2678
        %vm3050 = vweird.f32 %v3044
        %vm3051 = vmor %vm3049, %vm3050
        %v3052 = vsel %vm3051, %v3044, %v3048
        %v3053 = vand.u32 2147483647, %v2678
        %vm3054 = vcmp.eq.f32.partialorder %v3053, 8.507059e+37
        %v3055 = vand.u32 %v2678, 2147483648
        %v3056 = vor.u32 1.1754944e-38, %v3055
        %v3057 = vsel %vm3054, %v3056, %v3052
        %v3058 = vmul.f32 1.0, %v3057
        %v3059 = vrcp.pop %v2679
        %v3060 = vmul.f32 %v2679, %v3059
        %v3061 = vsub.f32 1.0, %v3060
        %v3062 = vmul.f32 %v3059, %v3061
        %v3063 = vadd.f32 %v3059, %v3062
        %vm3064 = vweird.f32 %v2679
        %vm3065 = vweird.f32 %v3059
        %vm3066 = vmor %vm3064, %vm3065
        %v3067 = vsel %vm3066, %v3059, %v3063
        %v3068 = vand.u32 2147483647, %v2679
        %vm3069 = vcmp.eq.f32.partialorder %v3068, 8.507059e+37
        %v3070 = vand.u32 %v2679, 2147483648
        %v3071 = vor.u32 1.1754944e-38, %v3070
        %v3072 = vsel %vm3069, %v3071, %v3067
        %v3073 = vmul.f32 1.0, %v3072
        %v3074 = vrcp.pop %v2680
        %v3075 = vmul.f32 %v2680, %v3074
        %v3076 = vsub.f32 1.0, %v3075
        %v3077 = vmul.f32 %v3074, %v3076
        %v3078 = vadd.f32 %v3074, %v3077
        %vm3079 = vweird.f32 %v2680
        %vm3080 = vweird.f32 %v3074
        %vm3081 = vmor %vm3079, %vm3080
        %v3082 = vsel %vm3081, %v3074, %v3078
        %v3083 = vand.u32 2147483647, %v2680
        %vm3084 = vcmp.eq.f32.partialorder %v3083, 8.507059e+37
        %v3085 = vand.u32 %v2680, 2147483648
        %v3086 = vor.u32 1.1754944e-38, %v3085
        %v3087 = vsel %vm3084, %v3086, %v3082
        %v3088 = vmul.f32 1.0, %v3087
        %v3089 = vrcp.pop %v2681
        %v3090 = vmul.f32 %v2681, %v3089
        %v3091 = vsub.f32 1.0, %v3090
        %v3092 = vmul.f32 %v3089, %v3091
        %v3093 = vadd.f32 %v3089, %v3092
        %vm3094 = vweird.f32 %v2681
        %vm3095 = vweird.f32 %v3089
        %vm3096 = vmor %vm3094, %vm3095
        %v3097 = vsel %vm3096, %v3089, %v3093
        %v3098 = vand.u32 2147483647, %v2681
        %vm3099 = vcmp.eq.f32.partialorder %v3098, 8.507059e+37
        %v3100 = vand.u32 %v2681, 2147483648
        %v3101 = vor.u32 1.1754944e-38, %v3100
        %v3102 = vsel %vm3099, %v3101, %v3097
        %v3103 = vmul.f32 1.0, %v3102
        %v3104 = vrcp.pop %v2682
        %v3105 = vmul.f32 %v2682, %v3104
        %v3106 = vsub.f32 1.0, %v3105
        %v3107 = vmul.f32 %v3104, %v3106
        %v3108 = vadd.f32 %v3104, %v3107
        %vm3109 = vweird.f32 %v2682
        %vm3110 = vweird.f32 %v3104
        %vm3111 = vmor %vm3109, %vm3110
        %v3112 = vsel %vm3111, %v3104, %v3108
        %v3113 = vand.u32 2147483647, %v2682
        %vm3114 = vcmp.eq.f32.partialorder %v3113, 8.507059e+37
        %v3115 = vand.u32 %v2682, 2147483648
        %v3116 = vor.u32 1.1754944e-38, %v3115
        %v3117 = vsel %vm3114, %v3116, %v3112
        %v3118 = vmul.f32 1.0, %v3117
        %v3119 = vrcp.pop %v2683
        %v3120 = vmul.f32 %v2683, %v3119
        %v3121 = vsub.f32 1.0, %v3120
        %v3122 = vmul.f32 %v3119, %v3121
        %v3123 = vadd.f32 %v3119, %v3122
        %vm3124 = vweird.f32 %v2683
        %vm3125 = vweird.f32 %v3119
        %vm3126 = vmor %vm3124, %vm3125
        %v3127 = vsel %vm3126, %v3119, %v3123
        %v3128 = vand.u32 2147483647, %v2683
        %vm3129 = vcmp.eq.f32.partialorder %v3128, 8.507059e+37
        %v3130 = vand.u32 %v2683, 2147483648
        %v3131 = vor.u32 1.1754944e-38, %v3130
        %v3132 = vsel %vm3129, %v3131, %v3127
        %v3133 = vmul.f32 1.0, %v3132
        %v3134 = vrcp.pop %v2684
        %v3135 = vmul.f32 %v2684, %v3134
        %v3136 = vsub.f32 1.0, %v3135
        %v3137 = vmul.f32 %v3134, %v3136
        %v3138 = vadd.f32 %v3134, %v3137
        %vm3139 = vweird.f32 %v2684
        %vm3140 = vweird.f32 %v3134
        %vm3141 = vmor %vm3139, %vm3140
        %v3142 = vsel %vm3141, %v3134, %v3138
        %v3143 = vand.u32 2147483647, %v2684
        %vm3144 = vcmp.eq.f32.partialorder %v3143, 8.507059e+37
        %v3145 = vand.u32 %v2684, 2147483648
        %v3146 = vor.u32 1.1754944e-38, %v3145
        %v3147 = vsel %vm3144, %v3146, %v3142
        %v3148 = vmul.f32 1.0, %v3147
        %v3149 = vrcp.pop %v2685
        %v3150 = vmul.f32 %v2685, %v3149
        %v3151 = vsub.f32 1.0, %v3150
        %v3152 = vmul.f32 %v3149, %v3151
        %v3153 = vadd.f32 %v3149, %v3152
        %vm3154 = vweird.f32 %v2685
        %vm3155 = vweird.f32 %v3149
        %vm3156 = vmor %vm3154, %vm3155
        %v3157 = vsel %vm3156, %v3149, %v3153
        %v3158 = vand.u32 2147483647, %v2685
        %vm3159 = vcmp.eq.f32.partialorder %v3158, 8.507059e+37
        %v3160 = vand.u32 %v2685, 2147483648
        %v3161 = vor.u32 1.1754944e-38, %v3160
        %v3162 = vsel %vm3159, %v3161, %v3157
        %v3163 = vmul.f32 1.0, %v3162
        %v3164 = vrcp.pop %v2686
        %v3165 = vmul.f32 %v2686, %v3164
        %v3166 = vsub.f32 1.0, %v3165
        %v3167 = vmul.f32 %v3164, %v3166
        %v3168 = vadd.f32 %v3164, %v3167
        %vm3169 = vweird.f32 %v2686
        %vm3170 = vweird.f32 %v3164
        %vm3171 = vmor %vm3169, %vm3170
        %v3172 = vsel %vm3171, %v3164, %v3168
        %v3173 = vand.u32 2147483647, %v2686
        %vm3174 = vcmp.eq.f32.partialorder %v3173, 8.507059e+37
        %v3175 = vand.u32 %v2686, 2147483648
        %v3176 = vor.u32 1.1754944e-38, %v3175
        %v3177 = vsel %vm3174, %v3176, %v3172
        %v3178 = vmul.f32 1.0, %v3177
        %v3179 = vrcp.pop %v2687
        %v3180 = vmul.f32 %v2687, %v3179
        %v3181 = vsub.f32 1.0, %v3180
        %v3182 = vmul.f32 %v3179, %v3181
        %v3183 = vadd.f32 %v3179, %v3182
        %vm3184 = vweird.f32 %v2687
        %vm3185 = vweird.f32 %v3179
        %vm3186 = vmor %vm3184, %vm3185
        %v3187 = vsel %vm3186, %v3179, %v3183
        %v3188 = vand.u32 2147483647, %v2687
        %vm3189 = vcmp.eq.f32.partialorder %v3188, 8.507059e+37
        %v3190 = vand.u32 %v2687, 2147483648
        %v3191 = vor.u32 1.1754944e-38, %v3190
        %v3192 = vsel %vm3189, %v3191, %v3187
        %v3193 = vmul.f32 1.0, %v3192
        %v3194 = vrcp.pop %v2688
        %v3195 = vmul.f32 %v2688, %v3194
        %v3196 = vsub.f32 1.0, %v3195
        %v3197 = vmul.f32 %v3194, %v3196
        %v3198 = vadd.f32 %v3194, %v3197
        %vm3199 = vweird.f32 %v2688
        %vm3200 = vweird.f32 %v3194
        %vm3201 = vmor %vm3199, %vm3200
        %v3202 = vsel %vm3201, %v3194, %v3198
        %v3203 = vand.u32 2147483647, %v2688
        %vm3204 = vcmp.eq.f32.partialorder %v3203, 8.507059e+37
        %v3205 = vand.u32 %v2688, 2147483648
        %v3206 = vor.u32 1.1754944e-38, %v3205
        %v3207 = vsel %vm3204, %v3206, %v3202
        %v3208 = vmul.f32 1.0, %v3207
        %v3209 = vrcp.pop %v2689
        %v3210 = vmul.f32 %v2689, %v3209
        %v3211 = vsub.f32 1.0, %v3210
        %v3212 = vmul.f32 %v3209, %v3211
        %v3213 = vadd.f32 %v3209, %v3212
        %vm3214 = vweird.f32 %v2689
        %vm3215 = vweird.f32 %v3209
        %vm3216 = vmor %vm3214, %vm3215
        %v3217 = vsel %vm3216, %v3209, %v3213
        %v3218 = vand.u32 2147483647, %v2689
        %vm3219 = vcmp.eq.f32.partialorder %v3218, 8.507059e+37
        %v3220 = vand.u32 %v2689, 2147483648
        %v3221 = vor.u32 1.1754944e-38, %v3220
        %v3222 = vsel %vm3219, %v3221, %v3217
        %v3223 = vmul.f32 1.0, %v3222
        %v3224 = vrcp.pop %v2690
        %v3225 = vmul.f32 %v2690, %v3224
        %v3226 = vsub.f32 1.0, %v3225
        %v3227 = vmul.f32 %v3224, %v3226
        %v3228 = vadd.f32 %v3224, %v3227
        %vm3229 = vweird.f32 %v2690
        %vm3230 = vweird.f32 %v3224
        %vm3231 = vmor %vm3229, %vm3230
        %v3232 = vsel %vm3231, %v3224, %v3228
        %v3233 = vand.u32 2147483647, %v2690
        %vm3234 = vcmp.eq.f32.partialorder %v3233, 8.507059e+37
        %v3235 = vand.u32 %v2690, 2147483648
        %v3236 = vor.u32 1.1754944e-38, %v3235
        %v3237 = vsel %vm3234, %v3236, %v3232
        %v3238 = vmul.f32 1.0, %v3237
        %v3239 = vrcp.pop %v2691
        %v3240 = vmul.f32 %v2691, %v3239
        %v3241 = vsub.f32 1.0, %v3240
        %v3242 = vmul.f32 %v3239, %v3241
        %v3243 = vadd.f32 %v3239, %v3242
        %vm3244 = vweird.f32 %v2691
        %vm3245 = vweird.f32 %v3239
        %vm3246 = vmor %vm3244, %vm3245
        %v3247 = vsel %vm3246, %v3239, %v3243
        %v3248 = vand.u32 2147483647, %v2691
        %vm3249 = vcmp.eq.f32.partialorder %v3248, 8.507059e+37
        %v3250 = vand.u32 %v2691, 2147483648
        %v3251 = vor.u32 1.1754944e-38, %v3250
        %v3252 = vsel %vm3249, %v3251, %v3247
        %v3253 = vmul.f32 1.0, %v3252
        %v3254 = vrcp.pop %v2692
        %v3255 = vmul.f32 %v2692, %v3254
        %v3256 = vsub.f32 1.0, %v3255
        %v3257 = vmul.f32 %v3254, %v3256
        %v3258 = vadd.f32 %v3254, %v3257
        %vm3259 = vweird.f32 %v2692
        %vm3260 = vweird.f32 %v3254
        %vm3261 = vmor %vm3259, %vm3260
        %v3262 = vsel %vm3261, %v3254, %v3258
        %v3263 = vand.u32 2147483647, %v2692
        %vm3264 = vcmp.eq.f32.partialorder %v3263, 8.507059e+37
        %v3265 = vand.u32 %v2692, 2147483648
        %v3266 = vor.u32 1.1754944e-38, %v3265
        %v3267 = vsel %vm3264, %v3266, %v3262
        %v3268 = vmul.f32 1.0, %v3267
        %v3269 = vrcp.pop %v2693
        %v3270 = vmul.f32 %v2693, %v3269
        %v3271 = vsub.f32 1.0, %v3270
        %v3272 = vmul.f32 %v3269, %v3271
        %v3273 = vadd.f32 %v3269, %v3272
        %vm3274 = vweird.f32 %v2693
        %vm3275 = vweird.f32 %v3269
        %vm3276 = vmor %vm3274, %vm3275
        %v3277 = vsel %vm3276, %v3269, %v3273
        %v3278 = vand.u32 2147483647, %v2693
        %vm3279 = vcmp.eq.f32.partialorder %v3278, 8.507059e+37
        %v3280 = vand.u32 %v2693, 2147483648
        %v3281 = vor.u32 1.1754944e-38, %v3280
        %v3282 = vsel %vm3279, %v3281, %v3277
        %v3283 = vmul.f32 1.0, %v3282
        %v3284 = vrcp.pop %v2694
        %v3285 = vmul.f32 %v2694, %v3284
        %v3286 = vsub.f32 1.0, %v3285
        %v3287 = vmul.f32 %v3284, %v3286
        %v3288 = vadd.f32 %v3284, %v3287
        %vm3289 = vweird.f32 %v2694
        %vm3290 = vweird.f32 %v3284
        %vm3291 = vmor %vm3289, %vm3290
        %v3292 = vsel %vm3291, %v3284, %v3288
        %v3293 = vand.u32 2147483647, %v2694
        %vm3294 = vcmp.eq.f32.partialorder %v3293, 8.507059e+37
        %v3295 = vand.u32 %v2694, 2147483648
        %v3296 = vor.u32 1.1754944e-38, %v3295
        %v3297 = vsel %vm3294, %v3296, %v3292
        %v3298 = vmul.f32 1.0, %v3297
        %v3299 = vrcp.pop %v2695
        %v3300 = vmul.f32 %v2695, %v3299
        %v3301 = vsub.f32 1.0, %v3300
        %v3302 = vmul.f32 %v3299, %v3301
        %v3303 = vadd.f32 %v3299, %v3302
        %vm3304 = vweird.f32 %v2695
        %vm3305 = vweird.f32 %v3299
        %vm3306 = vmor %vm3304, %vm3305
        %v3307 = vsel %vm3306, %v3299, %v3303
        %v3308 = vand.u32 2147483647, %v2695
        %vm3309 = vcmp.eq.f32.partialorder %v3308, 8.507059e+37
        %v3310 = vand.u32 %v2695, 2147483648
        %v3311 = vor.u32 1.1754944e-38, %v3310
        %v3312 = vsel %vm3309, %v3311, %v3307
        %v3313 = vmul.f32 1.0, %v3312
        %v3314 = vrcp.pop %v2696
        %v3315 = vmul.f32 %v2696, %v3314
        %v3316 = vsub.f32 1.0, %v3315
        %v3317 = vmul.f32 %v3314, %v3316
        %v3318 = vadd.f32 %v3314, %v3317
        %vm3319 = vweird.f32 %v2696
        %vm3320 = vweird.f32 %v3314
        %vm3321 = vmor %vm3319, %vm3320
        %v3322 = vsel %vm3321, %v3314, %v3318
        %v3323 = vand.u32 2147483647, %v2696
        %vm3324 = vcmp.eq.f32.partialorder %v3323, 8.507059e+37
        %v3325 = vand.u32 %v2696, 2147483648
        %v3326 = vor.u32 1.1754944e-38, %v3325
        %v3327 = vsel %vm3324, %v3326, %v3322
        %v3328 = vmul.f32 1.0, %v3327
        %v3329 = vrcp.pop %v2697
        %v3330 = vmul.f32 %v2697, %v3329
        %v3331 = vsub.f32 1.0, %v3330
        %v3332 = vmul.f32 %v3329, %v3331
        %v3333 = vadd.f32 %v3329, %v3332
        %vm3334 = vweird.f32 %v2697
        %vm3335 = vweird.f32 %v3329
        %vm3336 = vmor %vm3334, %vm3335
        %v3337 = vsel %vm3336, %v3329, %v3333
        %v3338 = vand.u32 2147483647, %v2697
        %vm3339 = vcmp.eq.f32.partialorder %v3338, 8.507059e+37
        %v3340 = vand.u32 %v2697, 2147483648
        %v3341 = vor.u32 1.1754944e-38, %v3340
        %v3342 = vsel %vm3339, %v3341, %v3337
        %v3343 = vmul.f32 1.0, %v3342
        %v3344 = vrcp.pop %v2698
        %v3345 = vmul.f32 %v2698, %v3344
        %v3346 = vsub.f32 1.0, %v3345
        %v3347 = vmul.f32 %v3344, %v3346
        %v3348 = vadd.f32 %v3344, %v3347
        %vm3349 = vweird.f32 %v2698
        %vm3350 = vweird.f32 %v3344
        %vm3351 = vmor %vm3349, %vm3350
        %v3352 = vsel %vm3351, %v3344, %v3348
        %v3353 = vand.u32 2147483647, %v2698
        %vm3354 = vcmp.eq.f32.partialorder %v3353, 8.507059e+37
        %v3355 = vand.u32 %v2698, 2147483648
        %v3356 = vor.u32 1.1754944e-38, %v3355
        %v3357 = vsel %vm3354, %v3356, %v3352
        %v3358 = vmul.f32 1.0, %v3357
        %v3359 = vrcp.pop %v2699
        %v3360 = vmul.f32 %v2699, %v3359
        %v3361 = vsub.f32 1.0, %v3360
        %v3362 = vmul.f32 %v3359, %v3361
        %v3363 = vadd.f32 %v3359, %v3362
        %vm3364 = vweird.f32 %v2699
        %vm3365 = vweird.f32 %v3359
        %vm3366 = vmor %vm3364, %vm3365
        %v3367 = vsel %vm3366, %v3359, %v3363
        %v3368 = vand.u32 2147483647, %v2699
        %vm3369 = vcmp.eq.f32.partialorder %v3368, 8.507059e+37
        %v3370 = vand.u32 %v2699, 2147483648
        %v3371 = vor.u32 1.1754944e-38, %v3370
        %v3372 = vsel %vm3369, %v3371, %v3367
        %v3373 = vmul.f32 1.0, %v3372
        %v3374 = vrcp.pop %v2700
        %v3375 = vmul.f32 %v2700, %v3374
        %v3376 = vsub.f32 1.0, %v3375
        %v3377 = vmul.f32 %v3374, %v3376
        %v3378 = vadd.f32 %v3374, %v3377
        %vm3379 = vweird.f32 %v2700
        %vm3380 = vweird.f32 %v3374
        %vm3381 = vmor %vm3379, %vm3380
        %v3382 = vsel %vm3381, %v3374, %v3378
        %v3383 = vand.u32 2147483647, %v2700
        %vm3384 = vcmp.eq.f32.partialorder %v3383, 8.507059e+37
        %v3385 = vand.u32 %v2700, 2147483648
        %v3386 = vor.u32 1.1754944e-38, %v3385
        %v3387 = vsel %vm3384, %v3386, %v3382
        %v3388 = vmul.f32 1.0, %v3387
        %v3389 = vrcp.pop %v2701
        %v3390 = vmul.f32 %v2701, %v3389
        %v3391 = vsub.f32 1.0, %v3390
        %v3392 = vmul.f32 %v3389, %v3391
        %v3393 = vadd.f32 %v3389, %v3392
        %vm3394 = vweird.f32 %v2701
        %vm3395 = vweird.f32 %v3389
        %vm3396 = vmor %vm3394, %vm3395
        %v3397 = vsel %vm3396, %v3389, %v3393
        %v3398 = vand.u32 2147483647, %v2701
        %vm3399 = vcmp.eq.f32.partialorder %v3398, 8.507059e+37
        %v3400 = vand.u32 %v2701, 2147483648
        %v3401 = vor.u32 1.1754944e-38, %v3400
        %v3402 = vsel %vm3399, %v3401, %v3397
        %v3403 = vmul.f32 1.0, %v3402
        %v3404 = vrcp.pop %v2702
        %v3405 = vmul.f32 %v2702, %v3404
        %v3406 = vsub.f32 1.0, %v3405
        %v3407 = vmul.f32 %v3404, %v3406
        %v3408 = vadd.f32 %v3404, %v3407
        %vm3409 = vweird.f32 %v2702
        %vm3410 = vweird.f32 %v3404
        %vm3411 = vmor %vm3409, %vm3410
        %v3412 = vsel %vm3411, %v3404, %v3408
        %v3413 = vand.u32 2147483647, %v2702
        %vm3414 = vcmp.eq.f32.partialorder %v3413, 8.507059e+37
        %v3415 = vand.u32 %v2702, 2147483648
        %v3416 = vor.u32 1.1754944e-38, %v3415
        %v3417 = vsel %vm3414, %v3416, %v3412
        %v3418 = vmul.f32 1.0, %v3417
        %v3419 = vrcp.pop %v2703
        %v3420 = vmul.f32 %v2703, %v3419
        %v3421 = vsub.f32 1.0, %v3420
        %v3422 = vmul.f32 %v3419, %v3421
        %v3423 = vadd.f32 %v3419, %v3422
        %vm3424 = vweird.f32 %v2703
        %vm3425 = vweird.f32 %v3419
        %vm3426 = vmor %vm3424, %vm3425
        %v3427 = vsel %vm3426, %v3419, %v3423
        %v3428 = vand.u32 2147483647, %v2703
        %vm3429 = vcmp.eq.f32.partialorder %v3428, 8.507059e+37
        %v3430 = vand.u32 %v2703, 2147483648
        %v3431 = vor.u32 1.1754944e-38, %v3430
        %v3432 = vsel %vm3429, %v3431, %v3427
        %v3433 = vmul.f32 1.0, %v3432
        %v3434 = vrcp.pop %v2704
        %v3435 = vmul.f32 %v2704, %v3434
        %v3436 = vsub.f32 1.0, %v3435
        %v3437 = vmul.f32 %v3434, %v3436
        %v3438 = vadd.f32 %v3434, %v3437
        %vm3439 = vweird.f32 %v2704
        %vm3440 = vweird.f32 %v3434
        %vm3441 = vmor %vm3439, %vm3440
        %v3442 = vsel %vm3441, %v3434, %v3438
        %v3443 = vand.u32 2147483647, %v2704
        %vm3444 = vcmp.eq.f32.partialorder %v3443, 8.507059e+37
        %v3445 = vand.u32 %v2704, 2147483648
        %v3446 = vor.u32 1.1754944e-38, %v3445
        %v3447 = vsel %vm3444, %v3446, %v3442
        %v3448 = vmul.f32 1.0, %v3447
        %v3449 = vrcp.pop %v2705
        %v3450 = vmul.f32 %v2705, %v3449
        %v3451 = vsub.f32 1.0, %v3450
        %v3452 = vmul.f32 %v3449, %v3451
        %v3453 = vadd.f32 %v3449, %v3452
        %vm3454 = vweird.f32 %v2705
        %vm3455 = vweird.f32 %v3449
        %vm3456 = vmor %vm3454, %vm3455
        %v3457 = vsel %vm3456, %v3449, %v3453
        %v3458 = vand.u32 2147483647, %v2705
        %vm3459 = vcmp.eq.f32.partialorder %v3458, 8.507059e+37
        %v3460 = vand.u32 %v2705, 2147483648
        %v3461 = vor.u32 1.1754944e-38, %v3460
        %v3462 = vsel %vm3459, %v3461, %v3457
        %v3463 = vmul.f32 1.0, %v3462
        %v3464 = vrcp.pop %v2706
        %v3465 = vmul.f32 %v2706, %v3464
        %v3466 = vsub.f32 1.0, %v3465
        %v3467 = vmul.f32 %v3464, %v3466
        %v3468 = vadd.f32 %v3464, %v3467
        %vm3469 = vweird.f32 %v2706
        %vm3470 = vweird.f32 %v3464
        %vm3471 = vmor %vm3469, %vm3470
        %v3472 = vsel %vm3471, %v3464, %v3468
        %v3473 = vand.u32 2147483647, %v2706
        %vm3474 = vcmp.eq.f32.partialorder %v3473, 8.507059e+37
        %v3475 = vand.u32 %v2706, 2147483648
        %v3476 = vor.u32 1.1754944e-38, %v3475
        %v3477 = vsel %vm3474, %v3476, %v3472
        %v3478 = vmul.f32 1.0, %v3477
        %v3479 = vrcp.pop %v2707
        %v3480 = vmul.f32 %v2707, %v3479
        %v3481 = vsub.f32 1.0, %v3480
        %v3482 = vmul.f32 %v3479, %v3481
        %v3483 = vadd.f32 %v3479, %v3482
        %vm3484 = vweird.f32 %v2707
        %vm3485 = vweird.f32 %v3479
        %vm3486 = vmor %vm3484, %vm3485
        %v3487 = vsel %vm3486, %v3479, %v3483
        %v3488 = vand.u32 2147483647, %v2707
        %vm3489 = vcmp.eq.f32.partialorder %v3488, 8.507059e+37
        %v3490 = vand.u32 %v2707, 2147483648
        %v3491 = vor.u32 1.1754944e-38, %v3490
        %v3492 = vsel %vm3489, %v3491, %v3487
        %v3493 = vmul.f32 1.0, %v3492
        %v3494 = vrcp.pop %v2708
        %v3495 = vmul.f32 %v2708, %v3494
        %v3496 = vsub.f32 1.0, %v3495
        %v3497 = vmul.f32 %v3494, %v3496
        %v3498 = vadd.f32 %v3494, %v3497
        %vm3499 = vweird.f32 %v2708
        %vm3500 = vweird.f32 %v3494
        %vm3501 = vmor %vm3499, %vm3500
        %v3502 = vsel %vm3501, %v3494, %v3498
        %v3503 = vand.u32 2147483647, %v2708
        %vm3504 = vcmp.eq.f32.partialorder %v3503, 8.507059e+37
        %v3505 = vand.u32 %v2708, 2147483648
        %v3506 = vor.u32 1.1754944e-38, %v3505
        %v3507 = vsel %vm3504, %v3506, %v3502
        %v3508 = vmul.f32 1.0, %v3507
        %v3509 = vrcp.pop %v2709
        %v3510 = vmul.f32 %v2709, %v3509
        %v3511 = vsub.f32 1.0, %v3510
        %v3512 = vmul.f32 %v3509, %v3511
        %v3513 = vadd.f32 %v3509, %v3512
        %vm3514 = vweird.f32 %v2709
        %vm3515 = vweird.f32 %v3509
        %vm3516 = vmor %vm3514, %vm3515
        %v3517 = vsel %vm3516, %v3509, %v3513
        %v3518 = vand.u32 2147483647, %v2709
        %vm3519 = vcmp.eq.f32.partialorder %v3518, 8.507059e+37
        %v3520 = vand.u32 %v2709, 2147483648
        %v3521 = vor.u32 1.1754944e-38, %v3520
        %v3522 = vsel %vm3519, %v3521, %v3517
        %v3523 = vmul.f32 1.0, %v3522
        %v3524 = vrcp.pop %v2710
        %v3525 = vmul.f32 %v2710, %v3524
        %v3526 = vsub.f32 1.0, %v3525
        %v3527 = vmul.f32 %v3524, %v3526
        %v3528 = vadd.f32 %v3524, %v3527
        %vm3529 = vweird.f32 %v2710
        %vm3530 = vweird.f32 %v3524
        %vm3531 = vmor %vm3529, %vm3530
        %v3532 = vsel %vm3531, %v3524, %v3528
        %v3533 = vand.u32 2147483647, %v2710
        %vm3534 = vcmp.eq.f32.partialorder %v3533, 8.507059e+37
        %v3535 = vand.u32 %v2710, 2147483648
        %v3536 = vor.u32 1.1754944e-38, %v3535
        %v3537 = vsel %vm3534, %v3536, %v3532
        %v3538 = vmul.f32 1.0, %v3537
        %v3539 = vrcp.pop %v2711
        %v3540 = vmul.f32 %v2711, %v3539
        %v3541 = vsub.f32 1.0, %v3540
        %v3542 = vmul.f32 %v3539, %v3541
        %v3543 = vadd.f32 %v3539, %v3542
        %vm3544 = vweird.f32 %v2711
        %vm3545 = vweird.f32 %v3539
        %vm3546 = vmor %vm3544, %vm3545
        %v3547 = vsel %vm3546, %v3539, %v3543
        %v3548 = vand.u32 2147483647, %v2711
        %vm3549 = vcmp.eq.f32.partialorder %v3548, 8.507059e+37
        %v3550 = vand.u32 %v2711, 2147483648
        %v3551 = vor.u32 1.1754944e-38, %v3550
        %v3552 = vsel %vm3549, %v3551, %v3547
        %v3553 = vmul.f32 1.0, %v3552
        %v3554 = vrcp.pop %v2712
        %v3555 = vmul.f32 %v2712, %v3554
        %v3556 = vsub.f32 1.0, %v3555
        %v3557 = vmul.f32 %v3554, %v3556
        %v3558 = vadd.f32 %v3554, %v3557
        %vm3559 = vweird.f32 %v2712
        %vm3560 = vweird.f32 %v3554
        %vm3561 = vmor %vm3559, %vm3560
        %v3562 = vsel %vm3561, %v3554, %v3558
        %v3563 = vand.u32 2147483647, %v2712
        %vm3564 = vcmp.eq.f32.partialorder %v3563, 8.507059e+37
        %v3565 = vand.u32 %v2712, 2147483648
        %v3566 = vor.u32 1.1754944e-38, %v3565
        %v3567 = vsel %vm3564, %v3566, %v3562
        %v3568 = vmul.f32 1.0, %v3567
        %v3569 = vrcp.pop %v2713
        %v3570 = vmul.f32 %v2713, %v3569
        %v3571 = vsub.f32 1.0, %v3570
        %v3572 = vmul.f32 %v3569, %v3571
        %v3573 = vadd.f32 %v3569, %v3572
        %vm3574 = vweird.f32 %v2713
        %vm3575 = vweird.f32 %v3569
        %vm3576 = vmor %vm3574, %vm3575
        %v3577 = vsel %vm3576, %v3569, %v3573
        %v3578 = vand.u32 2147483647, %v2713
        %vm3579 = vcmp.eq.f32.partialorder %v3578, 8.507059e+37
        %v3580 = vand.u32 %v2713, 2147483648
        %v3581 = vor.u32 1.1754944e-38, %v3580
        %v3582 = vsel %vm3579, %v3581, %v3577
        %v3583 = vmul.f32 1.0, %v3582
        %v3584 = vrcp.pop %v2714
        %v3585 = vmul.f32 %v2714, %v3584
        %v3586 = vsub.f32 1.0, %v3585
        %v3587 = vmul.f32 %v3584, %v3586
        %v3588 = vadd.f32 %v3584, %v3587
        %vm3589 = vweird.f32 %v2714
        %vm3590 = vweird.f32 %v3584
        %vm3591 = vmor %vm3589, %vm3590
        %v3592 = vsel %vm3591, %v3584, %v3588
        %v3593 = vand.u32 2147483647, %v2714
        %vm3594 = vcmp.eq.f32.partialorder %v3593, 8.507059e+37
        %v3595 = vand.u32 %v2714, 2147483648
        %v3596 = vor.u32 1.1754944e-38, %v3595
        %v3597 = vsel %vm3594, %v3596, %v3592
        %v3598 = vmul.f32 1.0, %v3597
        %v3599 = vrcp.pop %v2715
        %v3600 = vmul.f32 %v2715, %v3599
        %v3601 = vsub.f32 1.0, %v3600
        %v3602 = vmul.f32 %v3599, %v3601
        %v3603 = vadd.f32 %v3599, %v3602
        %vm3604 = vweird.f32 %v2715
        %vm3605 = vweird.f32 %v3599
        %vm3606 = vmor %vm3604, %vm3605
        %v3607 = vsel %vm3606, %v3599, %v3603
        %v3608 = vand.u32 2147483647, %v2715
        %vm3609 = vcmp.eq.f32.partialorder %v3608, 8.507059e+37
        %v3610 = vand.u32 %v2715, 2147483648
        %v3611 = vor.u32 1.1754944e-38, %v3610
        %v3612 = vsel %vm3609, %v3611, %v3607
        %v3613 = vmul.f32 1.0, %v3612
        %v3614 = vrcp.pop %v2716
        %v3615 = vmul.f32 %v2716, %v3614
        %v3616 = vsub.f32 1.0, %v3615
        %v3617 = vmul.f32 %v3614, %v3616
        %v3618 = vadd.f32 %v3614, %v3617
        %vm3619 = vweird.f32 %v2716
        %vm3620 = vweird.f32 %v3614
        %vm3621 = vmor %vm3619, %vm3620
        %v3622 = vsel %vm3621, %v3614, %v3618
        %v3623 = vand.u32 2147483647, %v2716
        %vm3624 = vcmp.eq.f32.partialorder %v3623, 8.507059e+37
        %v3625 = vand.u32 %v2716, 2147483648
        %v3626 = vor.u32 1.1754944e-38, %v3625
        %v3627 = vsel %vm3624, %v3626, %v3622
        %v3628 = vmul.f32 1.0, %v3627
        %v3629 = vrcp.pop %v2717
        %v3630 = vmul.f32 %v2717, %v3629
        %v3631 = vsub.f32 1.0, %v3630
        %v3632 = vmul.f32 %v3629, %v3631
        %v3633 = vadd.f32 %v3629, %v3632
        %vm3634 = vweird.f32 %v2717
        %vm3635 = vweird.f32 %v3629
        %vm3636 = vmor %vm3634, %vm3635
        %v3637 = vsel %vm3636, %v3629, %v3633
        %v3638 = vand.u32 2147483647, %v2717
        %vm3639 = vcmp.eq.f32.partialorder %v3638, 8.507059e+37
        %v3640 = vand.u32 %v2717, 2147483648
        %v3641 = vor.u32 1.1754944e-38, %v3640
        %v3642 = vsel %vm3639, %v3641, %v3637
        %v3643 = vmul.f32 1.0, %v3642
        %v3644 = vrcp.pop %v2718
        %v3645 = vmul.f32 %v2718, %v3644
        %v3646 = vsub.f32 1.0, %v3645
        %v3647 = vmul.f32 %v3644, %v3646
        %v3648 = vadd.f32 %v3644, %v3647
        %vm3649 = vweird.f32 %v2718
        %vm3650 = vweird.f32 %v3644
        %vm3651 = vmor %vm3649, %vm3650
        %v3652 = vsel %vm3651, %v3644, %v3648
        %v3653 = vand.u32 2147483647, %v2718
        %vm3654 = vcmp.eq.f32.partialorder %v3653, 8.507059e+37
        %v3655 = vand.u32 %v2718, 2147483648
        %v3656 = vor.u32 1.1754944e-38, %v3655
        %v3657 = vsel %vm3654, %v3656, %v3652
        %v3658 = vmul.f32 1.0, %v3657
        %v3659 = vrcp.pop %v2719
        %v3660 = vmul.f32 %v2719, %v3659
        %v3661 = vsub.f32 1.0, %v3660
        %v3662 = vmul.f32 %v3659, %v3661
        %v3663 = vadd.f32 %v3659, %v3662
        %vm3664 = vweird.f32 %v2719
        %vm3665 = vweird.f32 %v3659
        %vm3666 = vmor %vm3664, %vm3665
        %v3667 = vsel %vm3666, %v3659, %v3663
        %v3668 = vand.u32 2147483647, %v2719
        %vm3669 = vcmp.eq.f32.partialorder %v3668, 8.507059e+37
        %v3670 = vand.u32 %v2719, 2147483648
        %v3671 = vor.u32 1.1754944e-38, %v3670
        %v3672 = vsel %vm3669, %v3671, %v3667
        %v3673 = vmul.f32 1.0, %v3672
        %v3674 = vrcp.pop %v2720
        %v3675 = vmul.f32 %v2720, %v3674
        %v3676 = vsub.f32 1.0, %v3675
        %v3677 = vmul.f32 %v3674, %v3676
        %v3678 = vadd.f32 %v3674, %v3677
        %vm3679 = vweird.f32 %v2720
        %vm3680 = vweird.f32 %v3674
        %vm3681 = vmor %vm3679, %vm3680
        %v3682 = vsel %vm3681, %v3674, %v3678
        %v3683 = vand.u32 2147483647, %v2720
        %vm3684 = vcmp.eq.f32.partialorder %v3683, 8.507059e+37
        %v3685 = vand.u32 %v2720, 2147483648
        %v3686 = vor.u32 1.1754944e-38, %v3685
        %v3687 = vsel %vm3684, %v3686, %v3682
        %v3688 = vmul.f32 1.0, %v3687
        %v3689 = vrcp.pop %v2721
        %v3690 = vmul.f32 %v2721, %v3689
        %v3691 = vsub.f32 1.0, %v3690
        %v3692 = vmul.f32 %v3689, %v3691
        %v3693 = vadd.f32 %v3689, %v3692
        %vm3694 = vweird.f32 %v2721
        %vm3695 = vweird.f32 %v3689
        %vm3696 = vmor %vm3694, %vm3695
        %v3697 = vsel %vm3696, %v3689, %v3693
        %v3698 = vand.u32 2147483647, %v2721
        %vm3699 = vcmp.eq.f32.partialorder %v3698, 8.507059e+37
        %v3700 = vand.u32 %v2721, 2147483648
        %v3701 = vor.u32 1.1754944e-38, %v3700
        %v3702 = vsel %vm3699, %v3701, %v3697
        %v3703 = vmul.f32 1.0, %v3702
        %v3704 = vrcp.pop %v2722
        %v3705 = vmul.f32 %v2722, %v3704
        %v3706 = vsub.f32 1.0, %v3705
        %v3707 = vmul.f32 %v3704, %v3706
        %v3708 = vadd.f32 %v3704, %v3707
        %vm3709 = vweird.f32 %v2722
        %vm3710 = vweird.f32 %v3704
        %vm3711 = vmor %vm3709, %vm3710
        %v3712 = vsel %vm3711, %v3704, %v3708
        %v3713 = vand.u32 2147483647, %v2722
        %vm3714 = vcmp.eq.f32.partialorder %v3713, 8.507059e+37
        %v3715 = vand.u32 %v2722, 2147483648
        %v3716 = vor.u32 1.1754944e-38, %v3715
        %v3717 = vsel %vm3714, %v3716, %v3712
        %v3718 = vmul.f32 1.0, %v3717
        %v3719 = vrcp.pop %v2723
        %v3720 = vmul.f32 %v2723, %v3719
        %v3721 = vsub.f32 1.0, %v3720
        %v3722 = vmul.f32 %v3719, %v3721
        %v3723 = vadd.f32 %v3719, %v3722
        %vm3724 = vweird.f32 %v2723
        %vm3725 = vweird.f32 %v3719
        %vm3726 = vmor %vm3724, %vm3725
        %v3727 = vsel %vm3726, %v3719, %v3723
        %v3728 = vand.u32 2147483647, %v2723
        %vm3729 = vcmp.eq.f32.partialorder %v3728, 8.507059e+37
        %v3730 = vand.u32 %v2723, 2147483648
        %v3731 = vor.u32 1.1754944e-38, %v3730
        %v3732 = vsel %vm3729, %v3731, %v3727
        %v3733 = vmul.f32 1.0, %v3732
        %v3734 = vrcp.pop %v2724
        %v3735 = vmul.f32 %v2724, %v3734
        %v3736 = vsub.f32 1.0, %v3735
        %v3737 = vmul.f32 %v3734, %v3736
        %v3738 = vadd.f32 %v3734, %v3737
        %vm3739 = vweird.f32 %v2724
        %vm3740 = vweird.f32 %v3734
        %vm3741 = vmor %vm3739, %vm3740
        %v3742 = vsel %vm3741, %v3734, %v3738
        %v3743 = vand.u32 2147483647, %v2724
        %vm3744 = vcmp.eq.f32.partialorder %v3743, 8.507059e+37
        %v3745 = vand.u32 %v2724, 2147483648
        %v3746 = vor.u32 1.1754944e-38, %v3745
        %v3747 = vsel %vm3744, %v3746, %v3742
        %v3748 = vmul.f32 1.0, %v3747
        %v3749 = vrcp.pop %v2725
        %v3750 = vmul.f32 %v2725, %v3749
        %v3751 = vsub.f32 1.0, %v3750
        %v3752 = vmul.f32 %v3749, %v3751
        %v3753 = vadd.f32 %v3749, %v3752
        %vm3754 = vweird.f32 %v2725
        %vm3755 = vweird.f32 %v3749
        %vm3756 = vmor %vm3754, %vm3755
        %v3757 = vsel %vm3756, %v3749, %v3753
        %v3758 = vand.u32 2147483647, %v2725
        %vm3759 = vcmp.eq.f32.partialorder %v3758, 8.507059e+37
        %v3760 = vand.u32 %v2725, 2147483648
        %v3761 = vor.u32 1.1754944e-38, %v3760
        %v3762 = vsel %vm3759, %v3761, %v3757
        %v3763 = vmul.f32 1.0, %v3762
        %v3764 = vrcp.pop %v2726
        %v3765 = vmul.f32 %v2726, %v3764
        %v3766 = vsub.f32 1.0, %v3765
        %v3767 = vmul.f32 %v3764, %v3766
        %v3768 = vadd.f32 %v3764, %v3767
        %vm3769 = vweird.f32 %v2726
        %vm3770 = vweird.f32 %v3764
        %vm3771 = vmor %vm3769, %vm3770
        %v3772 = vsel %vm3771, %v3764, %v3768
        %v3773 = vand.u32 2147483647, %v2726
        %vm3774 = vcmp.eq.f32.partialorder %v3773, 8.507059e+37
        %v3775 = vand.u32 %v2726, 2147483648
        %v3776 = vor.u32 1.1754944e-38, %v3775
        %v3777 = vsel %vm3774, %v3776, %v3772
        %v3778 = vmul.f32 1.0, %v3777
        %v3779 = vrcp.pop %v2727
        %v3780 = vmul.f32 %v2727, %v3779
        %v3781 = vsub.f32 1.0, %v3780
        %v3782 = vmul.f32 %v3779, %v3781
        %v3783 = vadd.f32 %v3779, %v3782
        %vm3784 = vweird.f32 %v2727
        %vm3785 = vweird.f32 %v3779
        %vm3786 = vmor %vm3784, %vm3785
        %v3787 = vsel %vm3786, %v3779, %v3783
        %v3788 = vand.u32 2147483647, %v2727
        %vm3789 = vcmp.eq.f32.partialorder %v3788, 8.507059e+37
        %v3790 = vand.u32 %v2727, 2147483648
        %v3791 = vor.u32 1.1754944e-38, %v3790
        %v3792 = vsel %vm3789, %v3791, %v3787
        %v3793 = vmul.f32 1.0, %v3792
        %v3794 = vrcp.pop %v2728
        %v3795 = vmul.f32 %v2728, %v3794
        %v3796 = vsub.f32 1.0, %v3795
        %v3797 = vmul.f32 %v3794, %v3796
        %v3798 = vadd.f32 %v3794, %v3797
        %vm3799 = vweird.f32 %v2728
        %vm3800 = vweird.f32 %v3794
        %vm3801 = vmor %vm3799, %vm3800
        %v3802 = vsel %vm3801, %v3794, %v3798
        %v3803 = vand.u32 2147483647, %v2728
        %vm3804 = vcmp.eq.f32.partialorder %v3803, 8.507059e+37
        %v3805 = vand.u32 %v2728, 2147483648
        %v3806 = vor.u32 1.1754944e-38, %v3805
        %v3807 = vsel %vm3804, %v3806, %v3802
        %v3808 = vmul.f32 1.0, %v3807
        %v3809 = vrcp.pop %v2729
        %v3810 = vmul.f32 %v2729, %v3809
        %v3811 = vsub.f32 1.0, %v3810
        %v3812 = vmul.f32 %v3809, %v3811
        %v3813 = vadd.f32 %v3809, %v3812
        %vm3814 = vweird.f32 %v2729
        %vm3815 = vweird.f32 %v3809
        %vm3816 = vmor %vm3814, %vm3815
        %v3817 = vsel %vm3816, %v3809, %v3813
        %v3818 = vand.u32 2147483647, %v2729
        %vm3819 = vcmp.eq.f32.partialorder %v3818, 8.507059e+37
        %v3820 = vand.u32 %v2729, 2147483648
        %v3821 = vor.u32 1.1754944e-38, %v3820
        %v3822 = vsel %vm3819, %v3821, %v3817
        %v3823 = vmul.f32 1.0, %v3822
        %v3824 = vrcp.pop %v2730
        %v3825 = vmul.f32 %v2730, %v3824
        %v3826 = vsub.f32 1.0, %v3825
        %v3827 = vmul.f32 %v3824, %v3826
        %v3828 = vadd.f32 %v3824, %v3827
        %vm3829 = vweird.f32 %v2730
        %vm3830 = vweird.f32 %v3824
        %vm3831 = vmor %vm3829, %vm3830
        %v3832 = vsel %vm3831, %v3824, %v3828
        %v3833 = vand.u32 2147483647, %v2730
        %vm3834 = vcmp.eq.f32.partialorder %v3833, 8.507059e+37
        %v3835 = vand.u32 %v2730, 2147483648
        %v3836 = vor.u32 1.1754944e-38, %v3835
        %v3837 = vsel %vm3834, %v3836, %v3832
        %v3838 = vmul.f32 1.0, %v3837
        %v3839 = vrcp.pop %v2731
        %v3840 = vmul.f32 %v2731, %v3839
        %v3841 = vsub.f32 1.0, %v3840
        %v3842 = vmul.f32 %v3839, %v3841
        %v3843 = vadd.f32 %v3839, %v3842
        %vm3844 = vweird.f32 %v2731
        %vm3845 = vweird.f32 %v3839
        %vm3846 = vmor %vm3844, %vm3845
        %v3847 = vsel %vm3846, %v3839, %v3843
        %v3848 = vand.u32 2147483647, %v2731
        %vm3849 = vcmp.eq.f32.partialorder %v3848, 8.507059e+37
        %v3850 = vand.u32 %v2731, 2147483648
        %v3851 = vor.u32 1.1754944e-38, %v3850
        %v3852 = vsel %vm3849, %v3851, %v3847
        %v3853 = vmul.f32 1.0, %v3852
        %v3854 = vrcp.pop %v2732
        %v3855 = vmul.f32 %v2732, %v3854
        %v3856 = vsub.f32 1.0, %v3855
        %v3857 = vmul.f32 %v3854, %v3856
        %v3858 = vadd.f32 %v3854, %v3857
        %vm3859 = vweird.f32 %v2732
        %vm3860 = vweird.f32 %v3854
        %vm3861 = vmor %vm3859, %vm3860
        %v3862 = vsel %vm3861, %v3854, %v3858
        %v3863 = vand.u32 2147483647, %v2732
        %vm3864 = vcmp.eq.f32.partialorder %v3863, 8.507059e+37
        %v3865 = vand.u32 %v2732, 2147483648
        %v3866 = vor.u32 1.1754944e-38, %v3865
        %v3867 = vsel %vm3864, %v3866, %v3862
        %v3868 = vmul.f32 1.0, %v3867
        %v3869 = vrcp.pop %v2733
        %v3870 = vmul.f32 %v2733, %v3869
        %v3871 = vsub.f32 1.0, %v3870
        %v3872 = vmul.f32 %v3869, %v3871
        %v3873 = vadd.f32 %v3869, %v3872
        %vm3874 = vweird.f32 %v2733
        %vm3875 = vweird.f32 %v3869
        %vm3876 = vmor %vm3874, %vm3875
        %v3877 = vsel %vm3876, %v3869, %v3873
        %v3878 = vand.u32 2147483647, %v2733
        %vm3879 = vcmp.eq.f32.partialorder %v3878, 8.507059e+37
        %v3880 = vand.u32 %v2733, 2147483648
        %v3881 = vor.u32 1.1754944e-38, %v3880
        %v3882 = vsel %vm3879, %v3881, %v3877
        %v3883 = vmul.f32 1.0, %v3882
        %v3884 = vrcp.pop %v2734
        %v3885 = vmul.f32 %v2734, %v3884
        %v3886 = vsub.f32 1.0, %v3885
        %v3887 = vmul.f32 %v3884, %v3886
        %v3888 = vadd.f32 %v3884, %v3887
        %vm3889 = vweird.f32 %v2734
        %vm3890 = vweird.f32 %v3884
        %vm3891 = vmor %vm3889, %vm3890
        %v3892 = vsel %vm3891, %v3884, %v3888
        %v3893 = vand.u32 2147483647, %v2734
        %vm3894 = vcmp.eq.f32.partialorder %v3893, 8.507059e+37
        %v3895 = vand.u32 %v2734, 2147483648
        %v3896 = vor.u32 1.1754944e-38, %v3895
        %v3897 = vsel %vm3894, %v3896, %v3892
        %v3898 = vmul.f32 1.0, %v3897
        %v3899 = vrcp.pop %v2735
        %v3900 = vmul.f32 %v2735, %v3899
        %v3901 = vsub.f32 1.0, %v3900
        %v3902 = vmul.f32 %v3899, %v3901
        %v3903 = vadd.f32 %v3899, %v3902
        %vm3904 = vweird.f32 %v2735
        %vm3905 = vweird.f32 %v3899
        %vm3906 = vmor %vm3904, %vm3905
        %v3907 = vsel %vm3906, %v3899, %v3903
        %v3908 = vand.u32 2147483647, %v2735
        %vm3909 = vcmp.eq.f32.partialorder %v3908, 8.507059e+37
        %v3910 = vand.u32 %v2735, 2147483648
        %v3911 = vor.u32 1.1754944e-38, %v3910
        %v3912 = vsel %vm3909, %v3911, %v3907
        %v3913 = vmul.f32 1.0, %v3912
        %v3914 = vrcp.pop %v2736
        %v3915 = vmul.f32 %v2736, %v3914
        %v3916 = vsub.f32 1.0, %v3915
        %v3917 = vmul.f32 %v3914, %v3916
        %v3918 = vadd.f32 %v3914, %v3917
        %vm3919 = vweird.f32 %v2736
        %vm3920 = vweird.f32 %v3914
        %vm3921 = vmor %vm3919, %vm3920
        %v3922 = vsel %vm3921, %v3914, %v3918
        %v3923 = vand.u32 2147483647, %v2736
        %vm3924 = vcmp.eq.f32.partialorder %v3923, 8.507059e+37
        %v3925 = vand.u32 %v2736, 2147483648
        %v3926 = vor.u32 1.1754944e-38, %v3925
        %v3927 = vsel %vm3924, %v3926, %v3922
        %v3928 = vmul.f32 1.0, %v3927
        %v3929 = vrcp.pop %v2737
        %v3930 = vmul.f32 %v2737, %v3929
        %v3931 = vsub.f32 1.0, %v3930
        %v3932 = vmul.f32 %v3929, %v3931
        %v3933 = vadd.f32 %v3929, %v3932
        %vm3934 = vweird.f32 %v2737
        %vm3935 = vweird.f32 %v3929
        %vm3936 = vmor %vm3934, %vm3935
        %v3937 = vsel %vm3936, %v3929, %v3933
        %v3938 = vand.u32 2147483647, %v2737
        %vm3939 = vcmp.eq.f32.partialorder %v3938, 8.507059e+37
        %v3940 = vand.u32 %v2737, 2147483648
        %v3941 = vor.u32 1.1754944e-38, %v3940
        %v3942 = vsel %vm3939, %v3941, %v3937
        %v3943 = vmul.f32 1.0, %v3942
        %v3944 = vrcp.pop %v2738
        %v3945 = vmul.f32 %v2738, %v3944
        %v3946 = vsub.f32 1.0, %v3945
        %v3947 = vmul.f32 %v3944, %v3946
        %v3948 = vadd.f32 %v3944, %v3947
        %vm3949 = vweird.f32 %v2738
        %vm3950 = vweird.f32 %v3944
        %vm3951 = vmor %vm3949, %vm3950
        %v3952 = vsel %vm3951, %v3944, %v3948
        %v3953 = vand.u32 2147483647, %v2738
        %vm3954 = vcmp.eq.f32.partialorder %v3953, 8.507059e+37
        %v3955 = vand.u32 %v2738, 2147483648
        %v3956 = vor.u32 1.1754944e-38, %v3955
        %v3957 = vsel %vm3954, %v3956, %v3952
        %v3958 = vmul.f32 1.0, %v3957
        %v3959 = vrcp.pop %v2739
        %v3960 = vmul.f32 %v2739, %v3959
        %v3961 = vsub.f32 1.0, %v3960
        %v3962 = vmul.f32 %v3959, %v3961
        %v3963 = vadd.f32 %v3959, %v3962
        %vm3964 = vweird.f32 %v2739
        %vm3965 = vweird.f32 %v3959
        %vm3966 = vmor %vm3964, %vm3965
        %v3967 = vsel %vm3966, %v3959, %v3963
        %v3968 = vand.u32 2147483647, %v2739
        %vm3969 = vcmp.eq.f32.partialorder %v3968, 8.507059e+37
        %v3970 = vand.u32 %v2739, 2147483648
        %v3971 = vor.u32 1.1754944e-38, %v3970
        %v3972 = vsel %vm3969, %v3971, %v3967
        %v3973 = vmul.f32 1.0, %v3972
        %v3974 = vrcp.pop %v2740
        %v3975 = vmul.f32 %v2740, %v3974
        %v3976 = vsub.f32 1.0, %v3975
        %v3977 = vmul.f32 %v3974, %v3976
        %v3978 = vadd.f32 %v3974, %v3977
        %vm3979 = vweird.f32 %v2740
        %vm3980 = vweird.f32 %v3974
        %vm3981 = vmor %vm3979, %vm3980
        %v3982 = vsel %vm3981, %v3974, %v3978
        %v3983 = vand.u32 2147483647, %v2740
        %vm3984 = vcmp.eq.f32.partialorder %v3983, 8.507059e+37
        %v3985 = vand.u32 %v2740, 2147483648
        %v3986 = vor.u32 1.1754944e-38, %v3985
        %v3987 = vsel %vm3984, %v3986, %v3982
        %v3988 = vmul.f32 1.0, %v3987
        %v3989 = vrcp.pop %v2741
        %v3990 = vmul.f32 %v2741, %v3989
        %v3991 = vsub.f32 1.0, %v3990
        %v3992 = vmul.f32 %v3989, %v3991
        %v3993 = vadd.f32 %v3989, %v3992
        %vm3994 = vweird.f32 %v2741
        %vm3995 = vweird.f32 %v3989
        %vm3996 = vmor %vm3994, %vm3995
        %v3997 = vsel %vm3996, %v3989, %v3993
        %v3998 = vand.u32 2147483647, %v2741
        %vm3999 = vcmp.eq.f32.partialorder %v3998, 8.507059e+37
        %v4000 = vand.u32 %v2741, 2147483648
        %v4001 = vor.u32 1.1754944e-38, %v4000
        %v4002 = vsel %vm3999, %v4001, %v3997
        %v4003 = vmul.f32 1.0, %v4002
        %v4004 = vrcp.pop %v2742
        %v4005 = vmul.f32 %v2742, %v4004
        %v4006 = vsub.f32 1.0, %v4005
        %v4007 = vmul.f32 %v4004, %v4006
        %v4008 = vadd.f32 %v4004, %v4007
        %vm4009 = vweird.f32 %v2742
        %vm4010 = vweird.f32 %v4004
        %vm4011 = vmor %vm4009, %vm4010
        %v4012 = vsel %vm4011, %v4004, %v4008
        %v4013 = vand.u32 2147483647, %v2742
        %vm4014 = vcmp.eq.f32.partialorder %v4013, 8.507059e+37
        %v4015 = vand.u32 %v2742, 2147483648
        %v4016 = vor.u32 1.1754944e-38, %v4015
        %v4017 = vsel %vm4014, %v4016, %v4012
        %v4018 = vmul.f32 1.0, %v4017
        %v4019 = vrcp.pop %v2743
        %v4020 = vmul.f32 %v2743, %v4019
        %v4021 = vsub.f32 1.0, %v4020
        %v4022 = vmul.f32 %v4019, %v4021
        %v4023 = vadd.f32 %v4019, %v4022
        %vm4024 = vweird.f32 %v2743
        %vm4025 = vweird.f32 %v4019
        %vm4026 = vmor %vm4024, %vm4025
        %v4027 = vsel %vm4026, %v4019, %v4023
        %v4028 = vand.u32 2147483647, %v2743
        %vm4029 = vcmp.eq.f32.partialorder %v4028, 8.507059e+37
        %v4030 = vand.u32 %v2743, 2147483648
        %v4031 = vor.u32 1.1754944e-38, %v4030
        %v4032 = vsel %vm4029, %v4031, %v4027
        %v4033 = vmul.f32 1.0, %v4032
        %v4034 = vrcp.pop %v2744
        %v4035 = vmul.f32 %v2744, %v4034
        %v4036 = vsub.f32 1.0, %v4035
        %v4037 = vmul.f32 %v4034, %v4036
        %v4038 = vadd.f32 %v4034, %v4037
        %vm4039 = vweird.f32 %v2744
        %vm4040 = vweird.f32 %v4034
        %vm4041 = vmor %vm4039, %vm4040
        %v4042 = vsel %vm4041, %v4034, %v4038
        %v4043 = vand.u32 2147483647, %v2744
        %vm4044 = vcmp.eq.f32.partialorder %v4043, 8.507059e+37
        %v4045 = vand.u32 %v2744, 2147483648
        %v4046 = vor.u32 1.1754944e-38, %v4045
        %v4047 = vsel %vm4044, %v4046, %v4042
        %v4048 = vmul.f32 1.0, %v4047
        %v4049 = vrcp.pop %v2745
        %v4050 = vmul.f32 %v2745, %v4049
        %v4051 = vsub.f32 1.0, %v4050
        %v4052 = vmul.f32 %v4049, %v4051
        %v4053 = vadd.f32 %v4049, %v4052
        %vm4054 = vweird.f32 %v2745
        %vm4055 = vweird.f32 %v4049
        %vm4056 = vmor %vm4054, %vm4055
        %v4057 = vsel %vm4056, %v4049, %v4053
        %v4058 = vand.u32 2147483647, %v2745
        %vm4059 = vcmp.eq.f32.partialorder %v4058, 8.507059e+37
        %v4060 = vand.u32 %v2745, 2147483648
        %v4061 = vor.u32 1.1754944e-38, %v4060
        %v4062 = vsel %vm4059, %v4061, %v4057
        %v4063 = vmul.f32 1.0, %v4062
        %v4064 = vrcp.pop %v2746
        %v4065 = vmul.f32 %v2746, %v4064
        %v4066 = vsub.f32 1.0, %v4065
        %v4067 = vmul.f32 %v4064, %v4066
        %v4068 = vadd.f32 %v4064, %v4067
        %vm4069 = vweird.f32 %v2746
        %vm4070 = vweird.f32 %v4064
        %vm4071 = vmor %vm4069, %vm4070
        %v4072 = vsel %vm4071, %v4064, %v4068
        %v4073 = vand.u32 2147483647, %v2746
        %vm4074 = vcmp.eq.f32.partialorder %v4073, 8.507059e+37
        %v4075 = vand.u32 %v2746, 2147483648
        %v4076 = vor.u32 1.1754944e-38, %v4075
        %v4077 = vsel %vm4074, %v4076, %v4072
        %v4078 = vmul.f32 1.0, %v4077
        %v4079 = vrcp.pop %v2747
        %v4080 = vmul.f32 %v2747, %v4079
        %v4081 = vsub.f32 1.0, %v4080
        %v4082 = vmul.f32 %v4079, %v4081
        %v4083 = vadd.f32 %v4079, %v4082
        %vm4084 = vweird.f32 %v2747
        %vm4085 = vweird.f32 %v4079
        %vm4086 = vmor %vm4084, %vm4085
        %v4087 = vsel %vm4086, %v4079, %v4083
        %v4088 = vand.u32 2147483647, %v2747
        %vm4089 = vcmp.eq.f32.partialorder %v4088, 8.507059e+37
        %v4090 = vand.u32 %v2747, 2147483648
        %v4091 = vor.u32 1.1754944e-38, %v4090
        %v4092 = vsel %vm4089, %v4091, %v4087
        %v4093 = vmul.f32 1.0, %v4092
        %v4094 = vrcp.pop %v2748
        %v4095 = vmul.f32 %v2748, %v4094
        %v4096 = vsub.f32 1.0, %v4095
        %v4097 = vmul.f32 %v4094, %v4096
        %v4098 = vadd.f32 %v4094, %v4097
        %vm4099 = vweird.f32 %v2748
        %vm4100 = vweird.f32 %v4094
        %vm4101 = vmor %vm4099, %vm4100
        %v4102 = vsel %vm4101, %v4094, %v4098
        %v4103 = vand.u32 2147483647, %v2748
        %vm4104 = vcmp.eq.f32.partialorder %v4103, 8.507059e+37
        %v4105 = vand.u32 %v2748, 2147483648
        %v4106 = vor.u32 1.1754944e-38, %v4105
        %v4107 = vsel %vm4104, %v4106, %v4102
        %v4108 = vmul.f32 1.0, %v4107
        %v4109 = vrcp.pop %v2749
        %v4110 = vmul.f32 %v2749, %v4109
        %v4111 = vsub.f32 1.0, %v4110
        %v4112 = vmul.f32 %v4109, %v4111
        %v4113 = vadd.f32 %v4109, %v4112
        %vm4114 = vweird.f32 %v2749
        %vm4115 = vweird.f32 %v4109
        %vm4116 = vmor %vm4114, %vm4115
        %v4117 = vsel %vm4116, %v4109, %v4113
        %v4118 = vand.u32 2147483647, %v2749
        %vm4119 = vcmp.eq.f32.partialorder %v4118, 8.507059e+37
        %v4120 = vand.u32 %v2749, 2147483648
        %v4121 = vor.u32 1.1754944e-38, %v4120
        %v4122 = vsel %vm4119, %v4121, %v4117
        %v4123 = vmul.f32 1.0, %v4122
        %v4124 = vrcp.pop %v2750
        %v4125 = vmul.f32 %v2750, %v4124
        %v4126 = vsub.f32 1.0, %v4125
        %v4127 = vmul.f32 %v4124, %v4126
        %v4128 = vadd.f32 %v4124, %v4127
        %vm4129 = vweird.f32 %v2750
        %vm4130 = vweird.f32 %v4124
        %vm4131 = vmor %vm4129, %vm4130
        %v4132 = vsel %vm4131, %v4124, %v4128
        %v4133 = vand.u32 2147483647, %v2750
        %vm4134 = vcmp.eq.f32.partialorder %v4133, 8.507059e+37
        %v4135 = vand.u32 %v2750, 2147483648
        %v4136 = vor.u32 1.1754944e-38, %v4135
        %v4137 = vsel %vm4134, %v4136, %v4132
        %v4138 = vmul.f32 1.0, %v4137
        %v4139 = vrcp.pop %v2751
        %v4140 = vmul.f32 %v2751, %v4139
        %v4141 = vsub.f32 1.0, %v4140
        %v4142 = vmul.f32 %v4139, %v4141
        %v4143 = vadd.f32 %v4139, %v4142
        %vm4144 = vweird.f32 %v2751
        %vm4145 = vweird.f32 %v4139
        %vm4146 = vmor %vm4144, %vm4145
        %v4147 = vsel %vm4146, %v4139, %v4143
        %v4148 = vand.u32 2147483647, %v2751
        %vm4149 = vcmp.eq.f32.partialorder %v4148, 8.507059e+37
        %v4150 = vand.u32 %v2751, 2147483648
        %v4151 = vor.u32 1.1754944e-38, %v4150
        %v4152 = vsel %vm4149, %v4151, %v4147
        %v4153 = vmul.f32 1.0, %v4152
        %v4154 = vrcp.pop %v2752
        %v4155 = vmul.f32 %v2752, %v4154
        %v4156 = vsub.f32 1.0, %v4155
        %v4157 = vmul.f32 %v4154, %v4156
        %v4158 = vadd.f32 %v4154, %v4157
        %vm4159 = vweird.f32 %v2752
        %vm4160 = vweird.f32 %v4154
        %vm4161 = vmor %vm4159, %vm4160
        %v4162 = vsel %vm4161, %v4154, %v4158
        %v4163 = vand.u32 2147483647, %v2752
        %vm4164 = vcmp.eq.f32.partialorder %v4163, 8.507059e+37
        %v4165 = vand.u32 %v2752, 2147483648
        %v4166 = vor.u32 1.1754944e-38, %v4165
        %v4167 = vsel %vm4164, %v4166, %v4162
        %v4168 = vmul.f32 1.0, %v4167
        %v4169 = vrcp.pop %v2753
        %v4170 = vmul.f32 %v2753, %v4169
        %v4171 = vsub.f32 1.0, %v4170
        %v4172 = vmul.f32 %v4169, %v4171
        %v4173 = vadd.f32 %v4169, %v4172
        %vm4174 = vweird.f32 %v2753
        %vm4175 = vweird.f32 %v4169
        %vm4176 = vmor %vm4174, %vm4175
        %v4177 = vsel %vm4176, %v4169, %v4173
        %v4178 = vand.u32 2147483647, %v2753
        %vm4179 = vcmp.eq.f32.partialorder %v4178, 8.507059e+37
        %v4180 = vand.u32 %v2753, 2147483648
        %v4181 = vor.u32 1.1754944e-38, %v4180
        %v4182 = vsel %vm4179, %v4181, %v4177
        %v4183 = vmul.f32 1.0, %v4182
        %v4184 = vrcp.pop %v2754
        %v4185 = vmul.f32 %v2754, %v4184
        %v4186 = vsub.f32 1.0, %v4185
        %v4187 = vmul.f32 %v4184, %v4186
        %v4188 = vadd.f32 %v4184, %v4187
        %vm4189 = vweird.f32 %v2754
        %vm4190 = vweird.f32 %v4184
        %vm4191 = vmor %vm4189, %vm4190
        %v4192 = vsel %vm4191, %v4184, %v4188
        %v4193 = vand.u32 2147483647, %v2754
        %vm4194 = vcmp.eq.f32.partialorder %v4193, 8.507059e+37
        %v4195 = vand.u32 %v2754, 2147483648
        %v4196 = vor.u32 1.1754944e-38, %v4195
        %v4197 = vsel %vm4194, %v4196, %v4192
        %v4198 = vmul.f32 1.0, %v4197
        %v4199 = vrcp.pop %v2755
        %v4200 = vmul.f32 %v2755, %v4199
        %v4201 = vsub.f32 1.0, %v4200
        %v4202 = vmul.f32 %v4199, %v4201
        %v4203 = vadd.f32 %v4199, %v4202
        %vm4204 = vweird.f32 %v2755
        %vm4205 = vweird.f32 %v4199
        %vm4206 = vmor %vm4204, %vm4205
        %v4207 = vsel %vm4206, %v4199, %v4203
        %v4208 = vand.u32 2147483647, %v2755
        %vm4209 = vcmp.eq.f32.partialorder %v4208, 8.507059e+37
        %v4210 = vand.u32 %v2755, 2147483648
        %v4211 = vor.u32 1.1754944e-38, %v4210
        %v4212 = vsel %vm4209, %v4211, %v4207
        %v4213 = vmul.f32 1.0, %v4212
        %v4214 = vrcp.pop %v2756
        %v4215 = vmul.f32 %v2756, %v4214
        %v4216 = vsub.f32 1.0, %v4215
        %v4217 = vmul.f32 %v4214, %v4216
        %v4218 = vadd.f32 %v4214, %v4217
        %vm4219 = vweird.f32 %v2756
        %vm4220 = vweird.f32 %v4214
        %vm4221 = vmor %vm4219, %vm4220
        %v4222 = vsel %vm4221, %v4214, %v4218
        %v4223 = vand.u32 2147483647, %v2756
        %vm4224 = vcmp.eq.f32.partialorder %v4223, 8.507059e+37
        %v4225 = vand.u32 %v2756, 2147483648
        %v4226 = vor.u32 1.1754944e-38, %v4225
        %v4227 = vsel %vm4224, %v4226, %v4222
        %v4228 = vmul.f32 1.0, %v4227
        %v4229 = vrcp.pop %v2757
        %v4230 = vmul.f32 %v2757, %v4229
        %v4231 = vsub.f32 1.0, %v4230
        %v4232 = vmul.f32 %v4229, %v4231
        %v4233 = vadd.f32 %v4229, %v4232
        %vm4234 = vweird.f32 %v2757
        %vm4235 = vweird.f32 %v4229
        %vm4236 = vmor %vm4234, %vm4235
        %v4237 = vsel %vm4236, %v4229, %v4233
        %v4238 = vand.u32 2147483647, %v2757
        %vm4239 = vcmp.eq.f32.partialorder %v4238, 8.507059e+37
        %v4240 = vand.u32 %v2757, 2147483648
        %v4241 = vor.u32 1.1754944e-38, %v4240
        %v4242 = vsel %vm4239, %v4241, %v4237
        %v4243 = vmul.f32 1.0, %v4242
        %v4244 = vrcp.pop %v2758
        %v4245 = vmul.f32 %v2758, %v4244
        %v4246 = vsub.f32 1.0, %v4245
        %v4247 = vmul.f32 %v4244, %v4246
        %v4248 = vadd.f32 %v4244, %v4247
        %vm4249 = vweird.f32 %v2758
        %vm4250 = vweird.f32 %v4244
        %vm4251 = vmor %vm4249, %vm4250
        %v4252 = vsel %vm4251, %v4244, %v4248
        %v4253 = vand.u32 2147483647, %v2758
        %vm4254 = vcmp.eq.f32.partialorder %v4253, 8.507059e+37
        %v4255 = vand.u32 %v2758, 2147483648
        %v4256 = vor.u32 1.1754944e-38, %v4255
        %v4257 = vsel %vm4254, %v4256, %v4252
        %v4258 = vmul.f32 1.0, %v4257
        %v4259 = vrcp.pop %v2759
        %v4260 = vmul.f32 %v2759, %v4259
        %v4261 = vsub.f32 1.0, %v4260
        %v4262 = vmul.f32 %v4259, %v4261
        %v4263 = vadd.f32 %v4259, %v4262
        %vm4264 = vweird.f32 %v2759
        %vm4265 = vweird.f32 %v4259
        %vm4266 = vmor %vm4264, %vm4265
        %v4267 = vsel %vm4266, %v4259, %v4263
        %v4268 = vand.u32 2147483647, %v2759
        %vm4269 = vcmp.eq.f32.partialorder %v4268, 8.507059e+37
        %v4270 = vand.u32 %v2759, 2147483648
        %v4271 = vor.u32 1.1754944e-38, %v4270
        %v4272 = vsel %vm4269, %v4271, %v4267
        %v4273 = vmul.f32 1.0, %v4272
        %v4274 = vrcp.pop %v2760
        %v4275 = vmul.f32 %v2760, %v4274
        %v4276 = vsub.f32 1.0, %v4275
        %v4277 = vmul.f32 %v4274, %v4276
        %v4278 = vadd.f32 %v4274, %v4277
        %vm4279 = vweird.f32 %v2760
        %vm4280 = vweird.f32 %v4274
        %vm4281 = vmor %vm4279, %vm4280
        %v4282 = vsel %vm4281, %v4274, %v4278
        %v4283 = vand.u32 2147483647, %v2760
        %vm4284 = vcmp.eq.f32.partialorder %v4283, 8.507059e+37
        %v4285 = vand.u32 %v2760, 2147483648
        %v4286 = vor.u32 1.1754944e-38, %v4285
        %v4287 = vsel %vm4284, %v4286, %v4282
        %v4288 = vmul.f32 1.0, %v4287
        %v4289 = vrcp.pop %v2761
        %v4290 = vmul.f32 %v2761, %v4289
        %v4291 = vsub.f32 1.0, %v4290
        %v4292 = vmul.f32 %v4289, %v4291
        %v4293 = vadd.f32 %v4289, %v4292
        %vm4294 = vweird.f32 %v2761
        %vm4295 = vweird.f32 %v4289
        %vm4296 = vmor %vm4294, %vm4295
        %v4297 = vsel %vm4296, %v4289, %v4293
        %v4298 = vand.u32 2147483647, %v2761
        %vm4299 = vcmp.eq.f32.partialorder %v4298, 8.507059e+37
        %v4300 = vand.u32 %v2761, 2147483648
        %v4301 = vor.u32 1.1754944e-38, %v4300
        %v4302 = vsel %vm4299, %v4301, %v4297
        %v4303 = vmul.f32 1.0, %v4302
        %v4304 = vrcp.pop %v2762
        %v4305 = vmul.f32 %v2762, %v4304
        %v4306 = vsub.f32 1.0, %v4305
        %v4307 = vmul.f32 %v4304, %v4306
        %v4308 = vadd.f32 %v4304, %v4307
        %vm4309 = vweird.f32 %v2762
        %vm4310 = vweird.f32 %v4304
        %vm4311 = vmor %vm4309, %vm4310
        %v4312 = vsel %vm4311, %v4304, %v4308
        %v4313 = vand.u32 2147483647, %v2762
        %vm4314 = vcmp.eq.f32.partialorder %v4313, 8.507059e+37
        %v4315 = vand.u32 %v2762, 2147483648
        %v4316 = vor.u32 1.1754944e-38, %v4315
        %v4317 = vsel %vm4314, %v4316, %v4312
        %v4318 = vmul.f32 1.0, %v4317
        %v4319 = vrcp.pop %v2763
        %v4320 = vmul.f32 %v2763, %v4319
        %v4321 = vsub.f32 1.0, %v4320
        %v4322 = vmul.f32 %v4319, %v4321
        %v4323 = vadd.f32 %v4319, %v4322
        %vm4324 = vweird.f32 %v2763
        %vm4325 = vweird.f32 %v4319
        %vm4326 = vmor %vm4324, %vm4325
        %v4327 = vsel %vm4326, %v4319, %v4323
        %v4328 = vand.u32 2147483647, %v2763
        %vm4329 = vcmp.eq.f32.partialorder %v4328, 8.507059e+37
        %v4330 = vand.u32 %v2763, 2147483648
        %v4331 = vor.u32 1.1754944e-38, %v4330
        %v4332 = vsel %vm4329, %v4331, %v4327
        %v4333 = vmul.f32 1.0, %v4332
        %v4334 = vrcp.pop %v2764
        %v4335 = vmul.f32 %v2764, %v4334
        %v4336 = vsub.f32 1.0, %v4335
        %v4337 = vmul.f32 %v4334, %v4336
        %v4338 = vadd.f32 %v4334, %v4337
        %vm4339 = vweird.f32 %v2764
        %vm4340 = vweird.f32 %v4334
        %vm4341 = vmor %vm4339, %vm4340
        %v4342 = vsel %vm4341, %v4334, %v4338
        %v4343 = vand.u32 2147483647, %v2764
        %vm4344 = vcmp.eq.f32.partialorder %v4343, 8.507059e+37
        %v4345 = vand.u32 %v2764, 2147483648
        %v4346 = vor.u32 1.1754944e-38, %v4345
        %v4347 = vsel %vm4344, %v4346, %v4342
        %v4348 = vmul.f32 1.0, %v4347
        %v4349 = vrcp.pop %v2765
        %v4350 = vmul.f32 %v2765, %v4349
        %v4351 = vsub.f32 1.0, %v4350
        %v4352 = vmul.f32 %v4349, %v4351
        %v4353 = vadd.f32 %v4349, %v4352
        %vm4354 = vweird.f32 %v2765
        %vm4355 = vweird.f32 %v4349
        %vm4356 = vmor %vm4354, %vm4355
        %v4357 = vsel %vm4356, %v4349, %v4353
        %v4358 = vand.u32 2147483647, %v2765
        %vm4359 = vcmp.eq.f32.partialorder %v4358, 8.507059e+37
        %v4360 = vand.u32 %v2765, 2147483648
        %v4361 = vor.u32 1.1754944e-38, %v4360
        %v4362 = vsel %vm4359, %v4361, %v4357
        %v4363 = vmul.f32 1.0, %v4362
        %v4364 = vrcp.pop %v2766
        %v4365 = vmul.f32 %v2766, %v4364
        %v4366 = vsub.f32 1.0, %v4365
        %v4367 = vmul.f32 %v4364, %v4366
        %v4368 = vadd.f32 %v4364, %v4367
        %vm4369 = vweird.f32 %v2766
        %vm4370 = vweird.f32 %v4364
        %vm4371 = vmor %vm4369, %vm4370
        %v4372 = vsel %vm4371, %v4364, %v4368
        %v4373 = vand.u32 2147483647, %v2766
        %vm4374 = vcmp.eq.f32.partialorder %v4373, 8.507059e+37
        %v4375 = vand.u32 %v2766, 2147483648
        %v4376 = vor.u32 1.1754944e-38, %v4375
        %v4377 = vsel %vm4374, %v4376, %v4372
        %v4378 = vmul.f32 1.0, %v4377
        %v4379 = vrcp.pop %v2767
        %v4380 = vmul.f32 %v2767, %v4379
        %v4381 = vsub.f32 1.0, %v4380
        %v4382 = vmul.f32 %v4379, %v4381
        %v4383 = vadd.f32 %v4379, %v4382
        %vm4384 = vweird.f32 %v2767
        %vm4385 = vweird.f32 %v4379
        %vm4386 = vmor %vm4384, %vm4385
        %v4387 = vsel %vm4386, %v4379, %v4383
        %v4388 = vand.u32 2147483647, %v2767
        %vm4389 = vcmp.eq.f32.partialorder %v4388, 8.507059e+37
        %v4390 = vand.u32 %v2767, 2147483648
        %v4391 = vor.u32 1.1754944e-38, %v4390
        %v4392 = vsel %vm4389, %v4391, %v4387
        %v4393 = vmul.f32 1.0, %v4392
        %v4394 = vrcp.pop %v2768
        %v4395 = vmul.f32 %v2768, %v4394
        %v4396 = vsub.f32 1.0, %v4395
        %v4397 = vmul.f32 %v4394, %v4396
        %v4398 = vadd.f32 %v4394, %v4397
        %vm4399 = vweird.f32 %v2768
        %vm4400 = vweird.f32 %v4394
        %vm4401 = vmor %vm4399, %vm4400
        %v4402 = vsel %vm4401, %v4394, %v4398
        %v4403 = vand.u32 2147483647, %v2768
        %vm4404 = vcmp.eq.f32.partialorder %v4403, 8.507059e+37
        %v4405 = vand.u32 %v2768, 2147483648
        %v4406 = vor.u32 1.1754944e-38, %v4405
        %v4407 = vsel %vm4404, %v4406, %v4402
        %v4408 = vmul.f32 1.0, %v4407
        %v4409 = vrcp.pop %v2769
        %v4410 = vmul.f32 %v2769, %v4409
        %v4411 = vsub.f32 1.0, %v4410
        %v4412 = vmul.f32 %v4409, %v4411
        %v4413 = vadd.f32 %v4409, %v4412
        %vm4414 = vweird.f32 %v2769
        %vm4415 = vweird.f32 %v4409
        %vm4416 = vmor %vm4414, %vm4415
        %v4417 = vsel %vm4416, %v4409, %v4413
        %v4418 = vand.u32 2147483647, %v2769
        %vm4419 = vcmp.eq.f32.partialorder %v4418, 8.507059e+37
        %v4420 = vand.u32 %v2769, 2147483648
        %v4421 = vor.u32 1.1754944e-38, %v4420
        %v4422 = vsel %vm4419, %v4421, %v4417
        %v4423 = vmul.f32 1.0, %v4422
        %v4424 = vrcp.pop %v2770
        %v4425 = vmul.f32 %v2770, %v4424
        %v4426 = vsub.f32 1.0, %v4425
        %v4427 = vmul.f32 %v4424, %v4426
        %v4428 = vadd.f32 %v4424, %v4427
        %vm4429 = vweird.f32 %v2770
        %vm4430 = vweird.f32 %v4424
        %vm4431 = vmor %vm4429, %vm4430
        %v4432 = vsel %vm4431, %v4424, %v4428
        %v4433 = vand.u32 2147483647, %v2770
        %vm4434 = vcmp.eq.f32.partialorder %v4433, 8.507059e+37
        %v4435 = vand.u32 %v2770, 2147483648
        %v4436 = vor.u32 1.1754944e-38, %v4435
        %v4437 = vsel %vm4434, %v4436, %v4432
        %v4438 = vmul.f32 1.0, %v4437
        %v4439 = vrcp.pop %v2771
        %v4440 = vmul.f32 %v2771, %v4439
        %v4441 = vsub.f32 1.0, %v4440
        %v4442 = vmul.f32 %v4439, %v4441
        %v4443 = vadd.f32 %v4439, %v4442
        %vm4444 = vweird.f32 %v2771
        %vm4445 = vweird.f32 %v4439
        %vm4446 = vmor %vm4444, %vm4445
        %v4447 = vsel %vm4446, %v4439, %v4443
        %v4448 = vand.u32 2147483647, %v2771
        %vm4449 = vcmp.eq.f32.partialorder %v4448, 8.507059e+37
        %v4450 = vand.u32 %v2771, 2147483648
        %v4451 = vor.u32 1.1754944e-38, %v4450
        %v4452 = vsel %vm4449, %v4451, %v4447
        %v4453 = vmul.f32 1.0, %v4452
        %v4454 = vrcp.pop %v2772
        %v4455 = vmul.f32 %v2772, %v4454
        %v4456 = vsub.f32 1.0, %v4455
        %v4457 = vmul.f32 %v4454, %v4456
        %v4458 = vadd.f32 %v4454, %v4457
        %vm4459 = vweird.f32 %v2772
        %vm4460 = vweird.f32 %v4454
        %vm4461 = vmor %vm4459, %vm4460
        %v4462 = vsel %vm4461, %v4454, %v4458
        %v4463 = vand.u32 2147483647, %v2772
        %vm4464 = vcmp.eq.f32.partialorder %v4463, 8.507059e+37
        %v4465 = vand.u32 %v2772, 2147483648
        %v4466 = vor.u32 1.1754944e-38, %v4465
        %v4467 = vsel %vm4464, %v4466, %v4462
        %v4468 = vmul.f32 1.0, %v4467
        %v4469 = vrcp.pop %v2773
        %v4470 = vmul.f32 %v2773, %v4469
        %v4471 = vsub.f32 1.0, %v4470
        %v4472 = vmul.f32 %v4469, %v4471
        %v4473 = vadd.f32 %v4469, %v4472
        %vm4474 = vweird.f32 %v2773
        %vm4475 = vweird.f32 %v4469
        %vm4476 = vmor %vm4474, %vm4475
        %v4477 = vsel %vm4476, %v4469, %v4473
        %v4478 = vand.u32 2147483647, %v2773
        %vm4479 = vcmp.eq.f32.partialorder %v4478, 8.507059e+37
        %v4480 = vand.u32 %v2773, 2147483648
        %v4481 = vor.u32 1.1754944e-38, %v4480
        %v4482 = vsel %vm4479, %v4481, %v4477
        %v4483 = vmul.f32 1.0, %v4482
        %v4484 = vrcp.pop %v2774
        %v4485 = vmul.f32 %v2774, %v4484
        %v4486 = vsub.f32 1.0, %v4485
        %v4487 = vmul.f32 %v4484, %v4486
        %v4488 = vadd.f32 %v4484, %v4487
        %vm4489 = vweird.f32 %v2774
        %vm4490 = vweird.f32 %v4484
        %vm4491 = vmor %vm4489, %vm4490
        %v4492 = vsel %vm4491, %v4484, %v4488
        %v4493 = vand.u32 2147483647, %v2774
        %vm4494 = vcmp.eq.f32.partialorder %v4493, 8.507059e+37
        %v4495 = vand.u32 %v2774, 2147483648
        %v4496 = vor.u32 1.1754944e-38, %v4495
        %v4497 = vsel %vm4494, %v4496, %v4492
        %v4498 = vmul.f32 1.0, %v4497
        %v4499 = vrcp.pop %v2775
        %v4500 = vmul.f32 %v2775, %v4499
        %v4501 = vsub.f32 1.0, %v4500
        %v4502 = vmul.f32 %v4499, %v4501
        %v4503 = vadd.f32 %v4499, %v4502
        %vm4504 = vweird.f32 %v2775
        %vm4505 = vweird.f32 %v4499
        %vm4506 = vmor %vm4504, %vm4505
        %v4507 = vsel %vm4506, %v4499, %v4503
        %v4508 = vand.u32 2147483647, %v2775
        %vm4509 = vcmp.eq.f32.partialorder %v4508, 8.507059e+37
        %v4510 = vand.u32 %v2775, 2147483648
        %v4511 = vor.u32 1.1754944e-38, %v4510
        %v4512 = vsel %vm4509, %v4511, %v4507
        %v4513 = vmul.f32 1.0, %v4512
        %v4514 = vrcp.pop %v2776
        %v4515 = vmul.f32 %v2776, %v4514
        %v4516 = vsub.f32 1.0, %v4515
        %v4517 = vmul.f32 %v4514, %v4516
        %v4518 = vadd.f32 %v4514, %v4517
        %vm4519 = vweird.f32 %v2776
        %vm4520 = vweird.f32 %v4514
        %vm4521 = vmor %vm4519, %vm4520
        %v4522 = vsel %vm4521, %v4514, %v4518
        %v4523 = vand.u32 2147483647, %v2776
        %vm4524 = vcmp.eq.f32.partialorder %v4523, 8.507059e+37
        %v4525 = vand.u32 %v2776, 2147483648
        %v4526 = vor.u32 1.1754944e-38, %v4525
        %v4527 = vsel %vm4524, %v4526, %v4522
        %v4528 = vmul.f32 1.0, %v4527
        %v4529 = vrcp.pop %v2777
        %v4530 = vmul.f32 %v2777, %v4529
        %v4531 = vsub.f32 1.0, %v4530
        %v4532 = vmul.f32 %v4529, %v4531
        %v4533 = vadd.f32 %v4529, %v4532
        %vm4534 = vweird.f32 %v2777
        %vm4535 = vweird.f32 %v4529
        %vm4536 = vmor %vm4534, %vm4535
        %v4537 = vsel %vm4536, %v4529, %v4533
        %v4538 = vand.u32 2147483647, %v2777
        %vm4539 = vcmp.eq.f32.partialorder %v4538, 8.507059e+37
        %v4540 = vand.u32 %v2777, 2147483648
        %v4541 = vor.u32 1.1754944e-38, %v4540
        %v4542 = vsel %vm4539, %v4541, %v4537
        %v4543 = vmul.f32 1.0, %v4542
        %v4544 = vrcp.pop %v2778
        %v4545 = vmul.f32 %v2778, %v4544
        %v4546 = vsub.f32 1.0, %v4545
        %v4547 = vmul.f32 %v4544, %v4546
        %v4548 = vadd.f32 %v4544, %v4547
        %vm4549 = vweird.f32 %v2778
        %vm4550 = vweird.f32 %v4544
        %vm4551 = vmor %vm4549, %vm4550
        %v4552 = vsel %vm4551, %v4544, %v4548
        %v4553 = vand.u32 2147483647, %v2778
        %vm4554 = vcmp.eq.f32.partialorder %v4553, 8.507059e+37
        %v4555 = vand.u32 %v2778, 2147483648
        %v4556 = vor.u32 1.1754944e-38, %v4555
        %v4557 = vsel %vm4554, %v4556, %v4552
        %v4558 = vmul.f32 1.0, %v4557
        %v4559 = vrcp.pop %v2779
        %v4560 = vmul.f32 %v2779, %v4559
        %v4561 = vsub.f32 1.0, %v4560
        %v4562 = vmul.f32 %v4559, %v4561
        %v4563 = vadd.f32 %v4559, %v4562
        %vm4564 = vweird.f32 %v2779
        %vm4565 = vweird.f32 %v4559
        %vm4566 = vmor %vm4564, %vm4565
        %v4567 = vsel %vm4566, %v4559, %v4563
        %v4568 = vand.u32 2147483647, %v2779
        %vm4569 = vcmp.eq.f32.partialorder %v4568, 8.507059e+37
        %v4570 = vand.u32 %v2779, 2147483648
        %v4571 = vor.u32 1.1754944e-38, %v4570
        %v4572 = vsel %vm4569, %v4571, %v4567
        %v4573 = vmul.f32 1.0, %v4572
        %v4574 = vrcp.pop %v2780
        %v4575 = vmul.f32 %v2780, %v4574
        %v4576 = vsub.f32 1.0, %v4575
        %v4577 = vmul.f32 %v4574, %v4576
        %v4578 = vadd.f32 %v4574, %v4577
        %vm4579 = vweird.f32 %v2780
        %vm4580 = vweird.f32 %v4574
        %vm4581 = vmor %vm4579, %vm4580
        %v4582 = vsel %vm4581, %v4574, %v4578
        %v4583 = vand.u32 2147483647, %v2780
        %vm4584 = vcmp.eq.f32.partialorder %v4583, 8.507059e+37
        %v4585 = vand.u32 %v2780, 2147483648
        %v4586 = vor.u32 1.1754944e-38, %v4585
        %v4587 = vsel %vm4584, %v4586, %v4582
        %v4588 = vmul.f32 1.0, %v4587
        %v4589 = vrcp.pop %v2781
        %v4590 = vmul.f32 %v2781, %v4589
        %v4591 = vsub.f32 1.0, %v4590
        %v4592 = vmul.f32 %v4589, %v4591
        %v4593 = vadd.f32 %v4589, %v4592
        %vm4594 = vweird.f32 %v2781
        %vm4595 = vweird.f32 %v4589
        %vm4596 = vmor %vm4594, %vm4595
        %v4597 = vsel %vm4596, %v4589, %v4593
        %v4598 = vand.u32 2147483647, %v2781
        %vm4599 = vcmp.eq.f32.partialorder %v4598, 8.507059e+37
        %v4600 = vand.u32 %v2781, 2147483648
        %v4601 = vor.u32 1.1754944e-38, %v4600
        %v4602 = vsel %vm4599, %v4601, %v4597
        %v4603 = vmul.f32 1.0, %v4602
        %v4604 = vrcp.pop %v2782
        %v4605 = vmul.f32 %v2782, %v4604
        %v4606 = vsub.f32 1.0, %v4605
        %v4607 = vmul.f32 %v4604, %v4606
        %v4608 = vadd.f32 %v4604, %v4607
        %vm4609 = vweird.f32 %v2782
        %vm4610 = vweird.f32 %v4604
        %vm4611 = vmor %vm4609, %vm4610
        %v4612 = vsel %vm4611, %v4604, %v4608
        %v4613 = vand.u32 2147483647, %v2782
        %vm4614 = vcmp.eq.f32.partialorder %v4613, 8.507059e+37
        %v4615 = vand.u32 %v2782, 2147483648
        %v4616 = vor.u32 1.1754944e-38, %v4615
        %v4617 = vsel %vm4614, %v4616, %v4612
        %v4618 = vmul.f32 1.0, %v4617
        %v4619 = vrcp.pop %v2783
        %v4620 = vmul.f32 %v2783, %v4619
        %v4621 = vsub.f32 1.0, %v4620
        %v4622 = vmul.f32 %v4619, %v4621
        %v4623 = vadd.f32 %v4619, %v4622
        %vm4624 = vweird.f32 %v2783
        %vm4625 = vweird.f32 %v4619
        %vm4626 = vmor %vm4624, %vm4625
        %v4627 = vsel %vm4626, %v4619, %v4623
        %v4628 = vand.u32 2147483647, %v2783
        %vm4629 = vcmp.eq.f32.partialorder %v4628, 8.507059e+37
        %v4630 = vand.u32 %v2783, 2147483648
        %v4631 = vor.u32 1.1754944e-38, %v4630
        %v4632 = vsel %vm4629, %v4631, %v4627
        %v4633 = vmul.f32 1.0, %v4632
        %v4634 = vrcp.pop %v2784
        %v4635 = vmul.f32 %v2784, %v4634
        %v4636 = vsub.f32 1.0, %v4635
        %v4637 = vmul.f32 %v4634, %v4636
        %v4638 = vadd.f32 %v4634, %v4637
        %vm4639 = vweird.f32 %v2784
        %vm4640 = vweird.f32 %v4634
        %vm4641 = vmor %vm4639, %vm4640
        %v4642 = vsel %vm4641, %v4634, %v4638
        %v4643 = vand.u32 2147483647, %v2784
        %vm4644 = vcmp.eq.f32.partialorder %v4643, 8.507059e+37
        %v4645 = vand.u32 %v2784, 2147483648
        %v4646 = vor.u32 1.1754944e-38, %v4645
        %v4647 = vsel %vm4644, %v4646, %v4642
        %v4648 = vmul.f32 1.0, %v4647
        %v4649 = vrcp.pop %v2785
        %v4650 = vmul.f32 %v2785, %v4649
        %v4651 = vsub.f32 1.0, %v4650
        %v4652 = vmul.f32 %v4649, %v4651
        %v4653 = vadd.f32 %v4649, %v4652
        %vm4654 = vweird.f32 %v2785
        %vm4655 = vweird.f32 %v4649
        %vm4656 = vmor %vm4654, %vm4655
        %v4657 = vsel %vm4656, %v4649, %v4653
        %v4658 = vand.u32 2147483647, %v2785
        %vm4659 = vcmp.eq.f32.partialorder %v4658, 8.507059e+37
        %v4660 = vand.u32 %v2785, 2147483648
        %v4661 = vor.u32 1.1754944e-38, %v4660
        %v4662 = vsel %vm4659, %v4661, %v4657
        %v4663 = vmul.f32 1.0, %v4662
        %v4664 = vrcp.pop %v2786
        %v4665 = vmul.f32 %v2786, %v4664
        %v4666 = vsub.f32 1.0, %v4665
        %v4667 = vmul.f32 %v4664, %v4666
        %v4668 = vadd.f32 %v4664, %v4667
        %vm4669 = vweird.f32 %v2786
        %vm4670 = vweird.f32 %v4664
        %vm4671 = vmor %vm4669, %vm4670
        %v4672 = vsel %vm4671, %v4664, %v4668
        %v4673 = vand.u32 2147483647, %v2786
        %vm4674 = vcmp.eq.f32.partialorder %v4673, 8.507059e+37
        %v4675 = vand.u32 %v2786, 2147483648
        %v4676 = vor.u32 1.1754944e-38, %v4675
        %v4677 = vsel %vm4674, %v4676, %v4672
        %v4678 = vmul.f32 1.0, %v4677
        %v4679 = vrcp.pop %v2787
        %v4680 = vmul.f32 %v2787, %v4679
        %v4681 = vsub.f32 1.0, %v4680
        %v4682 = vmul.f32 %v4679, %v4681
        %v4683 = vadd.f32 %v4679, %v4682
        %vm4684 = vweird.f32 %v2787
        %vm4685 = vweird.f32 %v4679
        %vm4686 = vmor %vm4684, %vm4685
        %v4687 = vsel %vm4686, %v4679, %v4683
        %v4688 = vand.u32 2147483647, %v2787
        %vm4689 = vcmp.eq.f32.partialorder %v4688, 8.507059e+37
        %v4690 = vand.u32 %v2787, 2147483648
        %v4691 = vor.u32 1.1754944e-38, %v4690
        %v4692 = vsel %vm4689, %v4691, %v4687
        %v4693 = vmul.f32 1.0, %v4692
        %v4694 = vrcp.pop %v2788
        %v4695 = vmul.f32 %v2788, %v4694
        %v4696 = vsub.f32 1.0, %v4695
        %v4697 = vmul.f32 %v4694, %v4696
        %v4698 = vadd.f32 %v4694, %v4697
        %vm4699 = vweird.f32 %v2788
        %vm4700 = vweird.f32 %v4694
        %vm4701 = vmor %vm4699, %vm4700
        %v4702 = vsel %vm4701, %v4694, %v4698
        %v4703 = vand.u32 2147483647, %v2788
        %vm4704 = vcmp.eq.f32.partialorder %v4703, 8.507059e+37
        %v4705 = vand.u32 %v2788, 2147483648
        %v4706 = vor.u32 1.1754944e-38, %v4705
        %v4707 = vsel %vm4704, %v4706, %v4702
        %v4708 = vmul.f32 1.0, %v4707
        %v4709 = vld [vmem:[%s8] sm:$0xff]
        %v4710 = vld [vmem:[%s8 + $0x8] sm:$0xff]
        %v4711 = vld [vmem:[%s8 + $0x10] sm:$0xff]
        %v4712 = vld [vmem:[%s8 + $0x18] sm:$0xff]
        %v4713 = vld [vmem:[%s8 + $0x20] sm:$0xff]
        %v4714 = vld [vmem:[%s8 + $0x28] sm:$0xff]
        %v4715 = vld [vmem:[%s8 + $0x30] sm:$0xff]
        %v4716 = vld [vmem:[%s8 + $0x38] sm:$0xff]
        %v4717 = vld [vmem:[%s8 + $0x40] sm:$0xff]
        %v4718 = vld [vmem:[%s8 + $0x48] sm:$0xff]
        %v4719 = vld [vmem:[%s8 + $0x50] sm:$0xff]
        %v4720 = vld [vmem:[%s8 + $0x58] sm:$0xff]
        %v4721 = vld [vmem:[%s8 + $0x60] sm:$0xff]
        %v4722 = vld [vmem:[%s8 + $0x68] sm:$0xff]
        %v4723 = vld [vmem:[%s8 + $0x70] sm:$0xff]
        %v4724 = vld [vmem:[%s8 + $0x78] sm:$0xff]
        %v4725 = vpack.c.bf16 %v2863, %v2803
        %v4726 = vpack.c.bf16 %v2878, %v2818
        %v4727 = vpack.c.bf16 %v2893, %v2833
        %v4728 = vpack.c.bf16 %v2908, %v2848
        %v4729 = vpack.c.bf16 %v2983, %v2923
        %v4730 = vpack.c.bf16 %v2998, %v2938
        %v4731 = vpack.c.bf16 %v3013, %v2953
        %v4732 = vpack.c.bf16 %v3028, %v2968
        %v4733 = vpack.c.bf16 %v3103, %v3043
        %v4734 = vpack.c.bf16 %v3118, %v3058
        %v4735 = vpack.c.bf16 %v3133, %v3073
        %v4736 = vpack.c.bf16 %v3148, %v3088
        %v4737 = vpack.c.bf16 %v3223, %v3163
        %v4738 = vpack.c.bf16 %v3238, %v3178
        %v4739 = vpack.c.bf16 %v3253, %v3193
        %v4740 = vpack.c.bf16 %v3268, %v3208
        %v4741 = vpack.c.bf16 %v3343, %v3283
        %v4742 = vpack.c.bf16 %v3358, %v3298
        %v4743 = vpack.c.bf16 %v3373, %v3313
        %v4744 = vpack.c.bf16 %v3388, %v3328
        %v4745 = vpack.c.bf16 %v3463, %v3403
        %v4746 = vpack.c.bf16 %v3478, %v3418
        %v4747 = vpack.c.bf16 %v3493, %v3433
        %v4748 = vpack.c.bf16 %v3508, %v3448
        %v4749 = vpack.c.bf16 %v3583, %v3523
        %v4750 = vpack.c.bf16 %v3598, %v3538
        %v4751 = vpack.c.bf16 %v3613, %v3553
        %v4752 = vpack.c.bf16 %v3628, %v3568
        %v4753 = vpack.c.bf16 %v3703, %v3643
        %v4754 = vpack.c.bf16 %v3718, %v3658
        %v4755 = vpack.c.bf16 %v3733, %v3673
        %v4756 = vpack.c.bf16 %v3748, %v3688
        %v4757 = vpack.c.bf16 %v3823, %v3763
        %v4758 = vpack.c.bf16 %v3838, %v3778
        %v4759 = vpack.c.bf16 %v3853, %v3793
        %v4760 = vpack.c.bf16 %v3868, %v3808
        %v4761 = vpack.c.bf16 %v3943, %v3883
        %v4762 = vpack.c.bf16 %v3958, %v3898
        %v4763 = vpack.c.bf16 %v3973, %v3913
        %v4764 = vpack.c.bf16 %v3988, %v3928
        %v4765 = vpack.c.bf16 %v4063, %v4003
        %v4766 = vpack.c.bf16 %v4078, %v4018
        %v4767 = vpack.c.bf16 %v4093, %v4033
        %v4768 = vpack.c.bf16 %v4108, %v4048
        %v4769 = vpack.c.bf16 %v4183, %v4123
        %v4770 = vpack.c.bf16 %v4198, %v4138
        %v4771 = vpack.c.bf16 %v4213, %v4153
        %v4772 = vpack.c.bf16 %v4228, %v4168
        %v4773 = vpack.c.bf16 %v4303, %v4243
        %v4774 = vpack.c.bf16 %v4318, %v4258
        %v4775 = vpack.c.bf16 %v4333, %v4273
        %v4776 = vpack.c.bf16 %v4348, %v4288
        %v4777 = vpack.c.bf16 %v4423, %v4363
        %v4778 = vpack.c.bf16 %v4438, %v4378
        %v4779 = vpack.c.bf16 %v4453, %v4393
        %v4780 = vpack.c.bf16 %v4468, %v4408
        %v4781 = vpack.c.bf16 %v4543, %v4483
        %v4782 = vpack.c.bf16 %v4558, %v4498
        %v4783 = vpack.c.bf16 %v4573, %v4513
        %v4784 = vpack.c.bf16 %v4588, %v4528
        %v4785 = vpack.c.bf16 %v4663, %v4603
        %v4786 = vpack.c.bf16 %v4678, %v4618
        %v4787 = vpack.c.bf16 %v4693, %v4633
        %v4788 = vpack.c.bf16 %v4708, %v4648
        %v4789 = vld [vmem:[%s9] sm:$0xff]
        %v4790 = vld [vmem:[%s9 + $0x8] sm:$0xff]
        %v4791 = vld [vmem:[%s9 + $0x10] sm:$0xff]
        %v4792 = vld [vmem:[%s9 + $0x18] sm:$0xff]
        %v4793 = vld [vmem:[%s9 + $0x20] sm:$0xff]
        %v4794 = vld [vmem:[%s9 + $0x28] sm:$0xff]
        %v4795 = vld [vmem:[%s9 + $0x30] sm:$0xff]
        %v4796 = vld [vmem:[%s9 + $0x38] sm:$0xff]
        %v4797 = vld [vmem:[%s9 + $0x40] sm:$0xff]
        %v4798 = vld [vmem:[%s9 + $0x48] sm:$0xff]
        %v4799 = vld [vmem:[%s9 + $0x50] sm:$0xff]
        %v4800 = vld [vmem:[%s9 + $0x58] sm:$0xff]
        %v4801 = vld [vmem:[%s9 + $0x60] sm:$0xff]
        %v4802 = vld [vmem:[%s9 + $0x68] sm:$0xff]
        %v4803 = vld [vmem:[%s9 + $0x70] sm:$0xff]
        %v4804 = vld [vmem:[%s9 + $0x78] sm:$0xff]
        %4806 = vset.pattern.permute.xlu0 0
        %4807 = vperm.xlu0 %4806, %v4789
        %v4808 = vpop.permute.xlu0 %4807
        %4811 = vset.pattern.permute.xlu0 0
        %4812 = vperm.xlu0 %4811, %v4790
        %v4813 = vpop.permute.xlu0 %4812
        %4816 = vset.pattern.permute.xlu0 0
        %4817 = vperm.xlu0 %4816, %v4791
        %v4818 = vpop.permute.xlu0 %4817
        %4821 = vset.pattern.permute.xlu0 0
        %4822 = vperm.xlu0 %4821, %v4792
        %v4823 = vpop.permute.xlu0 %4822
        %4826 = vset.pattern.permute.xlu0 0
        %4827 = vperm.xlu0 %4826, %v4793
        %v4828 = vpop.permute.xlu0 %4827
        %4831 = vset.pattern.permute.xlu0 0
        %4832 = vperm.xlu0 %4831, %v4794
        %v4833 = vpop.permute.xlu0 %4832
        %4836 = vset.pattern.permute.xlu0 0
        %4837 = vperm.xlu0 %4836, %v4795
        %v4838 = vpop.permute.xlu0 %4837
        %4841 = vset.pattern.permute.xlu0 0
        %4842 = vperm.xlu0 %4841, %v4796
        %v4843 = vpop.permute.xlu0 %4842
        %4846 = vset.pattern.permute.xlu0 0
        %4847 = vperm.xlu0 %4846, %v4797
        %v4848 = vpop.permute.xlu0 %4847
        %4851 = vset.pattern.permute.xlu0 0
        %4852 = vperm.xlu0 %4851, %v4798
        %v4853 = vpop.permute.xlu0 %4852
        %4856 = vset.pattern.permute.xlu0 0
        %4857 = vperm.xlu0 %4856, %v4799
        %v4858 = vpop.permute.xlu0 %4857
        %4861 = vset.pattern.permute.xlu0 0
        %4862 = vperm.xlu0 %4861, %v4800
        %v4863 = vpop.permute.xlu0 %4862
        %4866 = vset.pattern.permute.xlu0 0
        %4867 = vperm.xlu0 %4866, %v4801
        %v4868 = vpop.permute.xlu0 %4867
        %4871 = vset.pattern.permute.xlu0 0
        %4872 = vperm.xlu0 %4871, %v4802
        %v4873 = vpop.permute.xlu0 %4872
        %4876 = vset.pattern.permute.xlu0 0
        %4877 = vperm.xlu0 %4876, %v4803
        %v4878 = vpop.permute.xlu0 %4877
        %4881 = vset.pattern.permute.xlu0 0
        %4882 = vperm.xlu0 %4881, %v4804
        %v4883 = vpop.permute.xlu0 %4882
        %v4901 = vunpack.c.l.b16 %v4709
        %v4902 = vunpack.c.h.b16 %v4709
        %v4903 = vunpack.c.l.b16 %v4710
        %v4904 = vunpack.c.h.b16 %v4710
        %v4905 = vunpack.c.l.b16 %v4711
        %v4906 = vunpack.c.h.b16 %v4711
        %v4907 = vunpack.c.l.b16 %v4712
        %v4908 = vunpack.c.h.b16 %v4712
        %v4909 = vunpack.c.l.b16 %v4713
        %v4910 = vunpack.c.h.b16 %v4713
        %v4911 = vunpack.c.l.b16 %v4714
        %v4912 = vunpack.c.h.b16 %v4714
        %v4913 = vunpack.c.l.b16 %v4715
        %v4914 = vunpack.c.h.b16 %v4715
        %v4915 = vunpack.c.l.b16 %v4716
        %v4916 = vunpack.c.h.b16 %v4716
        %v4917 = vunpack.c.l.b16 %v4717
        %v4918 = vunpack.c.h.b16 %v4717
        %v4919 = vunpack.c.l.b16 %v4718
        %v4920 = vunpack.c.h.b16 %v4718
        %v4921 = vunpack.c.l.b16 %v4719
        %v4922 = vunpack.c.h.b16 %v4719
        %v4923 = vunpack.c.l.b16 %v4720
        %v4924 = vunpack.c.h.b16 %v4720
        %v4925 = vunpack.c.l.b16 %v4721
        %v4926 = vunpack.c.h.b16 %v4721
        %v4927 = vunpack.c.l.b16 %v4722
        %v4928 = vunpack.c.h.b16 %v4722
        %v4929 = vunpack.c.l.b16 %v4723
        %v4930 = vunpack.c.h.b16 %v4723
        %v4931 = vunpack.c.l.b16 %v4724
        %v4932 = vunpack.c.h.b16 %v4724
        %v4933 = vpack.c.b16 %v4903, %v4901
        %v4934 = vpack.c.b16 %v4904, %v4902
        %v4935 = vpack.c.b16 %v4907, %v4905
        %v4936 = vpack.c.b16 %v4908, %v4906
        %v4937 = vpack.c.b16 %v4911, %v4909
        %v4938 = vpack.c.b16 %v4912, %v4910
        %v4939 = vpack.c.b16 %v4915, %v4913
        %v4940 = vpack.c.b16 %v4916, %v4914
        %v4941 = vpack.c.b16 %v4919, %v4917
        %v4942 = vpack.c.b16 %v4920, %v4918
        %v4943 = vpack.c.b16 %v4923, %v4921
        %v4944 = vpack.c.b16 %v4924, %v4922
        %v4945 = vpack.c.b16 %v4927, %v4925
        %v4946 = vpack.c.b16 %v4928, %v4926
        %v4947 = vpack.c.b16 %v4931, %v4929
        %v4948 = vpack.c.b16 %v4932, %v4930
        %4965 = vmatpush.bf16.msra.mxu0 %v4753
        %4966 = vmatpush.bf16.msra.mxu0 %v4749
        %4967 = vmatpush.bf16.msra.mxu0 %v4745
        %4968 = vmatpush.bf16.msra.mxu0 %v4741
        %4969 = vmatpush.bf16.msra.mxu0 %v4737
        %4970 = vmatpush.bf16.msra.mxu0 %v4733
        %4971 = vmatpush.bf16.msra.mxu0 %v4729
        %4972 = vmatpush.bf16.msra.mxu0 %v4725
        %4973 = vmatmul.bf16.gmra.mxu0 %v4933
        %v4974 = vpop.f32.mrf.mxu0
        %v4975 = vadd.f32 %v4808, %v4974
        %v4976 = vpop.f32.mrf.mxu0
        %v4977 = vadd.f32 %v4813, %v4976
        %4978 = vmatmul.bf16.gmra.mxu0 %v4935
        %v4979 = vpop.f32.mrf.mxu0
        %v4980 = vadd.f32 %v4818, %v4979
        %v4981 = vpop.f32.mrf.mxu0
        %v4982 = vadd.f32 %v4823, %v4981
        %4983 = vmatmul.bf16.gmra.mxu0 %v4937
        %v4984 = vpop.f32.mrf.mxu0
        %v4985 = vadd.f32 %v4828, %v4984
        %v4986 = vpop.f32.mrf.mxu0
        %v4987 = vadd.f32 %v4833, %v4986
        %4988 = vmatmul.bf16.gmra.mxu0 %v4939
        %v4989 = vpop.f32.mrf.mxu0
        %v4990 = vadd.f32 %v4838, %v4989
        %v4991 = vpop.f32.mrf.mxu0
        %v4992 = vadd.f32 %v4843, %v4991
        %4993 = vmatmul.bf16.gmra.mxu0 %v4941
        %v4994 = vpop.f32.mrf.mxu0
        %v4995 = vadd.f32 %v4848, %v4994
        %v4996 = vpop.f32.mrf.mxu0
        %v4997 = vadd.f32 %v4853, %v4996
        %4998 = vmatmul.bf16.gmra.mxu0 %v4943
        %v4999 = vpop.f32.mrf.mxu0
        %v5000 = vadd.f32 %v4858, %v4999
        %v5001 = vpop.f32.mrf.mxu0
        %v5002 = vadd.f32 %v4863, %v5001
        %5003 = vmatmul.bf16.gmra.mxu0 %v4945
        %v5004 = vpop.f32.mrf.mxu0
        %v5005 = vadd.f32 %v4868, %v5004
        %v5006 = vpop.f32.mrf.mxu0
        %v5007 = vadd.f32 %v4873, %v5006
        %5008 = vmatmul.bf16.gmra.mxu0 %v4947
        %v5009 = vpop.f32.mrf.mxu0
        %v5010 = vadd.f32 %v4878, %v5009
        %v5011 = vpop.f32.mrf.mxu0
        %v5012 = vadd.f32 %v4883, %v5011
        %5013 = vdwg.mxu0
        %5014 = vmatpush.bf16.msra.mxu0 %v4785
        %5015 = vmatpush.bf16.msra.mxu0 %v4781
        %5016 = vmatpush.bf16.msra.mxu0 %v4777
        %5017 = vmatpush.bf16.msra.mxu0 %v4773
        %5018 = vmatpush.bf16.msra.mxu0 %v4769
        %5019 = vmatpush.bf16.msra.mxu0 %v4765
        %5020 = vmatpush.bf16.msra.mxu0 %v4761
        %5021 = vmatpush.bf16.msra.mxu0 %v4757
        %5022 = vmatmul.bf16.gmra.mxu0 %v4934
        %v5023 = vpop.f32.mrf.mxu0
        %v5024 = vadd.f32 %v4975, %v5023
        %v5025 = vpop.f32.mrf.mxu0
        %v5026 = vadd.f32 %v4977, %v5025
        %5027 = vmatmul.bf16.gmra.mxu0 %v4936
        %v5028 = vpop.f32.mrf.mxu0
        %v5029 = vadd.f32 %v4980, %v5028
        %v5030 = vpop.f32.mrf.mxu0
        %v5031 = vadd.f32 %v4982, %v5030
        %5032 = vmatmul.bf16.gmra.mxu0 %v4938
        %v5033 = vpop.f32.mrf.mxu0
        %v5034 = vadd.f32 %v4985, %v5033
        %v5035 = vpop.f32.mrf.mxu0
        %v5036 = vadd.f32 %v4987, %v5035
        %5037 = vmatmul.bf16.gmra.mxu0 %v4940
        %v5038 = vpop.f32.mrf.mxu0
        %v5039 = vadd.f32 %v4990, %v5038
        %v5040 = vpop.f32.mrf.mxu0
        %v5041 = vadd.f32 %v4992, %v5040
        %5042 = vmatmul.bf16.gmra.mxu0 %v4942
        %v5043 = vpop.f32.mrf.mxu0
        %v5044 = vadd.f32 %v4995, %v5043
        %v5045 = vpop.f32.mrf.mxu0
        %v5046 = vadd.f32 %v4997, %v5045
        %5047 = vmatmul.bf16.gmra.mxu0 %v4944
        %v5048 = vpop.f32.mrf.mxu0
        %v5049 = vadd.f32 %v5000, %v5048
        %v5050 = vpop.f32.mrf.mxu0
        %v5051 = vadd.f32 %v5002, %v5050
        %5052 = vmatmul.bf16.gmra.mxu0 %v4946
        %v5053 = vpop.f32.mrf.mxu0
        %v5054 = vadd.f32 %v5005, %v5053
        %v5055 = vpop.f32.mrf.mxu0
        %v5056 = vadd.f32 %v5007, %v5055
        %5057 = vmatmul.bf16.gmra.mxu0 %v4948
        %v5058 = vpop.f32.mrf.mxu0
        %v5059 = vadd.f32 %v5010, %v5058
        %v5060 = vpop.f32.mrf.mxu0
        %v5061 = vadd.f32 %v5012, %v5060
        %5062 = vdwg.mxu0
        %5063 = vmatpush.bf16.msra.mxu0 %v4754
        %5064 = vmatpush.bf16.msra.mxu0 %v4750
        %5065 = vmatpush.bf16.msra.mxu0 %v4746
        %5066 = vmatpush.bf16.msra.mxu0 %v4742
        %5067 = vmatpush.bf16.msra.mxu0 %v4738
        %5068 = vmatpush.bf16.msra.mxu0 %v4734
        %5069 = vmatpush.bf16.msra.mxu0 %v4730
        %5070 = vmatpush.bf16.msra.mxu0 %v4726
        %5071 = vmatmul.bf16.gmra.mxu0 %v4933
        %v5072 = vpop.f32.mrf.mxu0
        %v5073 = vadd.f32 %v4808, %v5072
        %v5074 = vpop.f32.mrf.mxu0
        %v5075 = vadd.f32 %v4813, %v5074
        %5076 = vmatmul.bf16.gmra.mxu0 %v4935
        %v5077 = vpop.f32.mrf.mxu0
        %v5078 = vadd.f32 %v4818, %v5077
        %v5079 = vpop.f32.mrf.mxu0
        %v5080 = vadd.f32 %v4823, %v5079
        %5081 = vmatmul.bf16.gmra.mxu0 %v4937
        %v5082 = vpop.f32.mrf.mxu0
        %v5083 = vadd.f32 %v4828, %v5082
        %v5084 = vpop.f32.mrf.mxu0
        %v5085 = vadd.f32 %v4833, %v5084
        %5086 = vmatmul.bf16.gmra.mxu0 %v4939
        %v5087 = vpop.f32.mrf.mxu0
        %v5088 = vadd.f32 %v4838, %v5087
        %v5089 = vpop.f32.mrf.mxu0
        %v5090 = vadd.f32 %v4843, %v5089
        %5091 = vmatmul.bf16.gmra.mxu0 %v4941
        %v5092 = vpop.f32.mrf.mxu0
        %v5093 = vadd.f32 %v4848, %v5092
        %v5094 = vpop.f32.mrf.mxu0
        %v5095 = vadd.f32 %v4853, %v5094
        %5096 = vmatmul.bf16.gmra.mxu0 %v4943
        %v5097 = vpop.f32.mrf.mxu0
        %v5098 = vadd.f32 %v4858, %v5097
        %v5099 = vpop.f32.mrf.mxu0
        %v5100 = vadd.f32 %v4863, %v5099
        %5101 = vmatmul.bf16.gmra.mxu0 %v4945
        %v5102 = vpop.f32.mrf.mxu0
        %v5103 = vadd.f32 %v4868, %v5102
        %v5104 = vpop.f32.mrf.mxu0
        %v5105 = vadd.f32 %v4873, %v5104
        %5106 = vmatmul.bf16.gmra.mxu0 %v4947
        %v5107 = vpop.f32.mrf.mxu0
        %v5108 = vadd.f32 %v4878, %v5107
        %v5109 = vpop.f32.mrf.mxu0
        %v5110 = vadd.f32 %v4883, %v5109
        %5111 = vdwg.mxu0
        %5112 = vmatpush.bf16.msra.mxu0 %v4786
        %5113 = vmatpush.bf16.msra.mxu0 %v4782
        %5114 = vmatpush.bf16.msra.mxu0 %v4778
        %5115 = vmatpush.bf16.msra.mxu0 %v4774
        %5116 = vmatpush.bf16.msra.mxu0 %v4770
        %5117 = vmatpush.bf16.msra.mxu0 %v4766
        %5118 = vmatpush.bf16.msra.mxu0 %v4762
        %5119 = vmatpush.bf16.msra.mxu0 %v4758
        %5120 = vmatmul.bf16.gmra.mxu0 %v4934
        %v5121 = vpop.f32.mrf.mxu0
        %v5122 = vadd.f32 %v5073, %v5121
        %v5123 = vpop.f32.mrf.mxu0
        %v5124 = vadd.f32 %v5075, %v5123
        %5125 = vmatmul.bf16.gmra.mxu0 %v4936
        %v5126 = vpop.f32.mrf.mxu0
        %v5127 = vadd.f32 %v5078, %v5126
        %v5128 = vpop.f32.mrf.mxu0
        %v5129 = vadd.f32 %v5080, %v5128
        %5130 = vmatmul.bf16.gmra.mxu0 %v4938
        %v5131 = vpop.f32.mrf.mxu0
        %v5132 = vadd.f32 %v5083, %v5131
        %v5133 = vpop.f32.mrf.mxu0
        %v5134 = vadd.f32 %v5085, %v5133
        %5135 = vmatmul.bf16.gmra.mxu0 %v4940
        %v5136 = vpop.f32.mrf.mxu0
        %v5137 = vadd.f32 %v5088, %v5136
        %v5138 = vpop.f32.mrf.mxu0
        %v5139 = vadd.f32 %v5090, %v5138
        %5140 = vmatmul.bf16.gmra.mxu0 %v4942
        %v5141 = vpop.f32.mrf.mxu0
        %v5142 = vadd.f32 %v5093, %v5141
        %v5143 = vpop.f32.mrf.mxu0
        %v5144 = vadd.f32 %v5095, %v5143
        %5145 = vmatmul.bf16.gmra.mxu0 %v4944
        %v5146 = vpop.f32.mrf.mxu0
        %v5147 = vadd.f32 %v5098, %v5146
        %v5148 = vpop.f32.mrf.mxu0
        %v5149 = vadd.f32 %v5100, %v5148
        %5150 = vmatmul.bf16.gmra.mxu0 %v4946
        %v5151 = vpop.f32.mrf.mxu0
        %v5152 = vadd.f32 %v5103, %v5151
        %v5153 = vpop.f32.mrf.mxu0
        %v5154 = vadd.f32 %v5105, %v5153
        %5155 = vmatmul.bf16.gmra.mxu0 %v4948
        %v5156 = vpop.f32.mrf.mxu0
        %v5157 = vadd.f32 %v5108, %v5156
        %v5158 = vpop.f32.mrf.mxu0
        %v5159 = vadd.f32 %v5110, %v5158
        %5160 = vdwg.mxu0
        %5161 = vmatpush.bf16.msra.mxu0 %v4755
        %5162 = vmatpush.bf16.msra.mxu0 %v4751
        %5163 = vmatpush.bf16.msra.mxu0 %v4747
        %5164 = vmatpush.bf16.msra.mxu0 %v4743
        %5165 = vmatpush.bf16.msra.mxu0 %v4739
        %5166 = vmatpush.bf16.msra.mxu0 %v4735
        %5167 = vmatpush.bf16.msra.mxu0 %v4731
        %5168 = vmatpush.bf16.msra.mxu0 %v4727
        %5169 = vmatmul.bf16.gmra.mxu0 %v4933
        %v5170 = vpop.f32.mrf.mxu0
        %v5171 = vadd.f32 %v4808, %v5170
        %v5172 = vpop.f32.mrf.mxu0
        %v5173 = vadd.f32 %v4813, %v5172
        %5174 = vmatmul.bf16.gmra.mxu0 %v4935
        %v5175 = vpop.f32.mrf.mxu0
        %v5176 = vadd.f32 %v4818, %v5175
        %v5177 = vpop.f32.mrf.mxu0
        %v5178 = vadd.f32 %v4823, %v5177
        %5179 = vmatmul.bf16.gmra.mxu0 %v4937
        %v5180 = vpop.f32.mrf.mxu0
        %v5181 = vadd.f32 %v4828, %v5180
        %v5182 = vpop.f32.mrf.mxu0
        %v5183 = vadd.f32 %v4833, %v5182
        %5184 = vmatmul.bf16.gmra.mxu0 %v4939
        %v5185 = vpop.f32.mrf.mxu0
        %v5186 = vadd.f32 %v4838, %v5185
        %v5187 = vpop.f32.mrf.mxu0
        %v5188 = vadd.f32 %v4843, %v5187
        %5189 = vmatmul.bf16.gmra.mxu0 %v4941
        %v5190 = vpop.f32.mrf.mxu0
        %v5191 = vadd.f32 %v4848, %v5190
        %v5192 = vpop.f32.mrf.mxu0
        %v5193 = vadd.f32 %v4853, %v5192
        %5194 = vmatmul.bf16.gmra.mxu0 %v4943
        %v5195 = vpop.f32.mrf.mxu0
        %v5196 = vadd.f32 %v4858, %v5195
        %v5197 = vpop.f32.mrf.mxu0
        %v5198 = vadd.f32 %v4863, %v5197
        %5199 = vmatmul.bf16.gmra.mxu0 %v4945
        %v5200 = vpop.f32.mrf.mxu0
        %v5201 = vadd.f32 %v4868, %v5200
        %v5202 = vpop.f32.mrf.mxu0
        %v5203 = vadd.f32 %v4873, %v5202
        %5204 = vmatmul.bf16.gmra.mxu0 %v4947
        %v5205 = vpop.f32.mrf.mxu0
        %v5206 = vadd.f32 %v4878, %v5205
        %v5207 = vpop.f32.mrf.mxu0
        %v5208 = vadd.f32 %v4883, %v5207
        %5209 = vdwg.mxu0
        %5210 = vmatpush.bf16.msra.mxu0 %v4787
        %5211 = vmatpush.bf16.msra.mxu0 %v4783
        %5212 = vmatpush.bf16.msra.mxu0 %v4779
        %5213 = vmatpush.bf16.msra.mxu0 %v4775
        %5214 = vmatpush.bf16.msra.mxu0 %v4771
        %5215 = vmatpush.bf16.msra.mxu0 %v4767
        %5216 = vmatpush.bf16.msra.mxu0 %v4763
        %5217 = vmatpush.bf16.msra.mxu0 %v4759
        %5218 = vmatmul.bf16.gmra.mxu0 %v4934
        %v5219 = vpop.f32.mrf.mxu0
        %v5220 = vadd.f32 %v5171, %v5219
        %v5221 = vpop.f32.mrf.mxu0
        %v5222 = vadd.f32 %v5173, %v5221
        %5223 = vmatmul.bf16.gmra.mxu0 %v4936
        %v5224 = vpop.f32.mrf.mxu0
        %v5225 = vadd.f32 %v5176, %v5224
        %v5226 = vpop.f32.mrf.mxu0
        %v5227 = vadd.f32 %v5178, %v5226
        %5228 = vmatmul.bf16.gmra.mxu0 %v4938
        %v5229 = vpop.f32.mrf.mxu0
        %v5230 = vadd.f32 %v5181, %v5229
        %v5231 = vpop.f32.mrf.mxu0
        %v5232 = vadd.f32 %v5183, %v5231
        %5233 = vmatmul.bf16.gmra.mxu0 %v4940
        %v5234 = vpop.f32.mrf.mxu0
        %v5235 = vadd.f32 %v5186, %v5234
        %v5236 = vpop.f32.mrf.mxu0
        %v5237 = vadd.f32 %v5188, %v5236
        %5238 = vmatmul.bf16.gmra.mxu0 %v4942
        %v5239 = vpop.f32.mrf.mxu0
        %v5240 = vadd.f32 %v5191, %v5239
        %v5241 = vpop.f32.mrf.mxu0
        %v5242 = vadd.f32 %v5193, %v5241
        %5243 = vmatmul.bf16.gmra.mxu0 %v4944
        %v5244 = vpop.f32.mrf.mxu0
        %v5245 = vadd.f32 %v5196, %v5244
        %v5246 = vpop.f32.mrf.mxu0
        %v5247 = vadd.f32 %v5198, %v5246
        %5248 = vmatmul.bf16.gmra.mxu0 %v4946
        %v5249 = vpop.f32.mrf.mxu0
        %v5250 = vadd.f32 %v5201, %v5249
        %v5251 = vpop.f32.mrf.mxu0
        %v5252 = vadd.f32 %v5203, %v5251
        %5253 = vmatmul.bf16.gmra.mxu0 %v4948
        %v5254 = vpop.f32.mrf.mxu0
        %v5255 = vadd.f32 %v5206, %v5254
        %v5256 = vpop.f32.mrf.mxu0
        %v5257 = vadd.f32 %v5208, %v5256
        %5258 = vdwg.mxu0
        %5259 = vmatpush.bf16.msra.mxu0 %v4756
        %5260 = vmatpush.bf16.msra.mxu0 %v4752
        %5261 = vmatpush.bf16.msra.mxu0 %v4748
        %5262 = vmatpush.bf16.msra.mxu0 %v4744
        %5263 = vmatpush.bf16.msra.mxu0 %v4740
        %5264 = vmatpush.bf16.msra.mxu0 %v4736
        %5265 = vmatpush.bf16.msra.mxu0 %v4732
        %5266 = vmatpush.bf16.msra.mxu0 %v4728
        %5267 = vmatmul.bf16.gmra.mxu0 %v4933
        %v5268 = vpop.f32.mrf.mxu0
        %v5269 = vadd.f32 %v4808, %v5268
        %v5270 = vpop.f32.mrf.mxu0
        %v5271 = vadd.f32 %v4813, %v5270
        %5272 = vmatmul.bf16.gmra.mxu0 %v4935
        %v5273 = vpop.f32.mrf.mxu0
        %v5274 = vadd.f32 %v4818, %v5273
        %v5275 = vpop.f32.mrf.mxu0
        %v5276 = vadd.f32 %v4823, %v5275
        %5277 = vmatmul.bf16.gmra.mxu0 %v4937
        %v5278 = vpop.f32.mrf.mxu0
        %v5279 = vadd.f32 %v4828, %v5278
        %v5280 = vpop.f32.mrf.mxu0
        %v5281 = vadd.f32 %v4833, %v5280
        %5282 = vmatmul.bf16.gmra.mxu0 %v4939
        %v5283 = vpop.f32.mrf.mxu0
        %v5284 = vadd.f32 %v4838, %v5283
        %v5285 = vpop.f32.mrf.mxu0
        %v5286 = vadd.f32 %v4843, %v5285
        %5287 = vmatmul.bf16.gmra.mxu0 %v4941
        %v5288 = vpop.f32.mrf.mxu0
        %v5289 = vadd.f32 %v4848, %v5288
        %v5290 = vpop.f32.mrf.mxu0
        %v5291 = vadd.f32 %v4853, %v5290
        %5292 = vmatmul.bf16.gmra.mxu0 %v4943
        %v5293 = vpop.f32.mrf.mxu0
        %v5294 = vadd.f32 %v4858, %v5293
        %v5295 = vpop.f32.mrf.mxu0
        %v5296 = vadd.f32 %v4863, %v5295
        %5297 = vmatmul.bf16.gmra.mxu0 %v4945
        %v5298 = vpop.f32.mrf.mxu0
        %v5299 = vadd.f32 %v4868, %v5298
        %v5300 = vpop.f32.mrf.mxu0
        %v5301 = vadd.f32 %v4873, %v5300
        %5302 = vmatmul.bf16.gmra.mxu0 %v4947
        %v5303 = vpop.f32.mrf.mxu0
        %v5304 = vadd.f32 %v4878, %v5303
        %v5305 = vpop.f32.mrf.mxu0
        %v5306 = vadd.f32 %v4883, %v5305
        %5307 = vdwg.mxu0
        %5308 = vmatpush.bf16.msra.mxu0 %v4788
        %5309 = vmatpush.bf16.msra.mxu0 %v4784
        %5310 = vmatpush.bf16.msra.mxu0 %v4780
        %5311 = vmatpush.bf16.msra.mxu0 %v4776
        %5312 = vmatpush.bf16.msra.mxu0 %v4772
        %5313 = vmatpush.bf16.msra.mxu0 %v4768
        %5314 = vmatpush.bf16.msra.mxu0 %v4764
        %5315 = vmatpush.bf16.msra.mxu0 %v4760
        %5316 = vmatmul.bf16.gmra.mxu0 %v4934
        %v5317 = vpop.f32.mrf.mxu0
        %v5318 = vadd.f32 %v5269, %v5317
        %v5319 = vpop.f32.mrf.mxu0
        %v5320 = vadd.f32 %v5271, %v5319
        %5321 = vmatmul.bf16.gmra.mxu0 %v4936
        %v5322 = vpop.f32.mrf.mxu0
        %v5323 = vadd.f32 %v5274, %v5322
        %v5324 = vpop.f32.mrf.mxu0
        %v5325 = vadd.f32 %v5276, %v5324
        %5326 = vmatmul.bf16.gmra.mxu0 %v4938
        %v5327 = vpop.f32.mrf.mxu0
        %v5328 = vadd.f32 %v5279, %v5327
        %v5329 = vpop.f32.mrf.mxu0
        %v5330 = vadd.f32 %v5281, %v5329
        %5331 = vmatmul.bf16.gmra.mxu0 %v4940
        %v5332 = vpop.f32.mrf.mxu0
        %v5333 = vadd.f32 %v5284, %v5332
        %v5334 = vpop.f32.mrf.mxu0
        %v5335 = vadd.f32 %v5286, %v5334
        %5336 = vmatmul.bf16.gmra.mxu0 %v4942
        %v5337 = vpop.f32.mrf.mxu0
        %v5338 = vadd.f32 %v5289, %v5337
        %v5339 = vpop.f32.mrf.mxu0
        %v5340 = vadd.f32 %v5291, %v5339
        %5341 = vmatmul.bf16.gmra.mxu0 %v4944
        %v5342 = vpop.f32.mrf.mxu0
        %v5343 = vadd.f32 %v5294, %v5342
        %v5344 = vpop.f32.mrf.mxu0
        %v5345 = vadd.f32 %v5296, %v5344
        %5346 = vmatmul.bf16.gmra.mxu0 %v4946
        %v5347 = vpop.f32.mrf.mxu0
        %v5348 = vadd.f32 %v5299, %v5347
        %v5349 = vpop.f32.mrf.mxu0
        %v5350 = vadd.f32 %v5301, %v5349
        %5351 = vmatmul.bf16.gmra.mxu0 %v4948
        %v5352 = vpop.f32.mrf.mxu0
        %v5353 = vadd.f32 %v5304, %v5352
        %v5354 = vpop.f32.mrf.mxu0
        %v5355 = vadd.f32 %v5306, %v5354
        %5356 = vdwg.mxu0
        %v5357 = vxor.u32 %v5024, 2147483648
        %v5358 = vxor.u32 %v5122, 2147483648
        %v5359 = vxor.u32 %v5220, 2147483648
        %v5360 = vxor.u32 %v5318, 2147483648
        %v5361 = vxor.u32 %v5026, 2147483648
        %v5362 = vxor.u32 %v5124, 2147483648
        %v5363 = vxor.u32 %v5222, 2147483648
        %v5364 = vxor.u32 %v5320, 2147483648
        %v5365 = vxor.u32 %v5029, 2147483648
        %v5366 = vxor.u32 %v5127, 2147483648
        %v5367 = vxor.u32 %v5225, 2147483648
        %v5368 = vxor.u32 %v5323, 2147483648
        %v5369 = vxor.u32 %v5031, 2147483648
        %v5370 = vxor.u32 %v5129, 2147483648
        %v5371 = vxor.u32 %v5227, 2147483648
        %v5372 = vxor.u32 %v5325, 2147483648
        %v5373 = vxor.u32 %v5034, 2147483648
        %v5374 = vxor.u32 %v5132, 2147483648
        %v5375 = vxor.u32 %v5230, 2147483648
        %v5376 = vxor.u32 %v5328, 2147483648
        %v5377 = vxor.u32 %v5036, 2147483648
        %v5378 = vxor.u32 %v5134, 2147483648
        %v5379 = vxor.u32 %v5232, 2147483648
        %v5380 = vxor.u32 %v5330, 2147483648
        %v5381 = vxor.u32 %v5039, 2147483648
        %v5382 = vxor.u32 %v5137, 2147483648
        %v5383 = vxor.u32 %v5235, 2147483648
        %v5384 = vxor.u32 %v5333, 2147483648
        %v5385 = vxor.u32 %v5041, 2147483648
        %v5386 = vxor.u32 %v5139, 2147483648
        %v5387 = vxor.u32 %v5237, 2147483648
        %v5388 = vxor.u32 %v5335, 2147483648
        %v5389 = vxor.u32 %v5044, 2147483648
        %v5390 = vxor.u32 %v5142, 2147483648
        %v5391 = vxor.u32 %v5240, 2147483648
        %v5392 = vxor.u32 %v5338, 2147483648
        %v5393 = vxor.u32 %v5046, 2147483648
        %v5394 = vxor.u32 %v5144, 2147483648
        %v5395 = vxor.u32 %v5242, 2147483648
        %v5396 = vxor.u32 %v5340, 2147483648
        %v5397 = vxor.u32 %v5049, 2147483648
        %v5398 = vxor.u32 %v5147, 2147483648
        %v5399 = vxor.u32 %v5245, 2147483648
        %v5400 = vxor.u32 %v5343, 2147483648
        %v5401 = vxor.u32 %v5051, 2147483648
        %v5402 = vxor.u32 %v5149, 2147483648
        %v5403 = vxor.u32 %v5247, 2147483648
        %v5404 = vxor.u32 %v5345, 2147483648
        %v5405 = vxor.u32 %v5054, 2147483648
        %v5406 = vxor.u32 %v5152, 2147483648
        %v5407 = vxor.u32 %v5250, 2147483648
        %v5408 = vxor.u32 %v5348, 2147483648
        %v5409 = vxor.u32 %v5056, 2147483648
        %v5410 = vxor.u32 %v5154, 2147483648
        %v5411 = vxor.u32 %v5252, 2147483648
        %v5412 = vxor.u32 %v5350, 2147483648
        %v5413 = vxor.u32 %v5059, 2147483648
        %v5414 = vxor.u32 %v5157, 2147483648
        %v5415 = vxor.u32 %v5255, 2147483648
        %v5416 = vxor.u32 %v5353, 2147483648
        %v5417 = vxor.u32 %v5061, 2147483648
        %v5418 = vxor.u32 %v5159, 2147483648
        %v5419 = vxor.u32 %v5257, 2147483648
        %v5420 = vxor.u32 %v5355, 2147483648
        %v5421 = vmul.f32 %v5357, 1.442695
        %v5422 = vpow.pop %v5421
        %v5423 = vmul.f32 %v5358, 1.442695
        %v5424 = vpow.pop %v5423
        %v5425 = vmul.f32 %v5359, 1.442695
        %v5426 = vpow.pop %v5425
        %v5427 = vmul.f32 %v5360, 1.442695
        %v5428 = vpow.pop %v5427
        %v5429 = vmul.f32 %v5361, 1.442695
        %v5430 = vpow.pop %v5429
        %v5431 = vmul.f32 %v5362, 1.442695
        %v5432 = vpow.pop %v5431
        %v5433 = vmul.f32 %v5363, 1.442695
        %v5434 = vpow.pop %v5433
        %v5435 = vmul.f32 %v5364, 1.442695
        %v5436 = vpow.pop %v5435
        %v5437 = vmul.f32 %v5365, 1.442695
        %v5438 = vpow.pop %v5437
        %v5439 = vmul.f32 %v5366, 1.442695
        %v5440 = vpow.pop %v5439
        %v5441 = vmul.f32 %v5367, 1.442695
        %v5442 = vpow.pop %v5441
        %v5443 = vmul.f32 %v5368, 1.442695
        %v5444 = vpow.pop %v5443
        %v5445 = vmul.f32 %v5369, 1.442695
        %v5446 = vpow.pop %v5445
        %v5447 = vmul.f32 %v5370, 1.442695
        %v5448 = vpow.pop %v5447
        %v5449 = vmul.f32 %v5371, 1.442695
        %v5450 = vpow.pop %v5449
        %v5451 = vmul.f32 %v5372, 1.442695
        %v5452 = vpow.pop %v5451
        %v5453 = vmul.f32 %v5373, 1.442695
        %v5454 = vpow.pop %v5453
        %v5455 = vmul.f32 %v5374, 1.442695
        %v5456 = vpow.pop %v5455
        %v5457 = vmul.f32 %v5375, 1.442695
        %v5458 = vpow.pop %v5457
        %v5459 = vmul.f32 %v5376, 1.442695
        %v5460 = vpow.pop %v5459
        %v5461 = vmul.f32 %v5377, 1.442695
        %v5462 = vpow.pop %v5461
        %v5463 = vmul.f32 %v5378, 1.442695
        %v5464 = vpow.pop %v5463
        %v5465 = vmul.f32 %v5379, 1.442695
        %v5466 = vpow.pop %v5465
        %v5467 = vmul.f32 %v5380, 1.442695
        %v5468 = vpow.pop %v5467
        %v5469 = vmul.f32 %v5381, 1.442695
        %v5470 = vpow.pop %v5469
        %v5471 = vmul.f32 %v5382, 1.442695
        %v5472 = vpow.pop %v5471
        %v5473 = vmul.f32 %v5383, 1.442695
        %v5474 = vpow.pop %v5473
        %v5475 = vmul.f32 %v5384, 1.442695
        %v5476 = vpow.pop %v5475
        %v5477 = vmul.f32 %v5385, 1.442695
        %v5478 = vpow.pop %v5477
        %v5479 = vmul.f32 %v5386, 1.442695
        %v5480 = vpow.pop %v5479
        %v5481 = vmul.f32 %v5387, 1.442695
        %v5482 = vpow.pop %v5481
        %v5483 = vmul.f32 %v5388, 1.442695
        %v5484 = vpow.pop %v5483
        %v5485 = vmul.f32 %v5389, 1.442695
        %v5486 = vpow.pop %v5485
        %v5487 = vmul.f32 %v5390, 1.442695
        %v5488 = vpow.pop %v5487
        %v5489 = vmul.f32 %v5391, 1.442695
        %v5490 = vpow.pop %v5489
        %v5491 = vmul.f32 %v5392, 1.442695
        %v5492 = vpow.pop %v5491
        %v5493 = vmul.f32 %v5393, 1.442695
        %v5494 = vpow.pop %v5493
        %v5495 = vmul.f32 %v5394, 1.442695
        %v5496 = vpow.pop %v5495
        %v5497 = vmul.f32 %v5395, 1.442695
        %v5498 = vpow.pop %v5497
        %v5499 = vmul.f32 %v5396, 1.442695
        %v5500 = vpow.pop %v5499
        %v5501 = vmul.f32 %v5397, 1.442695
        %v5502 = vpow.pop %v5501
        %v5503 = vmul.f32 %v5398, 1.442695
        %v5504 = vpow.pop %v5503
        %v5505 = vmul.f32 %v5399, 1.442695
        %v5506 = vpow.pop %v5505
        %v5507 = vmul.f32 %v5400, 1.442695
        %v5508 = vpow.pop %v5507
        %v5509 = vmul.f32 %v5401, 1.442695
        %v5510 = vpow.pop %v5509
        %v5511 = vmul.f32 %v5402, 1.442695
        %v5512 = vpow.pop %v5511
        %v5513 = vmul.f32 %v5403, 1.442695
        %v5514 = vpow.pop %v5513
        %v5515 = vmul.f32 %v5404, 1.442695
        %v5516 = vpow.pop %v5515
        %v5517 = vmul.f32 %v5405, 1.442695
        %v5518 = vpow.pop %v5517
        %v5519 = vmul.f32 %v5406, 1.442695
        %v5520 = vpow.pop %v5519
        %v5521 = vmul.f32 %v5407, 1.442695
        %v5522 = vpow.pop %v5521
        %v5523 = vmul.f32 %v5408, 1.442695
        %v5524 = vpow.pop %v5523
        %v5525 = vmul.f32 %v5409, 1.442695
        %v5526 = vpow.pop %v5525
        %v5527 = vmul.f32 %v5410, 1.442695
        %v5528 = vpow.pop %v5527
        %v5529 = vmul.f32 %v5411, 1.442695
        %v5530 = vpow.pop %v5529
        %v5531 = vmul.f32 %v5412, 1.442695
        %v5532 = vpow.pop %v5531
        %v5533 = vmul.f32 %v5413, 1.442695
        %v5534 = vpow.pop %v5533
        %v5535 = vmul.f32 %v5414, 1.442695
        %v5536 = vpow.pop %v5535
        %v5537 = vmul.f32 %v5415, 1.442695
        %v5538 = vpow.pop %v5537
        %v5539 = vmul.f32 %v5416, 1.442695
        %v5540 = vpow.pop %v5539
        %v5541 = vmul.f32 %v5417, 1.442695
        %v5542 = vpow.pop %v5541
        %v5543 = vmul.f32 %v5418, 1.442695
        %v5544 = vpow.pop %v5543
        %v5545 = vmul.f32 %v5419, 1.442695
        %v5546 = vpow.pop %v5545
        %v5547 = vmul.f32 %v5420, 1.442695
        %v5548 = vpow.pop %v5547
        %v5549 = vadd.f32 %v5422, 1.0
        %v5550 = vadd.f32 %v5424, 1.0
        %v5551 = vadd.f32 %v5426, 1.0
        %v5552 = vadd.f32 %v5428, 1.0
        %v5553 = vadd.f32 %v5430, 1.0
        %v5554 = vadd.f32 %v5432, 1.0
        %v5555 = vadd.f32 %v5434, 1.0
        %v5556 = vadd.f32 %v5436, 1.0
        %v5557 = vadd.f32 %v5438, 1.0
        %v5558 = vadd.f32 %v5440, 1.0
        %v5559 = vadd.f32 %v5442, 1.0
        %v5560 = vadd.f32 %v5444, 1.0
        %v5561 = vadd.f32 %v5446, 1.0
        %v5562 = vadd.f32 %v5448, 1.0
        %v5563 = vadd.f32 %v5450, 1.0
        %v5564 = vadd.f32 %v5452, 1.0
        %v5565 = vadd.f32 %v5454, 1.0
        %v5566 = vadd.f32 %v5456, 1.0
        %v5567 = vadd.f32 %v5458, 1.0
        %v5568 = vadd.f32 %v5460, 1.0
        %v5569 = vadd.f32 %v5462, 1.0
        %v5570 = vadd.f32 %v5464, 1.0
        %v5571 = vadd.f32 %v5466, 1.0
        %v5572 = vadd.f32 %v5468, 1.0
        %v5573 = vadd.f32 %v5470, 1.0
        %v5574 = vadd.f32 %v5472, 1.0
        %v5575 = vadd.f32 %v5474, 1.0
        %v5576 = vadd.f32 %v5476, 1.0
        %v5577 = vadd.f32 %v5478, 1.0
        %v5578 = vadd.f32 %v5480, 1.0
        %v5579 = vadd.f32 %v5482, 1.0
        %v5580 = vadd.f32 %v5484, 1.0
        %v5581 = vadd.f32 %v5486, 1.0
        %v5582 = vadd.f32 %v5488, 1.0
        %v5583 = vadd.f32 %v5490, 1.0
        %v5584 = vadd.f32 %v5492, 1.0
        %v5585 = vadd.f32 %v5494, 1.0
        %v5586 = vadd.f32 %v5496, 1.0
        %v5587 = vadd.f32 %v5498, 1.0
        %v5588 = vadd.f32 %v5500, 1.0
        %v5589 = vadd.f32 %v5502, 1.0
        %v5590 = vadd.f32 %v5504, 1.0
        %v5591 = vadd.f32 %v5506, 1.0
        %v5592 = vadd.f32 %v5508, 1.0
        %v5593 = vadd.f32 %v5510, 1.0
        %v5594 = vadd.f32 %v5512, 1.0
        %v5595 = vadd.f32 %v5514, 1.0
        %v5596 = vadd.f32 %v5516, 1.0
        %v5597 = vadd.f32 %v5518, 1.0
        %v5598 = vadd.f32 %v5520, 1.0
        %v5599 = vadd.f32 %v5522, 1.0
        %v5600 = vadd.f32 %v5524, 1.0
        %v5601 = vadd.f32 %v5526, 1.0
        %v5602 = vadd.f32 %v5528, 1.0
        %v5603 = vadd.f32 %v5530, 1.0
        %v5604 = vadd.f32 %v5532, 1.0
        %v5605 = vadd.f32 %v5534, 1.0
        %v5606 = vadd.f32 %v5536, 1.0
        %v5607 = vadd.f32 %v5538, 1.0
        %v5608 = vadd.f32 %v5540, 1.0
        %v5609 = vadd.f32 %v5542, 1.0
        %v5610 = vadd.f32 %v5544, 1.0
        %v5611 = vadd.f32 %v5546, 1.0
        %v5612 = vadd.f32 %v5548, 1.0
        %v5613 = vrcp.pop %v5549
        %v5614 = vmul.f32 %v5549, %v5613
        %v5615 = vsub.f32 1.0, %v5614
        %v5616 = vmul.f32 %v5613, %v5615
        %v5617 = vadd.f32 %v5613, %v5616
        %vm5618 = vweird.f32 %v5549
        %vm5619 = vweird.f32 %v5613
        %vm5620 = vmor %vm5618, %vm5619
        %v5621 = vsel %vm5620, %v5613, %v5617
        %v5622 = vand.u32 2147483647, %v5549
        %vm5623 = vcmp.eq.f32.partialorder %v5622, 8.507059e+37
        %v5624 = vand.u32 %v5549, 2147483648
        %v5625 = vor.u32 1.1754944e-38, %v5624
        %v5626 = vsel %vm5623, %v5625, %v5621
        %v5627 = vmul.f32 1.0, %v5626
        %v5628 = vrcp.pop %v5550
        %v5629 = vmul.f32 %v5550, %v5628
        %v5630 = vsub.f32 1.0, %v5629
        %v5631 = vmul.f32 %v5628, %v5630
        %v5632 = vadd.f32 %v5628, %v5631
        %vm5633 = vweird.f32 %v5550
        %vm5634 = vweird.f32 %v5628
        %vm5635 = vmor %vm5633, %vm5634
        %v5636 = vsel %vm5635, %v5628, %v5632
        %v5637 = vand.u32 2147483647, %v5550
        %vm5638 = vcmp.eq.f32.partialorder %v5637, 8.507059e+37
        %v5639 = vand.u32 %v5550, 2147483648
        %v5640 = vor.u32 1.1754944e-38, %v5639
        %v5641 = vsel %vm5638, %v5640, %v5636
        %v5642 = vmul.f32 1.0, %v5641
        %v5643 = vrcp.pop %v5551
        %v5644 = vmul.f32 %v5551, %v5643
        %v5645 = vsub.f32 1.0, %v5644
        %v5646 = vmul.f32 %v5643, %v5645
        %v5647 = vadd.f32 %v5643, %v5646
        %vm5648 = vweird.f32 %v5551
        %vm5649 = vweird.f32 %v5643
        %vm5650 = vmor %vm5648, %vm5649
        %v5651 = vsel %vm5650, %v5643, %v5647
        %v5652 = vand.u32 2147483647, %v5551
        %vm5653 = vcmp.eq.f32.partialorder %v5652, 8.507059e+37
        %v5654 = vand.u32 %v5551, 2147483648
        %v5655 = vor.u32 1.1754944e-38, %v5654
        %v5656 = vsel %vm5653, %v5655, %v5651
        %v5657 = vmul.f32 1.0, %v5656
        %v5658 = vrcp.pop %v5552
        %v5659 = vmul.f32 %v5552, %v5658
        %v5660 = vsub.f32 1.0, %v5659
        %v5661 = vmul.f32 %v5658, %v5660
        %v5662 = vadd.f32 %v5658, %v5661
        %vm5663 = vweird.f32 %v5552
        %vm5664 = vweird.f32 %v5658
        %vm5665 = vmor %vm5663, %vm5664
        %v5666 = vsel %vm5665, %v5658, %v5662
        %v5667 = vand.u32 2147483647, %v5552
        %vm5668 = vcmp.eq.f32.partialorder %v5667, 8.507059e+37
        %v5669 = vand.u32 %v5552, 2147483648
        %v5670 = vor.u32 1.1754944e-38, %v5669
        %v5671 = vsel %vm5668, %v5670, %v5666
        %v5672 = vmul.f32 1.0, %v5671
        %v5673 = vrcp.pop %v5553
        %v5674 = vmul.f32 %v5553, %v5673
        %v5675 = vsub.f32 1.0, %v5674
        %v5676 = vmul.f32 %v5673, %v5675
        %v5677 = vadd.f32 %v5673, %v5676
        %vm5678 = vweird.f32 %v5553
        %vm5679 = vweird.f32 %v5673
        %vm5680 = vmor %vm5678, %vm5679
        %v5681 = vsel %vm5680, %v5673, %v5677
        %v5682 = vand.u32 2147483647, %v5553
        %vm5683 = vcmp.eq.f32.partialorder %v5682, 8.507059e+37
        %v5684 = vand.u32 %v5553, 2147483648
        %v5685 = vor.u32 1.1754944e-38, %v5684
        %v5686 = vsel %vm5683, %v5685, %v5681
        %v5687 = vmul.f32 1.0, %v5686
        %v5688 = vrcp.pop %v5554
        %v5689 = vmul.f32 %v5554, %v5688
        %v5690 = vsub.f32 1.0, %v5689
        %v5691 = vmul.f32 %v5688, %v5690
        %v5692 = vadd.f32 %v5688, %v5691
        %vm5693 = vweird.f32 %v5554
        %vm5694 = vweird.f32 %v5688
        %vm5695 = vmor %vm5693, %vm5694
        %v5696 = vsel %vm5695, %v5688, %v5692
        %v5697 = vand.u32 2147483647, %v5554
        %vm5698 = vcmp.eq.f32.partialorder %v5697, 8.507059e+37
        %v5699 = vand.u32 %v5554, 2147483648
        %v5700 = vor.u32 1.1754944e-38, %v5699
        %v5701 = vsel %vm5698, %v5700, %v5696
        %v5702 = vmul.f32 1.0, %v5701
        %v5703 = vrcp.pop %v5555
        %v5704 = vmul.f32 %v5555, %v5703
        %v5705 = vsub.f32 1.0, %v5704
        %v5706 = vmul.f32 %v5703, %v5705
        %v5707 = vadd.f32 %v5703, %v5706
        %vm5708 = vweird.f32 %v5555
        %vm5709 = vweird.f32 %v5703
        %vm5710 = vmor %vm5708, %vm5709
        %v5711 = vsel %vm5710, %v5703, %v5707
        %v5712 = vand.u32 2147483647, %v5555
        %vm5713 = vcmp.eq.f32.partialorder %v5712, 8.507059e+37
        %v5714 = vand.u32 %v5555, 2147483648
        %v5715 = vor.u32 1.1754944e-38, %v5714
        %v5716 = vsel %vm5713, %v5715, %v5711
        %v5717 = vmul.f32 1.0, %v5716
        %v5718 = vrcp.pop %v5556
        %v5719 = vmul.f32 %v5556, %v5718
        %v5720 = vsub.f32 1.0, %v5719
        %v5721 = vmul.f32 %v5718, %v5720
        %v5722 = vadd.f32 %v5718, %v5721
        %vm5723 = vweird.f32 %v5556
        %vm5724 = vweird.f32 %v5718
        %vm5725 = vmor %vm5723, %vm5724
        %v5726 = vsel %vm5725, %v5718, %v5722
        %v5727 = vand.u32 2147483647, %v5556
        %vm5728 = vcmp.eq.f32.partialorder %v5727, 8.507059e+37
        %v5729 = vand.u32 %v5556, 2147483648
        %v5730 = vor.u32 1.1754944e-38, %v5729
        %v5731 = vsel %vm5728, %v5730, %v5726
        %v5732 = vmul.f32 1.0, %v5731
        %v5733 = vrcp.pop %v5557
        %v5734 = vmul.f32 %v5557, %v5733
        %v5735 = vsub.f32 1.0, %v5734
        %v5736 = vmul.f32 %v5733, %v5735
        %v5737 = vadd.f32 %v5733, %v5736
        %vm5738 = vweird.f32 %v5557
        %vm5739 = vweird.f32 %v5733
        %vm5740 = vmor %vm5738, %vm5739
        %v5741 = vsel %vm5740, %v5733, %v5737
        %v5742 = vand.u32 2147483647, %v5557
        %vm5743 = vcmp.eq.f32.partialorder %v5742, 8.507059e+37
        %v5744 = vand.u32 %v5557, 2147483648
        %v5745 = vor.u32 1.1754944e-38, %v5744
        %v5746 = vsel %vm5743, %v5745, %v5741
        %v5747 = vmul.f32 1.0, %v5746
        %v5748 = vrcp.pop %v5558
        %v5749 = vmul.f32 %v5558, %v5748
        %v5750 = vsub.f32 1.0, %v5749
        %v5751 = vmul.f32 %v5748, %v5750
        %v5752 = vadd.f32 %v5748, %v5751
        %vm5753 = vweird.f32 %v5558
        %vm5754 = vweird.f32 %v5748
        %vm5755 = vmor %vm5753, %vm5754
        %v5756 = vsel %vm5755, %v5748, %v5752
        %v5757 = vand.u32 2147483647, %v5558
        %vm5758 = vcmp.eq.f32.partialorder %v5757, 8.507059e+37
        %v5759 = vand.u32 %v5558, 2147483648
        %v5760 = vor.u32 1.1754944e-38, %v5759
        %v5761 = vsel %vm5758, %v5760, %v5756
        %v5762 = vmul.f32 1.0, %v5761
        %v5763 = vrcp.pop %v5559
        %v5764 = vmul.f32 %v5559, %v5763
        %v5765 = vsub.f32 1.0, %v5764
        %v5766 = vmul.f32 %v5763, %v5765
        %v5767 = vadd.f32 %v5763, %v5766
        %vm5768 = vweird.f32 %v5559
        %vm5769 = vweird.f32 %v5763
        %vm5770 = vmor %vm5768, %vm5769
        %v5771 = vsel %vm5770, %v5763, %v5767
        %v5772 = vand.u32 2147483647, %v5559
        %vm5773 = vcmp.eq.f32.partialorder %v5772, 8.507059e+37
        %v5774 = vand.u32 %v5559, 2147483648
        %v5775 = vor.u32 1.1754944e-38, %v5774
        %v5776 = vsel %vm5773, %v5775, %v5771
        %v5777 = vmul.f32 1.0, %v5776
        %v5778 = vrcp.pop %v5560
        %v5779 = vmul.f32 %v5560, %v5778
        %v5780 = vsub.f32 1.0, %v5779
        %v5781 = vmul.f32 %v5778, %v5780
        %v5782 = vadd.f32 %v5778, %v5781
        %vm5783 = vweird.f32 %v5560
        %vm5784 = vweird.f32 %v5778
        %vm5785 = vmor %vm5783, %vm5784
        %v5786 = vsel %vm5785, %v5778, %v5782
        %v5787 = vand.u32 2147483647, %v5560
        %vm5788 = vcmp.eq.f32.partialorder %v5787, 8.507059e+37
        %v5789 = vand.u32 %v5560, 2147483648
        %v5790 = vor.u32 1.1754944e-38, %v5789
        %v5791 = vsel %vm5788, %v5790, %v5786
        %v5792 = vmul.f32 1.0, %v5791
        %v5793 = vrcp.pop %v5561
        %v5794 = vmul.f32 %v5561, %v5793
        %v5795 = vsub.f32 1.0, %v5794
        %v5796 = vmul.f32 %v5793, %v5795
        %v5797 = vadd.f32 %v5793, %v5796
        %vm5798 = vweird.f32 %v5561
        %vm5799 = vweird.f32 %v5793
        %vm5800 = vmor %vm5798, %vm5799
        %v5801 = vsel %vm5800, %v5793, %v5797
        %v5802 = vand.u32 2147483647, %v5561
        %vm5803 = vcmp.eq.f32.partialorder %v5802, 8.507059e+37
        %v5804 = vand.u32 %v5561, 2147483648
        %v5805 = vor.u32 1.1754944e-38, %v5804
        %v5806 = vsel %vm5803, %v5805, %v5801
        %v5807 = vmul.f32 1.0, %v5806
        %v5808 = vrcp.pop %v5562
        %v5809 = vmul.f32 %v5562, %v5808
        %v5810 = vsub.f32 1.0, %v5809
        %v5811 = vmul.f32 %v5808, %v5810
        %v5812 = vadd.f32 %v5808, %v5811
        %vm5813 = vweird.f32 %v5562
        %vm5814 = vweird.f32 %v5808
        %vm5815 = vmor %vm5813, %vm5814
        %v5816 = vsel %vm5815, %v5808, %v5812
        %v5817 = vand.u32 2147483647, %v5562
        %vm5818 = vcmp.eq.f32.partialorder %v5817, 8.507059e+37
        %v5819 = vand.u32 %v5562, 2147483648
        %v5820 = vor.u32 1.1754944e-38, %v5819
        %v5821 = vsel %vm5818, %v5820, %v5816
        %v5822 = vmul.f32 1.0, %v5821
        %v5823 = vrcp.pop %v5563
        %v5824 = vmul.f32 %v5563, %v5823
        %v5825 = vsub.f32 1.0, %v5824
        %v5826 = vmul.f32 %v5823, %v5825
        %v5827 = vadd.f32 %v5823, %v5826
        %vm5828 = vweird.f32 %v5563
        %vm5829 = vweird.f32 %v5823
        %vm5830 = vmor %vm5828, %vm5829
        %v5831 = vsel %vm5830, %v5823, %v5827
        %v5832 = vand.u32 2147483647, %v5563
        %vm5833 = vcmp.eq.f32.partialorder %v5832, 8.507059e+37
        %v5834 = vand.u32 %v5563, 2147483648
        %v5835 = vor.u32 1.1754944e-38, %v5834
        %v5836 = vsel %vm5833, %v5835, %v5831
        %v5837 = vmul.f32 1.0, %v5836
        %v5838 = vrcp.pop %v5564
        %v5839 = vmul.f32 %v5564, %v5838
        %v5840 = vsub.f32 1.0, %v5839
        %v5841 = vmul.f32 %v5838, %v5840
        %v5842 = vadd.f32 %v5838, %v5841
        %vm5843 = vweird.f32 %v5564
        %vm5844 = vweird.f32 %v5838
        %vm5845 = vmor %vm5843, %vm5844
        %v5846 = vsel %vm5845, %v5838, %v5842
        %v5847 = vand.u32 2147483647, %v5564
        %vm5848 = vcmp.eq.f32.partialorder %v5847, 8.507059e+37
        %v5849 = vand.u32 %v5564, 2147483648
        %v5850 = vor.u32 1.1754944e-38, %v5849
        %v5851 = vsel %vm5848, %v5850, %v5846
        %v5852 = vmul.f32 1.0, %v5851
        %v5853 = vrcp.pop %v5565
        %v5854 = vmul.f32 %v5565, %v5853
        %v5855 = vsub.f32 1.0, %v5854
        %v5856 = vmul.f32 %v5853, %v5855
        %v5857 = vadd.f32 %v5853, %v5856
        %vm5858 = vweird.f32 %v5565
        %vm5859 = vweird.f32 %v5853
        %vm5860 = vmor %vm5858, %vm5859
        %v5861 = vsel %vm5860, %v5853, %v5857
        %v5862 = vand.u32 2147483647, %v5565
        %vm5863 = vcmp.eq.f32.partialorder %v5862, 8.507059e+37
        %v5864 = vand.u32 %v5565, 2147483648
        %v5865 = vor.u32 1.1754944e-38, %v5864
        %v5866 = vsel %vm5863, %v5865, %v5861
        %v5867 = vmul.f32 1.0, %v5866
        %v5868 = vrcp.pop %v5566
        %v5869 = vmul.f32 %v5566, %v5868
        %v5870 = vsub.f32 1.0, %v5869
        %v5871 = vmul.f32 %v5868, %v5870
        %v5872 = vadd.f32 %v5868, %v5871
        %vm5873 = vweird.f32 %v5566
        %vm5874 = vweird.f32 %v5868
        %vm5875 = vmor %vm5873, %vm5874
        %v5876 = vsel %vm5875, %v5868, %v5872
        %v5877 = vand.u32 2147483647, %v5566
        %vm5878 = vcmp.eq.f32.partialorder %v5877, 8.507059e+37
        %v5879 = vand.u32 %v5566, 2147483648
        %v5880 = vor.u32 1.1754944e-38, %v5879
        %v5881 = vsel %vm5878, %v5880, %v5876
        %v5882 = vmul.f32 1.0, %v5881
        %v5883 = vrcp.pop %v5567
        %v5884 = vmul.f32 %v5567, %v5883
        %v5885 = vsub.f32 1.0, %v5884
        %v5886 = vmul.f32 %v5883, %v5885
        %v5887 = vadd.f32 %v5883, %v5886
        %vm5888 = vweird.f32 %v5567
        %vm5889 = vweird.f32 %v5883
        %vm5890 = vmor %vm5888, %vm5889
        %v5891 = vsel %vm5890, %v5883, %v5887
        %v5892 = vand.u32 2147483647, %v5567
        %vm5893 = vcmp.eq.f32.partialorder %v5892, 8.507059e+37
        %v5894 = vand.u32 %v5567, 2147483648
        %v5895 = vor.u32 1.1754944e-38, %v5894
        %v5896 = vsel %vm5893, %v5895, %v5891
        %v5897 = vmul.f32 1.0, %v5896
        %v5898 = vrcp.pop %v5568
        %v5899 = vmul.f32 %v5568, %v5898
        %v5900 = vsub.f32 1.0, %v5899
        %v5901 = vmul.f32 %v5898, %v5900
        %v5902 = vadd.f32 %v5898, %v5901
        %vm5903 = vweird.f32 %v5568
        %vm5904 = vweird.f32 %v5898
        %vm5905 = vmor %vm5903, %vm5904
        %v5906 = vsel %vm5905, %v5898, %v5902
        %v5907 = vand.u32 2147483647, %v5568
        %vm5908 = vcmp.eq.f32.partialorder %v5907, 8.507059e+37
        %v5909 = vand.u32 %v5568, 2147483648
        %v5910 = vor.u32 1.1754944e-38, %v5909
        %v5911 = vsel %vm5908, %v5910, %v5906
        %v5912 = vmul.f32 1.0, %v5911
        %v5913 = vrcp.pop %v5569
        %v5914 = vmul.f32 %v5569, %v5913
        %v5915 = vsub.f32 1.0, %v5914
        %v5916 = vmul.f32 %v5913, %v5915
        %v5917 = vadd.f32 %v5913, %v5916
        %vm5918 = vweird.f32 %v5569
        %vm5919 = vweird.f32 %v5913
        %vm5920 = vmor %vm5918, %vm5919
        %v5921 = vsel %vm5920, %v5913, %v5917
        %v5922 = vand.u32 2147483647, %v5569
        %vm5923 = vcmp.eq.f32.partialorder %v5922, 8.507059e+37
        %v5924 = vand.u32 %v5569, 2147483648
        %v5925 = vor.u32 1.1754944e-38, %v5924
        %v5926 = vsel %vm5923, %v5925, %v5921
        %v5927 = vmul.f32 1.0, %v5926
        %v5928 = vrcp.pop %v5570
        %v5929 = vmul.f32 %v5570, %v5928
        %v5930 = vsub.f32 1.0, %v5929
        %v5931 = vmul.f32 %v5928, %v5930
        %v5932 = vadd.f32 %v5928, %v5931
        %vm5933 = vweird.f32 %v5570
        %vm5934 = vweird.f32 %v5928
        %vm5935 = vmor %vm5933, %vm5934
        %v5936 = vsel %vm5935, %v5928, %v5932
        %v5937 = vand.u32 2147483647, %v5570
        %vm5938 = vcmp.eq.f32.partialorder %v5937, 8.507059e+37
        %v5939 = vand.u32 %v5570, 2147483648
        %v5940 = vor.u32 1.1754944e-38, %v5939
        %v5941 = vsel %vm5938, %v5940, %v5936
        %v5942 = vmul.f32 1.0, %v5941
        %v5943 = vrcp.pop %v5571
        %v5944 = vmul.f32 %v5571, %v5943
        %v5945 = vsub.f32 1.0, %v5944
        %v5946 = vmul.f32 %v5943, %v5945
        %v5947 = vadd.f32 %v5943, %v5946
        %vm5948 = vweird.f32 %v5571
        %vm5949 = vweird.f32 %v5943
        %vm5950 = vmor %vm5948, %vm5949
        %v5951 = vsel %vm5950, %v5943, %v5947
        %v5952 = vand.u32 2147483647, %v5571
        %vm5953 = vcmp.eq.f32.partialorder %v5952, 8.507059e+37
        %v5954 = vand.u32 %v5571, 2147483648
        %v5955 = vor.u32 1.1754944e-38, %v5954
        %v5956 = vsel %vm5953, %v5955, %v5951
        %v5957 = vmul.f32 1.0, %v5956
        %v5958 = vrcp.pop %v5572
        %v5959 = vmul.f32 %v5572, %v5958
        %v5960 = vsub.f32 1.0, %v5959
        %v5961 = vmul.f32 %v5958, %v5960
        %v5962 = vadd.f32 %v5958, %v5961
        %vm5963 = vweird.f32 %v5572
        %vm5964 = vweird.f32 %v5958
        %vm5965 = vmor %vm5963, %vm5964
        %v5966 = vsel %vm5965, %v5958, %v5962
        %v5967 = vand.u32 2147483647, %v5572
        %vm5968 = vcmp.eq.f32.partialorder %v5967, 8.507059e+37
        %v5969 = vand.u32 %v5572, 2147483648
        %v5970 = vor.u32 1.1754944e-38, %v5969
        %v5971 = vsel %vm5968, %v5970, %v5966
        %v5972 = vmul.f32 1.0, %v5971
        %v5973 = vrcp.pop %v5573
        %v5974 = vmul.f32 %v5573, %v5973
        %v5975 = vsub.f32 1.0, %v5974
        %v5976 = vmul.f32 %v5973, %v5975
        %v5977 = vadd.f32 %v5973, %v5976
        %vm5978 = vweird.f32 %v5573
        %vm5979 = vweird.f32 %v5973
        %vm5980 = vmor %vm5978, %vm5979
        %v5981 = vsel %vm5980, %v5973, %v5977
        %v5982 = vand.u32 2147483647, %v5573
        %vm5983 = vcmp.eq.f32.partialorder %v5982, 8.507059e+37
        %v5984 = vand.u32 %v5573, 2147483648
        %v5985 = vor.u32 1.1754944e-38, %v5984
        %v5986 = vsel %vm5983, %v5985, %v5981
        %v5987 = vmul.f32 1.0, %v5986
        %v5988 = vrcp.pop %v5574
        %v5989 = vmul.f32 %v5574, %v5988
        %v5990 = vsub.f32 1.0, %v5989
        %v5991 = vmul.f32 %v5988, %v5990
        %v5992 = vadd.f32 %v5988, %v5991
        %vm5993 = vweird.f32 %v5574
        %vm5994 = vweird.f32 %v5988
        %vm5995 = vmor %vm5993, %vm5994
        %v5996 = vsel %vm5995, %v5988, %v5992
        %v5997 = vand.u32 2147483647, %v5574
        %vm5998 = vcmp.eq.f32.partialorder %v5997, 8.507059e+37
        %v5999 = vand.u32 %v5574, 2147483648
        %v6000 = vor.u32 1.1754944e-38, %v5999
        %v6001 = vsel %vm5998, %v6000, %v5996
        %v6002 = vmul.f32 1.0, %v6001
        %v6003 = vrcp.pop %v5575
        %v6004 = vmul.f32 %v5575, %v6003
        %v6005 = vsub.f32 1.0, %v6004
        %v6006 = vmul.f32 %v6003, %v6005
        %v6007 = vadd.f32 %v6003, %v6006
        %vm6008 = vweird.f32 %v5575
        %vm6009 = vweird.f32 %v6003
        %vm6010 = vmor %vm6008, %vm6009
        %v6011 = vsel %vm6010, %v6003, %v6007
        %v6012 = vand.u32 2147483647, %v5575
        %vm6013 = vcmp.eq.f32.partialorder %v6012, 8.507059e+37
        %v6014 = vand.u32 %v5575, 2147483648
        %v6015 = vor.u32 1.1754944e-38, %v6014
        %v6016 = vsel %vm6013, %v6015, %v6011
        %v6017 = vmul.f32 1.0, %v6016
        %v6018 = vrcp.pop %v5576
        %v6019 = vmul.f32 %v5576, %v6018
        %v6020 = vsub.f32 1.0, %v6019
        %v6021 = vmul.f32 %v6018, %v6020
        %v6022 = vadd.f32 %v6018, %v6021
        %vm6023 = vweird.f32 %v5576
        %vm6024 = vweird.f32 %v6018
        %vm6025 = vmor %vm6023, %vm6024
        %v6026 = vsel %vm6025, %v6018, %v6022
        %v6027 = vand.u32 2147483647, %v5576
        %vm6028 = vcmp.eq.f32.partialorder %v6027, 8.507059e+37
        %v6029 = vand.u32 %v5576, 2147483648
        %v6030 = vor.u32 1.1754944e-38, %v6029
        %v6031 = vsel %vm6028, %v6030, %v6026
        %v6032 = vmul.f32 1.0, %v6031
        %v6033 = vrcp.pop %v5577
        %v6034 = vmul.f32 %v5577, %v6033
        %v6035 = vsub.f32 1.0, %v6034
        %v6036 = vmul.f32 %v6033, %v6035
        %v6037 = vadd.f32 %v6033, %v6036
        %vm6038 = vweird.f32 %v5577
        %vm6039 = vweird.f32 %v6033
        %vm6040 = vmor %vm6038, %vm6039
        %v6041 = vsel %vm6040, %v6033, %v6037
        %v6042 = vand.u32 2147483647, %v5577
        %vm6043 = vcmp.eq.f32.partialorder %v6042, 8.507059e+37
        %v6044 = vand.u32 %v5577, 2147483648
        %v6045 = vor.u32 1.1754944e-38, %v6044
        %v6046 = vsel %vm6043, %v6045, %v6041
        %v6047 = vmul.f32 1.0, %v6046
        %v6048 = vrcp.pop %v5578
        %v6049 = vmul.f32 %v5578, %v6048
        %v6050 = vsub.f32 1.0, %v6049
        %v6051 = vmul.f32 %v6048, %v6050
        %v6052 = vadd.f32 %v6048, %v6051
        %vm6053 = vweird.f32 %v5578
        %vm6054 = vweird.f32 %v6048
        %vm6055 = vmor %vm6053, %vm6054
        %v6056 = vsel %vm6055, %v6048, %v6052
        %v6057 = vand.u32 2147483647, %v5578
        %vm6058 = vcmp.eq.f32.partialorder %v6057, 8.507059e+37
        %v6059 = vand.u32 %v5578, 2147483648
        %v6060 = vor.u32 1.1754944e-38, %v6059
        %v6061 = vsel %vm6058, %v6060, %v6056
        %v6062 = vmul.f32 1.0, %v6061
        %v6063 = vrcp.pop %v5579
        %v6064 = vmul.f32 %v5579, %v6063
        %v6065 = vsub.f32 1.0, %v6064
        %v6066 = vmul.f32 %v6063, %v6065
        %v6067 = vadd.f32 %v6063, %v6066
        %vm6068 = vweird.f32 %v5579
        %vm6069 = vweird.f32 %v6063
        %vm6070 = vmor %vm6068, %vm6069
        %v6071 = vsel %vm6070, %v6063, %v6067
        %v6072 = vand.u32 2147483647, %v5579
        %vm6073 = vcmp.eq.f32.partialorder %v6072, 8.507059e+37
        %v6074 = vand.u32 %v5579, 2147483648
        %v6075 = vor.u32 1.1754944e-38, %v6074
        %v6076 = vsel %vm6073, %v6075, %v6071
        %v6077 = vmul.f32 1.0, %v6076
        %v6078 = vrcp.pop %v5580
        %v6079 = vmul.f32 %v5580, %v6078
        %v6080 = vsub.f32 1.0, %v6079
        %v6081 = vmul.f32 %v6078, %v6080
        %v6082 = vadd.f32 %v6078, %v6081
        %vm6083 = vweird.f32 %v5580
        %vm6084 = vweird.f32 %v6078
        %vm6085 = vmor %vm6083, %vm6084
        %v6086 = vsel %vm6085, %v6078, %v6082
        %v6087 = vand.u32 2147483647, %v5580
        %vm6088 = vcmp.eq.f32.partialorder %v6087, 8.507059e+37
        %v6089 = vand.u32 %v5580, 2147483648
        %v6090 = vor.u32 1.1754944e-38, %v6089
        %v6091 = vsel %vm6088, %v6090, %v6086
        %v6092 = vmul.f32 1.0, %v6091
        %v6093 = vrcp.pop %v5581
        %v6094 = vmul.f32 %v5581, %v6093
        %v6095 = vsub.f32 1.0, %v6094
        %v6096 = vmul.f32 %v6093, %v6095
        %v6097 = vadd.f32 %v6093, %v6096
        %vm6098 = vweird.f32 %v5581
        %vm6099 = vweird.f32 %v6093
        %vm6100 = vmor %vm6098, %vm6099
        %v6101 = vsel %vm6100, %v6093, %v6097
        %v6102 = vand.u32 2147483647, %v5581
        %vm6103 = vcmp.eq.f32.partialorder %v6102, 8.507059e+37
        %v6104 = vand.u32 %v5581, 2147483648
        %v6105 = vor.u32 1.1754944e-38, %v6104
        %v6106 = vsel %vm6103, %v6105, %v6101
        %v6107 = vmul.f32 1.0, %v6106
        %v6108 = vrcp.pop %v5582
        %v6109 = vmul.f32 %v5582, %v6108
        %v6110 = vsub.f32 1.0, %v6109
        %v6111 = vmul.f32 %v6108, %v6110
        %v6112 = vadd.f32 %v6108, %v6111
        %vm6113 = vweird.f32 %v5582
        %vm6114 = vweird.f32 %v6108
        %vm6115 = vmor %vm6113, %vm6114
        %v6116 = vsel %vm6115, %v6108, %v6112
        %v6117 = vand.u32 2147483647, %v5582
        %vm6118 = vcmp.eq.f32.partialorder %v6117, 8.507059e+37
        %v6119 = vand.u32 %v5582, 2147483648
        %v6120 = vor.u32 1.1754944e-38, %v6119
        %v6121 = vsel %vm6118, %v6120, %v6116
        %v6122 = vmul.f32 1.0, %v6121
        %v6123 = vrcp.pop %v5583
        %v6124 = vmul.f32 %v5583, %v6123
        %v6125 = vsub.f32 1.0, %v6124
        %v6126 = vmul.f32 %v6123, %v6125
        %v6127 = vadd.f32 %v6123, %v6126
        %vm6128 = vweird.f32 %v5583
        %vm6129 = vweird.f32 %v6123
        %vm6130 = vmor %vm6128, %vm6129
        %v6131 = vsel %vm6130, %v6123, %v6127
        %v6132 = vand.u32 2147483647, %v5583
        %vm6133 = vcmp.eq.f32.partialorder %v6132, 8.507059e+37
        %v6134 = vand.u32 %v5583, 2147483648
        %v6135 = vor.u32 1.1754944e-38, %v6134
        %v6136 = vsel %vm6133, %v6135, %v6131
        %v6137 = vmul.f32 1.0, %v6136
        %v6138 = vrcp.pop %v5584
        %v6139 = vmul.f32 %v5584, %v6138
        %v6140 = vsub.f32 1.0, %v6139
        %v6141 = vmul.f32 %v6138, %v6140
        %v6142 = vadd.f32 %v6138, %v6141
        %vm6143 = vweird.f32 %v5584
        %vm6144 = vweird.f32 %v6138
        %vm6145 = vmor %vm6143, %vm6144
        %v6146 = vsel %vm6145, %v6138, %v6142
        %v6147 = vand.u32 2147483647, %v5584
        %vm6148 = vcmp.eq.f32.partialorder %v6147, 8.507059e+37
        %v6149 = vand.u32 %v5584, 2147483648
        %v6150 = vor.u32 1.1754944e-38, %v6149
        %v6151 = vsel %vm6148, %v6150, %v6146
        %v6152 = vmul.f32 1.0, %v6151
        %v6153 = vrcp.pop %v5585
        %v6154 = vmul.f32 %v5585, %v6153
        %v6155 = vsub.f32 1.0, %v6154
        %v6156 = vmul.f32 %v6153, %v6155
        %v6157 = vadd.f32 %v6153, %v6156
        %vm6158 = vweird.f32 %v5585
        %vm6159 = vweird.f32 %v6153
        %vm6160 = vmor %vm6158, %vm6159
        %v6161 = vsel %vm6160, %v6153, %v6157
        %v6162 = vand.u32 2147483647, %v5585
        %vm6163 = vcmp.eq.f32.partialorder %v6162, 8.507059e+37
        %v6164 = vand.u32 %v5585, 2147483648
        %v6165 = vor.u32 1.1754944e-38, %v6164
        %v6166 = vsel %vm6163, %v6165, %v6161
        %v6167 = vmul.f32 1.0, %v6166
        %v6168 = vrcp.pop %v5586
        %v6169 = vmul.f32 %v5586, %v6168
        %v6170 = vsub.f32 1.0, %v6169
        %v6171 = vmul.f32 %v6168, %v6170
        %v6172 = vadd.f32 %v6168, %v6171
        %vm6173 = vweird.f32 %v5586
        %vm6174 = vweird.f32 %v6168
        %vm6175 = vmor %vm6173, %vm6174
        %v6176 = vsel %vm6175, %v6168, %v6172
        %v6177 = vand.u32 2147483647, %v5586
        %vm6178 = vcmp.eq.f32.partialorder %v6177, 8.507059e+37
        %v6179 = vand.u32 %v5586, 2147483648
        %v6180 = vor.u32 1.1754944e-38, %v6179
        %v6181 = vsel %vm6178, %v6180, %v6176
        %v6182 = vmul.f32 1.0, %v6181
        %v6183 = vrcp.pop %v5587
        %v6184 = vmul.f32 %v5587, %v6183
        %v6185 = vsub.f32 1.0, %v6184
        %v6186 = vmul.f32 %v6183, %v6185
        %v6187 = vadd.f32 %v6183, %v6186
        %vm6188 = vweird.f32 %v5587
        %vm6189 = vweird.f32 %v6183
        %vm6190 = vmor %vm6188, %vm6189
        %v6191 = vsel %vm6190, %v6183, %v6187
        %v6192 = vand.u32 2147483647, %v5587
        %vm6193 = vcmp.eq.f32.partialorder %v6192, 8.507059e+37
        %v6194 = vand.u32 %v5587, 2147483648
        %v6195 = vor.u32 1.1754944e-38, %v6194
        %v6196 = vsel %vm6193, %v6195, %v6191
        %v6197 = vmul.f32 1.0, %v6196
        %v6198 = vrcp.pop %v5588
        %v6199 = vmul.f32 %v5588, %v6198
        %v6200 = vsub.f32 1.0, %v6199
        %v6201 = vmul.f32 %v6198, %v6200
        %v6202 = vadd.f32 %v6198, %v6201
        %vm6203 = vweird.f32 %v5588
        %vm6204 = vweird.f32 %v6198
        %vm6205 = vmor %vm6203, %vm6204
        %v6206 = vsel %vm6205, %v6198, %v6202
        %v6207 = vand.u32 2147483647, %v5588
        %vm6208 = vcmp.eq.f32.partialorder %v6207, 8.507059e+37
        %v6209 = vand.u32 %v5588, 2147483648
        %v6210 = vor.u32 1.1754944e-38, %v6209
        %v6211 = vsel %vm6208, %v6210, %v6206
        %v6212 = vmul.f32 1.0, %v6211
        %v6213 = vrcp.pop %v5589
        %v6214 = vmul.f32 %v5589, %v6213
        %v6215 = vsub.f32 1.0, %v6214
        %v6216 = vmul.f32 %v6213, %v6215
        %v6217 = vadd.f32 %v6213, %v6216
        %vm6218 = vweird.f32 %v5589
        %vm6219 = vweird.f32 %v6213
        %vm6220 = vmor %vm6218, %vm6219
        %v6221 = vsel %vm6220, %v6213, %v6217
        %v6222 = vand.u32 2147483647, %v5589
        %vm6223 = vcmp.eq.f32.partialorder %v6222, 8.507059e+37
        %v6224 = vand.u32 %v5589, 2147483648
        %v6225 = vor.u32 1.1754944e-38, %v6224
        %v6226 = vsel %vm6223, %v6225, %v6221
        %v6227 = vmul.f32 1.0, %v6226
        %v6228 = vrcp.pop %v5590
        %v6229 = vmul.f32 %v5590, %v6228
        %v6230 = vsub.f32 1.0, %v6229
        %v6231 = vmul.f32 %v6228, %v6230
        %v6232 = vadd.f32 %v6228, %v6231
        %vm6233 = vweird.f32 %v5590
        %vm6234 = vweird.f32 %v6228
        %vm6235 = vmor %vm6233, %vm6234
        %v6236 = vsel %vm6235, %v6228, %v6232
        %v6237 = vand.u32 2147483647, %v5590
        %vm6238 = vcmp.eq.f32.partialorder %v6237, 8.507059e+37
        %v6239 = vand.u32 %v5590, 2147483648
        %v6240 = vor.u32 1.1754944e-38, %v6239
        %v6241 = vsel %vm6238, %v6240, %v6236
        %v6242 = vmul.f32 1.0, %v6241
        %v6243 = vrcp.pop %v5591
        %v6244 = vmul.f32 %v5591, %v6243
        %v6245 = vsub.f32 1.0, %v6244
        %v6246 = vmul.f32 %v6243, %v6245
        %v6247 = vadd.f32 %v6243, %v6246
        %vm6248 = vweird.f32 %v5591
        %vm6249 = vweird.f32 %v6243
        %vm6250 = vmor %vm6248, %vm6249
        %v6251 = vsel %vm6250, %v6243, %v6247
        %v6252 = vand.u32 2147483647, %v5591
        %vm6253 = vcmp.eq.f32.partialorder %v6252, 8.507059e+37
        %v6254 = vand.u32 %v5591, 2147483648
        %v6255 = vor.u32 1.1754944e-38, %v6254
        %v6256 = vsel %vm6253, %v6255, %v6251
        %v6257 = vmul.f32 1.0, %v6256
        %v6258 = vrcp.pop %v5592
        %v6259 = vmul.f32 %v5592, %v6258
        %v6260 = vsub.f32 1.0, %v6259
        %v6261 = vmul.f32 %v6258, %v6260
        %v6262 = vadd.f32 %v6258, %v6261
        %vm6263 = vweird.f32 %v5592
        %vm6264 = vweird.f32 %v6258
        %vm6265 = vmor %vm6263, %vm6264
        %v6266 = vsel %vm6265, %v6258, %v6262
        %v6267 = vand.u32 2147483647, %v5592
        %vm6268 = vcmp.eq.f32.partialorder %v6267, 8.507059e+37
        %v6269 = vand.u32 %v5592, 2147483648
        %v6270 = vor.u32 1.1754944e-38, %v6269
        %v6271 = vsel %vm6268, %v6270, %v6266
        %v6272 = vmul.f32 1.0, %v6271
        %v6273 = vrcp.pop %v5593
        %v6274 = vmul.f32 %v5593, %v6273
        %v6275 = vsub.f32 1.0, %v6274
        %v6276 = vmul.f32 %v6273, %v6275
        %v6277 = vadd.f32 %v6273, %v6276
        %vm6278 = vweird.f32 %v5593
        %vm6279 = vweird.f32 %v6273
        %vm6280 = vmor %vm6278, %vm6279
        %v6281 = vsel %vm6280, %v6273, %v6277
        %v6282 = vand.u32 2147483647, %v5593
        %vm6283 = vcmp.eq.f32.partialorder %v6282, 8.507059e+37
        %v6284 = vand.u32 %v5593, 2147483648
        %v6285 = vor.u32 1.1754944e-38, %v6284
        %v6286 = vsel %vm6283, %v6285, %v6281
        %v6287 = vmul.f32 1.0, %v6286
        %v6288 = vrcp.pop %v5594
        %v6289 = vmul.f32 %v5594, %v6288
        %v6290 = vsub.f32 1.0, %v6289
        %v6291 = vmul.f32 %v6288, %v6290
        %v6292 = vadd.f32 %v6288, %v6291
        %vm6293 = vweird.f32 %v5594
        %vm6294 = vweird.f32 %v6288
        %vm6295 = vmor %vm6293, %vm6294
        %v6296 = vsel %vm6295, %v6288, %v6292
        %v6297 = vand.u32 2147483647, %v5594
        %vm6298 = vcmp.eq.f32.partialorder %v6297, 8.507059e+37
        %v6299 = vand.u32 %v5594, 2147483648
        %v6300 = vor.u32 1.1754944e-38, %v6299
        %v6301 = vsel %vm6298, %v6300, %v6296
        %v6302 = vmul.f32 1.0, %v6301
        %v6303 = vrcp.pop %v5595
        %v6304 = vmul.f32 %v5595, %v6303
        %v6305 = vsub.f32 1.0, %v6304
        %v6306 = vmul.f32 %v6303, %v6305
        %v6307 = vadd.f32 %v6303, %v6306
        %vm6308 = vweird.f32 %v5595
        %vm6309 = vweird.f32 %v6303
        %vm6310 = vmor %vm6308, %vm6309
        %v6311 = vsel %vm6310, %v6303, %v6307
        %v6312 = vand.u32 2147483647, %v5595
        %vm6313 = vcmp.eq.f32.partialorder %v6312, 8.507059e+37
        %v6314 = vand.u32 %v5595, 2147483648
        %v6315 = vor.u32 1.1754944e-38, %v6314
        %v6316 = vsel %vm6313, %v6315, %v6311
        %v6317 = vmul.f32 1.0, %v6316
        %v6318 = vrcp.pop %v5596
        %v6319 = vmul.f32 %v5596, %v6318
        %v6320 = vsub.f32 1.0, %v6319
        %v6321 = vmul.f32 %v6318, %v6320
        %v6322 = vadd.f32 %v6318, %v6321
        %vm6323 = vweird.f32 %v5596
        %vm6324 = vweird.f32 %v6318
        %vm6325 = vmor %vm6323, %vm6324
        %v6326 = vsel %vm6325, %v6318, %v6322
        %v6327 = vand.u32 2147483647, %v5596
        %vm6328 = vcmp.eq.f32.partialorder %v6327, 8.507059e+37
        %v6329 = vand.u32 %v5596, 2147483648
        %v6330 = vor.u32 1.1754944e-38, %v6329
        %v6331 = vsel %vm6328, %v6330, %v6326
        %v6332 = vmul.f32 1.0, %v6331
        %v6333 = vrcp.pop %v5597
        %v6334 = vmul.f32 %v5597, %v6333
        %v6335 = vsub.f32 1.0, %v6334
        %v6336 = vmul.f32 %v6333, %v6335
        %v6337 = vadd.f32 %v6333, %v6336
        %vm6338 = vweird.f32 %v5597
        %vm6339 = vweird.f32 %v6333
        %vm6340 = vmor %vm6338, %vm6339
        %v6341 = vsel %vm6340, %v6333, %v6337
        %v6342 = vand.u32 2147483647, %v5597
        %vm6343 = vcmp.eq.f32.partialorder %v6342, 8.507059e+37
        %v6344 = vand.u32 %v5597, 2147483648
        %v6345 = vor.u32 1.1754944e-38, %v6344
        %v6346 = vsel %vm6343, %v6345, %v6341
        %v6347 = vmul.f32 1.0, %v6346
        %v6348 = vrcp.pop %v5598
        %v6349 = vmul.f32 %v5598, %v6348
        %v6350 = vsub.f32 1.0, %v6349
        %v6351 = vmul.f32 %v6348, %v6350
        %v6352 = vadd.f32 %v6348, %v6351
        %vm6353 = vweird.f32 %v5598
        %vm6354 = vweird.f32 %v6348
        %vm6355 = vmor %vm6353, %vm6354
        %v6356 = vsel %vm6355, %v6348, %v6352
        %v6357 = vand.u32 2147483647, %v5598
        %vm6358 = vcmp.eq.f32.partialorder %v6357, 8.507059e+37
        %v6359 = vand.u32 %v5598, 2147483648
        %v6360 = vor.u32 1.1754944e-38, %v6359
        %v6361 = vsel %vm6358, %v6360, %v6356
        %v6362 = vmul.f32 1.0, %v6361
        %v6363 = vrcp.pop %v5599
        %v6364 = vmul.f32 %v5599, %v6363
        %v6365 = vsub.f32 1.0, %v6364
        %v6366 = vmul.f32 %v6363, %v6365
        %v6367 = vadd.f32 %v6363, %v6366
        %vm6368 = vweird.f32 %v5599
        %vm6369 = vweird.f32 %v6363
        %vm6370 = vmor %vm6368, %vm6369
        %v6371 = vsel %vm6370, %v6363, %v6367
        %v6372 = vand.u32 2147483647, %v5599
        %vm6373 = vcmp.eq.f32.partialorder %v6372, 8.507059e+37
        %v6374 = vand.u32 %v5599, 2147483648
        %v6375 = vor.u32 1.1754944e-38, %v6374
        %v6376 = vsel %vm6373, %v6375, %v6371
        %v6377 = vmul.f32 1.0, %v6376
        %v6378 = vrcp.pop %v5600
        %v6379 = vmul.f32 %v5600, %v6378
        %v6380 = vsub.f32 1.0, %v6379
        %v6381 = vmul.f32 %v6378, %v6380
        %v6382 = vadd.f32 %v6378, %v6381
        %vm6383 = vweird.f32 %v5600
        %vm6384 = vweird.f32 %v6378
        %vm6385 = vmor %vm6383, %vm6384
        %v6386 = vsel %vm6385, %v6378, %v6382
        %v6387 = vand.u32 2147483647, %v5600
        %vm6388 = vcmp.eq.f32.partialorder %v6387, 8.507059e+37
        %v6389 = vand.u32 %v5600, 2147483648
        %v6390 = vor.u32 1.1754944e-38, %v6389
        %v6391 = vsel %vm6388, %v6390, %v6386
        %v6392 = vmul.f32 1.0, %v6391
        %v6393 = vrcp.pop %v5601
        %v6394 = vmul.f32 %v5601, %v6393
        %v6395 = vsub.f32 1.0, %v6394
        %v6396 = vmul.f32 %v6393, %v6395
        %v6397 = vadd.f32 %v6393, %v6396
        %vm6398 = vweird.f32 %v5601
        %vm6399 = vweird.f32 %v6393
        %vm6400 = vmor %vm6398, %vm6399
        %v6401 = vsel %vm6400, %v6393, %v6397
        %v6402 = vand.u32 2147483647, %v5601
        %vm6403 = vcmp.eq.f32.partialorder %v6402, 8.507059e+37
        %v6404 = vand.u32 %v5601, 2147483648
        %v6405 = vor.u32 1.1754944e-38, %v6404
        %v6406 = vsel %vm6403, %v6405, %v6401
        %v6407 = vmul.f32 1.0, %v6406
        %v6408 = vrcp.pop %v5602
        %v6409 = vmul.f32 %v5602, %v6408
        %v6410 = vsub.f32 1.0, %v6409
        %v6411 = vmul.f32 %v6408, %v6410
        %v6412 = vadd.f32 %v6408, %v6411
        %vm6413 = vweird.f32 %v5602
        %vm6414 = vweird.f32 %v6408
        %vm6415 = vmor %vm6413, %vm6414
        %v6416 = vsel %vm6415, %v6408, %v6412
        %v6417 = vand.u32 2147483647, %v5602
        %vm6418 = vcmp.eq.f32.partialorder %v6417, 8.507059e+37
        %v6419 = vand.u32 %v5602, 2147483648
        %v6420 = vor.u32 1.1754944e-38, %v6419
        %v6421 = vsel %vm6418, %v6420, %v6416
        %v6422 = vmul.f32 1.0, %v6421
        %v6423 = vrcp.pop %v5603
        %v6424 = vmul.f32 %v5603, %v6423
        %v6425 = vsub.f32 1.0, %v6424
        %v6426 = vmul.f32 %v6423, %v6425
        %v6427 = vadd.f32 %v6423, %v6426
        %vm6428 = vweird.f32 %v5603
        %vm6429 = vweird.f32 %v6423
        %vm6430 = vmor %vm6428, %vm6429
        %v6431 = vsel %vm6430, %v6423, %v6427
        %v6432 = vand.u32 2147483647, %v5603
        %vm6433 = vcmp.eq.f32.partialorder %v6432, 8.507059e+37
        %v6434 = vand.u32 %v5603, 2147483648
        %v6435 = vor.u32 1.1754944e-38, %v6434
        %v6436 = vsel %vm6433, %v6435, %v6431
        %v6437 = vmul.f32 1.0, %v6436
        %v6438 = vrcp.pop %v5604
        %v6439 = vmul.f32 %v5604, %v6438
        %v6440 = vsub.f32 1.0, %v6439
        %v6441 = vmul.f32 %v6438, %v6440
        %v6442 = vadd.f32 %v6438, %v6441
        %vm6443 = vweird.f32 %v5604
        %vm6444 = vweird.f32 %v6438
        %vm6445 = vmor %vm6443, %vm6444
        %v6446 = vsel %vm6445, %v6438, %v6442
        %v6447 = vand.u32 2147483647, %v5604
        %vm6448 = vcmp.eq.f32.partialorder %v6447, 8.507059e+37
        %v6449 = vand.u32 %v5604, 2147483648
        %v6450 = vor.u32 1.1754944e-38, %v6449
        %v6451 = vsel %vm6448, %v6450, %v6446
        %v6452 = vmul.f32 1.0, %v6451
        %v6453 = vrcp.pop %v5605
        %v6454 = vmul.f32 %v5605, %v6453
        %v6455 = vsub.f32 1.0, %v6454
        %v6456 = vmul.f32 %v6453, %v6455
        %v6457 = vadd.f32 %v6453, %v6456
        %vm6458 = vweird.f32 %v5605
        %vm6459 = vweird.f32 %v6453
        %vm6460 = vmor %vm6458, %vm6459
        %v6461 = vsel %vm6460, %v6453, %v6457
        %v6462 = vand.u32 2147483647, %v5605
        %vm6463 = vcmp.eq.f32.partialorder %v6462, 8.507059e+37
        %v6464 = vand.u32 %v5605, 2147483648
        %v6465 = vor.u32 1.1754944e-38, %v6464
        %v6466 = vsel %vm6463, %v6465, %v6461
        %v6467 = vmul.f32 1.0, %v6466
        %v6468 = vrcp.pop %v5606
        %v6469 = vmul.f32 %v5606, %v6468
        %v6470 = vsub.f32 1.0, %v6469
        %v6471 = vmul.f32 %v6468, %v6470
        %v6472 = vadd.f32 %v6468, %v6471
        %vm6473 = vweird.f32 %v5606
        %vm6474 = vweird.f32 %v6468
        %vm6475 = vmor %vm6473, %vm6474
        %v6476 = vsel %vm6475, %v6468, %v6472
        %v6477 = vand.u32 2147483647, %v5606
        %vm6478 = vcmp.eq.f32.partialorder %v6477, 8.507059e+37
        %v6479 = vand.u32 %v5606, 2147483648
        %v6480 = vor.u32 1.1754944e-38, %v6479
        %v6481 = vsel %vm6478, %v6480, %v6476
        %v6482 = vmul.f32 1.0, %v6481
        %v6483 = vrcp.pop %v5607
        %v6484 = vmul.f32 %v5607, %v6483
        %v6485 = vsub.f32 1.0, %v6484
        %v6486 = vmul.f32 %v6483, %v6485
        %v6487 = vadd.f32 %v6483, %v6486
        %vm6488 = vweird.f32 %v5607
        %vm6489 = vweird.f32 %v6483
        %vm6490 = vmor %vm6488, %vm6489
        %v6491 = vsel %vm6490, %v6483, %v6487
        %v6492 = vand.u32 2147483647, %v5607
        %vm6493 = vcmp.eq.f32.partialorder %v6492, 8.507059e+37
        %v6494 = vand.u32 %v5607, 2147483648
        %v6495 = vor.u32 1.1754944e-38, %v6494
        %v6496 = vsel %vm6493, %v6495, %v6491
        %v6497 = vmul.f32 1.0, %v6496
        %v6498 = vrcp.pop %v5608
        %v6499 = vmul.f32 %v5608, %v6498
        %v6500 = vsub.f32 1.0, %v6499
        %v6501 = vmul.f32 %v6498, %v6500
        %v6502 = vadd.f32 %v6498, %v6501
        %vm6503 = vweird.f32 %v5608
        %vm6504 = vweird.f32 %v6498
        %vm6505 = vmor %vm6503, %vm6504
        %v6506 = vsel %vm6505, %v6498, %v6502
        %v6507 = vand.u32 2147483647, %v5608
        %vm6508 = vcmp.eq.f32.partialorder %v6507, 8.507059e+37
        %v6509 = vand.u32 %v5608, 2147483648
        %v6510 = vor.u32 1.1754944e-38, %v6509
        %v6511 = vsel %vm6508, %v6510, %v6506
        %v6512 = vmul.f32 1.0, %v6511
        %v6513 = vrcp.pop %v5609
        %v6514 = vmul.f32 %v5609, %v6513
        %v6515 = vsub.f32 1.0, %v6514
        %v6516 = vmul.f32 %v6513, %v6515
        %v6517 = vadd.f32 %v6513, %v6516
        %vm6518 = vweird.f32 %v5609
        %vm6519 = vweird.f32 %v6513
        %vm6520 = vmor %vm6518, %vm6519
        %v6521 = vsel %vm6520, %v6513, %v6517
        %v6522 = vand.u32 2147483647, %v5609
        %vm6523 = vcmp.eq.f32.partialorder %v6522, 8.507059e+37
        %v6524 = vand.u32 %v5609, 2147483648
        %v6525 = vor.u32 1.1754944e-38, %v6524
        %v6526 = vsel %vm6523, %v6525, %v6521
        %v6527 = vmul.f32 1.0, %v6526
        %v6528 = vrcp.pop %v5610
        %v6529 = vmul.f32 %v5610, %v6528
        %v6530 = vsub.f32 1.0, %v6529
        %v6531 = vmul.f32 %v6528, %v6530
        %v6532 = vadd.f32 %v6528, %v6531
        %vm6533 = vweird.f32 %v5610
        %vm6534 = vweird.f32 %v6528
        %vm6535 = vmor %vm6533, %vm6534
        %v6536 = vsel %vm6535, %v6528, %v6532
        %v6537 = vand.u32 2147483647, %v5610
        %vm6538 = vcmp.eq.f32.partialorder %v6537, 8.507059e+37
        %v6539 = vand.u32 %v5610, 2147483648
        %v6540 = vor.u32 1.1754944e-38, %v6539
        %v6541 = vsel %vm6538, %v6540, %v6536
        %v6542 = vmul.f32 1.0, %v6541
        %v6543 = vrcp.pop %v5611
        %v6544 = vmul.f32 %v5611, %v6543
        %v6545 = vsub.f32 1.0, %v6544
        %v6546 = vmul.f32 %v6543, %v6545
        %v6547 = vadd.f32 %v6543, %v6546
        %vm6548 = vweird.f32 %v5611
        %vm6549 = vweird.f32 %v6543
        %vm6550 = vmor %vm6548, %vm6549
        %v6551 = vsel %vm6550, %v6543, %v6547
        %v6552 = vand.u32 2147483647, %v5611
        %vm6553 = vcmp.eq.f32.partialorder %v6552, 8.507059e+37
        %v6554 = vand.u32 %v5611, 2147483648
        %v6555 = vor.u32 1.1754944e-38, %v6554
        %v6556 = vsel %vm6553, %v6555, %v6551
        %v6557 = vmul.f32 1.0, %v6556
        %v6558 = vrcp.pop %v5612
        %v6559 = vmul.f32 %v5612, %v6558
        %v6560 = vsub.f32 1.0, %v6559
        %v6561 = vmul.f32 %v6558, %v6560
        %v6562 = vadd.f32 %v6558, %v6561
        %vm6563 = vweird.f32 %v5612
        %vm6564 = vweird.f32 %v6558
        %vm6565 = vmor %vm6563, %vm6564
        %v6566 = vsel %vm6565, %v6558, %v6562
        %v6567 = vand.u32 2147483647, %v5612
        %vm6568 = vcmp.eq.f32.partialorder %v6567, 8.507059e+37
        %v6569 = vand.u32 %v5612, 2147483648
        %v6570 = vor.u32 1.1754944e-38, %v6569
        %v6571 = vsel %vm6568, %v6570, %v6566
        %v6572 = vmul.f32 1.0, %v6571
        %v6573 = vld [vmem:[%s10] sm:$0xff]
        %v6574 = vld [vmem:[%s10 + $0x8] sm:$0xff]
        %v6575 = vld [vmem:[%s10 + $0x10] sm:$0xff]
        %v6576 = vld [vmem:[%s10 + $0x18] sm:$0xff]
        %v6577 = vld [vmem:[%s10 + $0x20] sm:$0xff]
        %v6578 = vld [vmem:[%s10 + $0x28] sm:$0xff]
        %v6579 = vld [vmem:[%s10 + $0x30] sm:$0xff]
        %v6580 = vld [vmem:[%s10 + $0x38] sm:$0xff]
        %v6581 = vld [vmem:[%s10 + $0x40] sm:$0xff]
        %v6582 = vld [vmem:[%s10 + $0x48] sm:$0xff]
        %v6583 = vld [vmem:[%s10 + $0x50] sm:$0xff]
        %v6584 = vld [vmem:[%s10 + $0x58] sm:$0xff]
        %v6585 = vld [vmem:[%s10 + $0x60] sm:$0xff]
        %v6586 = vld [vmem:[%s10 + $0x68] sm:$0xff]
        %v6587 = vld [vmem:[%s10 + $0x70] sm:$0xff]
        %v6588 = vld [vmem:[%s10 + $0x78] sm:$0xff]
        %6590 = vset.pattern.permute.xlu0 0
        %6591 = vperm.xlu0 %6590, %v6573
        %v6592 = vpop.permute.xlu0 %6591
        %6595 = vset.pattern.permute.xlu0 0
        %6596 = vperm.xlu0 %6595, %v6574
        %v6597 = vpop.permute.xlu0 %6596
        %6600 = vset.pattern.permute.xlu0 0
        %6601 = vperm.xlu0 %6600, %v6575
        %v6602 = vpop.permute.xlu0 %6601
        %6605 = vset.pattern.permute.xlu0 0
        %6606 = vperm.xlu0 %6605, %v6576
        %v6607 = vpop.permute.xlu0 %6606
        %6610 = vset.pattern.permute.xlu0 0
        %6611 = vperm.xlu0 %6610, %v6577
        %v6612 = vpop.permute.xlu0 %6611
        %6615 = vset.pattern.permute.xlu0 0
        %6616 = vperm.xlu0 %6615, %v6578
        %v6617 = vpop.permute.xlu0 %6616
        %6620 = vset.pattern.permute.xlu0 0
        %6621 = vperm.xlu0 %6620, %v6579
        %v6622 = vpop.permute.xlu0 %6621
        %6625 = vset.pattern.permute.xlu0 0
        %6626 = vperm.xlu0 %6625, %v6580
        %v6627 = vpop.permute.xlu0 %6626
        %6630 = vset.pattern.permute.xlu0 0
        %6631 = vperm.xlu0 %6630, %v6581
        %v6632 = vpop.permute.xlu0 %6631
        %6635 = vset.pattern.permute.xlu0 0
        %6636 = vperm.xlu0 %6635, %v6582
        %v6637 = vpop.permute.xlu0 %6636
        %6640 = vset.pattern.permute.xlu0 0
        %6641 = vperm.xlu0 %6640, %v6583
        %v6642 = vpop.permute.xlu0 %6641
        %6645 = vset.pattern.permute.xlu0 0
        %6646 = vperm.xlu0 %6645, %v6584
        %v6647 = vpop.permute.xlu0 %6646
        %6650 = vset.pattern.permute.xlu0 0
        %6651 = vperm.xlu0 %6650, %v6585
        %v6652 = vpop.permute.xlu0 %6651
        %6655 = vset.pattern.permute.xlu0 0
        %6656 = vperm.xlu0 %6655, %v6586
        %v6657 = vpop.permute.xlu0 %6656
        %6660 = vset.pattern.permute.xlu0 0
        %6661 = vperm.xlu0 %6660, %v6587
        %v6662 = vpop.permute.xlu0 %6661
        %6665 = vset.pattern.permute.xlu0 0
        %6666 = vperm.xlu0 %6665, %v6588
        %v6667 = vpop.permute.xlu0 %6666
        %v6669 = vmul.f32 %v6592, %v5627
        %v6670 = vmul.f32 %v6592, %v5642
        %v6671 = vmul.f32 %v6592, %v5657
        %v6672 = vmul.f32 %v6592, %v5672
        %v6673 = vmul.f32 %v6597, %v5687
        %v6674 = vmul.f32 %v6597, %v5702
        %v6675 = vmul.f32 %v6597, %v5717
        %v6676 = vmul.f32 %v6597, %v5732
        %v6677 = vmul.f32 %v6602, %v5747
        %v6678 = vmul.f32 %v6602, %v5762
        %v6679 = vmul.f32 %v6602, %v5777
        %v6680 = vmul.f32 %v6602, %v5792
        %v6681 = vmul.f32 %v6607, %v5807
        %v6682 = vmul.f32 %v6607, %v5822
        %v6683 = vmul.f32 %v6607, %v5837
        %v6684 = vmul.f32 %v6607, %v5852
        %v6685 = vmul.f32 %v6612, %v5867
        %v6686 = vmul.f32 %v6612, %v5882
        %v6687 = vmul.f32 %v6612, %v5897
        %v6688 = vmul.f32 %v6612, %v5912
        %v6689 = vmul.f32 %v6617, %v5927
        %v6690 = vmul.f32 %v6617, %v5942
        %v6691 = vmul.f32 %v6617, %v5957
        %v6692 = vmul.f32 %v6617, %v5972
        %v6693 = vmul.f32 %v6622, %v5987
        %v6694 = vmul.f32 %v6622, %v6002
        %v6695 = vmul.f32 %v6622, %v6017
        %v6696 = vmul.f32 %v6622, %v6032
        %v6697 = vmul.f32 %v6627, %v6047
        %v6698 = vmul.f32 %v6627, %v6062
        %v6699 = vmul.f32 %v6627, %v6077
        %v6700 = vmul.f32 %v6627, %v6092
        %v6701 = vmul.f32 %v6632, %v6107
        %v6702 = vmul.f32 %v6632, %v6122
        %v6703 = vmul.f32 %v6632, %v6137
        %v6704 = vmul.f32 %v6632, %v6152
        %v6705 = vmul.f32 %v6637, %v6167
        %v6706 = vmul.f32 %v6637, %v6182
        %v6707 = vmul.f32 %v6637, %v6197
        %v6708 = vmul.f32 %v6637, %v6212
        %v6709 = vmul.f32 %v6642, %v6227
        %v6710 = vmul.f32 %v6642, %v6242
        %v6711 = vmul.f32 %v6642, %v6257
        %v6712 = vmul.f32 %v6642, %v6272
        %v6713 = vmul.f32 %v6647, %v6287
        %v6714 = vmul.f32 %v6647, %v6302
        %v6715 = vmul.f32 %v6647, %v6317
        %v6716 = vmul.f32 %v6647, %v6332
        %v6717 = vmul.f32 %v6652, %v6347
        %v6718 = vmul.f32 %v6652, %v6362
        %v6719 = vmul.f32 %v6652, %v6377
        %v6720 = vmul.f32 %v6652, %v6392
        %v6721 = vmul.f32 %v6657, %v6407
        %v6722 = vmul.f32 %v6657, %v6422
        %v6723 = vmul.f32 %v6657, %v6437
        %v6724 = vmul.f32 %v6657, %v6452
        %v6725 = vmul.f32 %v6662, %v6467
        %v6726 = vmul.f32 %v6662, %v6482
        %v6727 = vmul.f32 %v6662, %v6497
        %v6728 = vmul.f32 %v6662, %v6512
        %v6729 = vmul.f32 %v6667, %v6527
        %v6730 = vmul.f32 %v6667, %v6542
        %v6731 = vmul.f32 %v6667, %v6557
        %v6732 = vmul.f32 %v6667, %v6572
        %v6733 = vadd.f32 %v6669, %v6673
        %v6734 = vadd.f32 %v6733, %v6677
        %v6735 = vadd.f32 %v6734, %v6681
        %v6736 = vadd.f32 %v6735, %v6685
        %v6737 = vadd.f32 %v6736, %v6689
        %v6738 = vadd.f32 %v6737, %v6693
        %v6739 = vadd.f32 %v6738, %v6697
        %v6740 = vadd.f32 %v6739, %v6701
        %v6741 = vadd.f32 %v6740, %v6705
        %v6742 = vadd.f32 %v6741, %v6709
        %v6743 = vadd.f32 %v6742, %v6713
        %v6744 = vadd.f32 %v6743, %v6717
        %v6745 = vadd.f32 %v6744, %v6721
        %v6746 = vadd.f32 %v6745, %v6725
        %v6747 = vadd.f32 %v6746, %v6729
        %v6748 = vrot.slane %v6747, 4
        %v6749 = vadd.f32 %v6747, %v6748
        %v6750 = vrot.slane %v6749, 2
        %v6751 = vadd.f32 %v6749, %v6750
        %v6752 = vrot.slane %v6751, 1
        %v6753 = vadd.f32 %v6751, %v6752
        %v6754 = vadd.f32 %v6670, %v6674
        %v6755 = vadd.f32 %v6754, %v6678
        %v6756 = vadd.f32 %v6755, %v6682
        %v6757 = vadd.f32 %v6756, %v6686
        %v6758 = vadd.f32 %v6757, %v6690
        %v6759 = vadd.f32 %v6758, %v6694
        %v6760 = vadd.f32 %v6759, %v6698
        %v6761 = vadd.f32 %v6760, %v6702
        %v6762 = vadd.f32 %v6761, %v6706
        %v6763 = vadd.f32 %v6762, %v6710
        %v6764 = vadd.f32 %v6763, %v6714
        %v6765 = vadd.f32 %v6764, %v6718
        %v6766 = vadd.f32 %v6765, %v6722
        %v6767 = vadd.f32 %v6766, %v6726
        %v6768 = vadd.f32 %v6767, %v6730
        %v6769 = vrot.slane %v6768, 4
        %v6770 = vadd.f32 %v6768, %v6769
        %v6771 = vrot.slane %v6770, 2
        %v6772 = vadd.f32 %v6770, %v6771
        %v6773 = vrot.slane %v6772, 1
        %v6774 = vadd.f32 %v6772, %v6773
        %v6775 = vadd.f32 %v6671, %v6675
        %v6776 = vadd.f32 %v6775, %v6679
        %v6777 = vadd.f32 %v6776, %v6683
        %v6778 = vadd.f32 %v6777, %v6687
        %v6779 = vadd.f32 %v6778, %v6691
        %v6780 = vadd.f32 %v6779, %v6695
        %v6781 = vadd.f32 %v6780, %v6699
        %v6782 = vadd.f32 %v6781, %v6703
        %v6783 = vadd.f32 %v6782, %v6707
        %v6784 = vadd.f32 %v6783, %v6711
        %v6785 = vadd.f32 %v6784, %v6715
        %v6786 = vadd.f32 %v6785, %v6719
        %v6787 = vadd.f32 %v6786, %v6723
        %v6788 = vadd.f32 %v6787, %v6727
        %v6789 = vadd.f32 %v6788, %v6731
        %v6790 = vrot.slane %v6789, 4
        %v6791 = vadd.f32 %v6789, %v6790
        %v6792 = vrot.slane %v6791, 2
        %v6793 = vadd.f32 %v6791, %v6792
        %v6794 = vrot.slane %v6793, 1
        %v6795 = vadd.f32 %v6793, %v6794
        %v6796 = vadd.f32 %v6672, %v6676
        %v6797 = vadd.f32 %v6796, %v6680
        %v6798 = vadd.f32 %v6797, %v6684
        %v6799 = vadd.f32 %v6798, %v6688
        %v6800 = vadd.f32 %v6799, %v6692
        %v6801 = vadd.f32 %v6800, %v6696
        %v6802 = vadd.f32 %v6801, %v6700
        %v6803 = vadd.f32 %v6802, %v6704
        %v6804 = vadd.f32 %v6803, %v6708
        %v6805 = vadd.f32 %v6804, %v6712
        %v6806 = vadd.f32 %v6805, %v6716
        %v6807 = vadd.f32 %v6806, %v6720
        %v6808 = vadd.f32 %v6807, %v6724
        %v6809 = vadd.f32 %v6808, %v6728
        %v6810 = vadd.f32 %v6809, %v6732
        %v6811 = vrot.slane %v6810, 4
        %v6812 = vadd.f32 %v6810, %v6811
        %v6813 = vrot.slane %v6812, 2
        %v6814 = vadd.f32 %v6812, %v6813
        %v6815 = vrot.slane %v6814, 1
        %v6816 = vadd.f32 %v6814, %v6815
        %v6817 = vld [vmem:[#allocation3] sm:$0x1]
        %6819 = vset.pattern.permute.xlu0 0
        %6820 = vperm.xlu0 %6819, %v6817
        %v6821 = vpop.permute.xlu0 %6820
        %v6823 = vperm.slane %v6821, 0
        %v6824 = vadd.f32 %v6753, %v6823
        %v6825 = vadd.f32 %v6774, %v6823
        %v6826 = vadd.f32 %v6795, %v6823
        %v6827 = vadd.f32 %v6816, %v6823
        %v6828 = vxor.u32 %v6824, 2147483648
        %v6829 = vxor.u32 %v6825, 2147483648
        %v6830 = vxor.u32 %v6826, 2147483648
        %v6831 = vxor.u32 %v6827, 2147483648
        %v6832 = vmul.f32 %v6828, 1.442695
        %v6833 = vpow.pop %v6832
        %v6834 = vmul.f32 %v6829, 1.442695
        %v6835 = vpow.pop %v6834
        %v6836 = vmul.f32 %v6830, 1.442695
        %v6837 = vpow.pop %v6836
        %v6838 = vmul.f32 %v6831, 1.442695
        %v6839 = vpow.pop %v6838
        %v6840 = vadd.f32 %v6833, 1.0
        %v6841 = vadd.f32 %v6835, 1.0
        %v6842 = vadd.f32 %v6837, 1.0
        %v6843 = vadd.f32 %v6839, 1.0
        %v6844 = vrcp.pop %v6840
        %v6845 = vmul.f32 %v6840, %v6844
        %v6846 = vsub.f32 1.0, %v6845
        %v6847 = vmul.f32 %v6844, %v6846
        %v6848 = vadd.f32 %v6844, %v6847
        %vm6849 = vweird.f32 %v6840
        %vm6850 = vweird.f32 %v6844
        %vm6851 = vmor %vm6849, %vm6850
        %v6852 = vsel %vm6851, %v6844, %v6848
        %v6853 = vand.u32 2147483647, %v6840
        %vm6854 = vcmp.eq.f32.partialorder %v6853, 8.507059e+37
        %v6855 = vand.u32 %v6840, 2147483648
        %v6856 = vor.u32 1.1754944e-38, %v6855
        %v6857 = vsel %vm6854, %v6856, %v6852
        %v6858 = vmul.f32 1.0, %v6857
        %v6859 = vrcp.pop %v6841
        %v6860 = vmul.f32 %v6841, %v6859
        %v6861 = vsub.f32 1.0, %v6860
        %v6862 = vmul.f32 %v6859, %v6861
        %v6863 = vadd.f32 %v6859, %v6862
        %vm6864 = vweird.f32 %v6841
        %vm6865 = vweird.f32 %v6859
        %vm6866 = vmor %vm6864, %vm6865
        %v6867 = vsel %vm6866, %v6859, %v6863
        %v6868 = vand.u32 2147483647, %v6841
        %vm6869 = vcmp.eq.f32.partialorder %v6868, 8.507059e+37
        %v6870 = vand.u32 %v6841, 2147483648
        %v6871 = vor.u32 1.1754944e-38, %v6870
        %v6872 = vsel %vm6869, %v6871, %v6867
        %v6873 = vmul.f32 1.0, %v6872
        %v6874 = vrcp.pop %v6842
        %v6875 = vmul.f32 %v6842, %v6874
        %v6876 = vsub.f32 1.0, %v6875
        %v6877 = vmul.f32 %v6874, %v6876
        %v6878 = vadd.f32 %v6874, %v6877
        %vm6879 = vweird.f32 %v6842
        %vm6880 = vweird.f32 %v6874
        %vm6881 = vmor %vm6879, %vm6880
        %v6882 = vsel %vm6881, %v6874, %v6878
        %v6883 = vand.u32 2147483647, %v6842
        %vm6884 = vcmp.eq.f32.partialorder %v6883, 8.507059e+37
        %v6885 = vand.u32 %v6842, 2147483648
        %v6886 = vor.u32 1.1754944e-38, %v6885
        %v6887 = vsel %vm6884, %v6886, %v6882
        %v6888 = vmul.f32 1.0, %v6887
        %v6889 = vrcp.pop %v6843
        %v6890 = vmul.f32 %v6843, %v6889
        %v6891 = vsub.f32 1.0, %v6890
        %v6892 = vmul.f32 %v6889, %v6891
        %v6893 = vadd.f32 %v6889, %v6892
        %vm6894 = vweird.f32 %v6843
        %vm6895 = vweird.f32 %v6889
        %vm6896 = vmor %vm6894, %vm6895
        %v6897 = vsel %vm6896, %v6889, %v6893
        %v6898 = vand.u32 2147483647, %v6843
        %vm6899 = vcmp.eq.f32.partialorder %v6898, 8.507059e+37
        %v6900 = vand.u32 %v6843, 2147483648
        %v6901 = vor.u32 1.1754944e-38, %v6900
        %v6902 = vsel %vm6899, %v6901, %v6897
        %v6903 = vmul.f32 1.0, %v6902
        %v6908 = vrot.slane %v6873, 7
        %v6909 = vrot.slane %v6888, 6
        %v6910 = vrot.slane %v6903, 5
        %vm6911 = vcmask 1040384
        %v6912 = vsel %vm6911, %v6858, %v6908
        %vm6913 = vcmask 1042434
        %v6914 = vsel %vm6913, %v6909, %v6910
        %vm6915 = vcmask 1041408
        %v6916 = vsel %vm6915, %v6912, %v6914
        %v6918 = vlaneseq
        %vm6919 = vcmp.ge.s32.totalorder %v6918, 0
        %vm6920 = vcmp.lt.s32.totalorder %v6918, 512
        %vm6921 = vmand %vm6919, %vm6920
        %6922 = vst.msk [vmem:[%s535] sm:$0xf] %vm6921, %v6916
        %s6923 = smul.u32 4, %s26
        %p6924 = scmp.lt.s32.totalorder %s6923, 7
        %s6925 = scalar_select %p6924, %s6923, 7
        %s6926 = scalar_lea.vmem %s12, %s6925
        // Predicated region
        $region92: #{neuralcdm_forward.1} parent=86 // pred_check
          %p6927 = pneg %p311
        $region93: #{neuralcdm_forward.1} parent=86 // pred_check_branch
          %6929 = sbr.rel (%p6927) target = $region95
        $region94: #{neuralcdm_forward.1} parent=86 // pred_region
          %s6930 = smul.u32 4, %s26
        $region95: #{neuralcdm_forward.1} parent=86 // pred_fallthru
          _
      $region87: #{neuralcdm_forward.1} parent=5 // pred_fallthru
        _
      %p6931 = scmp.le.s32.totalorder 2, %s21
      // Predicated region
      $region96: #{neuralcdm_forward.1} parent=5 // pred_check
        %p6932 = pneg %p6931
      $region97: #{neuralcdm_forward.1} parent=5 // pred_check_branch
        %6934 = sbr.rel (%p6932) target = $region99
      $region98: #{neuralcdm_forward.1} parent=5 // pred_region
        %s6935 = ssub.s32 %s21, 2
        // Predicated region
        $region100: #{neuralcdm_forward.1} parent=98 // pred_check
          %p6936 = pneg %p317
        $region101: #{neuralcdm_forward.1} parent=98 // pred_check_branch
          %6938 = sbr.rel (%p6936) target = $region103
        $region102: #{neuralcdm_forward.1} parent=98 // pred_region
          %s6939 = smul.u32 4, %s27
          %p6940 = scmp.lt.s32.totalorder %s6939, 7
          %s6941 = scalar_select %p6940, %s6939, 7
          %s6942 = scalar_lea.vmem %s12, %s6941
        $region103: #{neuralcdm_forward.1} parent=98 // pred_fallthru
          _
      $region99: #{neuralcdm_forward.1} parent=5 // pred_fallthru
        _
    $region6: #{neuralcdm_forward.1} parent=1 // loop_footer
      %s25 = sadd.s32 1, %s21
    $region7: #{neuralcdm_forward.1} parent=1 // loop_footer_branch
      %20 = sbr.rel target = $region3
    $region8: #{neuralcdm_forward.1} parent=1 // loop_exit
      _

</llo_original>
